<compile_context>
chip_gen: v6e
topology: v6e:2x2x1
jax: 0.10.0
libtpu: 0.0.40
codegen_flags: <defaults>
</compile_context>

<pallas_src>
import math

import jax
import jax.numpy as jnp
from jax.experimental import pallas as pl
from jax.experimental.pallas import tpu as pltpu

# -------- static model config (matches get_model defaults) ----------------
D_MODEL = 128            # d_model of nn.Transformer / Encoder / DispGenerator
NHEAD = 8                # nn.Transformer default
DH = D_MODEL // NHEAD    # 16
FFN_DIM = 2048           # nn.Transformer default dim_feedforward
NUM_LAYERS = 3           # num_encoder_layers = num_decoder_layers = 3
K_NN = 4                 # DGCNN k-nearest neighbours (small, self included)
LN_EPS = 1e-5
BN_EPS = 1e-5
NEG_SLOPE = 0.2          # DGCNN LeakyReLU slope


def _row_tile(m, cap):
    """Largest tile <= cap that evenly divides m (multiple of 8), else full m."""
    if m <= cap:
        return m
    t = cap
    while t >= 8:
        if m % t == 0:
            return t
        t //= 2
    return m


# --------------------------- kNN distance kernel ---------------------------
def knn_neg_dist(points):
    """points: (B, N, C) -> neg squared pairwise distances (B, N, N)."""
    B, N, C = points.shape
    pts_t = jnp.transpose(points, (0, 2, 1))                    # (B, C, N)
    sq = jnp.sum(points * points, axis=-1, keepdims=True)       # (B, N, 1)
    sq_t = jnp.transpose(sq, (0, 2, 1))                         # (B, 1, N)
    tn = _row_tile(N, 512)

    def kernel(p_ref, pt_ref, sq_ref, sqt_ref, o_ref):
        inner = jnp.dot(p_ref[0], pt_ref[0], preferred_element_type=jnp.float32)
        o_ref[0] = 2.0 * inner - sq_ref[0] - sqt_ref[0]

    return pl.pallas_call(
        kernel,
        out_shape=jax.ShapeDtypeStruct((B, N, N), jnp.float32),
        grid=(B, N // tn),
        in_specs=[pl.BlockSpec((1, tn, C), lambda b, i: (b, i, 0)),
                  pl.BlockSpec((1, C, N), lambda b, i: (b, 0, 0)),
                  pl.BlockSpec((1, tn, 1), lambda b, i: (b, i, 0)),
                  pl.BlockSpec((1, 1, N), lambda b, i: (b, 0, 0))],
        out_specs=pl.BlockSpec((1, tn, N), lambda b, i: (b, i, 0)),
        compiler_params=pltpu.CompilerParams(
            dimension_semantics=("parallel", "parallel")),
    )(points, pts_t, sq, sq_t)


def get_graph_feature(points):
    """(B, N, C) -> edge features laid out (K_NN, B*N, 2C)."""
    B, N, C = points.shape
    neg_dist = knn_neg_dist(points)
    # TODO(synk): top-k neighbour selection + index gather stay in JAX (no clean
    # Pallas sort/gather primitive for this pattern).
    _, idx = jax.lax.top_k(neg_dist, K_NN)                          # (B, N, k)
    neighbors = jax.vmap(lambda pts, ind: pts[ind])(points, idx)    # (B, N, k, C)
    center = jnp.broadcast_to(points[:, :, None, :], neighbors.shape)
    edge = jnp.concatenate([neighbors - center, center], axis=-1)   # (B, N, k, 2C)
    return jnp.transpose(edge, (2, 0, 1, 3)).reshape(K_NN, B * N, 2 * C)


# ----------------------- fused DGCNN edge-conv kernel -----------------------
def dgcnn_conv_fused(edge, p):
    """edge: (K_NN, M, 2C) -> per-point embedding (M, D_MODEL).

    All 4 edge-convs + their neighbor-max reductions + the 512->d_model
    aggregation conv run inside one kernel; only (M, D_MODEL) is written to HBM.
    """
    k, M, cin = edge.shape
    tm = _row_tile(M, 256)
    ws = [p["conv%d" % i]["w"] for i in range(1, 6)]
    bs = [p["conv%d" % i]["b"] for i in range(1, 6)]

    def kernel(e_ref, w1, b1, w2, b2, w3, b3, w4, b4, w5, b5, o_ref):
        def edge_conv(xs, w_ref, b_ref):
            w = w_ref[...]
            b = b_ref[...]
            hs = []
            for xj in xs:
                a = jnp.dot(xj.astype(jnp.bfloat16), w,
                            preferred_element_type=jnp.float32) + b
                hs.append(jnp.where(a > 0.0, a, NEG_SLOPE * a))
            m = hs[0]
            for hh in hs[1:]:
                m = jnp.maximum(m, hh)
            return hs, m

        xs0 = [e_ref[j] for j in range(K_NN)]
        h1, x1 = edge_conv(xs0, w1, b1)
        h2, x2 = edge_conv(h1, w2, b2)
        h3, x3 = edge_conv(h2, w3, b3)
        h4, x4 = edge_conv(h3, w4, b4)
        cat = jnp.concatenate([x1, x2, x3, x4], axis=-1)            # (tm, 512)
        a = jnp.dot(cat.astype(jnp.bfloat16), w5[...],
                    preferred_element_type=jnp.float32) + b5[...]
        o_ref[...] = jnp.where(a > 0.0, a, NEG_SLOPE * a)

    in_specs = [pl.BlockSpec((K_NN, tm, cin), lambda i: (0, i, 0))]
    args = [edge]
    for w, b in zip(ws, bs):
        in_specs.append(pl.BlockSpec(w.shape, lambda i: (0, 0)))
        in_specs.append(pl.BlockSpec(b.shape, lambda i: (0, 0)))
        args.extend([w, b])

    return pl.pallas_call(
        kernel,
        out_shape=jax.ShapeDtypeStruct((M, D_MODEL), jnp.float32),
        grid=(M // tm,),
        in_specs=in_specs,
        out_specs=pl.BlockSpec((tm, D_MODEL), lambda i: (i, 0)),
        compiler_params=pltpu.CompilerParams(dimension_semantics=("parallel",)),
    )(*args)


def dgcnn_forward(points, p):
    B, N, _ = points.shape
    edge = get_graph_feature(points)
    emb = dgcnn_conv_fused(edge, p)
    return emb.reshape(B, N, D_MODEL)


# ------------------------ fused MHA sub-layer kernel ------------------------
def mha_block(x, mem, pa, pn):
    """LayerNorm(x + MultiHeadAttention(x, mem, mem)), fused in one kernel.

    x: (B, L, E) queries / residual; mem: (B, S, E) keys & values.
    Grid over batch; heads iterated inside the kernel with lane-dense E tiles.
    TODO(synk): for very long sequences add flash-style kv tiling of the scores.
    """
    B, L, E = x.shape
    S = mem.shape[1]
    scale = 1.0 / math.sqrt(DH)

    def kernel(x_ref, m_ref, wq_ref, bq_ref, wk_ref, bk_ref, wv_ref, bv_ref,
               wo_ref, bo_ref, g_ref, bt_ref, o_ref):
        xv = x_ref[0]                                    # (L, E) f32
        mv = m_ref[0]                                    # (S, E) f32
        xb = xv.astype(jnp.bfloat16)
        mb = mv.astype(jnp.bfloat16)
        acc = None
        for h in range(NHEAD):                           # static unroll
            q = jnp.dot(xb, wq_ref[h], preferred_element_type=jnp.float32) + bq_ref[h]
            k = jnp.dot(mb, wk_ref[h], preferred_element_type=jnp.float32) + bk_ref[h]
            v = jnp.dot(mb, wv_ref[h], preferred_element_type=jnp.float32) + bv_ref[h]
            s = jax.lax.dot_general(
                q.astype(jnp.bfloat16), k.astype(jnp.bfloat16),
                (((1,), (1,)), ((), ())),
                preferred_element_type=jnp.float32) * scale          # (L, S)
            s = s - jnp.max(s, axis=-1, keepdims=True)               # f32 softmax
            pw = jnp.exp(s)
            pw = pw / jnp.sum(pw, axis=-1, keepdims=True)
            oh = jnp.dot(pw.astype(jnp.bfloat16), v.astype(jnp.bfloat16),
                         preferred_element_type=jnp.float32)         # (L, DH)
            contrib = jnp.dot(oh.astype(jnp.bfloat16), wo_ref[h],
                              preferred_element_type=jnp.float32)    # (L, E)
            acc = contrib if acc is None else acc + contrib
        y = xv + acc + bo_ref[...]                        # residual, f32
        mu = jnp.mean(y, axis=-1, keepdims=True)
        yc = y - mu
        var = jnp.mean(yc * yc, axis=-1, keepdims=True)
        o_ref[0] = yc * jax.lax.rsqrt(var + LN_EPS) * g_ref[...] + bt_ref[...]

    return pl.pallas_call(
        kernel,
        out_shape=jax.ShapeDtypeStruct((B, L, E), jnp.float32),
        grid=(B,),
        in_specs=[
            pl.BlockSpec((1, L, E), lambda b: (b, 0, 0)),
            pl.BlockSpec((1, S, E), lambda b: (b, 0, 0)),
            pl.BlockSpec((NHEAD, E, DH), lambda b: (0, 0, 0)),
            pl.BlockSpec((NHEAD, 1, DH), lambda b: (0, 0, 0)),
            pl.BlockSpec((NHEAD, E, DH), lambda b: (0, 0, 0)),
            pl.BlockSpec((NHEAD, 1, DH), lambda b: (0, 0, 0)),
            pl.BlockSpec((NHEAD, E, DH), lambda b: (0, 0, 0)),
            pl.BlockSpec((NHEAD, 1, DH), lambda b: (0, 0, 0)),
            pl.BlockSpec((NHEAD, DH, E), lambda b: (0, 0, 0)),
            pl.BlockSpec((1, E), lambda b: (0, 0)),
            pl.BlockSpec((1, E), lambda b: (0, 0)),
            pl.BlockSpec((1, E), lambda b: (0, 0)),
        ],
        out_specs=pl.BlockSpec((1, L, E), lambda b: (b, 0, 0)),
        compiler_params=pltpu.CompilerParams(dimension_semantics=("parallel",)),
    )(x, mem, pa["wq"], pa["bq"], pa["wk"], pa["bk"], pa["wv"], pa["bv"],
      pa["wo"], pa["bo"], pn["g"], pn["b"])


# ------------------------ fused FFN sub-layer kernel ------------------------
def ffn_block(x, p_lin1, p_lin2, p_norm):
    """LayerNorm(x + lin2(relu(lin1(x)))) fused; (tm, 2048) stays in VMEM."""
    B, L, E = x.shape
    M = B * L
    x2 = x.reshape(M, E)
    tm = _row_tile(M, 256)   # (tm,2048) f32 intermediate ~2 MiB, fits v7x VMEM

    def kernel(x_ref, w1, b1, w2, b2, g_ref, bt_ref, o_ref):
        xv = x_ref[...]                                   # (tm, E) f32
        h = jnp.dot(xv.astype(jnp.bfloat16), w1[...],
                    preferred_element_type=jnp.float32) + b1[...]
        h = jnp.maximum(h, 0.0)
        y = jnp.dot(h.astype(jnp.bfloat16), w2[...],
                    preferred_element_type=jnp.float32) + b2[...]
        y = xv + y                                        # residual, f32
        mu = jnp.mean(y, axis=-1, keepdims=True)
        yc = y - mu
        var = jnp.mean(yc * yc, axis=-1, keepdims=True)
        o_ref[...] = yc * jax.lax.rsqrt(var + LN_EPS) * g_ref[...] + bt_ref[...]

    out = pl.pallas_call(
        kernel,
        out_shape=jax.ShapeDtypeStruct((M, E), jnp.float32),
        grid=(M // tm,),
        in_specs=[pl.BlockSpec((tm, E), lambda i: (i, 0)),
                  pl.BlockSpec((E, FFN_DIM), lambda i: (0, 0)),
                  pl.BlockSpec((1, FFN_DIM), lambda i: (0, 0)),
                  pl.BlockSpec((FFN_DIM, E), lambda i: (0, 0)),
                  pl.BlockSpec((1, E), lambda i: (0, 0)),
                  pl.BlockSpec((1, E), lambda i: (0, 0)),
                  pl.BlockSpec((1, E), lambda i: (0, 0))],
        out_specs=pl.BlockSpec((tm, E), lambda i: (i, 0)),
        compiler_params=pltpu.CompilerParams(dimension_semantics=("parallel",)),
    )(x2, p_lin1["w"], p_lin1["b"], p_lin2["w"], p_lin2["b"],
      p_norm["g"], p_norm["b"])
    return out.reshape(B, L, E)


# --------------------------- standalone LayerNorm ---------------------------
def layer_norm_rows(x2, g, b):
    M, D = x2.shape
    tm = _row_tile(M, 512)

    def kernel(x_ref, g_ref, b_ref, o_ref):
        xv = x_ref[...]
        mu = jnp.mean(xv, axis=-1, keepdims=True)
        xc = xv - mu
        var = jnp.mean(xc * xc, axis=-1, keepdims=True)
        o_ref[...] = xc * jax.lax.rsqrt(var + LN_EPS) * g_ref[...] + b_ref[...]

    return pl.pallas_call(
        kernel,
        out_shape=jax.ShapeDtypeStruct((M, D), jnp.float32),
        grid=(M // tm,),
        in_specs=[pl.BlockSpec((tm, D), lambda i: (i, 0)),
                  pl.BlockSpec((1, D), lambda i: (0, 0)),
                  pl.BlockSpec((1, D), lambda i: (0, 0))],
        out_specs=pl.BlockSpec((tm, D), lambda i: (i, 0)),
        compiler_params=pltpu.CompilerParams(dimension_semantics=("parallel",)),
    )(x2, g, b)


# --------------------------- transformer wrapper ----------------------------
def transformer_forward(src, tgt, p):
    # src/tgt: (B, seq, E).  PyTorch's (seq, batch, E) layout is equivalent here
    # because attention only mixes over seq within one batch element.
    B, L, E = src.shape
    mem = src
    for lp in p["enc_layers"]:
        mem = mha_block(mem, mem, lp["self_attn"], lp["norm1"])
        mem = ffn_block(mem, lp["lin1"], lp["lin2"], lp["norm2"])
    mem = layer_norm_rows(mem.reshape(B * L, E), p["enc_norm"]["g"],
                          p["enc_norm"]["b"]).reshape(B, L, E)
    out = tgt
    for lp in p["dec_layers"]:
        out = mha_block(out, out, lp["self_attn"], lp["norm1"])
        out = mha_block(out, mem, lp["cross_attn"], lp["norm2"])
        out = ffn_block(out, lp["lin1"], lp["lin2"], lp["norm3"])
    out = layer_norm_rows(out.reshape(B * L, E), p["dec_norm"]["g"],
                          p["dec_norm"]["b"]).reshape(B, L, E)
    return out


# --------------------------- displacement decoder ---------------------------
def disp_fused(x2, p):
    """Three fused 1x1 convs; output is a lane-dense 128-wide slab (ch 0..2 valid)."""
    M, E = x2.shape
    tm = _row_tile(M, 256)
    n_out = p["conv3"]["w"].shape[1]           # padded to D_MODEL (128)

    def kernel(x_ref, w1, b1, w2, b2, w3, b3, o_ref):
        h = jnp.dot(x_ref[...].astype(jnp.bfloat16), w1[...],
                    preferred_element_type=jnp.float32) + b1[...]
        h = jnp.maximum(h, 0.0)
        h = jnp.dot(h.astype(jnp.bfloat16), w2[...],
                    preferred_element_type=jnp.float32) + b2[...]
        h = jnp.maximum(h, 0.0)
        o_ref[...] = jnp.dot(h.astype(jnp.bfloat16), w3[...],
                             preferred_element_type=jnp.float32) + b3[...]

    return pl.pallas_call(
        kernel,
        out_shape=jax.ShapeDtypeStruct((M, n_out), jnp.float32),
        grid=(M // tm,),
        in_specs=[pl.BlockSpec((tm, E), lambda i: (i, 0)),
                  pl.BlockSpec(p["conv1"]["w"].shape, lambda i: (0, 0)),
                  pl.BlockSpec(p["conv1"]["b"].shape, lambda i: (0, 0)),
                  pl.BlockSpec(p["conv2"]["w"].shape, lambda i: (0, 0)),
                  pl.BlockSpec(p["conv2"]["b"].shape, lambda i: (0, 0)),
                  pl.BlockSpec(p["conv3"]["w"].shape, lambda i: (0, 0)),
                  pl.BlockSpec(p["conv3"]["b"].shape, lambda i: (0, 0))],
        out_specs=pl.BlockSpec((tm, n_out), lambda i: (i, 0)),
        compiler_params=pltpu.CompilerParams(dimension_semantics=("parallel",)),
    )(x2, p["conv1"]["w"], p["conv1"]["b"], p["conv2"]["w"], p["conv2"]["b"],
      p["conv3"]["w"], p["conv3"]["b"])


def disp_generator_forward(feat, p):
    B, N, E = feat.shape
    out = disp_fused(feat.reshape(B * N, E), p)
    return out[:, :3].reshape(B, N, 3)


# -------------------------------- loss kernel -------------------------------
def sum_sq_loss(a, b):
    """loss = sum((a - b) ** 2), accumulated across row tiles in one output cell."""
    a2 = a.reshape(-1, a.shape[-1]).astype(jnp.float32)
    b2 = b.reshape(-1, b.shape[-1]).astype(jnp.float32)
    M, C = a2.shape
    tm = _row_tile(M, 1024)

    def kernel(a_ref, b_ref, o_ref):
        @pl.when(pl.program_id(0) == 0)
        def _():
            o_ref[...] = jnp.zeros_like(o_ref)
        d = a_ref[...] - b_ref[...]
        o_ref[...] = o_ref[...] + jnp.sum(d * d).reshape(1, 1)

    out = pl.pallas_call(
        kernel,
        out_shape=jax.ShapeDtypeStruct((1, 1), jnp.float32),
        grid=(M // tm,),
        in_specs=[pl.BlockSpec((tm, C), lambda i: (i, 0)),
                  pl.BlockSpec((tm, C), lambda i: (i, 0))],
        out_specs=pl.BlockSpec((1, 1), lambda i: (0, 0)),
        compiler_params=pltpu.CompilerParams(dimension_semantics=("arbitrary",)),
    )(a2, b2)
    return out[0, 0]


# ------------------------- parameter initialization -------------------------
def init_params(key):
    keys = iter(jax.random.split(key, 256))

    def _u(shape, bound):
        return jax.random.uniform(next(keys), shape, jnp.float32, -bound, bound)

    def conv_bn(cin, cout):
        # 1x1 conv (bias=False) + BatchNorm folded in eval mode with default
        # running stats (mean=0, var=1) and affine (gamma=1, beta=0).
        w = _u((cin, cout), 1.0 / math.sqrt(cin))
        scale = 1.0 / jnp.sqrt(jnp.ones((cout,), jnp.float32) + BN_EPS)
        return {"w": (w * scale[None, :]).astype(jnp.bfloat16),
                "b": jnp.zeros((1, cout), jnp.float32)}

    def linear(cin, cout, pad_to=None):
        bound = 1.0 / math.sqrt(cin)
        w = _u((cin, cout), bound)
        b = _u((cout,), bound)
        if pad_to is not None and pad_to > cout:
            w = jnp.pad(w, ((0, 0), (0, pad_to - cout)))   # lane-dense output slab
            b = jnp.pad(b, (0, pad_to - cout))
        return {"w": w.astype(jnp.bfloat16),
                "b": b.reshape(1, -1).astype(jnp.float32)}

    def layer_norm():
        return {"g": jnp.ones((1, D_MODEL), jnp.float32),
                "b": jnp.zeros((1, D_MODEL), jnp.float32)}

    def mha():
        bound = 1.0 / math.sqrt(D_MODEL)

        def col_heads(w):   # (E, E) -> (H, E, DH): per-head column blocks of W
            return jnp.transpose(w.reshape(D_MODEL, NHEAD, DH),
                                 (1, 0, 2)).astype(jnp.bfloat16)

        return {
            "wq": col_heads(_u((D_MODEL, D_MODEL), bound)),
            "wk": col_heads(_u((D_MODEL, D_MODEL), bound)),
            "wv": col_heads(_u((D_MODEL, D_MODEL), bound)),
            "bq": jnp.zeros((NHEAD, 1, DH), jnp.float32),
            "bk": jnp.zeros((NHEAD, 1, DH), jnp.float32),
            "bv": jnp.zeros((NHEAD, 1, DH), jnp.float32),
            # out_proj rows split per head: (H, DH, E)
            "wo": _u((D_MODEL, D_MODEL), bound).reshape(
                NHEAD, DH, D_MODEL).astype(jnp.bfloat16),
            "bo": jnp.zeros((1, D_MODEL), jnp.float32),
        }

    def enc_layer():
        return {"self_attn": mha(),
                "lin1": linear(D_MODEL, FFN_DIM), "lin2": linear(FFN_DIM, D_MODEL),
                "norm1": layer_norm(), "norm2": layer_norm()}

    def dec_layer():
        return {"self_attn": mha(), "cross_attn": mha(),
                "lin1": linear(D_MODEL, FFN_DIM), "lin2": linear(FFN_DIM, D_MODEL),
                "norm1": layer_norm(), "norm2": layer_norm(), "norm3": layer_norm()}

    return {
        # TODO(synk): Encoder / DispGenerator definitions were not provided with
        # the module; a DCP-style DGCNN encoder (edge-conv 6->64->64->128->256,
        # concat -> 1x1 conv 512->d_model, LeakyReLU(0.2)) and a 3-layer 1x1-conv
        # head d_model->128->64->3 are assumed.
        "dgcnn": {
            "conv1": conv_bn(6, 64),
            "conv2": conv_bn(64, 64),
            "conv3": conv_bn(64, 128),
            "conv4": conv_bn(128, 256),
            "conv5": conv_bn(512, D_MODEL),
        },
        "transformer": {
            "enc_layers": [enc_layer() for _ in range(NUM_LAYERS)],
            "dec_layers": [dec_layer() for _ in range(NUM_LAYERS)],
            "enc_norm": layer_norm(),
            "dec_norm": layer_norm(),
        },
        "disp": {
            "conv1": conv_bn(D_MODEL, 128),
            "conv2": conv_bn(128, 64),
            "conv3": linear(64, 3, pad_to=D_MODEL),
        },
    }


# -------------------------------- full model --------------------------------
def model_forward(encoder_input, decoder_input, params):
    # encoder_input / decoder_input: (B, N, 3) -- the PyTorch module's raw inputs
    # (it permutes to (B, 3, N) internally; here everything stays channels-last,
    # which is numerically equivalent).
    displacement_gt = encoder_input - decoder_input                     # (B, N, 3)
    embed_input = dgcnn_forward(encoder_input, params["dgcnn"])         # (B, N, E)
    embed_output = dgcnn_forward(decoder_input, params["dgcnn"])
    trans_out = transformer_forward(embed_input, embed_output,
                                    params["transformer"])              # (B, N, E)
    displacement = disp_generator_forward(trans_out, params["disp"])    # (B, N, 3)
    warped = displacement + decoder_input[:, :, 0:3]
    loss1 = sum_sq_loss(displacement, displacement_gt)
    # returned "warped" already matches PyTorch's warped.permute(0, 2, 1): (B, N, 3)
    return warped, loss1


if __name__ == "__main__":
    key = jax.random.PRNGKey(0)
    k_enc, k_dec, k_par = jax.random.split(key, 3)
    B, N = 2, 16
    encoder_input = jax.random.normal(k_enc, (B, N, 3), jnp.float32)
    decoder_input = jax.random.normal(k_dec, (B, N, 3), jnp.float32)
    params = init_params(k_par)

    fwd = jax.jit(model_forward)
    warped, loss1 = fwd(encoder_input, decoder_input, params)
    jax.block_until_ready((warped, loss1))

    assert warped.shape == (B, N, 3)
    assert loss1.shape == ()
    assert bool(jnp.isfinite(loss1)) and bool(jnp.all(jnp.isfinite(warped)))
    print("KERNEL_OK")
</pallas_src>

<mosaic_0001>
module attributes {stable_mosaic.version = 11 : i64} {
  func.func @kernel(%arg0: i32, %arg1: i32, %arg2: memref<1x16x3xf32, #tpu.memory_space<vmem>>, %arg3: memref<1x3x16xf32, #tpu.memory_space<vmem>>, %arg4: memref<1x16x1xf32, #tpu.memory_space<vmem>>, %arg5: memref<1x1x16xf32, #tpu.memory_space<vmem>>, %arg6: memref<1x16x16xf32, #tpu.memory_space<vmem>>) attributes {dimension_semantics = [#tpu.dimension_semantics<parallel>, #tpu.dimension_semantics<parallel>], iteration_bounds = array<i64: 2, 1>, scalar_prefetch = 0 : i64, scratch_operands = 0 : i64, tpu.core_type = #tpu.core_type<tc>, window_params = [{transform_indices = @transform_0, window_bounds = array<i64: 1, 16, 3>}, {transform_indices = @transform_1, window_bounds = array<i64: 1, 3, 16>}, {transform_indices = @transform_2, window_bounds = array<i64: 1, 16, 1>}, {transform_indices = @transform_3, window_bounds = array<i64: 1, 1, 16>}, {transform_indices = @transform_4, window_bounds = array<i64: 1, 16, 16>}]} {
    %c0 = arith.constant 0 : index
    %c0_0 = arith.constant 0 : index
    %c0_1 = arith.constant 0 : index
    %0 = vector.load %arg2[%c0, %c0_0, %c0_1] : memref<1x16x3xf32, #tpu.memory_space<vmem>>, vector<1x16x3xf32>
    %1 = vector.shape_cast %0 : vector<1x16x3xf32> to vector<16x3xf32>
    %c0_2 = arith.constant 0 : index
    %c0_3 = arith.constant 0 : index
    %c0_4 = arith.constant 0 : index
    %2 = vector.load %arg3[%c0_2, %c0_3, %c0_4] : memref<1x3x16xf32, #tpu.memory_space<vmem>>, vector<1x3x16xf32>
    %3 = vector.shape_cast %2 : vector<1x3x16xf32> to vector<3x16xf32>
    %cst = arith.constant dense<0.000000e+00> : vector<16x16xf32>
    %4 = tpu.matmul %1, %3, %cst {dimension_numbers = #tpu.dot_dimension_numbers<[1], [0], [0], [1], [0, 0, 1, 1], [], []>} : vector<16x3xf32>, vector<3x16xf32>, vector<16x16xf32> -> vector<16x16xf32>
    %cst_5 = arith.constant 2.000000e+00 : f32
    %5 = vector.broadcast %cst_5 : f32 to vector<16x16xf32>
    %6 = arith.mulf %5, %4 : vector<16x16xf32>
    %c0_6 = arith.constant 0 : index
    %c0_7 = arith.constant 0 : index
    %c0_8 = arith.constant 0 : index
    %7 = vector.load %arg4[%c0_6, %c0_7, %c0_8] : memref<1x16x1xf32, #tpu.memory_space<vmem>>, vector<1x16x1xf32>
    %8 = vector.shape_cast %7 : vector<1x16x1xf32> to vector<16x1xf32>
    %9 = vector.broadcast %8 : vector<16x1xf32> to vector<16x16xf32>
    %10 = arith.subf %6, %9 : vector<16x16xf32>
    %c0_9 = arith.constant 0 : index
    %c0_10 = arith.constant 0 : index
    %c0_11 = arith.constant 0 : index
    %11 = vector.load %arg5[%c0_9, %c0_10, %c0_11] : memref<1x1x16xf32, #tpu.memory_space<vmem>>, vector<1x1x16xf32>
    %12 = vector.shape_cast %11 : vector<1x1x16xf32> to vector<1x16xf32>
    %13 = vector.broadcast %12 : vector<1x16xf32> to vector<16x16xf32>
    %14 = arith.subf %10, %13 : vector<16x16xf32>
    %c0_12 = arith.constant 0 : index
    %c0_13 = arith.constant 0 : index
    %c0_14 = arith.constant 0 : index
    %15 = vector.load %arg6[%c0_12, %c0_13, %c0_14] : memref<1x16x16xf32, #tpu.memory_space<vmem>>, vector<1x16x16xf32>
    %16 = vector.shape_cast %15 : vector<1x16x16xf32> to vector<16x16xf32>
    %17 = vector.shape_cast %14 : vector<16x16xf32> to vector<1x16x16xf32>
    tpu.vector_store %arg6[%c0_12, %c0_13, %c0_14], %17 {strides = array<i32>} : memref<1x16x16xf32, #tpu.memory_space<vmem>>, vector<1x16x16xf32>,
    return
  }
  func.func @transform_0(%arg0: i32, %arg1: i32) -> (i32, i32, i32) {
    %c0_i32 = arith.constant 0 : i32
    %c0_i32_0 = arith.constant 0 : i32
    return %arg0, %arg1, %c0_i32 : i32, i32, i32
  }
  func.func @transform_1(%arg0: i32, %arg1: i32) -> (i32, i32, i32) {
    %c0_i32 = arith.constant 0 : i32
    %c0_i32_0 = arith.constant 0 : i32
    %c0_i32_1 = arith.constant 0 : i32
    return %arg0, %c0_i32, %c0_i32_0 : i32, i32, i32
  }
  func.func @transform_2(%arg0: i32, %arg1: i32) -> (i32, i32, i32) {
    %c0_i32 = arith.constant 0 : i32
    %c0_i32_0 = arith.constant 0 : i32
    return %arg0, %arg1, %c0_i32 : i32, i32, i32
  }
  func.func @transform_3(%arg0: i32, %arg1: i32) -> (i32, i32, i32) {
    %c0_i32 = arith.constant 0 : i32
    %c0_i32_0 = arith.constant 0 : i32
    %c0_i32_1 = arith.constant 0 : i32
    return %arg0, %c0_i32, %c0_i32_0 : i32, i32, i32
  }
  func.func @transform_4(%arg0: i32, %arg1: i32) -> (i32, i32, i32) {
    %c0_i32 = arith.constant 0 : i32
    %c0_i32_0 = arith.constant 0 : i32
    return %arg0, %arg1, %c0_i32 : i32, i32, i32
  }
}

module attributes {stable_mosaic.version = 11 : i64} {
  func.func @kernel(%arg0: i32, %arg1: memref<4x32x6xf32, #tpu.memory_space<vmem>>, %arg2: memref<6x64xbf16, #tpu.memory_space<vmem>>, %arg3: memref<1x64xf32, #tpu.memory_space<vmem>>, %arg4: memref<64x64xbf16, #tpu.memory_space<vmem>>, %arg5: memref<1x64xf32, #tpu.memory_space<vmem>>, %arg6: memref<64x128xbf16, #tpu.memory_space<vmem>>, %arg7: memref<1x128xf32, #tpu.memory_space<vmem>>, %arg8: memref<128x256xbf16, #tpu.memory_space<vmem>>, %arg9: memref<1x256xf32, #tpu.memory_space<vmem>>, %arg10: memref<512x128xbf16, #tpu.memory_space<vmem>>, %arg11: memref<1x128xf32, #tpu.memory_space<vmem>>, %arg12: memref<32x128xf32, #tpu.memory_space<vmem>>) attributes {dimension_semantics = [#tpu.dimension_semantics<parallel>], iteration_bounds = array<i64: 1>, scalar_prefetch = 0 : i64, scratch_operands = 0 : i64, tpu.core_type = #tpu.core_type<tc>, window_params = [{transform_indices = @transform_0, window_bounds = array<i64: 4, 32, 6>}, {pipeline_mode = #tpu.pipeline_mode<synchronous>, transform_indices = @transform_1, window_bounds = array<i64: 6, 64>}, {pipeline_mode = #tpu.pipeline_mode<synchronous>, transform_indices = @transform_2, window_bounds = array<i64: 1, 64>}, {pipeline_mode = #tpu.pipeline_mode<synchronous>, transform_indices = @transform_3, window_bounds = array<i64: 64, 64>}, {pipeline_mode = #tpu.pipeline_mode<synchronous>, transform_indices = @transform_4, window_bounds = array<i64: 1, 64>}, {pipeline_mode = #tpu.pipeline_mode<synchronous>, transform_indices = @transform_5, window_bounds = array<i64: 64, 128>}, {pipeline_mode = #tpu.pipeline_mode<synchronous>, transform_indices = @transform_6, window_bounds = array<i64: 1, 128>}, {pipeline_mode = #tpu.pipeline_mode<synchronous>, transform_indices = @transform_7, window_bounds = array<i64: 128, 256>}, {pipeline_mode = #tpu.pipeline_mode<synchronous>, transform_indices = @transform_8, window_bounds = array<i64: 1, 256>}, {pipeline_mode = #tpu.pipeline_mode<synchronous>, transform_indices = @transform_9, window_bounds = array<i64: 512, 128>}, {pipeline_mode = #tpu.pipeline_mode<synchronous>, transform_indices = @transform_10, window_bounds = array<i64: 1, 128>}, {transform_indices = @transform_11, window_bounds = array<i64: 32, 128>}]} {
    %c0 = arith.constant 0 : index
    %c0_0 = arith.constant 0 : index
    %c0_1 = arith.constant 0 : index
    %0 = vector.load %arg1[%c0, %c0_0, %c0_1] : memref<4x32x6xf32, #tpu.memory_space<vmem>>, vector<1x32x6xf32>
    %1 = vector.shape_cast %0 : vector<1x32x6xf32> to vector<32x6xf32>
    %c1 = arith.constant 1 : index
    %c0_2 = arith.constant 0 : index
    %c0_3 = arith.constant 0 : index
    %2 = vector.load %arg1[%c1, %c0_2, %c0_3] : memref<4x32x6xf32, #tpu.memory_space<vmem>>, vector<1x32x6xf32>
    %3 = vector.shape_cast %2 : vector<1x32x6xf32> to vector<32x6xf32>
    %c2 = arith.constant 2 : index
    %c0_4 = arith.constant 0 : index
    %c0_5 = arith.constant 0 : index
    %4 = vector.load %arg1[%c2, %c0_4, %c0_5] : memref<4x32x6xf32, #tpu.memory_space<vmem>>, vector<1x32x6xf32>
    %5 = vector.shape_cast %4 : vector<1x32x6xf32> to vector<32x6xf32>
    %c3 = arith.constant 3 : index
    %c0_6 = arith.constant 0 : index
    %c0_7 = arith.constant 0 : index
    %6 = vector.load %arg1[%c3, %c0_6, %c0_7] : memref<4x32x6xf32, #tpu.memory_space<vmem>>, vector<1x32x6xf32>
    %7 = vector.shape_cast %6 : vector<1x32x6xf32> to vector<32x6xf32>
    %c0_8 = arith.constant 0 : index
    %c0_9 = arith.constant 0 : index
    %8 = vector.load %arg2[%c0_8, %c0_9] : memref<6x64xbf16, #tpu.memory_space<vmem>>, vector<6x64xbf16>
    %c0_10 = arith.constant 0 : index
    %c0_11 = arith.constant 0 : index
    %9 = vector.load %arg3[%c0_10, %c0_11] : memref<1x64xf32, #tpu.memory_space<vmem>>, vector<1x64xf32>
    %10 = arith.truncf %1 : vector<32x6xf32> to vector<32x6xbf16>
    %cst = arith.constant dense<0.000000e+00> : vector<32x64xf32>
    %11 = tpu.matmul %10, %8, %cst {dimension_numbers = #tpu.dot_dimension_numbers<[1], [0], [0], [1], [0, 0, 1, 1], [], []>} : vector<32x6xbf16>, vector<6x64xbf16>, vector<32x64xf32> -> vector<32x64xf32>
    %12 = vector.broadcast %9 : vector<1x64xf32> to vector<32x64xf32>
    %13 = arith.addf %11, %12 : vector<32x64xf32>
    %cst_12 = arith.constant 0.000000e+00 : f32
    %14 = vector.broadcast %cst_12 : f32 to vector<32x64xf32>
    %15 = arith.cmpf ogt, %13, %14 : vector<32x64xf32>
    %cst_13 = arith.constant 2.000000e-01 : f32
    %16 = vector.broadcast %cst_13 : f32 to vector<32x64xf32>
    %17 = arith.mulf %16, %13 : vector<32x64xf32>
    %18 = arith.select %15, %13, %17 : vector<32x64xi1>, vector<32x64xf32>
    %19 = arith.truncf %3 : vector<32x6xf32> to vector<32x6xbf16>
    %cst_14 = arith.constant dense<0.000000e+00> : vector<32x64xf32>
    %20 = tpu.matmul %19, %8, %cst_14 {dimension_numbers = #tpu.dot_dimension_numbers<[1], [0], [0], [1], [0, 0, 1, 1], [], []>} : vector<32x6xbf16>, vector<6x64xbf16>, vector<32x64xf32> -> vector<32x64xf32>
    %21 = vector.broadcast %9 : vector<1x64xf32> to vector<32x64xf32>
    %22 = arith.addf %20, %21 : vector<32x64xf32>
    %cst_15 = arith.constant 0.000000e+00 : f32
    %23 = vector.broadcast %cst_15 : f32 to vector<32x64xf32>
    %24 = arith.cmpf ogt, %22, %23 : vector<32x64xf32>
    %cst_16 = arith.constant 2.000000e-01 : f32
    %25 = vector.broadcast %cst_16 : f32 to vector<32x64xf32>
    %26 = arith.mulf %25, %22 : vector<32x64xf32>
    %27 = arith.select %24, %22, %26 : vector<32x64xi1>, vector<32x64xf32>
    %28 = arith.truncf %5 : vector<32x6xf32> to vector<32x6xbf16>
    %cst_17 = arith.constant dense<0.000000e+00> : vector<32x64xf32>
    %29 = tpu.matmul %28, %8, %cst_17 {dimension_numbers = #tpu.dot_dimension_numbers<[1], [0], [0], [1], [0, 0, 1, 1], [], []>} : vector<32x6xbf16>, vector<6x64xbf16>, vector<32x64xf32> -> vector<32x64xf32>
    %30 = vector.broadcast %9 : vector<1x64xf32> to vector<32x64xf32>
    %31 = arith.addf %29, %30 : vector<32x64xf32>
    %cst_18 = arith.constant 0.000000e+00 : f32
    %32 = vector.broadcast %cst_18 : f32 to vector<32x64xf32>
    %33 = arith.cmpf ogt, %31, %32 : vector<32x64xf32>
    %cst_19 = arith.constant 2.000000e-01 : f32
    %34 = vector.broadcast %cst_19 : f32 to vector<32x64xf32>
    %35 = arith.mulf %34, %31 : vector<32x64xf32>
    %36 = arith.select %33, %31, %35 : vector<32x64xi1>, vector<32x64xf32>
    %37 = arith.truncf %7 : vector<32x6xf32> to vector<32x6xbf16>
    %cst_20 = arith.constant dense<0.000000e+00> : vector<32x64xf32>
    %38 = tpu.matmul %37, %8, %cst_20 {dimension_numbers = #tpu.dot_dimension_numbers<[1], [0], [0], [1], [0, 0, 1, 1], [], []>} : vector<32x6xbf16>, vector<6x64xbf16>, vector<32x64xf32> -> vector<32x64xf32>
    %39 = vector.broadcast %9 : vector<1x64xf32> to vector<32x64xf32>
    %40 = arith.addf %38, %39 : vector<32x64xf32>
    %cst_21 = arith.constant 0.000000e+00 : f32
    %41 = vector.broadcast %cst_21 : f32 to vector<32x64xf32>
    %42 = arith.cmpf ogt, %40, %41 : vector<32x64xf32>
    %cst_22 = arith.constant 2.000000e-01 : f32
    %43 = vector.broadcast %cst_22 : f32 to vector<32x64xf32>
    %44 = arith.mulf %43, %40 : vector<32x64xf32>
    %45 = arith.select %42, %40, %44 : vector<32x64xi1>, vector<32x64xf32>
    %46 = arith.maximumf %18, %27 : vector<32x64xf32>
    %47 = arith.maximumf %46, %36 : vector<32x64xf32>
    %48 = arith.maximumf %47, %45 : vector<32x64xf32>
    %c0_23 = arith.constant 0 : index
    %c0_24 = arith.constant 0 : index
    %49 = vector.load %arg4[%c0_23, %c0_24] : memref<64x64xbf16, #tpu.memory_space<vmem>>, vector<64x64xbf16>
    %c0_25 = arith.constant 0 : index
    %c0_26 = arith.constant 0 : index
    %50 = vector.load %arg5[%c0_25, %c0_26] : memref<1x64xf32, #tpu.memory_space<vmem>>, vector<1x64xf32>
    %51 = arith.truncf %18 : vector<32x64xf32> to vector<32x64xbf16>
    %cst_27 = arith.constant dense<0.000000e+00> : vector<32x64xf32>
    %52 = tpu.matmul %51, %49, %cst_27 {dimension_numbers = #tpu.dot_dimension_numbers<[1], [0], [0], [1], [0, 0, 1, 1], [], []>} : vector<32x64xbf16>, vector<64x64xbf16>, vector<32x64xf32> -> vector<32x64xf32>
    %53 = vector.broadcast %50 : vector<1x64xf32> to vector<32x64xf32>
    %54 = arith.addf %52, %53 : vector<32x64xf32>
    %cst_28 = arith.constant 0.000000e+00 : f32
    %55 = vector.broadcast %cst_28 : f32 to vector<32x64xf32>
    %56 = arith.cmpf ogt, %54, %55 : vector<32x64xf32>
    %cst_29 = arith.constant 2.000000e-01 : f32
    %57 = vector.broadcast %cst_29 : f32 to vector<32x64xf32>
    %58 = arith.mulf %57, %54 : vector<32x64xf32>
    %59 = arith.select %56, %54, %58 : vector<32x64xi1>, vector<32x64xf32>
    %60 = arith.truncf %27 : vector<32x64xf32> to vector<32x64xbf16>
    %cst_30 = arith.constant dense<0.000000e+00> : vector<32x64xf32>
    %61 = tpu.matmul %60, %49, %cst_30 {dimension_numbers = #tpu.dot_dimension_numbers<[1], [0], [0], [1], [0, 0, 1, 1], [], []>} : vector<32x64xbf16>, vector<64x64xbf16>, vector<32x64xf32> -> vector<32x64xf32>
    %62 = vector.broadcast %50 : vector<1x64xf32> to vector<32x64xf32>
    %63 = arith.addf %61, %62 : vector<32x64xf32>
    %cst_31 = arith.constant 0.000000e+00 : f32
    %64 = vector.broadcast %cst_31 : f32 to vector<32x64xf32>
    %65 = arith.cmpf ogt, %63, %64 : vector<32x64xf32>
    %cst_32 = arith.constant 2.000000e-01 : f32
    %66 = vector.broadcast %cst_32 : f32 to vector<32x64xf32>
    %67 = arith.mulf %66, %63 : vector<32x64xf32>
    %68 = arith.select %65, %63, %67 : vector<32x64xi1>, vector<32x64xf32>
    %69 = arith.truncf %36 : vector<32x64xf32> to vector<32x64xbf16>
    %cst_33 = arith.constant dense<0.000000e+00> : vector<32x64xf32>
    %70 = tpu.matmul %69, %49, %cst_33 {dimension_numbers = #tpu.dot_dimension_numbers<[1], [0], [0], [1], [0, 0, 1, 1], [], []>} : vector<32x64xbf16>, vector<64x64xbf16>, vector<32x64xf32> -> vector<32x64xf32>
    %71 = vector.broadcast %50 : vector<1x64xf32> to vector<32x64xf32>
    %72 = arith.addf %70, %71 : vector<32x64xf32>
    %cst_34 = arith.constant 0.000000e+00 : f32
    %73 = vector.broadcast %cst_34 : f32 to vector<32x64xf32>
    %74 = arith.cmpf ogt, %72, %73 : vector<32x64xf32>
    %cst_35 = arith.constant 2.000000e-01 : f32
    %75 = vector.broadcast %cst_35 : f32 to vector<32x64xf32>
    %76 = arith.mulf %75, %72 : vector<32x64xf32>
    %77 = arith.select %74, %72, %76 : vector<32x64xi1>, vector<32x64xf32>
    %78 = arith.truncf %45 : vector<32x64xf32> to vector<32x64xbf16>
    %cst_36 = arith.constant dense<0.000000e+00> : vector<32x64xf32>
    %79 = tpu.matmul %78, %49, %cst_36 {dimension_numbers = #tpu.dot_dimension_numbers<[1], [0], [0], [1], [0, 0, 1, 1], [], []>} : vector<32x64xbf16>, vector<64x64xbf16>, vector<32x64xf32> -> vector<32x64xf32>
    %80 = vector.broadcast %50 : vector<1x64xf32> to vector<32x64xf32>
    %81 = arith.addf %79, %80 : vector<32x64xf32>
    %cst_37 = arith.constant 0.000000e+00 : f32
    %82 = vector.broadcast %cst_37 : f32 to vector<32x64xf32>
    %83 = arith.cmpf ogt, %81, %82 : vector<32x64xf32>
    %cst_38 = arith.constant 2.000000e-01 : f32
    %84 = vector.broadcast %cst_38 : f32 to vector<32x64xf32>
    %85 = arith.mulf %84, %81 : vector<32x64xf32>
    %86 = arith.select %83, %81, %85 : vector<32x64xi1>, vector<32x64xf32>
    %87 = arith.maximumf %59, %68 : vector<32x64xf32>
    %88 = arith.maximumf %87, %77 : vector<32x64xf32>
    %89 = arith.maximumf %88, %86 : vector<32x64xf32>
    %c0_39 = arith.constant 0 : index
    %c0_40 = arith.constant 0 : index
    %90 = vector.load %arg6[%c0_39, %c0_40] : memref<64x128xbf16, #tpu.memory_space<vmem>>, vector<64x128xbf16>
    %c0_41 = arith.constant 0 : index
    %c0_42 = arith.constant 0 : index
    %91 = vector.load %arg7[%c0_41, %c0_42] : memref<1x128xf32, #tpu.memory_space<vmem>>, vector<1x128xf32>
    %92 = arith.truncf %59 : vector<32x64xf32> to vector<32x64xbf16>
    %cst_43 = arith.constant dense<0.000000e+00> : vector<32x128xf32>
    %93 = tpu.matmul %92, %90, %cst_43 {dimension_numbers = #tpu.dot_dimension_numbers<[1], [0], [0], [1], [0, 0, 1, 1], [], []>} : vector<32x64xbf16>, vector<64x128xbf16>, vector<32x128xf32> -> vector<32x128xf32>
    %94 = vector.broadcast %91 : vector<1x128xf32> to vector<32x128xf32>
    %95 = arith.addf %93, %94 : vector<32x128xf32>
    %cst_44 = arith.constant 0.000000e+00 : f32
    %96 = vector.broadcast %cst_44 : f32 to vector<32x128xf32>
    %97 = arith.cmpf ogt, %95, %96 : vector<32x128xf32>
    %cst_45 = arith.constant 2.000000e-01 : f32
    %98 = vector.broadcast %cst_45 : f32 to vector<32x128xf32>
    %99 = arith.mulf %98, %95 : vector<32x128xf32>
    %100 = arith.select %97, %95, %99 : vector<32x128xi1>, vector<32x128xf32>
    %101 = arith.truncf %68 : vector<32x64xf32> to vector<32x64xbf16>
    %cst_46 = arith.constant dense<0.000000e+00> : vector<32x128xf32>
    %102 = tpu.matmul %101, %90, %cst_46 {dimension_numbers = #tpu.dot_dimension_numbers<[1], [0], [0], [1], [0, 0, 1, 1], [], []>} : vector<32x64xbf16>, vector<64x128xbf16>, vector<32x128xf32> -> vector<32x128xf32>
    %103 = vector.broadcast %91 : vector<1x128xf32> to vector<32x128xf32>
    %104 = arith.addf %102, %103 : vector<32x128xf32>
    %cst_47 = arith.constant 0.000000e+00 : f32
    %105 = vector.broadcast %cst_47 : f32 to vector<32x128xf32>
    %106 = arith.cmpf ogt, %104, %105 : vector<32x128xf32>
    %cst_48 = arith.constant 2.000000e-01 : f32
    %107 = vector.broadcast %cst_48 : f32 to vector<32x128xf32>
    %108 = arith.mulf %107, %104 : vector<32x128xf32>
    %109 = arith.select %106, %104, %108 : vector<32x128xi1>, vector<32x128xf32>
    %110 = arith.truncf %77 : vector<32x64xf32> to vector<32x64xbf16>
    %cst_49 = arith.constant dense<0.000000e+00> : vector<32x128xf32>
    %111 = tpu.matmul %110, %90, %cst_49 {dimension_numbers = #tpu.dot_dimension_numbers<[1], [0], [0], [1], [0, 0, 1, 1], [], []>} : vector<32x64xbf16>, vector<64x128xbf16>, vector<32x128xf32> -> vector<32x128xf32>
    %112 = vector.broadcast %91 : vector<1x128xf32> to vector<32x128xf32>
    %113 = arith.addf %111, %112 : vector<32x128xf32>
    %cst_50 = arith.constant 0.000000e+00 : f32
    %114 = vector.broadcast %cst_50 : f32 to vector<32x128xf32>
    %115 = arith.cmpf ogt, %113, %114 : vector<32x128xf32>
    %cst_51 = arith.constant 2.000000e-01 : f32
    %116 = vector.broadcast %cst_51 : f32 to vector<32x128xf32>
    %117 = arith.mulf %116, %113 : vector<32x128xf32>
    %118 = arith.select %115, %113, %117 : vector<32x128xi1>, vector<32x128xf32>
    %119 = arith.truncf %86 : vector<32x64xf32> to vector<32x64xbf16>
    %cst_52 = arith.constant dense<0.000000e+00> : vector<32x128xf32>
    %120 = tpu.matmul %119, %90, %cst_52 {dimension_numbers = #tpu.dot_dimension_numbers<[1], [0], [0], [1], [0, 0, 1, 1], [], []>} : vector<32x64xbf16>, vector<64x128xbf16>, vector<32x128xf32> -> vector<32x128xf32>
    %121 = vector.broadcast %91 : vector<1x128xf32> to vector<32x128xf32>
    %122 = arith.addf %120, %121 : vector<32x128xf32>
    %cst_53 = arith.constant 0.000000e+00 : f32
    %123 = vector.broadcast %cst_53 : f32 to vector<32x128xf32>
    %124 = arith.cmpf ogt, %122, %123 : vector<32x128xf32>
    %cst_54 = arith.constant 2.000000e-01 : f32
    %125 = vector.broadcast %cst_54 : f32 to vector<32x128xf32>
    %126 = arith.mulf %125, %122 : vector<32x128xf32>
    %127 = arith.select %124, %122, %126 : vector<32x128xi1>, vector<32x128xf32>
    %128 = arith.maximumf %100, %109 : vector<32x128xf32>
    %129 = arith.maximumf %128, %118 : vector<32x128xf32>
    %130 = arith.maximumf %129, %127 : vector<32x128xf32>
    %c0_55 = arith.constant 0 : index
    %c0_56 = arith.constant 0 : index
    %131 = vector.load %arg8[%c0_55, %c0_56] : memref<128x256xbf16, #tpu.memory_space<vmem>>, vector<128x256xbf16>
    %c0_57 = arith.constant 0 : index
    %c0_58 = arith.constant 0 : index
    %132 = vector.load %arg9[%c0_57, %c0_58] : memref<1x256xf32, #tpu.memory_space<vmem>>, vector<1x256xf32>
    %133 = arith.truncf %100 : vector<32x128xf32> to vector<32x128xbf16>
    %cst_59 = arith.constant dense<0.000000e+00> : vector<32x256xf32>
    %134 = tpu.matmul %133, %131, %cst_59 {dimension_numbers = #tpu.dot_dimension_numbers<[1], [0], [0], [1], [0, 0, 1, 1], [], []>} : vector<32x128xbf16>, vector<128x256xbf16>, vector<32x256xf32> -> vector<32x256xf32>
    %135 = vector.broadcast %132 : vector<1x256xf32> to vector<32x256xf32>
    %136 = arith.addf %134, %135 : vector<32x256xf32>
    %cst_60 = arith.constant 0.000000e+00 : f32
    %137 = vector.broadcast %cst_60 : f32 to vector<32x256xf32>
    %138 = arith.cmpf ogt, %136, %137 : vector<32x256xf32>
    %cst_61 = arith.constant 2.000000e-01 : f32
    %139 = vector.broadcast %cst_61 : f32 to vector<32x256xf32>
    %140 = arith.mulf %139, %136 : vector<32x256xf32>
    %141 = arith.select %138, %136, %140 : vector<32x256xi1>, vector<32x256xf32>
    %142 = arith.truncf %109 : vector<32x128xf32> to vector<32x128xbf16>
    %cst_62 = arith.constant dense<0.000000e+00> : vector<32x256xf32>
    %143 = tpu.matmul %142, %131, %cst_62 {dimension_numbers = #tpu.dot_dimension_numbers<[1], [0], [0], [1], [0, 0, 1, 1], [], []>} : vector<32x128xbf16>, vector<128x256xbf16>, vector<32x256xf32> -> vector<32x256xf32>
    %144 = vector.broadcast %132 : vector<1x256xf32> to vector<32x256xf32>
    %145 = arith.addf %143, %144 : vector<32x256xf32>
    %cst_63 = arith.constant 0.000000e+00 : f32
    %146 = vector.broadcast %cst_63 : f32 to vector<32x256xf32>
    %147 = arith.cmpf ogt, %145, %146 : vector<32x256xf32>
    %cst_64 = arith.constant 2.000000e-01 : f32
    %148 = vector.broadcast %cst_64 : f32 to vector<32x256xf32>
    %149 = arith.mulf %148, %145 : vector<32x256xf32>
    %150 = arith.select %147, %145, %149 : vector<32x256xi1>, vector<32x256xf32>
    %151 = arith.truncf %118 : vector<32x128xf32> to vector<32x128xbf16>
    %cst_65 = arith.constant dense<0.000000e+00> : vector<32x256xf32>
    %152 = tpu.matmul %151, %131, %cst_65 {dimension_numbers = #tpu.dot_dimension_numbers<[1], [0], [0], [1], [0, 0, 1, 1], [], []>} : vector<32x128xbf16>, vector<128x256xbf16>, vector<32x256xf32> -> vector<32x256xf32>
    %153 = vector.broadcast %132 : vector<1x256xf32> to vector<32x256xf32>
    %154 = arith.addf %152, %153 : vector<32x256xf32>
    %cst_66 = arith.constant 0.000000e+00 : f32
    %155 = vector.broadcast %cst_66 : f32 to vector<32x256xf32>
    %156 = arith.cmpf ogt, %154, %155 : vector<32x256xf32>
    %cst_67 = arith.constant 2.000000e-01 : f32
    %157 = vector.broadcast %cst_67 : f32 to vector<32x256xf32>
    %158 = arith.mulf %157, %154 : vector<32x256xf32>
    %159 = arith.select %156, %154, %158 : vector<32x256xi1>, vector<32x256xf32>
    %160 = arith.truncf %127 : vector<32x128xf32> to vector<32x128xbf16>
    %cst_68 = arith.constant dense<0.000000e+00> : vector<32x256xf32>
    %161 = tpu.matmul %160, %131, %cst_68 {dimension_numbers = #tpu.dot_dimension_numbers<[1], [0], [0], [1], [0, 0, 1, 1], [], []>} : vector<32x128xbf16>, vector<128x256xbf16>, vector<32x256xf32> -> vector<32x256xf32>
    %162 = vector.broadcast %132 : vector<1x256xf32> to vector<32x256xf32>
    %163 = arith.addf %161, %162 : vector<32x256xf32>
    %cst_69 = arith.constant 0.000000e+00 : f32
    %164 = vector.broadcast %cst_69 : f32 to vector<32x256xf32>
    %165 = arith.cmpf ogt, %163, %164 : vector<32x256xf32>
    %cst_70 = arith.constant 2.000000e-01 : f32
    %166 = vector.broadcast %cst_70 : f32 to vector<32x256xf32>
    %167 = arith.mulf %166, %163 : vector<32x256xf32>
    %168 = arith.select %165, %163, %167 : vector<32x256xi1>, vector<32x256xf32>
    %169 = arith.maximumf %141, %150 : vector<32x256xf32>
    %170 = arith.maximumf %169, %159 : vector<32x256xf32>
    %171 = arith.maximumf %170, %168 : vector<32x256xf32>
    %172 = tpu.concatenate %48, %89, %130, %171 in 1 : vector<32x64xf32>, vector<32x64xf32>, vector<32x128xf32>, vector<32x256xf32> -> vector<32x512xf32>
    %173 = arith.truncf %172 : vector<32x512xf32> to vector<32x512xbf16>
    %c0_71 = arith.constant 0 : index
    %c0_72 = arith.constant 0 : index
    %174 = vector.load %arg10[%c0_71, %c0_72] : memref<512x128xbf16, #tpu.memory_space<vmem>>, vector<512x128xbf16>
    %cst_73 = arith.constant dense<0.000000e+00> : vector<32x128xf32>
    %175 = tpu.matmul %173, %174, %cst_73 {dimension_numbers = #tpu.dot_dimension_numbers<[1], [0], [0], [1], [0, 0, 1, 1], [], []>} : vector<32x512xbf16>, vector<512x128xbf16>, vector<32x128xf32> -> vector<32x128xf32>
    %c0_74 = arith.constant 0 : index
    %c0_75 = arith.constant 0 : index
    %176 = vector.load %arg11[%c0_74, %c0_75] : memref<1x128xf32, #tpu.memory_space<vmem>>, vector<1x128xf32>
    %177 = vector.broadcast %176 : vector<1x128xf32> to vector<32x128xf32>
    %178 = arith.addf %175, %177 : vector<32x128xf32>
    %cst_76 = arith.constant 0.000000e+00 : f32
    %179 = vector.broadcast %cst_76 : f32 to vector<32x128xf32>
    %180 = arith.cmpf ogt, %178, %179 : vector<32x128xf32>
    %cst_77 = arith.constant 2.000000e-01 : f32
    %181 = vector.broadcast %cst_77 : f32 to vector<32x128xf32>
    %182 = arith.mulf %181, %178 : vector<32x128xf32>
    %183 = arith.select %180, %178, %182 : vector<32x128xi1>, vector<32x128xf32>
    %c0_78 = arith.constant 0 : index
    %c0_79 = arith.constant 0 : index
    %184 = vector.load %arg12[%c0_78, %c0_79] : memref<32x128xf32, #tpu.memory_space<vmem>>, vector<32x128xf32>
    tpu.vector_store %arg12[%c0_78, %c0_79], %183 {strides = array<i32>} : memref<32x128xf32, #tpu.memory_space<vmem>>, vector<32x128xf32>,
    return
  }
  func.func @transform_0(%arg0: i32) -> (i32, i32, i32) {
    %c0_i32 = arith.constant 0 : i32
    %c0_i32_0 = arith.constant 0 : i32
    %c0_i32_1 = arith.constant 0 : i32
    return %c0_i32, %arg0, %c0_i32_0 : i32, i32, i32
  }
  func.func @transform_1(%arg0: i32) -> (i32, i32) {
    %c0_i32 = arith.constant 0 : i32
    %c0_i32_0 = arith.constant 0 : i32
    %c0_i32_1 = arith.constant 0 : i32
    return %c0_i32, %c0_i32_0 : i32, i32
  }
  func.func @transform_2(%arg0: i32) -> (i32, i32) {
    %c0_i32 = arith.constant 0 : i32
    %c0_i32_0 = arith.constant 0 : i32
    %c0_i32_1 = arith.constant 0 : i32
    return %c0_i32, %c0_i32_0 : i32, i32
  }
  func.func @transform_3(%arg0: i32) -> (i32, i32) {
    %c0_i32 = arith.constant 0 : i32
    %c0_i32_0 = arith.constant 0 : i32
    %c0_i32_1 = arith.constant 0 : i32
    return %c0_i32, %c0_i32_0 : i32, i32
  }
  func.func @transform_4(%arg0: i32) -> (i32, i32) {
    %c0_i32 = arith.constant 0 : i32
    %c0_i32_0 = arith.constant 0 : i32
    %c0_i32_1 = arith.constant 0 : i32
    return %c0_i32, %c0_i32_0 : i32, i32
  }
  func.func @transform_5(%arg0: i32) -> (i32, i32) {
    %c0_i32 = arith.constant 0 : i32
    %c0_i32_0 = arith.constant 0 : i32
    %c0_i32_1 = arith.constant 0 : i32
    return %c0_i32, %c0_i32_0 : i32, i32
  }
  func.func @transform_6(%arg0: i32) -> (i32, i32) {
    %c0_i32 = arith.constant 0 : i32
    %c0_i32_0 = arith.constant 0 : i32
    %c0_i32_1 = arith.constant 0 : i32
    return %c0_i32, %c0_i32_0 : i32, i32
  }
  func.func @transform_7(%arg0: i32) -> (i32, i32) {
    %c0_i32 = arith.constant 0 : i32
    %c0_i32_0 = arith.constant 0 : i32
    %c0_i32_1 = arith.constant 0 : i32
    return %c0_i32, %c0_i32_0 : i32, i32
  }
  func.func @transform_8(%arg0: i32) -> (i32, i32) {
    %c0_i32 = arith.constant 0 : i32
    %c0_i32_0 = arith.constant 0 : i32
    %c0_i32_1 = arith.constant 0 : i32
    return %c0_i32, %c0_i32_0 : i32, i32
  }
  func.func @transform_9(%arg0: i32) -> (i32, i32) {
    %c0_i32 = arith.constant 0 : i32
    %c0_i32_0 = arith.constant 0 : i32
    %c0_i32_1 = arith.constant 0 : i32
    return %c0_i32, %c0_i32_0 : i32, i32
  }
  func.func @transform_10(%arg0: i32) -> (i32, i32) {
    %c0_i32 = arith.constant 0 : i32
    %c0_i32_0 = arith.constant 0 : i32
    %c0_i32_1 = arith.constant 0 : i32
    return %c0_i32, %c0_i32_0 : i32, i32
  }
  func.func @transform_11(%arg0: i32) -> (i32, i32) {
    %c0_i32 = arith.constant 0 : i32
    %c0_i32_0 = arith.constant 0 : i32
    return %arg0, %c0_i32 : i32, i32
  }
}

module attributes {stable_mosaic.version = 11 : i64} {
  func.func @kernel(%arg0: i32, %arg1: memref<1x16x128xf32, #tpu.memory_space<vmem>>, %arg2: memref<1x16x128xf32, #tpu.memory_space<vmem>>, %arg3: memref<8x128x16xbf16, #tpu.memory_space<vmem>>, %arg4: memref<8x1x16xf32, #tpu.memory_space<vmem>>, %arg5: memref<8x128x16xbf16, #tpu.memory_space<vmem>>, %arg6: memref<8x1x16xf32, #tpu.memory_space<vmem>>, %arg7: memref<8x128x16xbf16, #tpu.memory_space<vmem>>, %arg8: memref<8x1x16xf32, #tpu.memory_space<vmem>>, %arg9: memref<8x16x128xbf16, #tpu.memory_space<vmem>>, %arg10: memref<1x128xf32, #tpu.memory_space<vmem>>, %arg11: memref<1x128xf32, #tpu.memory_space<vmem>>, %arg12: memref<1x128xf32, #tpu.memory_space<vmem>>, %arg13: memref<1x16x128xf32, #tpu.memory_space<vmem>>) attributes {dimension_semantics = [#tpu.dimension_semantics<parallel>], iteration_bounds = array<i64: 2>, scalar_prefetch = 0 : i64, scratch_operands = 0 : i64, tpu.core_type = #tpu.core_type<tc>, window_params = [{transform_indices = @transform_0, window_bounds = array<i64: 1, 16, 128>}, {transform_indices = @transform_1, window_bounds = array<i64: 1, 16, 128>}, {pipeline_mode = #tpu.pipeline_mode<synchronous>, transform_indices = @transform_2, window_bounds = array<i64: 8, 128, 16>}, {pipeline_mode = #tpu.pipeline_mode<synchronous>, transform_indices = @transform_3, window_bounds = array<i64: 8, 1, 16>}, {pipeline_mode = #tpu.pipeline_mode<synchronous>, transform_indices = @transform_4, window_bounds = array<i64: 8, 128, 16>}, {pipeline_mode = #tpu.pipeline_mode<synchronous>, transform_indices = @transform_5, window_bounds = array<i64: 8, 1, 16>}, {pipeline_mode = #tpu.pipeline_mode<synchronous>, transform_indices = @transform_6, window_bounds = array<i64: 8, 128, 16>}, {pipeline_mode = #tpu.pipeline_mode<synchronous>, transform_indices = @transform_7, window_bounds = array<i64: 8, 1, 16>}, {pipeline_mode = #tpu.pipeline_mode<synchronous>, transform_indices = @transform_8, window_bounds = array<i64: 8, 16, 128>}, {pipeline_mode = #tpu.pipeline_mode<synchronous>, transform_indices = @transform_9, window_bounds = array<i64: 1, 128>}, {pipeline_mode = #tpu.pipeline_mode<synchronous>, transform_indices = @transform_10, window_bounds = array<i64: 1, 128>}, {pipeline_mode = #tpu.pipeline_mode<synchronous>, transform_indices = @transform_11, window_bounds = array<i64: 1, 128>}, {transform_indices = @transform_12, window_bounds = array<i64: 1, 16, 128>}]} {
    %c0 = arith.constant 0 : index
    %c0_0 = arith.constant 0 : index
    %c0_1 = arith.constant 0 : index
    %0 = vector.load %arg1[%c0, %c0_0, %c0_1] : memref<1x16x128xf32, #tpu.memory_space<vmem>>, vector<1x16x128xf32>
    %1 = vector.shape_cast %0 : vector<1x16x128xf32> to vector<16x128xf32>
    %c0_2 = arith.constant 0 : index
    %c0_3 = arith.constant 0 : index
    %c0_4 = arith.constant 0 : index
    %2 = vector.load %arg2[%c0_2, %c0_3, %c0_4] : memref<1x16x128xf32, #tpu.memory_space<vmem>>, vector<1x16x128xf32>
    %3 = vector.shape_cast %2 : vector<1x16x128xf32> to vector<16x128xf32>
    %4 = arith.truncf %1 : vector<16x128xf32> to vector<16x128xbf16>
    %5 = arith.truncf %3 : vector<16x128xf32> to vector<16x128xbf16>
    %c0_5 = arith.constant 0 : index
    %c0_6 = arith.constant 0 : index
    %c0_7 = arith.constant 0 : index
    %6 = vector.load %arg3[%c0_5, %c0_6, %c0_7] : memref<8x128x16xbf16, #tpu.memory_space<vmem>>, vector<1x128x16xbf16>
    %7 = vector.shape_cast %6 : vector<1x128x16xbf16> to vector<128x16xbf16>
    %cst = arith.constant dense<0.000000e+00> : vector<16x16xf32>
    %8 = tpu.matmul %4, %7, %cst {dimension_numbers = #tpu.dot_dimension_numbers<[1], [0], [0], [1], [0, 0, 1, 1], [], []>} : vector<16x128xbf16>, vector<128x16xbf16>, vector<16x16xf32> -> vector<16x16xf32>
    %c0_8 = arith.constant 0 : index
    %c0_9 = arith.constant 0 : index
    %c0_10 = arith.constant 0 : index
    %9 = vector.load %arg4[%c0_8, %c0_9, %c0_10] : memref<8x1x16xf32, #tpu.memory_space<vmem>>, vector<1x1x16xf32>
    %10 = vector.shape_cast %9 : vector<1x1x16xf32> to vector<1x16xf32>
    %11 = vector.broadcast %10 : vector<1x16xf32> to vector<16x16xf32>
    %12 = arith.addf %8, %11 : vector<16x16xf32>
    %c0_11 = arith.constant 0 : index
    %c0_12 = arith.constant 0 : index
    %c0_13 = arith.constant 0 : index
    %13 = vector.load %arg5[%c0_11, %c0_12, %c0_13] : memref<8x128x16xbf16, #tpu.memory_space<vmem>>, vector<1x128x16xbf16>
    %14 = vector.shape_cast %13 : vector<1x128x16xbf16> to vector<128x16xbf16>
    %cst_14 = arith.constant dense<0.000000e+00> : vector<16x16xf32>
    %15 = tpu.matmul %5, %14, %cst_14 {dimension_numbers = #tpu.dot_dimension_numbers<[1], [0], [0], [1], [0, 0, 1, 1], [], []>} : vector<16x128xbf16>, vector<128x16xbf16>, vector<16x16xf32> -> vector<16x16xf32>
    %c0_15 = arith.constant 0 : index
    %c0_16 = arith.constant 0 : index
    %c0_17 = arith.constant 0 : index
    %16 = vector.load %arg6[%c0_15, %c0_16, %c0_17] : memref<8x1x16xf32, #tpu.memory_space<vmem>>, vector<1x1x16xf32>
    %17 = vector.shape_cast %16 : vector<1x1x16xf32> to vector<1x16xf32>
    %18 = vector.broadcast %17 : vector<1x16xf32> to vector<16x16xf32>
    %19 = arith.addf %15, %18 : vector<16x16xf32>
    %c0_18 = arith.constant 0 : index
    %c0_19 = arith.constant 0 : index
    %c0_20 = arith.constant 0 : index
    %20 = vector.load %arg7[%c0_18, %c0_19, %c0_20] : memref<8x128x16xbf16, #tpu.memory_space<vmem>>, vector<1x128x16xbf16>
    %21 = vector.shape_cast %20 : vector<1x128x16xbf16> to vector<128x16xbf16>
    %cst_21 = arith.constant dense<0.000000e+00> : vector<16x16xf32>
    %22 = tpu.matmul %5, %21, %cst_21 {dimension_numbers = #tpu.dot_dimension_numbers<[1], [0], [0], [1], [0, 0, 1, 1], [], []>} : vector<16x128xbf16>, vector<128x16xbf16>, vector<16x16xf32> -> vector<16x16xf32>
    %c0_22 = arith.constant 0 : index
    %c0_23 = arith.constant 0 : index
    %c0_24 = arith.constant 0 : index
    %23 = vector.load %arg8[%c0_22, %c0_23, %c0_24] : memref<8x1x16xf32, #tpu.memory_space<vmem>>, vector<1x1x16xf32>
    %24 = vector.shape_cast %23 : vector<1x1x16xf32> to vector<1x16xf32>
    %25 = vector.broadcast %24 : vector<1x16xf32> to vector<16x16xf32>
    %26 = arith.addf %22, %25 : vector<16x16xf32>
    %27 = arith.truncf %12 : vector<16x16xf32> to vector<16x16xbf16>
    %28 = arith.truncf %19 : vector<16x16xf32> to vector<16x16xbf16>
    %cst_25 = arith.constant dense<0.000000e+00> : vector<16x16xf32>
    %29 = tpu.matmul %27, %28, %cst_25 {dimension_numbers = #tpu.dot_dimension_numbers<[1], [1], [0], [0], [0, 0, 1, 0], [], []>} : vector<16x16xbf16>, vector<16x16xbf16>, vector<16x16xf32> -> vector<16x16xf32>
    %cst_26 = arith.constant 2.500000e-01 : f32
    %30 = vector.broadcast %cst_26 : f32 to vector<16x16xf32>
    %31 = arith.mulf %29, %30 : vector<16x16xf32>
    %cst_27 = arith.constant dense<0xFF800000> : vector<16xf32>
    %32 = vector.multi_reduction <maximumf>, %31, %cst_27 [1] : vector<16x16xf32> to vector<16xf32>
    %33 = vector.shape_cast %32 : vector<16xf32> to vector<16x1xf32>
    %34 = vector.broadcast %33 : vector<16x1xf32> to vector<16x16xf32>
    %35 = arith.subf %31, %34 : vector<16x16xf32>
    %36 = math.exp %35 : vector<16x16xf32>
    %cst_28 = arith.constant dense<0.000000e+00> : vector<16xf32>
    %37 = vector.multi_reduction <add>, %36, %cst_28 [1] : vector<16x16xf32> to vector<16xf32>
    %38 = vector.shape_cast %37 : vector<16xf32> to vector<16x1xf32>
    %39 = vector.broadcast %38 : vector<16x1xf32> to vector<16x16xf32>
    %40 = arith.divf %36, %39 : vector<16x16xf32>
    %41 = arith.truncf %40 : vector<16x16xf32> to vector<16x16xbf16>
    %42 = arith.truncf %26 : vector<16x16xf32> to vector<16x16xbf16>
    %cst_29 = arith.constant dense<0.000000e+00> : vector<16x16xf32>
    %43 = tpu.matmul %41, %42, %cst_29 {dimension_numbers = #tpu.dot_dimension_numbers<[1], [0], [0], [1], [0, 0, 1, 1], [], []>} : vector<16x16xbf16>, vector<16x16xbf16>, vector<16x16xf32> -> vector<16x16xf32>
    %44 = arith.truncf %43 : vector<16x16xf32> to vector<16x16xbf16>
    %c0_30 = arith.constant 0 : index
    %c0_31 = arith.constant 0 : index
    %c0_32 = arith.constant 0 : index
    %45 = vector.load %arg9[%c0_30, %c0_31, %c0_32] : memref<8x16x128xbf16, #tpu.memory_space<vmem>>, vector<1x16x128xbf16>
    %46 = vector.shape_cast %45 : vector<1x16x128xbf16> to vector<16x128xbf16>
    %cst_33 = arith.constant dense<0.000000e+00> : vector<16x128xf32>
    %47 = tpu.matmul %44, %46, %cst_33 {dimension_numbers = #tpu.dot_dimension_numbers<[1], [0], [0], [1], [0, 0, 1, 1], [], []>} : vector<16x16xbf16>, vector<16x128xbf16>, vector<16x128xf32> -> vector<16x128xf32>
    %c1 = arith.constant 1 : index
    %c0_34 = arith.constant 0 : index
    %c0_35 = arith.constant 0 : index
    %48 = vector.load %arg3[%c1, %c0_34, %c0_35] : memref<8x128x16xbf16, #tpu.memory_space<vmem>>, vector<1x128x16xbf16>
    %49 = vector.shape_cast %48 : vector<1x128x16xbf16> to vector<128x16xbf16>
    %cst_36 = arith.constant dense<0.000000e+00> : vector<16x16xf32>
    %50 = tpu.matmul %4, %49, %cst_36 {dimension_numbers = #tpu.dot_dimension_numbers<[1], [0], [0], [1], [0, 0, 1, 1], [], []>} : vector<16x128xbf16>, vector<128x16xbf16>, vector<16x16xf32> -> vector<16x16xf32>
    %c1_37 = arith.constant 1 : index
    %c0_38 = arith.constant 0 : index
    %c0_39 = arith.constant 0 : index
    %51 = vector.load %arg4[%c1_37, %c0_38, %c0_39] : memref<8x1x16xf32, #tpu.memory_space<vmem>>, vector<1x1x16xf32>
    %52 = vector.shape_cast %51 : vector<1x1x16xf32> to vector<1x16xf32>
    %53 = vector.broadcast %52 : vector<1x16xf32> to vector<16x16xf32>
    %54 = arith.addf %50, %53 : vector<16x16xf32>
    %c1_40 = arith.constant 1 : index
    %c0_41 = arith.constant 0 : index
    %c0_42 = arith.constant 0 : index
    %55 = vector.load %arg5[%c1_40, %c0_41, %c0_42] : memref<8x128x16xbf16, #tpu.memory_space<vmem>>, vector<1x128x16xbf16>
    %56 = vector.shape_cast %55 : vector<1x128x16xbf16> to vector<128x16xbf16>
    %cst_43 = arith.constant dense<0.000000e+00> : vector<16x16xf32>
    %57 = tpu.matmul %5, %56, %cst_43 {dimension_numbers = #tpu.dot_dimension_numbers<[1], [0], [0], [1], [0, 0, 1, 1], [], []>} : vector<16x128xbf16>, vector<128x16xbf16>, vector<16x16xf32> -> vector<16x16xf32>
    %c1_44 = arith.constant 1 : index
    %c0_45 = arith.constant 0 : index
    %c0_46 = arith.constant 0 : index
    %58 = vector.load %arg6[%c1_44, %c0_45, %c0_46] : memref<8x1x16xf32, #tpu.memory_space<vmem>>, vector<1x1x16xf32>
    %59 = vector.shape_cast %58 : vector<1x1x16xf32> to vector<1x16xf32>
    %60 = vector.broadcast %59 : vector<1x16xf32> to vector<16x16xf32>
    %61 = arith.addf %57, %60 : vector<16x16xf32>
    %c1_47 = arith.constant 1 : index
    %c0_48 = arith.constant 0 : index
    %c0_49 = arith.constant 0 : index
    %62 = vector.load %arg7[%c1_47, %c0_48, %c0_49] : memref<8x128x16xbf16, #tpu.memory_space<vmem>>, vector<1x128x16xbf16>
    %63 = vector.shape_cast %62 : vector<1x128x16xbf16> to vector<128x16xbf16>
    %cst_50 = arith.constant dense<0.000000e+00> : vector<16x16xf32>
    %64 = tpu.matmul %5, %63, %cst_50 {dimension_numbers = #tpu.dot_dimension_numbers<[1], [0], [0], [1], [0, 0, 1, 1], [], []>} : vector<16x128xbf16>, vector<128x16xbf16>, vector<16x16xf32> -> vector<16x16xf32>
    %c1_51 = arith.constant 1 : index
    %c0_52 = arith.constant 0 : index
    %c0_53 = arith.constant 0 : index
    %65 = vector.load %arg8[%c1_51, %c0_52, %c0_53] : memref<8x1x16xf32, #tpu.memory_space<vmem>>, vector<1x1x16xf32>
    %66 = vector.shape_cast %65 : vector<1x1x16xf32> to vector<1x16xf32>
    %67 = vector.broadcast %66 : vector<1x16xf32> to vector<16x16xf32>
    %68 = arith.addf %64, %67 : vector<16x16xf32>
    %69 = arith.truncf %54 : vector<16x16xf32> to vector<16x16xbf16>
    %70 = arith.truncf %61 : vector<16x16xf32> to vector<16x16xbf16>
    %cst_54 = arith.constant dense<0.000000e+00> : vector<16x16xf32>
    %71 = tpu.matmul %69, %70, %cst_54 {dimension_numbers = #tpu.dot_dimension_numbers<[1], [1], [0], [0], [0, 0, 1, 0], [], []>} : vector<16x16xbf16>, vector<16x16xbf16>, vector<16x16xf32> -> vector<16x16xf32>
    %cst_55 = arith.constant 2.500000e-01 : f32
    %72 = vector.broadcast %cst_55 : f32 to vector<16x16xf32>
    %73 = arith.mulf %71, %72 : vector<16x16xf32>
    %cst_56 = arith.constant dense<0xFF800000> : vector<16xf32>
    %74 = vector.multi_reduction <maximumf>, %73, %cst_56 [1] : vector<16x16xf32> to vector<16xf32>
    %75 = vector.shape_cast %74 : vector<16xf32> to vector<16x1xf32>
    %76 = vector.broadcast %75 : vector<16x1xf32> to vector<16x16xf32>
    %77 = arith.subf %73, %76 : vector<16x16xf32>
    %78 = math.exp %77 : vector<16x16xf32>
    %cst_57 = arith.constant dense<0.000000e+00> : vector<16xf32>
    %79 = vector.multi_reduction <add>, %78, %cst_57 [1] : vector<16x16xf32> to vector<16xf32>
    %80 = vector.shape_cast %79 : vector<16xf32> to vector<16x1xf32>
    %81 = vector.broadcast %80 : vector<16x1xf32> to vector<16x16xf32>
    %82 = arith.divf %78, %81 : vector<16x16xf32>
    %83 = arith.truncf %82 : vector<16x16xf32> to vector<16x16xbf16>
    %84 = arith.truncf %68 : vector<16x16xf32> to vector<16x16xbf16>
    %cst_58 = arith.constant dense<0.000000e+00> : vector<16x16xf32>
    %85 = tpu.matmul %83, %84, %cst_58 {dimension_numbers = #tpu.dot_dimension_numbers<[1], [0], [0], [1], [0, 0, 1, 1], [], []>} : vector<16x16xbf16>, vector<16x16xbf16>, vector<16x16xf32> -> vector<16x16xf32>
    %86 = arith.truncf %85 : vector<16x16xf32> to vector<16x16xbf16>
    %c1_59 = arith.constant 1 : index
    %c0_60 = arith.constant 0 : index
    %c0_61 = arith.constant 0 : index
    %87 = vector.load %arg9[%c1_59, %c0_60, %c0_61] : memref<8x16x128xbf16, #tpu.memory_space<vmem>>, vector<1x16x128xbf16>
    %88 = vector.shape_cast %87 : vector<1x16x128xbf16> to vector<16x128xbf16>
    %cst_62 = arith.constant dense<0.000000e+00> : vector<16x128xf32>
    %89 = tpu.matmul %86, %88, %cst_62 {dimension_numbers = #tpu.dot_dimension_numbers<[1], [0], [0], [1], [0, 0, 1, 1], [], []>} : vector<16x16xbf16>, vector<16x128xbf16>, vector<16x128xf32> -> vector<16x128xf32>
    %90 = arith.addf %47, %89 : vector<16x128xf32>
    %c2 = arith.constant 2 : index
    %c0_63 = arith.constant 0 : index
    %c0_64 = arith.constant 0 : index
    %91 = vector.load %arg3[%c2, %c0_63, %c0_64] : memref<8x128x16xbf16, #tpu.memory_space<vmem>>, vector<1x128x16xbf16>
    %92 = vector.shape_cast %91 : vector<1x128x16xbf16> to vector<128x16xbf16>
    %cst_65 = arith.constant dense<0.000000e+00> : vector<16x16xf32>
    %93 = tpu.matmul %4, %92, %cst_65 {dimension_numbers = #tpu.dot_dimension_numbers<[1], [0], [0], [1], [0, 0, 1, 1], [], []>} : vector<16x128xbf16>, vector<128x16xbf16>, vector<16x16xf32> -> vector<16x16xf32>
    %c2_66 = arith.constant 2 : index
    %c0_67 = arith.constant 0 : index
    %c0_68 = arith.constant 0 : index
    %94 = vector.load %arg4[%c2_66, %c0_67, %c0_68] : memref<8x1x16xf32, #tpu.memory_space<vmem>>, vector<1x1x16xf32>
    %95 = vector.shape_cast %94 : vector<1x1x16xf32> to vector<1x16xf32>
    %96 = vector.broadcast %95 : vector<1x16xf32> to vector<16x16xf32>
    %97 = arith.addf %93, %96 : vector<16x16xf32>
    %c2_69 = arith.constant 2 : index
    %c0_70 = arith.constant 0 : index
    %c0_71 = arith.constant 0 : index
    %98 = vector.load %arg5[%c2_69, %c0_70, %c0_71] : memref<8x128x16xbf16, #tpu.memory_space<vmem>>, vector<1x128x16xbf16>
    %99 = vector.shape_cast %98 : vector<1x128x16xbf16> to vector<128x16xbf16>
    %cst_72 = arith.constant dense<0.000000e+00> : vector<16x16xf32>
    %100 = tpu.matmul %5, %99, %cst_72 {dimension_numbers = #tpu.dot_dimension_numbers<[1], [0], [0], [1], [0, 0, 1, 1], [], []>} : vector<16x128xbf16>, vector<128x16xbf16>, vector<16x16xf32> -> vector<16x16xf32>
    %c2_73 = arith.constant 2 : index
    %c0_74 = arith.constant 0 : index
    %c0_75 = arith.constant 0 : index
    %101 = vector.load %arg6[%c2_73, %c0_74, %c0_75] : memref<8x1x16xf32, #tpu.memory_space<vmem>>, vector<1x1x16xf32>
    %102 = vector.shape_cast %101 : vector<1x1x16xf32> to vector<1x16xf32>
    %103 = vector.broadcast %102 : vector<1x16xf32> to vector<16x16xf32>
    %104 = arith.addf %100, %103 : vector<16x16xf32>
    %c2_76 = arith.constant 2 : index
    %c0_77 = arith.constant 0 : index
    %c0_78 = arith.constant 0 : index
    %105 = vector.load %arg7[%c2_76, %c0_77, %c0_78] : memref<8x128x16xbf16, #tpu.memory_space<vmem>>, vector<1x128x16xbf16>
    %106 = vector.shape_cast %105 : vector<1x128x16xbf16> to vector<128x16xbf16>
    %cst_79 = arith.constant dense<0.000000e+00> : vector<16x16xf32>
    %107 = tpu.matmul %5, %106, %cst_79 {dimension_numbers = #tpu.dot_dimension_numbers<[1], [0], [0], [1], [0, 0, 1, 1], [], []>} : vector<16x128xbf16>, vector<128x16xbf16>, vector<16x16xf32> -> vector<16x16xf32>
    %c2_80 = arith.constant 2 : index
    %c0_81 = arith.constant 0 : index
    %c0_82 = arith.constant 0 : index
    %108 = vector.load %arg8[%c2_80, %c0_81, %c0_82] : memref<8x1x16xf32, #tpu.memory_space<vmem>>, vector<1x1x16xf32>
    %109 = vector.shape_cast %108 : vector<1x1x16xf32> to vector<1x16xf32>
    %110 = vector.broadcast %109 : vector<1x16xf32> to vector<16x16xf32>
    %111 = arith.addf %107, %110 : vector<16x16xf32>
    %112 = arith.truncf %97 : vector<16x16xf32> to vector<16x16xbf16>
    %113 = arith.truncf %104 : vector<16x16xf32> to vector<16x16xbf16>
    %cst_83 = arith.constant dense<0.000000e+00> : vector<16x16xf32>
    %114 = tpu.matmul %112, %113, %cst_83 {dimension_numbers = #tpu.dot_dimension_numbers<[1], [1], [0], [0], [0, 0, 1, 0], [], []>} : vector<16x16xbf16>, vector<16x16xbf16>, vector<16x16xf32> -> vector<16x16xf32>
    %cst_84 = arith.constant 2.500000e-01 : f32
    %115 = vector.broadcast %cst_84 : f32 to vector<16x16xf32>
    %116 = arith.mulf %114, %115 : vector<16x16xf32>
    %cst_85 = arith.constant dense<0xFF800000> : vector<16xf32>
    %117 = vector.multi_reduction <maximumf>, %116, %cst_85 [1] : vector<16x16xf32> to vector<16xf32>
    %118 = vector.shape_cast %117 : vector<16xf32> to vector<16x1xf32>
    %119 = vector.broadcast %118 : vector<16x1xf32> to vector<16x16xf32>
    %120 = arith.subf %116, %119 : vector<16x16xf32>
    %121 = math.exp %120 : vector<16x16xf32>
    %cst_86 = arith.constant dense<0.000000e+00> : vector<16xf32>
    %122 = vector.multi_reduction <add>, %121, %cst_86 [1] : vector<16x16xf32> to vector<16xf32>
    %123 = vector.shape_cast %122 : vector<16xf32> to vector<16x1xf32>
    %124 = vector.broadcast %123 : vector<16x1xf32> to vector<16x16xf32>
    %125 = arith.divf %121, %124 : vector<16x16xf32>
    %126 = arith.truncf %125 : vector<16x16xf32> to vector<16x16xbf16>
    %127 = arith.truncf %111 : vector<16x16xf32> to vector<16x16xbf16>
    %cst_87 = arith.constant dense<0.000000e+00> : vector<16x16xf32>
    %128 = tpu.matmul %126, %127, %cst_87 {dimension_numbers = #tpu.dot_dimension_numbers<[1], [0], [0], [1], [0, 0, 1, 1], [], []>} : vector<16x16xbf16>, vector<16x16xbf16>, vector<16x16xf32> -> vector<16x16xf32>
    %129 = arith.truncf %128 : vector<16x16xf32> to vector<16x16xbf16>
    %c2_88 = arith.constant 2 : index
    %c0_89 = arith.constant 0 : index
    %c0_90 = arith.constant 0 : index
    %130 = vector.load %arg9[%c2_88, %c0_89, %c0_90] : memref<8x16x128xbf16, #tpu.memory_space<vmem>>, vector<1x16x128xbf16>
    %131 = vector.shape_cast %130 : vector<1x16x128xbf16> to vector<16x128xbf16>
    %cst_91 = arith.constant dense<0.000000e+00> : vector<16x128xf32>
    %132 = tpu.matmul %129, %131, %cst_91 {dimension_numbers = #tpu.dot_dimension_numbers<[1], [0], [0], [1], [0, 0, 1, 1], [], []>} : vector<16x16xbf16>, vector<16x128xbf16>, vector<16x128xf32> -> vector<16x128xf32>
    %133 = arith.addf %90, %132 : vector<16x128xf32>
    %c3 = arith.constant 3 : index
    %c0_92 = arith.constant 0 : index
    %c0_93 = arith.constant 0 : index
    %134 = vector.load %arg3[%c3, %c0_92, %c0_93] : memref<8x128x16xbf16, #tpu.memory_space<vmem>>, vector<1x128x16xbf16>
    %135 = vector.shape_cast %134 : vector<1x128x16xbf16> to vector<128x16xbf16>
    %cst_94 = arith.constant dense<0.000000e+00> : vector<16x16xf32>
    %136 = tpu.matmul %4, %135, %cst_94 {dimension_numbers = #tpu.dot_dimension_numbers<[1], [0], [0], [1], [0, 0, 1, 1], [], []>} : vector<16x128xbf16>, vector<128x16xbf16>, vector<16x16xf32> -> vector<16x16xf32>
    %c3_95 = arith.constant 3 : index
    %c0_96 = arith.constant 0 : index
    %c0_97 = arith.constant 0 : index
    %137 = vector.load %arg4[%c3_95, %c0_96, %c0_97] : memref<8x1x16xf32, #tpu.memory_space<vmem>>, vector<1x1x16xf32>
    %138 = vector.shape_cast %137 : vector<1x1x16xf32> to vector<1x16xf32>
    %139 = vector.broadcast %138 : vector<1x16xf32> to vector<16x16xf32>
    %140 = arith.addf %136, %139 : vector<16x16xf32>
    %c3_98 = arith.constant 3 : index
    %c0_99 = arith.constant 0 : index
    %c0_100 = arith.constant 0 : index
    %141 = vector.load %arg5[%c3_98, %c0_99, %c0_100] : memref<8x128x16xbf16, #tpu.memory_space<vmem>>, vector<1x128x16xbf16>
    %142 = vector.shape_cast %141 : vector<1x128x16xbf16> to vector<128x16xbf16>
    %cst_101 = arith.constant dense<0.000000e+00> : vector<16x16xf32>
    %143 = tpu.matmul %5, %142, %cst_101 {dimension_numbers = #tpu.dot_dimension_numbers<[1], [0], [0], [1], [0, 0, 1, 1], [], []>} : vector<16x128xbf16>, vector<128x16xbf16>, vector<16x16xf32> -> vector<16x16xf32>
    %c3_102 = arith.constant 3 : index
    %c0_103 = arith.constant 0 : index
    %c0_104 = arith.constant 0 : index
    %144 = vector.load %arg6[%c3_102, %c0_103, %c0_104] : memref<8x1x16xf32, #tpu.memory_space<vmem>>, vector<1x1x16xf32>
    %145 = vector.shape_cast %144 : vector<1x1x16xf32> to vector<1x16xf32>
    %146 = vector.broadcast %145 : vector<1x16xf32> to vector<16x16xf32>
    %147 = arith.addf %143, %146 : vector<16x16xf32>
    %c3_105 = arith.constant 3 : index
    %c0_106 = arith.constant 0 : index
    %c0_107 = arith.constant 0 : index
    %148 = vector.load %arg7[%c3_105, %c0_106, %c0_107] : memref<8x128x16xbf16, #tpu.memory_space<vmem>>, vector<1x128x16xbf16>
    %149 = vector.shape_cast %148 : vector<1x128x16xbf16> to vector<128x16xbf16>
    %cst_108 = arith.constant dense<0.000000e+00> : vector<16x16xf32>
    %150 = tpu.matmul %5, %149, %cst_108 {dimension_numbers = #tpu.dot_dimension_numbers<[1], [0], [0], [1], [0, 0, 1, 1], [], []>} : vector<16x128xbf16>, vector<128x16xbf16>, vector<16x16xf32> -> vector<16x16xf32>
    %c3_109 = arith.constant 3 : index
    %c0_110 = arith.constant 0 : index
    %c0_111 = arith.constant 0 : index
    %151 = vector.load %arg8[%c3_109, %c0_110, %c0_111] : memref<8x1x16xf32, #tpu.memory_space<vmem>>, vector<1x1x16xf32>
    %152 = vector.shape_cast %151 : vector<1x1x16xf32> to vector<1x16xf32>
    %153 = vector.broadcast %152 : vector<1x16xf32> to vector<16x16xf32>
    %154 = arith.addf %150, %153 : vector<16x16xf32>
    %155 = arith.truncf %140 : vector<16x16xf32> to vector<16x16xbf16>
    %156 = arith.truncf %147 : vector<16x16xf32> to vector<16x16xbf16>
    %cst_112 = arith.constant dense<0.000000e+00> : vector<16x16xf32>
    %157 = tpu.matmul %155, %156, %cst_112 {dimension_numbers = #tpu.dot_dimension_numbers<[1], [1], [0], [0], [0, 0, 1, 0], [], []>} : vector<16x16xbf16>, vector<16x16xbf16>, vector<16x16xf32> -> vector<16x16xf32>
    %cst_113 = arith.constant 2.500000e-01 : f32
    %158 = vector.broadcast %cst_113 : f32 to vector<16x16xf32>
    %159 = arith.mulf %157, %158 : vector<16x16xf32>
    %cst_114 = arith.constant dense<0xFF800000> : vector<16xf32>
    %160 = vector.multi_reduction <maximumf>, %159, %cst_114 [1] : vector<16x16xf32> to vector<16xf32>
    %161 = vector.shape_cast %160 : vector<16xf32> to vector<16x1xf32>
    %162 = vector.broadcast %161 : vector<16x1xf32> to vector<16x16xf32>
    %163 = arith.subf %159, %162 : vector<16x16xf32>
    %164 = math.exp %163 : vector<16x16xf32>
    %cst_115 = arith.constant dense<0.000000e+00> : vector<16xf32>
    %165 = vector.multi_reduction <add>, %164, %cst_115 [1] : vector<16x16xf32> to vector<16xf32>
    %166 = vector.shape_cast %165 : vector<16xf32> to vector<16x1xf32>
    %167 = vector.broadcast %166 : vector<16x1xf32> to vector<16x16xf32>
    %168 = arith.divf %164, %167 : vector<16x16xf32>
    %169 = arith.truncf %168 : vector<16x16xf32> to vector<16x16xbf16>
    %170 = arith.truncf %154 : vector<16x16xf32> to vector<16x16xbf16>
    %cst_116 = arith.constant dense<0.000000e+00> : vector<16x16xf32>
    %171 = tpu.matmul %169, %170, %cst_116 {dimension_numbers = #tpu.dot_dimension_numbers<[1], [0], [0], [1], [0, 0, 1, 1], [], []>} : vector<16x16xbf16>, vector<16x16xbf16>, vector<16x16xf32> -> vector<16x16xf32>
    %172 = arith.truncf %171 : vector<16x16xf32> to vector<16x16xbf16>
    %c3_117 = arith.constant 3 : index
    %c0_118 = arith.constant 0 : index
    %c0_119 = arith.constant 0 : index
    %173 = vector.load %arg9[%c3_117, %c0_118, %c0_119] : memref<8x16x128xbf16, #tpu.memory_space<vmem>>, vector<1x16x128xbf16>
    %174 = vector.shape_cast %173 : vector<1x16x128xbf16> to vector<16x128xbf16>
    %cst_120 = arith.constant dense<0.000000e+00> : vector<16x128xf32>
    %175 = tpu.matmul %172, %174, %cst_120 {dimension_numbers = #tpu.dot_dimension_numbers<[1], [0], [0], [1], [0, 0, 1, 1], [], []>} : vector<16x16xbf16>, vector<16x128xbf16>, vector<16x128xf32> -> vector<16x128xf32>
    %176 = arith.addf %133, %175 : vector<16x128xf32>
    %c4 = arith.constant 4 : index
    %c0_121 = arith.constant 0 : index
    %c0_122 = arith.constant 0 : index
    %177 = vector.load %arg3[%c4, %c0_121, %c0_122] : memref<8x128x16xbf16, #tpu.memory_space<vmem>>, vector<1x128x16xbf16>
    %178 = vector.shape_cast %177 : vector<1x128x16xbf16> to vector<128x16xbf16>
    %cst_123 = arith.constant dense<0.000000e+00> : vector<16x16xf32>
    %179 = tpu.matmul %4, %178, %cst_123 {dimension_numbers = #tpu.dot_dimension_numbers<[1], [0], [0], [1], [0, 0, 1, 1], [], []>} : vector<16x128xbf16>, vector<128x16xbf16>, vector<16x16xf32> -> vector<16x16xf32>
    %c4_124 = arith.constant 4 : index
    %c0_125 = arith.constant 0 : index
    %c0_126 = arith.constant 0 : index
    %180 = vector.load %arg4[%c4_124, %c0_125, %c0_126] : memref<8x1x16xf32, #tpu.memory_space<vmem>>, vector<1x1x16xf32>
    %181 = vector.shape_cast %180 : vector<1x1x16xf32> to vector<1x16xf32>
    %182 = vector.broadcast %181 : vector<1x16xf32> to vector<16x16xf32>
    %183 = arith.addf %179, %182 : vector<16x16xf32>
    %c4_127 = arith.constant 4 : index
    %c0_128 = arith.constant 0 : index
    %c0_129 = arith.constant 0 : index
    %184 = vector.load %arg5[%c4_127, %c0_128, %c0_129] : memref<8x128x16xbf16, #tpu.memory_space<vmem>>, vector<1x128x16xbf16>
    %185 = vector.shape_cast %184 : vector<1x128x16xbf16> to vector<128x16xbf16>
    %cst_130 = arith.constant dense<0.000000e+00> : vector<16x16xf32>
    %186 = tpu.matmul %5, %185, %cst_130 {dimension_numbers = #tpu.dot_dimension_numbers<[1], [0], [0], [1], [0, 0, 1, 1], [], []>} : vector<16x128xbf16>, vector<128x16xbf16>, vector<16x16xf32> -> vector<16x16xf32>
    %c4_131 = arith.constant 4 : index
    %c0_132 = arith.constant 0 : index
    %c0_133 = arith.constant 0 : index
    %187 = vector.load %arg6[%c4_131, %c0_132, %c0_133] : memref<8x1x16xf32, #tpu.memory_space<vmem>>, vector<1x1x16xf32>
    %188 = vector.shape_cast %187 : vector<1x1x16xf32> to vector<1x16xf32>
    %189 = vector.broadcast %188 : vector<1x16xf32> to vector<16x16xf32>
    %190 = arith.addf %186, %189 : vector<16x16xf32>
    %c4_134 = arith.constant 4 : index
    %c0_135 = arith.constant 0 : index
    %c0_136 = arith.constant 0 : index
    %191 = vector.load %arg7[%c4_134, %c0_135, %c0_136] : memref<8x128x16xbf16, #tpu.memory_space<vmem>>, vector<1x128x16xbf16>
    %192 = vector.shape_cast %191 : vector<1x128x16xbf16> to vector<128x16xbf16>
    %cst_137 = arith.constant dense<0.000000e+00> : vector<16x16xf32>
    %193 = tpu.matmul %5, %192, %cst_137 {dimension_numbers = #tpu.dot_dimension_numbers<[1], [0], [0], [1], [0, 0, 1, 1], [], []>} : vector<16x128xbf16>, vector<128x16xbf16>, vector<16x16xf32> -> vector<16x16xf32>
    %c4_138 = arith.constant 4 : index
    %c0_139 = arith.constant 0 : index
    %c0_140 = arith.constant 0 : index
    %194 = vector.load %arg8[%c4_138, %c0_139, %c0_140] : memref<8x1x16xf32, #tpu.memory_space<vmem>>, vector<1x1x16xf32>
    %195 = vector.shape_cast %194 : vector<1x1x16xf32> to vector<1x16xf32>
    %196 = vector.broadcast %195 : vector<1x16xf32> to vector<16x16xf32>
    %197 = arith.addf %193, %196 : vector<16x16xf32>
    %198 = arith.truncf %183 : vector<16x16xf32> to vector<16x16xbf16>
    %199 = arith.truncf %190 : vector<16x16xf32> to vector<16x16xbf16>
    %cst_141 = arith.constant dense<0.000000e+00> : vector<16x16xf32>
    %200 = tpu.matmul %198, %199, %cst_141 {dimension_numbers = #tpu.dot_dimension_numbers<[1], [1], [0], [0], [0, 0, 1, 0], [], []>} : vector<16x16xbf16>, vector<16x16xbf16>, vector<16x16xf32> -> vector<16x16xf32>
    %cst_142 = arith.constant 2.500000e-01 : f32
    %201 = vector.broadcast %cst_142 : f32 to vector<16x16xf32>
    %202 = arith.mulf %200, %201 : vector<16x16xf32>
    %cst_143 = arith.constant dense<0xFF800000> : vector<16xf32>
    %203 = vector.multi_reduction <maximumf>, %202, %cst_143 [1] : vector<16x16xf32> to vector<16xf32>
    %204 = vector.shape_cast %203 : vector<16xf32> to vector<16x1xf32>
    %205 = vector.broadcast %204 : vector<16x1xf32> to vector<16x16xf32>
    %206 = arith.subf %202, %205 : vector<16x16xf32>
    %207 = math.exp %206 : vector<16x16xf32>
    %cst_144 = arith.constant dense<0.000000e+00> : vector<16xf32>
    %208 = vector.multi_reduction <add>, %207, %cst_144 [1] : vector<16x16xf32> to vector<16xf32>
    %209 = vector.shape_cast %208 : vector<16xf32> to vector<16x1xf32>
    %210 = vector.broadcast %209 : vector<16x1xf32> to vector<16x16xf32>
    %211 = arith.divf %207, %210 : vector<16x16xf32>
    %212 = arith.truncf %211 : vector<16x16xf32> to vector<16x16xbf16>
    %213 = arith.truncf %197 : vector<16x16xf32> to vector<16x16xbf16>
    %cst_145 = arith.constant dense<0.000000e+00> : vector<16x16xf32>
    %214 = tpu.matmul %212, %213, %cst_145 {dimension_numbers = #tpu.dot_dimension_numbers<[1], [0], [0], [1], [0, 0, 1, 1], [], []>} : vector<16x16xbf16>, vector<16x16xbf16>, vector<16x16xf32> -> vector<16x16xf32>
    %215 = arith.truncf %214 : vector<16x16xf32> to vector<16x16xbf16>
    %c4_146 = arith.constant 4 : index
    %c0_147 = arith.constant 0 : index
    %c0_148 = arith.constant 0 : index
    %216 = vector.load %arg9[%c4_146, %c0_147, %c0_148] : memref<8x16x128xbf16, #tpu.memory_space<vmem>>, vector<1x16x128xbf16>
    %217 = vector.shape_cast %216 : vector<1x16x128xbf16> to vector<16x128xbf16>
    %cst_149 = arith.constant dense<0.000000e+00> : vector<16x128xf32>
    %218 = tpu.matmul %215, %217, %cst_149 {dimension_numbers = #tpu.dot_dimension_numbers<[1], [0], [0], [1], [0, 0, 1, 1], [], []>} : vector<16x16xbf16>, vector<16x128xbf16>, vector<16x128xf32> -> vector<16x128xf32>
    %219 = arith.addf %176, %218 : vector<16x128xf32>
    %c5 = arith.constant 5 : index
    %c0_150 = arith.constant 0 : index
    %c0_151 = arith.constant 0 : index
    %220 = vector.load %arg3[%c5, %c0_150, %c0_151] : memref<8x128x16xbf16, #tpu.memory_space<vmem>>, vector<1x128x16xbf16>
    %221 = vector.shape_cast %220 : vector<1x128x16xbf16> to vector<128x16xbf16>
    %cst_152 = arith.constant dense<0.000000e+00> : vector<16x16xf32>
    %222 = tpu.matmul %4, %221, %cst_152 {dimension_numbers = #tpu.dot_dimension_numbers<[1], [0], [0], [1], [0, 0, 1, 1], [], []>} : vector<16x128xbf16>, vector<128x16xbf16>, vector<16x16xf32> -> vector<16x16xf32>
    %c5_153 = arith.constant 5 : index
    %c0_154 = arith.constant 0 : index
    %c0_155 = arith.constant 0 : index
    %223 = vector.load %arg4[%c5_153, %c0_154, %c0_155] : memref<8x1x16xf32, #tpu.memory_space<vmem>>, vector<1x1x16xf32>
    %224 = vector.shape_cast %223 : vector<1x1x16xf32> to vector<1x16xf32>
    %225 = vector.broadcast %224 : vector<1x16xf32> to vector<16x16xf32>
    %226 = arith.addf %222, %225 : vector<16x16xf32>
    %c5_156 = arith.constant 5 : index
    %c0_157 = arith.constant 0 : index
    %c0_158 = arith.constant 0 : index
    %227 = vector.load %arg5[%c5_156, %c0_157, %c0_158] : memref<8x128x16xbf16, #tpu.memory_space<vmem>>, vector<1x128x16xbf16>
    %228 = vector.shape_cast %227 : vector<1x128x16xbf16> to vector<128x16xbf16>
    %cst_159 = arith.constant dense<0.000000e+00> : vector<16x16xf32>
    %229 = tpu.matmul %5, %228, %cst_159 {dimension_numbers = #tpu.dot_dimension_numbers<[1], [0], [0], [1], [0, 0, 1, 1], [], []>} : vector<16x128xbf16>, vector<128x16xbf16>, vector<16x16xf32> -> vector<16x16xf32>
    %c5_160 = arith.constant 5 : index
    %c0_161 = arith.constant 0 : index
    %c0_162 = arith.constant 0 : index
    %230 = vector.load %arg6[%c5_160, %c0_161, %c0_162] : memref<8x1x16xf32, #tpu.memory_space<vmem>>, vector<1x1x16xf32>
    %231 = vector.shape_cast %230 : vector<1x1x16xf32> to vector<1x16xf32>
    %232 = vector.broadcast %231 : vector<1x16xf32> to vector<16x16xf32>
    %233 = arith.addf %229, %232 : vector<16x16xf32>
    %c5_163 = arith.constant 5 : index
    %c0_164 = arith.constant 0 : index
    %c0_165 = arith.constant 0 : index
    %234 = vector.load %arg7[%c5_163, %c0_164, %c0_165] : memref<8x128x16xbf16, #tpu.memory_space<vmem>>, vector<1x128x16xbf16>
    %235 = vector.shape_cast %234 : vector<1x128x16xbf16> to vector<128x16xbf16>
    %cst_166 = arith.constant dense<0.000000e+00> : vector<16x16xf32>
    %236 = tpu.matmul %5, %235, %cst_166 {dimension_numbers = #tpu.dot_dimension_numbers<[1], [0], [0], [1], [0, 0, 1, 1], [], []>} : vector<16x128xbf16>, vector<128x16xbf16>, vector<16x16xf32> -> vector<16x16xf32>
    %c5_167 = arith.constant 5 : index
    %c0_168 = arith.constant 0 : index
    %c0_169 = arith.constant 0 : index
    %237 = vector.load %arg8[%c5_167, %c0_168, %c0_169] : memref<8x1x16xf32, #tpu.memory_space<vmem>>, vector<1x1x16xf32>
    %238 = vector.shape_cast %237 : vector<1x1x16xf32> to vector<1x16xf32>
    %239 = vector.broadcast %238 : vector<1x16xf32> to vector<16x16xf32>
    %240 = arith.addf %236, %239 : vector<16x16xf32>
    %241 = arith.truncf %226 : vector<16x16xf32> to vector<16x16xbf16>
    %242 = arith.truncf %233 : vector<16x16xf32> to vector<16x16xbf16>
    %cst_170 = arith.constant dense<0.000000e+00> : vector<16x16xf32>
    %243 = tpu.matmul %241, %242, %cst_170 {dimension_numbers = #tpu.dot_dimension_numbers<[1], [1], [0], [0], [0, 0, 1, 0], [], []>} : vector<16x16xbf16>, vector<16x16xbf16>, vector<16x16xf32> -> vector<16x16xf32>
    %cst_171 = arith.constant 2.500000e-01 : f32
    %244 = vector.broadcast %cst_171 : f32 to vector<16x16xf32>
    %245 = arith.mulf %243, %244 : vector<16x16xf32>
    %cst_172 = arith.constant dense<0xFF800000> : vector<16xf32>
    %246 = vector.multi_reduction <maximumf>, %245, %cst_172 [1] : vector<16x16xf32> to vector<16xf32>
    %247 = vector.shape_cast %246 : vector<16xf32> to vector<16x1xf32>
    %248 = vector.broadcast %247 : vector<16x1xf32> to vector<16x16xf32>
    %249 = arith.subf %245, %248 : vector<16x16xf32>
    %250 = math.exp %249 : vector<16x16xf32>
    %cst_173 = arith.constant dense<0.000000e+00> : vector<16xf32>
    %251 = vector.multi_reduction <add>, %250, %cst_173 [1] : vector<16x16xf32> to vector<16xf32>
    %252 = vector.shape_cast %251 : vector<16xf32> to vector<16x1xf32>
    %253 = vector.broadcast %252 : vector<16x1xf32> to vector<16x16xf32>
    %254 = arith.divf %250, %253 : vector<16x16xf32>
    %255 = arith.truncf %254 : vector<16x16xf32> to vector<16x16xbf16>
    %256 = arith.truncf %240 : vector<16x16xf32> to vector<16x16xbf16>
    %cst_174 = arith.constant dense<0.000000e+00> : vector<16x16xf32>
    %257 = tpu.matmul %255, %256, %cst_174 {dimension_numbers = #tpu.dot_dimension_numbers<[1], [0], [0], [1], [0, 0, 1, 1], [], []>} : vector<16x16xbf16>, vector<16x16xbf16>, vector<16x16xf32> -> vector<16x16xf32>
    %258 = arith.truncf %257 : vector<16x16xf32> to vector<16x16xbf16>
    %c5_175 = arith.constant 5 : index
    %c0_176 = arith.constant 0 : index
    %c0_177 = arith.constant 0 : index
    %259 = vector.load %arg9[%c5_175, %c0_176, %c0_177] : memref<8x16x128xbf16, #tpu.memory_space<vmem>>, vector<1x16x128xbf16>
    %260 = vector.shape_cast %259 : vector<1x16x128xbf16> to vector<16x128xbf16>
    %cst_178 = arith.constant dense<0.000000e+00> : vector<16x128xf32>
    %261 = tpu.matmul %258, %260, %cst_178 {dimension_numbers = #tpu.dot_dimension_numbers<[1], [0], [0], [1], [0, 0, 1, 1], [], []>} : vector<16x16xbf16>, vector<16x128xbf16>, vector<16x128xf32> -> vector<16x128xf32>
    %262 = arith.addf %219, %261 : vector<16x128xf32>
    %c6 = arith.constant 6 : index
    %c0_179 = arith.constant 0 : index
    %c0_180 = arith.constant 0 : index
    %263 = vector.load %arg3[%c6, %c0_179, %c0_180] : memref<8x128x16xbf16, #tpu.memory_space<vmem>>, vector<1x128x16xbf16>
    %264 = vector.shape_cast %263 : vector<1x128x16xbf16> to vector<128x16xbf16>
    %cst_181 = arith.constant dense<0.000000e+00> : vector<16x16xf32>
    %265 = tpu.matmul %4, %264, %cst_181 {dimension_numbers = #tpu.dot_dimension_numbers<[1], [0], [0], [1], [0, 0, 1, 1], [], []>} : vector<16x128xbf16>, vector<128x16xbf16>, vector<16x16xf32> -> vector<16x16xf32>
    %c6_182 = arith.constant 6 : index
    %c0_183 = arith.constant 0 : index
    %c0_184 = arith.constant 0 : index
    %266 = vector.load %arg4[%c6_182, %c0_183, %c0_184] : memref<8x1x16xf32, #tpu.memory_space<vmem>>, vector<1x1x16xf32>
    %267 = vector.shape_cast %266 : vector<1x1x16xf32> to vector<1x16xf32>
    %268 = vector.broadcast %267 : vector<1x16xf32> to vector<16x16xf32>
    %269 = arith.addf %265, %268 : vector<16x16xf32>
    %c6_185 = arith.constant 6 : index
    %c0_186 = arith.constant 0 : index
    %c0_187 = arith.constant 0 : index
    %270 = vector.load %arg5[%c6_185, %c0_186, %c0_187] : memref<8x128x16xbf16, #tpu.memory_space<vmem>>, vector<1x128x16xbf16>
    %271 = vector.shape_cast %270 : vector<1x128x16xbf16> to vector<128x16xbf16>
    %cst_188 = arith.constant dense<0.000000e+00> : vector<16x16xf32>
    %272 = tpu.matmul %5, %271, %cst_188 {dimension_numbers = #tpu.dot_dimension_numbers<[1], [0], [0], [1], [0, 0, 1, 1], [], []>} : vector<16x128xbf16>, vector<128x16xbf16>, vector<16x16xf32> -> vector<16x16xf32>
    %c6_189 = arith.constant 6 : index
    %c0_190 = arith.constant 0 : index
    %c0_191 = arith.constant 0 : index
    %273 = vector.load %arg6[%c6_189, %c0_190, %c0_191] : memref<8x1x16xf32, #tpu.memory_space<vmem>>, vector<1x1x16xf32>
    %274 = vector.shape_cast %273 : vector<1x1x16xf32> to vector<1x16xf32>
    %275 = vector.broadcast %274 : vector<1x16xf32> to vector<16x16xf32>
    %276 = arith.addf %272, %275 : vector<16x16xf32>
    %c6_192 = arith.constant 6 : index
    %c0_193 = arith.constant 0 : index
    %c0_194 = arith.constant 0 : index
    %277 = vector.load %arg7[%c6_192, %c0_193, %c0_194] : memref<8x128x16xbf16, #tpu.memory_space<vmem>>, vector<1x128x16xbf16>
    %278 = vector.shape_cast %277 : vector<1x128x16xbf16> to vector<128x16xbf16>
    %cst_195 = arith.constant dense<0.000000e+00> : vector<16x16xf32>
    %279 = tpu.matmul %5, %278, %cst_195 {dimension_numbers = #tpu.dot_dimension_numbers<[1], [0], [0], [1], [0, 0, 1, 1], [], []>} : vector<16x128xbf16>, vector<128x16xbf16>, vector<16x16xf32> -> vector<16x16xf32>
    %c6_196 = arith.constant 6 : index
    %c0_197 = arith.constant 0 : index
    %c0_198 = arith.constant 0 : index
    %280 = vector.load %arg8[%c6_196, %c0_197, %c0_198] : memref<8x1x16xf32, #tpu.memory_space<vmem>>, vector<1x1x16xf32>
    %281 = vector.shape_cast %280 : vector<1x1x16xf32> to vector<1x16xf32>
    %282 = vector.broadcast %281 : vector<1x16xf32> to vector<16x16xf32>
    %283 = arith.addf %279, %282 : vector<16x16xf32>
    %284 = arith.truncf %269 : vector<16x16xf32> to vector<16x16xbf16>
    %285 = arith.truncf %276 : vector<16x16xf32> to vector<16x16xbf16>
    %cst_199 = arith.constant dense<0.000000e+00> : vector<16x16xf32>
    %286 = tpu.matmul %284, %285, %cst_199 {dimension_numbers = #tpu.dot_dimension_numbers<[1], [1], [0], [0], [0, 0, 1, 0], [], []>} : vector<16x16xbf16>, vector<16x16xbf16>, vector<16x16xf32> -> vector<16x16xf32>
    %cst_200 = arith.constant 2.500000e-01 : f32
    %287 = vector.broadcast %cst_200 : f32 to vector<16x16xf32>
    %288 = arith.mulf %286, %287 : vector<16x16xf32>
    %cst_201 = arith.constant dense<0xFF800000> : vector<16xf32>
    %289 = vector.multi_reduction <maximumf>, %288, %cst_201 [1] : vector<16x16xf32> to vector<16xf32>
    %290 = vector.shape_cast %289 : vector<16xf32> to vector<16x1xf32>
    %291 = vector.broadcast %290 : vector<16x1xf32> to vector<16x16xf32>
    %292 = arith.subf %288, %291 : vector<16x16xf32>
    %293 = math.exp %292 : vector<16x16xf32>
    %cst_202 = arith.constant dense<0.000000e+00> : vector<16xf32>
    %294 = vector.multi_reduction <add>, %293, %cst_202 [1] : vector<16x16xf32> to vector<16xf32>
    %295 = vector.shape_cast %294 : vector<16xf32> to vector<16x1xf32>
    %296 = vector.broadcast %295 : vector<16x1xf32> to vector<16x16xf32>
    %297 = arith.divf %293, %296 : vector<16x16xf32>
    %298 = arith.truncf %297 : vector<16x16xf32> to vector<16x16xbf16>
    %299 = arith.truncf %283 : vector<16x16xf32> to vector<16x16xbf16>
    %cst_203 = arith.constant dense<0.000000e+00> : vector<16x16xf32>
    %300 = tpu.matmul %298, %299, %cst_203 {dimension_numbers = #tpu.dot_dimension_numbers<[1], [0], [0], [1], [0, 0, 1, 1], [], []>} : vector<16x16xbf16>, vector<16x16xbf16>, vector<16x16xf32> -> vector<16x16xf32>
    %301 = arith.truncf %300 : vector<16x16xf32> to vector<16x16xbf16>
    %c6_204 = arith.constant 6 : index
    %c0_205 = arith.constant 0 : index
    %c0_206 = arith.constant 0 : index
    %302 = vector.load %arg9[%c6_204, %c0_205, %c0_206] : memref<8x16x128xbf16, #tpu.memory_space<vmem>>, vector<1x16x128xbf16>
    %303 = vector.shape_cast %302 : vector<1x16x128xbf16> to vector<16x128xbf16>
    %cst_207 = arith.constant dense<0.000000e+00> : vector<16x128xf32>
    %304 = tpu.matmul %301, %303, %cst_207 {dimension_numbers = #tpu.dot_dimension_numbers<[1], [0], [0], [1], [0, 0, 1, 1], [], []>} : vector<16x16xbf16>, vector<16x128xbf16>, vector<16x128xf32> -> vector<16x128xf32>
    %305 = arith.addf %262, %304 : vector<16x128xf32>
    %c7 = arith.constant 7 : index
    %c0_208 = arith.constant 0 : index
    %c0_209 = arith.constant 0 : index
    %306 = vector.load %arg3[%c7, %c0_208, %c0_209] : memref<8x128x16xbf16, #tpu.memory_space<vmem>>, vector<1x128x16xbf16>
    %307 = vector.shape_cast %306 : vector<1x128x16xbf16> to vector<128x16xbf16>
    %cst_210 = arith.constant dense<0.000000e+00> : vector<16x16xf32>
    %308 = tpu.matmul %4, %307, %cst_210 {dimension_numbers = #tpu.dot_dimension_numbers<[1], [0], [0], [1], [0, 0, 1, 1], [], []>} : vector<16x128xbf16>, vector<128x16xbf16>, vector<16x16xf32> -> vector<16x16xf32>
    %c7_211 = arith.constant 7 : index
    %c0_212 = arith.constant 0 : index
    %c0_213 = arith.constant 0 : index
    %309 = vector.load %arg4[%c7_211, %c0_212, %c0_213] : memref<8x1x16xf32, #tpu.memory_space<vmem>>, vector<1x1x16xf32>
    %310 = vector.shape_cast %309 : vector<1x1x16xf32> to vector<1x16xf32>
    %311 = vector.broadcast %310 : vector<1x16xf32> to vector<16x16xf32>
    %312 = arith.addf %308, %311 : vector<16x16xf32>
    %c7_214 = arith.constant 7 : index
    %c0_215 = arith.constant 0 : index
    %c0_216 = arith.constant 0 : index
    %313 = vector.load %arg5[%c7_214, %c0_215, %c0_216] : memref<8x128x16xbf16, #tpu.memory_space<vmem>>, vector<1x128x16xbf16>
    %314 = vector.shape_cast %313 : vector<1x128x16xbf16> to vector<128x16xbf16>
    %cst_217 = arith.constant dense<0.000000e+00> : vector<16x16xf32>
    %315 = tpu.matmul %5, %314, %cst_217 {dimension_numbers = #tpu.dot_dimension_numbers<[1], [0], [0], [1], [0, 0, 1, 1], [], []>} : vector<16x128xbf16>, vector<128x16xbf16>, vector<16x16xf32> -> vector<16x16xf32>
    %c7_218 = arith.constant 7 : index
    %c0_219 = arith.constant 0 : index
    %c0_220 = arith.constant 0 : index
    %316 = vector.load %arg6[%c7_218, %c0_219, %c0_220] : memref<8x1x16xf32, #tpu.memory_space<vmem>>, vector<1x1x16xf32>
    %317 = vector.shape_cast %316 : vector<1x1x16xf32> to vector<1x16xf32>
    %318 = vector.broadcast %317 : vector<1x16xf32> to vector<16x16xf32>
    %319 = arith.addf %315, %318 : vector<16x16xf32>
    %c7_221 = arith.constant 7 : index
    %c0_222 = arith.constant 0 : index
    %c0_223 = arith.constant 0 : index
    %320 = vector.load %arg7[%c7_221, %c0_222, %c0_223] : memref<8x128x16xbf16, #tpu.memory_space<vmem>>, vector<1x128x16xbf16>
    %321 = vector.shape_cast %320 : vector<1x128x16xbf16> to vector<128x16xbf16>
    %cst_224 = arith.constant dense<0.000000e+00> : vector<16x16xf32>
    %322 = tpu.matmul %5, %321, %cst_224 {dimension_numbers = #tpu.dot_dimension_numbers<[1], [0], [0], [1], [0, 0, 1, 1], [], []>} : vector<16x128xbf16>, vector<128x16xbf16>, vector<16x16xf32> -> vector<16x16xf32>
    %c7_225 = arith.constant 7 : index
    %c0_226 = arith.constant 0 : index
    %c0_227 = arith.constant 0 : index
    %323 = vector.load %arg8[%c7_225, %c0_226, %c0_227] : memref<8x1x16xf32, #tpu.memory_space<vmem>>, vector<1x1x16xf32>
    %324 = vector.shape_cast %323 : vector<1x1x16xf32> to vector<1x16xf32>
    %325 = vector.broadcast %324 : vector<1x16xf32> to vector<16x16xf32>
    %326 = arith.addf %322, %325 : vector<16x16xf32>
    %327 = arith.truncf %312 : vector<16x16xf32> to vector<16x16xbf16>
    %328 = arith.truncf %319 : vector<16x16xf32> to vector<16x16xbf16>
    %cst_228 = arith.constant dense<0.000000e+00> : vector<16x16xf32>
    %329 = tpu.matmul %327, %328, %cst_228 {dimension_numbers = #tpu.dot_dimension_numbers<[1], [1], [0], [0], [0, 0, 1, 0], [], []>} : vector<16x16xbf16>, vector<16x16xbf16>, vector<16x16xf32> -> vector<16x16xf32>
    %cst_229 = arith.constant 2.500000e-01 : f32
    %330 = vector.broadcast %cst_229 : f32 to vector<16x16xf32>
    %331 = arith.mulf %329, %330 : vector<16x16xf32>
    %cst_230 = arith.constant dense<0xFF800000> : vector<16xf32>
    %332 = vector.multi_reduction <maximumf>, %331, %cst_230 [1] : vector<16x16xf32> to vector<16xf32>
    %333 = vector.shape_cast %332 : vector<16xf32> to vector<16x1xf32>
    %334 = vector.broadcast %333 : vector<16x1xf32> to vector<16x16xf32>
    %335 = arith.subf %331, %334 : vector<16x16xf32>
    %336 = math.exp %335 : vector<16x16xf32>
    %cst_231 = arith.constant dense<0.000000e+00> : vector<16xf32>
    %337 = vector.multi_reduction <add>, %336, %cst_231 [1] : vector<16x16xf32> to vector<16xf32>
    %338 = vector.shape_cast %337 : vector<16xf32> to vector<16x1xf32>
    %339 = vector.broadcast %338 : vector<16x1xf32> to vector<16x16xf32>
    %340 = arith.divf %336, %339 : vector<16x16xf32>
    %341 = arith.truncf %340 : vector<16x16xf32> to vector<16x16xbf16>
    %342 = arith.truncf %326 : vector<16x16xf32> to vector<16x16xbf16>
    %cst_232 = arith.constant dense<0.000000e+00> : vector<16x16xf32>
    %343 = tpu.matmul %341, %342, %cst_232 {dimension_numbers = #tpu.dot_dimension_numbers<[1], [0], [0], [1], [0, 0, 1, 1], [], []>} : vector<16x16xbf16>, vector<16x16xbf16>, vector<16x16xf32> -> vector<16x16xf32>
    %344 = arith.truncf %343 : vector<16x16xf32> to vector<16x16xbf16>
    %c7_233 = arith.constant 7 : index
    %c0_234 = arith.constant 0 : index
    %c0_235 = arith.constant 0 : index
    %345 = vector.load %arg9[%c7_233, %c0_234, %c0_235] : memref<8x16x128xbf16, #tpu.memory_space<vmem>>, vector<1x16x128xbf16>
    %346 = vector.shape_cast %345 : vector<1x16x128xbf16> to vector<16x128xbf16>
    %cst_236 = arith.constant dense<0.000000e+00> : vector<16x128xf32>
    %347 = tpu.matmul %344, %346, %cst_236 {dimension_numbers = #tpu.dot_dimension_numbers<[1], [0], [0], [1], [0, 0, 1, 1], [], []>} : vector<16x16xbf16>, vector<16x128xbf16>, vector<16x128xf32> -> vector<16x128xf32>
    %348 = arith.addf %305, %347 : vector<16x128xf32>
    %349 = arith.addf %1, %348 : vector<16x128xf32>
    %c0_237 = arith.constant 0 : index
    %c0_238 = arith.constant 0 : index
    %350 = vector.load %arg10[%c0_237, %c0_238] : memref<1x128xf32, #tpu.memory_space<vmem>>, vector<1x128xf32>
    %351 = vector.broadcast %350 : vector<1x128xf32> to vector<16x128xf32>
    %352 = arith.addf %349, %351 : vector<16x128xf32>
    %cst_239 = arith.constant dense<0.000000e+00> : vector<16xf32>
    %353 = vector.multi_reduction <add>, %352, %cst_239 [1] : vector<16x128xf32> to vector<16xf32>
    %354 = vector.shape_cast %353 : vector<16xf32> to vector<16x1xf32>
    %cst_240 = arith.constant 1.280000e+02 : f32
    %355 = vector.broadcast %cst_240 : f32 to vector<16x1xf32>
    %356 = arith.divf %354, %355 : vector<16x1xf32>
    %357 = vector.broadcast %356 : vector<16x1xf32> to vector<16x128xf32>
    %358 = arith.subf %352, %357 : vector<16x128xf32>
    %359 = arith.mulf %358, %358 : vector<16x128xf32>
    %cst_241 = arith.constant dense<0.000000e+00> : vector<16xf32>
    %360 = vector.multi_reduction <add>, %359, %cst_241 [1] : vector<16x128xf32> to vector<16xf32>
    %361 = vector.shape_cast %360 : vector<16xf32> to vector<16x1xf32>
    %cst_242 = arith.constant 1.280000e+02 : f32
    %362 = vector.broadcast %cst_242 : f32 to vector<16x1xf32>
    %363 = arith.divf %361, %362 : vector<16x1xf32>
    %cst_243 = arith.constant 9.99999974E-6 : f32
    %364 = vector.broadcast %cst_243 : f32 to vector<16x1xf32>
    %365 = arith.addf %363, %364 : vector<16x1xf32>
    %366 = math.rsqrt %365 : vector<16x1xf32>
    %367 = vector.broadcast %366 : vector<16x1xf32> to vector<16x128xf32>
    %368 = arith.mulf %358, %367 : vector<16x128xf32>
    %c0_244 = arith.constant 0 : index
    %c0_245 = arith.constant 0 : index
    %369 = vector.load %arg11[%c0_244, %c0_245] : memref<1x128xf32, #tpu.memory_space<vmem>>, vector<1x128xf32>
    %370 = vector.broadcast %369 : vector<1x128xf32> to vector<16x128xf32>
    %371 = arith.mulf %368, %370 : vector<16x128xf32>
    %c0_246 = arith.constant 0 : index
    %c0_247 = arith.constant 0 : index
    %372 = vector.load %arg12[%c0_246, %c0_247] : memref<1x128xf32, #tpu.memory_space<vmem>>, vector<1x128xf32>
    %373 = vector.broadcast %372 : vector<1x128xf32> to vector<16x128xf32>
    %374 = arith.addf %371, %373 : vector<16x128xf32>
    %c0_248 = arith.constant 0 : index
    %c0_249 = arith.constant 0 : index
    %c0_250 = arith.constant 0 : index
    %375 = vector.load %arg13[%c0_248, %c0_249, %c0_250] : memref<1x16x128xf32, #tpu.memory_space<vmem>>, vector<1x16x128xf32>
    %376 = vector.shape_cast %375 : vector<1x16x128xf32> to vector<16x128xf32>
    %377 = vector.shape_cast %374 : vector<16x128xf32> to vector<1x16x128xf32>
    tpu.vector_store %arg13[%c0_248, %c0_249, %c0_250], %377 {strides = array<i32>} : memref<1x16x128xf32, #tpu.memory_space<vmem>>, vector<1x16x128xf32>,
    return
  }
  func.func @transform_0(%arg0: i32) -> (i32, i32, i32) {
    %c0_i32 = arith.constant 0 : i32
    %c0_i32_0 = arith.constant 0 : i32
    %c0_i32_1 = arith.constant 0 : i32
    return %arg0, %c0_i32, %c0_i32_0 : i32, i32, i32
  }
  func.func @transform_1(%arg0: i32) -> (i32, i32, i32) {
    %c0_i32 = arith.constant 0 : i32
    %c0_i32_0 = arith.constant 0 : i32
    %c0_i32_1 = arith.constant 0 : i32
    return %arg0, %c0_i32, %c0_i32_0 : i32, i32, i32
  }
  func.func @transform_2(%arg0: i32) -> (i32, i32, i32) {
    %c0_i32 = arith.constant 0 : i32
    %c0_i32_0 = arith.constant 0 : i32
    %c0_i32_1 = arith.constant 0 : i32
    %c0_i32_2 = arith.constant 0 : i32
    return %c0_i32, %c0_i32_0, %c0_i32_1 : i32, i32, i32
  }
  func.func @transform_3(%arg0: i32) -> (i32, i32, i32) {
    %c0_i32 = arith.constant 0 : i32
    %c0_i32_0 = arith.constant 0 : i32
    %c0_i32_1 = arith.constant 0 : i32
    %c0_i32_2 = arith.constant 0 : i32
    return %c0_i32, %c0_i32_0, %c0_i32_1 : i32, i32, i32
  }
  func.func @transform_4(%arg0: i32) -> (i32, i32, i32) {
    %c0_i32 = arith.constant 0 : i32
    %c0_i32_0 = arith.constant 0 : i32
    %c0_i32_1 = arith.constant 0 : i32
    %c0_i32_2 = arith.constant 0 : i32
    return %c0_i32, %c0_i32_0, %c0_i32_1 : i32, i32, i32
  }
  func.func @transform_5(%arg0: i32) -> (i32, i32, i32) {
    %c0_i32 = arith.constant 0 : i32
    %c0_i32_0 = arith.constant 0 : i32
    %c0_i32_1 = arith.constant 0 : i32
    %c0_i32_2 = arith.constant 0 : i32
    return %c0_i32, %c0_i32_0, %c0_i32_1 : i32, i32, i32
  }
  func.func @transform_6(%arg0: i32) -> (i32, i32, i32) {
    %c0_i32 = arith.constant 0 : i32
    %c0_i32_0 = arith.constant 0 : i32
    %c0_i32_1 = arith.constant 0 : i32
    %c0_i32_2 = arith.constant 0 : i32
    return %c0_i32, %c0_i32_0, %c0_i32_1 : i32, i32, i32
  }
  func.func @transform_7(%arg0: i32) -> (i32, i32, i32) {
    %c0_i32 = arith.constant 0 : i32
    %c0_i32_0 = arith.constant 0 : i32
    %c0_i32_1 = arith.constant 0 : i32
    %c0_i32_2 = arith.constant 0 : i32
    return %c0_i32, %c0_i32_0, %c0_i32_1 : i32, i32, i32
  }
  func.func @transform_8(%arg0: i32) -> (i32, i32, i32) {
    %c0_i32 = arith.constant 0 : i32
    %c0_i32_0 = arith.constant 0 : i32
    %c0_i32_1 = arith.constant 0 : i32
    %c0_i32_2 = arith.constant 0 : i32
    return %c0_i32, %c0_i32_0, %c0_i32_1 : i32, i32, i32
  }
  func.func @transform_9(%arg0: i32) -> (i32, i32) {
    %c0_i32 = arith.constant 0 : i32
    %c0_i32_0 = arith.constant 0 : i32
    %c0_i32_1 = arith.constant 0 : i32
    return %c0_i32, %c0_i32_0 : i32, i32
  }
  func.func @transform_10(%arg0: i32) -> (i32, i32) {
    %c0_i32 = arith.constant 0 : i32
    %c0_i32_0 = arith.constant 0 : i32
    %c0_i32_1 = arith.constant 0 : i32
    return %c0_i32, %c0_i32_0 : i32, i32
  }
  func.func @transform_11(%arg0: i32) -> (i32, i32) {
    %c0_i32 = arith.constant 0 : i32
    %c0_i32_0 = arith.constant 0 : i32
    %c0_i32_1 = arith.constant 0 : i32
    return %c0_i32, %c0_i32_0 : i32, i32
  }
  func.func @transform_12(%arg0: i32) -> (i32, i32, i32) {
    %c0_i32 = arith.constant 0 : i32
    %c0_i32_0 = arith.constant 0 : i32
    %c0_i32_1 = arith.constant 0 : i32
    return %arg0, %c0_i32, %c0_i32_0 : i32, i32, i32
  }
}

module attributes {stable_mosaic.version = 11 : i64} {
  func.func @kernel(%arg0: i32, %arg1: memref<32x128xf32, #tpu.memory_space<vmem>>, %arg2: memref<1x128xf32, #tpu.memory_space<vmem>>, %arg3: memref<1x128xf32, #tpu.memory_space<vmem>>, %arg4: memref<32x128xf32, #tpu.memory_space<vmem>>) attributes {dimension_semantics = [#tpu.dimension_semantics<parallel>], iteration_bounds = array<i64: 1>, scalar_prefetch = 0 : i64, scratch_operands = 0 : i64, tpu.core_type = #tpu.core_type<tc>, window_params = [{transform_indices = @transform_0, window_bounds = array<i64: 32, 128>}, {pipeline_mode = #tpu.pipeline_mode<synchronous>, transform_indices = @transform_1, window_bounds = array<i64: 1, 128>}, {pipeline_mode = #tpu.pipeline_mode<synchronous>, transform_indices = @transform_2, window_bounds = array<i64: 1, 128>}, {transform_indices = @transform_3, window_bounds = array<i64: 32, 128>}]} {
    %c0 = arith.constant 0 : index
    %c0_0 = arith.constant 0 : index
    %0 = vector.load %arg1[%c0, %c0_0] : memref<32x128xf32, #tpu.memory_space<vmem>>, vector<32x128xf32>
    %cst = arith.constant dense<0.000000e+00> : vector<32xf32>
    %1 = vector.multi_reduction <add>, %0, %cst [1] : vector<32x128xf32> to vector<32xf32>
    %2 = vector.shape_cast %1 : vector<32xf32> to vector<32x1xf32>
    %cst_1 = arith.constant 1.280000e+02 : f32
    %3 = vector.broadcast %cst_1 : f32 to vector<32x1xf32>
    %4 = arith.divf %2, %3 : vector<32x1xf32>
    %5 = vector.broadcast %4 : vector<32x1xf32> to vector<32x128xf32>
    %6 = arith.subf %0, %5 : vector<32x128xf32>
    %7 = arith.mulf %6, %6 : vector<32x128xf32>
    %cst_2 = arith.constant dense<0.000000e+00> : vector<32xf32>
    %8 = vector.multi_reduction <add>, %7, %cst_2 [1] : vector<32x128xf32> to vector<32xf32>
    %9 = vector.shape_cast %8 : vector<32xf32> to vector<32x1xf32>
    %cst_3 = arith.constant 1.280000e+02 : f32
    %10 = vector.broadcast %cst_3 : f32 to vector<32x1xf32>
    %11 = arith.divf %9, %10 : vector<32x1xf32>
    %cst_4 = arith.constant 9.99999974E-6 : f32
    %12 = vector.broadcast %cst_4 : f32 to vector<32x1xf32>
    %13 = arith.addf %11, %12 : vector<32x1xf32>
    %14 = math.rsqrt %13 : vector<32x1xf32>
    %15 = vector.broadcast %14 : vector<32x1xf32> to vector<32x128xf32>
    %16 = arith.mulf %6, %15 : vector<32x128xf32>
    %c0_5 = arith.constant 0 : index
    %c0_6 = arith.constant 0 : index
    %17 = vector.load %arg2[%c0_5, %c0_6] : memref<1x128xf32, #tpu.memory_space<vmem>>, vector<1x128xf32>
    %18 = vector.broadcast %17 : vector<1x128xf32> to vector<32x128xf32>
    %19 = arith.mulf %16, %18 : vector<32x128xf32>
    %c0_7 = arith.constant 0 : index
    %c0_8 = arith.constant 0 : index
    %20 = vector.load %arg3[%c0_7, %c0_8] : memref<1x128xf32, #tpu.memory_space<vmem>>, vector<1x128xf32>
    %21 = vector.broadcast %20 : vector<1x128xf32> to vector<32x128xf32>
    %22 = arith.addf %19, %21 : vector<32x128xf32>
    %c0_9 = arith.constant 0 : index
    %c0_10 = arith.constant 0 : index
    %23 = vector.load %arg4[%c0_9, %c0_10] : memref<32x128xf32, #tpu.memory_space<vmem>>, vector<32x128xf32>
    tpu.vector_store %arg4[%c0_9, %c0_10], %22 {strides = array<i32>} : memref<32x128xf32, #tpu.memory_space<vmem>>, vector<32x128xf32>,
    return
  }
  func.func @transform_0(%arg0: i32) -> (i32, i32) {
    %c0_i32 = arith.constant 0 : i32
    %c0_i32_0 = arith.constant 0 : i32
    return %arg0, %c0_i32 : i32, i32
  }
  func.func @transform_1(%arg0: i32) -> (i32, i32) {
    %c0_i32 = arith.constant 0 : i32
    %c0_i32_0 = arith.constant 0 : i32
    %c0_i32_1 = arith.constant 0 : i32
    return %c0_i32, %c0_i32_0 : i32, i32
  }
  func.func @transform_2(%arg0: i32) -> (i32, i32) {
    %c0_i32 = arith.constant 0 : i32
    %c0_i32_0 = arith.constant 0 : i32
    %c0_i32_1 = arith.constant 0 : i32
    return %c0_i32, %c0_i32_0 : i32, i32
  }
  func.func @transform_3(%arg0: i32) -> (i32, i32) {
    %c0_i32 = arith.constant 0 : i32
    %c0_i32_0 = arith.constant 0 : i32
    return %arg0, %c0_i32 : i32, i32
  }
}

module attributes {stable_mosaic.version = 11 : i64} {
  func.func @kernel(%arg0: i32, %arg1: memref<32x128xf32, #tpu.memory_space<vmem>>, %arg2: memref<128x2048xbf16, #tpu.memory_space<vmem>>, %arg3: memref<1x2048xf32, #tpu.memory_space<vmem>>, %arg4: memref<2048x128xbf16, #tpu.memory_space<vmem>>, %arg5: memref<1x128xf32, #tpu.memory_space<vmem>>, %arg6: memref<1x128xf32, #tpu.memory_space<vmem>>, %arg7: memref<1x128xf32, #tpu.memory_space<vmem>>, %arg8: memref<32x128xf32, #tpu.memory_space<vmem>>) attributes {dimension_semantics = [#tpu.dimension_semantics<parallel>], iteration_bounds = array<i64: 1>, scalar_prefetch = 0 : i64, scratch_operands = 0 : i64, tpu.core_type = #tpu.core_type<tc>, window_params = [{transform_indices = @transform_0, window_bounds = array<i64: 32, 128>}, {pipeline_mode = #tpu.pipeline_mode<synchronous>, transform_indices = @transform_1, window_bounds = array<i64: 128, 2048>}, {pipeline_mode = #tpu.pipeline_mode<synchronous>, transform_indices = @transform_2, window_bounds = array<i64: 1, 2048>}, {pipeline_mode = #tpu.pipeline_mode<synchronous>, transform_indices = @transform_3, window_bounds = array<i64: 2048, 128>}, {pipeline_mode = #tpu.pipeline_mode<synchronous>, transform_indices = @transform_4, window_bounds = array<i64: 1, 128>}, {pipeline_mode = #tpu.pipeline_mode<synchronous>, transform_indices = @transform_5, window_bounds = array<i64: 1, 128>}, {pipeline_mode = #tpu.pipeline_mode<synchronous>, transform_indices = @transform_6, window_bounds = array<i64: 1, 128>}, {transform_indices = @transform_7, window_bounds = array<i64: 32, 128>}]} {
    %c0 = arith.constant 0 : index
    %c0_0 = arith.constant 0 : index
    %0 = vector.load %arg1[%c0, %c0_0] : memref<32x128xf32, #tpu.memory_space<vmem>>, vector<32x128xf32>
    %1 = arith.truncf %0 : vector<32x128xf32> to vector<32x128xbf16>
    %c0_1 = arith.constant 0 : index
    %c0_2 = arith.constant 0 : index
    %2 = vector.load %arg2[%c0_1, %c0_2] : memref<128x2048xbf16, #tpu.memory_space<vmem>>, vector<128x2048xbf16>
    %cst = arith.constant dense<0.000000e+00> : vector<32x2048xf32>
    %3 = tpu.matmul %1, %2, %cst {dimension_numbers = #tpu.dot_dimension_numbers<[1], [0], [0], [1], [0, 0, 1, 1], [], []>} : vector<32x128xbf16>, vector<128x2048xbf16>, vector<32x2048xf32> -> vector<32x2048xf32>
    %c0_3 = arith.constant 0 : index
    %c0_4 = arith.constant 0 : index
    %4 = vector.load %arg3[%c0_3, %c0_4] : memref<1x2048xf32, #tpu.memory_space<vmem>>, vector<1x2048xf32>
    %5 = vector.broadcast %4 : vector<1x2048xf32> to vector<32x2048xf32>
    %6 = arith.addf %3, %5 : vector<32x2048xf32>
    %cst_5 = arith.constant 0.000000e+00 : f32
    %7 = vector.broadcast %cst_5 : f32 to vector<32x2048xf32>
    %8 = arith.maximumf %6, %7 : vector<32x2048xf32>
    %9 = arith.truncf %8 : vector<32x2048xf32> to vector<32x2048xbf16>
    %c0_6 = arith.constant 0 : index
    %c0_7 = arith.constant 0 : index
    %10 = vector.load %arg4[%c0_6, %c0_7] : memref<2048x128xbf16, #tpu.memory_space<vmem>>, vector<2048x128xbf16>
    %cst_8 = arith.constant dense<0.000000e+00> : vector<32x128xf32>
    %11 = tpu.matmul %9, %10, %cst_8 {dimension_numbers = #tpu.dot_dimension_numbers<[1], [0], [0], [1], [0, 0, 1, 1], [], []>} : vector<32x2048xbf16>, vector<2048x128xbf16>, vector<32x128xf32> -> vector<32x128xf32>
    %c0_9 = arith.constant 0 : index
    %c0_10 = arith.constant 0 : index
    %12 = vector.load %arg5[%c0_9, %c0_10] : memref<1x128xf32, #tpu.memory_space<vmem>>, vector<1x128xf32>
    %13 = vector.broadcast %12 : vector<1x128xf32> to vector<32x128xf32>
    %14 = arith.addf %11, %13 : vector<32x128xf32>
    %15 = arith.addf %0, %14 : vector<32x128xf32>
    %cst_11 = arith.constant dense<0.000000e+00> : vector<32xf32>
    %16 = vector.multi_reduction <add>, %15, %cst_11 [1] : vector<32x128xf32> to vector<32xf32>
    %17 = vector.shape_cast %16 : vector<32xf32> to vector<32x1xf32>
    %cst_12 = arith.constant 1.280000e+02 : f32
    %18 = vector.broadcast %cst_12 : f32 to vector<32x1xf32>
    %19 = arith.divf %17, %18 : vector<32x1xf32>
    %20 = vector.broadcast %19 : vector<32x1xf32> to vector<32x128xf32>
    %21 = arith.subf %15, %20 : vector<32x128xf32>
    %22 = arith.mulf %21, %21 : vector<32x128xf32>
    %cst_13 = arith.constant dense<0.000000e+00> : vector<32xf32>
    %23 = vector.multi_reduction <add>, %22, %cst_13 [1] : vector<32x128xf32> to vector<32xf32>
    %24 = vector.shape_cast %23 : vector<32xf32> to vector<32x1xf32>
    %cst_14 = arith.constant 1.280000e+02 : f32
    %25 = vector.broadcast %cst_14 : f32 to vector<32x1xf32>
    %26 = arith.divf %24, %25 : vector<32x1xf32>
    %cst_15 = arith.constant 9.99999974E-6 : f32
    %27 = vector.broadcast %cst_15 : f32 to vector<32x1xf32>
    %28 = arith.addf %26, %27 : vector<32x1xf32>
    %29 = math.rsqrt %28 : vector<32x1xf32>
    %30 = vector.broadcast %29 : vector<32x1xf32> to vector<32x128xf32>
    %31 = arith.mulf %21, %30 : vector<32x128xf32>
    %c0_16 = arith.constant 0 : index
    %c0_17 = arith.constant 0 : index
    %32 = vector.load %arg6[%c0_16, %c0_17] : memref<1x128xf32, #tpu.memory_space<vmem>>, vector<1x128xf32>
    %33 = vector.broadcast %32 : vector<1x128xf32> to vector<32x128xf32>
    %34 = arith.mulf %31, %33 : vector<32x128xf32>
    %c0_18 = arith.constant 0 : index
    %c0_19 = arith.constant 0 : index
    %35 = vector.load %arg7[%c0_18, %c0_19] : memref<1x128xf32, #tpu.memory_space<vmem>>, vector<1x128xf32>
    %36 = vector.broadcast %35 : vector<1x128xf32> to vector<32x128xf32>
    %37 = arith.addf %34, %36 : vector<32x128xf32>
    %c0_20 = arith.constant 0 : index
    %c0_21 = arith.constant 0 : index
    %38 = vector.load %arg8[%c0_20, %c0_21] : memref<32x128xf32, #tpu.memory_space<vmem>>, vector<32x128xf32>
    tpu.vector_store %arg8[%c0_20, %c0_21], %37 {strides = array<i32>} : memref<32x128xf32, #tpu.memory_space<vmem>>, vector<32x128xf32>,
    return
  }
  func.func @transform_0(%arg0: i32) -> (i32, i32) {
    %c0_i32 = arith.constant 0 : i32
    %c0_i32_0 = arith.constant 0 : i32
    return %arg0, %c0_i32 : i32, i32
  }
  func.func @transform_1(%arg0: i32) -> (i32, i32) {
    %c0_i32 = arith.constant 0 : i32
    %c0_i32_0 = arith.constant 0 : i32
    %c0_i32_1 = arith.constant 0 : i32
    return %c0_i32, %c0_i32_0 : i32, i32
  }
  func.func @transform_2(%arg0: i32) -> (i32, i32) {
    %c0_i32 = arith.constant 0 : i32
    %c0_i32_0 = arith.constant 0 : i32
    %c0_i32_1 = arith.constant 0 : i32
    return %c0_i32, %c0_i32_0 : i32, i32
  }
  func.func @transform_3(%arg0: i32) -> (i32, i32) {
    %c0_i32 = arith.constant 0 : i32
    %c0_i32_0 = arith.constant 0 : i32
    %c0_i32_1 = arith.constant 0 : i32
    return %c0_i32, %c0_i32_0 : i32, i32
  }
  func.func @transform_4(%arg0: i32) -> (i32, i32) {
    %c0_i32 = arith.constant 0 : i32
    %c0_i32_0 = arith.constant 0 : i32
    %c0_i32_1 = arith.constant 0 : i32
    return %c0_i32, %c0_i32_0 : i32, i32
  }
  func.func @transform_5(%arg0: i32) -> (i32, i32) {
    %c0_i32 = arith.constant 0 : i32
    %c0_i32_0 = arith.constant 0 : i32
    %c0_i32_1 = arith.constant 0 : i32
    return %c0_i32, %c0_i32_0 : i32, i32
  }
  func.func @transform_6(%arg0: i32) -> (i32, i32) {
    %c0_i32 = arith.constant 0 : i32
    %c0_i32_0 = arith.constant 0 : i32
    %c0_i32_1 = arith.constant 0 : i32
    return %c0_i32, %c0_i32_0 : i32, i32
  }
  func.func @transform_7(%arg0: i32) -> (i32, i32) {
    %c0_i32 = arith.constant 0 : i32
    %c0_i32_0 = arith.constant 0 : i32
    return %arg0, %c0_i32 : i32, i32
  }
}

module attributes {stable_mosaic.version = 11 : i64} {
  func.func @kernel(%arg0: i32, %arg1: memref<32x128xf32, #tpu.memory_space<vmem>>, %arg2: memref<128x128xbf16, #tpu.memory_space<vmem>>, %arg3: memref<1x128xf32, #tpu.memory_space<vmem>>, %arg4: memref<128x64xbf16, #tpu.memory_space<vmem>>, %arg5: memref<1x64xf32, #tpu.memory_space<vmem>>, %arg6: memref<64x128xbf16, #tpu.memory_space<vmem>>, %arg7: memref<1x128xf32, #tpu.memory_space<vmem>>, %arg8: memref<32x128xf32, #tpu.memory_space<vmem>>) attributes {dimension_semantics = [#tpu.dimension_semantics<parallel>], iteration_bounds = array<i64: 1>, scalar_prefetch = 0 : i64, scratch_operands = 0 : i64, tpu.core_type = #tpu.core_type<tc>, window_params = [{transform_indices = @transform_0, window_bounds = array<i64: 32, 128>}, {pipeline_mode = #tpu.pipeline_mode<synchronous>, transform_indices = @transform_1, window_bounds = array<i64: 128, 128>}, {pipeline_mode = #tpu.pipeline_mode<synchronous>, transform_indices = @transform_2, window_bounds = array<i64: 1, 128>}, {pipeline_mode = #tpu.pipeline_mode<synchronous>, transform_indices = @transform_3, window_bounds = array<i64: 128, 64>}, {pipeline_mode = #tpu.pipeline_mode<synchronous>, transform_indices = @transform_4, window_bounds = array<i64: 1, 64>}, {pipeline_mode = #tpu.pipeline_mode<synchronous>, transform_indices = @transform_5, window_bounds = array<i64: 64, 128>}, {pipeline_mode = #tpu.pipeline_mode<synchronous>, transform_indices = @transform_6, window_bounds = array<i64: 1, 128>}, {transform_indices = @transform_7, window_bounds = array<i64: 32, 128>}]} {
    %c0 = arith.constant 0 : index
    %c0_0 = arith.constant 0 : index
    %0 = vector.load %arg1[%c0, %c0_0] : memref<32x128xf32, #tpu.memory_space<vmem>>, vector<32x128xf32>
    %1 = arith.truncf %0 : vector<32x128xf32> to vector<32x128xbf16>
    %c0_1 = arith.constant 0 : index
    %c0_2 = arith.constant 0 : index
    %2 = vector.load %arg2[%c0_1, %c0_2] : memref<128x128xbf16, #tpu.memory_space<vmem>>, vector<128x128xbf16>
    %cst = arith.constant dense<0.000000e+00> : vector<32x128xf32>
    %3 = tpu.matmul %1, %2, %cst {dimension_numbers = #tpu.dot_dimension_numbers<[1], [0], [0], [1], [0, 0, 1, 1], [], []>} : vector<32x128xbf16>, vector<128x128xbf16>, vector<32x128xf32> -> vector<32x128xf32>
    %c0_3 = arith.constant 0 : index
    %c0_4 = arith.constant 0 : index
    %4 = vector.load %arg3[%c0_3, %c0_4] : memref<1x128xf32, #tpu.memory_space<vmem>>, vector<1x128xf32>
    %5 = vector.broadcast %4 : vector<1x128xf32> to vector<32x128xf32>
    %6 = arith.addf %3, %5 : vector<32x128xf32>
    %cst_5 = arith.constant 0.000000e+00 : f32
    %7 = vector.broadcast %cst_5 : f32 to vector<32x128xf32>
    %8 = arith.maximumf %6, %7 : vector<32x128xf32>
    %9 = arith.truncf %8 : vector<32x128xf32> to vector<32x128xbf16>
    %c0_6 = arith.constant 0 : index
    %c0_7 = arith.constant 0 : index
    %10 = vector.load %arg4[%c0_6, %c0_7] : memref<128x64xbf16, #tpu.memory_space<vmem>>, vector<128x64xbf16>
    %cst_8 = arith.constant dense<0.000000e+00> : vector<32x64xf32>
    %11 = tpu.matmul %9, %10, %cst_8 {dimension_numbers = #tpu.dot_dimension_numbers<[1], [0], [0], [1], [0, 0, 1, 1], [], []>} : vector<32x128xbf16>, vector<128x64xbf16>, vector<32x64xf32> -> vector<32x64xf32>
    %c0_9 = arith.constant 0 : index
    %c0_10 = arith.constant 0 : index
    %12 = vector.load %arg5[%c0_9, %c0_10] : memref<1x64xf32, #tpu.memory_space<vmem>>, vector<1x64xf32>
    %13 = vector.broadcast %12 : vector<1x64xf32> to vector<32x64xf32>
    %14 = arith.addf %11, %13 : vector<32x64xf32>
    %cst_11 = arith.constant 0.000000e+00 : f32
    %15 = vector.broadcast %cst_11 : f32 to vector<32x64xf32>
    %16 = arith.maximumf %14, %15 : vector<32x64xf32>
    %17 = arith.truncf %16 : vector<32x64xf32> to vector<32x64xbf16>
    %c0_12 = arith.constant 0 : index
    %c0_13 = arith.constant 0 : index
    %18 = vector.load %arg6[%c0_12, %c0_13] : memref<64x128xbf16, #tpu.memory_space<vmem>>, vector<64x128xbf16>
    %cst_14 = arith.constant dense<0.000000e+00> : vector<32x128xf32>
    %19 = tpu.matmul %17, %18, %cst_14 {dimension_numbers = #tpu.dot_dimension_numbers<[1], [0], [0], [1], [0, 0, 1, 1], [], []>} : vector<32x64xbf16>, vector<64x128xbf16>, vector<32x128xf32> -> vector<32x128xf32>
    %c0_15 = arith.constant 0 : index
    %c0_16 = arith.constant 0 : index
    %20 = vector.load %arg7[%c0_15, %c0_16] : memref<1x128xf32, #tpu.memory_space<vmem>>, vector<1x128xf32>
    %21 = vector.broadcast %20 : vector<1x128xf32> to vector<32x128xf32>
    %22 = arith.addf %19, %21 : vector<32x128xf32>
    %c0_17 = arith.constant 0 : index
    %c0_18 = arith.constant 0 : index
    %23 = vector.load %arg8[%c0_17, %c0_18] : memref<32x128xf32, #tpu.memory_space<vmem>>, vector<32x128xf32>
    tpu.vector_store %arg8[%c0_17, %c0_18], %22 {strides = array<i32>} : memref<32x128xf32, #tpu.memory_space<vmem>>, vector<32x128xf32>,
    return
  }
  func.func @transform_0(%arg0: i32) -> (i32, i32) {
    %c0_i32 = arith.constant 0 : i32
    %c0_i32_0 = arith.constant 0 : i32
    return %arg0, %c0_i32 : i32, i32
  }
  func.func @transform_1(%arg0: i32) -> (i32, i32) {
    %c0_i32 = arith.constant 0 : i32
    %c0_i32_0 = arith.constant 0 : i32
    %c0_i32_1 = arith.constant 0 : i32
    return %c0_i32, %c0_i32_0 : i32, i32
  }
  func.func @transform_2(%arg0: i32) -> (i32, i32) {
    %c0_i32 = arith.constant 0 : i32
    %c0_i32_0 = arith.constant 0 : i32
    %c0_i32_1 = arith.constant 0 : i32
    return %c0_i32, %c0_i32_0 : i32, i32
  }
  func.func @transform_3(%arg0: i32) -> (i32, i32) {
    %c0_i32 = arith.constant 0 : i32
    %c0_i32_0 = arith.constant 0 : i32
    %c0_i32_1 = arith.constant 0 : i32
    return %c0_i32, %c0_i32_0 : i32, i32
  }
  func.func @transform_4(%arg0: i32) -> (i32, i32) {
    %c0_i32 = arith.constant 0 : i32
    %c0_i32_0 = arith.constant 0 : i32
    %c0_i32_1 = arith.constant 0 : i32
    return %c0_i32, %c0_i32_0 : i32, i32
  }
  func.func @transform_5(%arg0: i32) -> (i32, i32) {
    %c0_i32 = arith.constant 0 : i32
    %c0_i32_0 = arith.constant 0 : i32
    %c0_i32_1 = arith.constant 0 : i32
    return %c0_i32, %c0_i32_0 : i32, i32
  }
  func.func @transform_6(%arg0: i32) -> (i32, i32) {
    %c0_i32 = arith.constant 0 : i32
    %c0_i32_0 = arith.constant 0 : i32
    %c0_i32_1 = arith.constant 0 : i32
    return %c0_i32, %c0_i32_0 : i32, i32
  }
  func.func @transform_7(%arg0: i32) -> (i32, i32) {
    %c0_i32 = arith.constant 0 : i32
    %c0_i32_0 = arith.constant 0 : i32
    return %arg0, %c0_i32 : i32, i32
  }
}

module attributes {stable_mosaic.version = 11 : i64} {
  func.func @kernel(%arg0: i32, %arg1: memref<32x3xf32, #tpu.memory_space<vmem>>, %arg2: memref<32x3xf32, #tpu.memory_space<vmem>>, %arg3: memref<1x1xf32, #tpu.memory_space<vmem>>) attributes {dimension_semantics = [#tpu.dimension_semantics<arbitrary>], iteration_bounds = array<i64: 1>, scalar_prefetch = 0 : i64, scratch_operands = 0 : i64, tpu.core_type = #tpu.core_type<tc>, window_params = [{transform_indices = @transform_0, window_bounds = array<i64: 32, 3>}, {transform_indices = @transform_1, window_bounds = array<i64: 32, 3>}, {pipeline_mode = #tpu.pipeline_mode<synchronous>, transform_indices = @transform_2, window_bounds = array<i64: 1, 1>}]} {
    %c0_i32 = arith.constant 0 : i32
    %0 = arith.cmpi eq, %arg0, %c0_i32 : i32
    %1 = arith.extui %0 : i1 to i32
    %c0_i32_0 = arith.constant 0 : i32
    %2 = arith.cmpi ne, %1, %c0_i32_0 : i32
    scf.if %2 {
      %cst_8 = arith.constant 0.000000e+00 : f32
      %15 = vector.broadcast %cst_8 : f32 to vector<1x1xf32>
      %c0_9 = arith.constant 0 : index
      %c0_10 = arith.constant 0 : index
      %16 = vector.load %arg3[%c0_9, %c0_10] : memref<1x1xf32, #tpu.memory_space<vmem>>, vector<1x1xf32>
      tpu.vector_store %arg3[%c0_9, %c0_10], %15 {strides = array<i32>} : memref<1x1xf32, #tpu.memory_space<vmem>>, vector<1x1xf32>,
    } else {
    }
    %c0 = arith.constant 0 : index
    %c0_1 = arith.constant 0 : index
    %3 = vector.load %arg1[%c0, %c0_1] : memref<32x3xf32, #tpu.memory_space<vmem>>, vector<32x3xf32>
    %c0_2 = arith.constant 0 : index
    %c0_3 = arith.constant 0 : index
    %4 = vector.load %arg2[%c0_2, %c0_3] : memref<32x3xf32, #tpu.memory_space<vmem>>, vector<32x3xf32>
    %5 = arith.subf %3, %4 : vector<32x3xf32>
    %c0_4 = arith.constant 0 : index
    %c0_5 = arith.constant 0 : index
    %6 = vector.load %arg3[%c0_4, %c0_5] : memref<1x1xf32, #tpu.memory_space<vmem>>, vector<1x1xf32>
    %7 = arith.mulf %5, %5 : vector<32x3xf32>
    %8 = vector.shape_cast %7 : vector<32x3xf32> to vector<1x32x3xf32>
    %cst = arith.constant dense<0.000000e+00> : vector<1xf32>
    %9 = vector.multi_reduction <add>, %8, %cst [1, 2] : vector<1x32x3xf32> to vector<1xf32>
    %10 = vector.shape_cast %9 : vector<1xf32> to vector<1x1x1xf32>
    %11 = vector.extract %10[0, 0, 0] : f32 from vector<1x1x1xf32>
    %12 = vector.broadcast %11 : f32 to vector<1x1xf32>
    %13 = arith.addf %6, %12 : vector<1x1xf32>
    %c0_6 = arith.constant 0 : index
    %c0_7 = arith.constant 0 : index
    %14 = vector.load %arg3[%c0_6, %c0_7] : memref<1x1xf32, #tpu.memory_space<vmem>>, vector<1x1xf32>
    tpu.vector_store %arg3[%c0_6, %c0_7], %13 {strides = array<i32>} : memref<1x1xf32, #tpu.memory_space<vmem>>, vector<1x1xf32>,
    return
  }
  func.func @transform_0(%arg0: i32) -> (i32, i32) {
    %c0_i32 = arith.constant 0 : i32
    %c0_i32_0 = arith.constant 0 : i32
    return %arg0, %c0_i32 : i32, i32
  }
  func.func @transform_1(%arg0: i32) -> (i32, i32) {
    %c0_i32 = arith.constant 0 : i32
    %c0_i32_0 = arith.constant 0 : i32
    return %arg0, %c0_i32 : i32, i32
  }
  func.func @transform_2(%arg0: i32) -> (i32, i32) {
    %c0_i32 = arith.constant 0 : i32
    %c0_i32_0 = arith.constant 0 : i32
    %c0_i32_1 = arith.constant 0 : i32
    return %c0_i32, %c0_i32_0 : i32, i32
  }
}

</mosaic_0001>

<llo_original>
// kernel: model_forward.23
$region0: #{model_forward.23}
  #allocation0 [shape = 'u32[]', space=smem, size = 0x4, offset = 0x4, fixed_abs, tag = 'smem constant byte address 0x4 - core index']
  #allocation1 [shape = 'u32[144,128]{1,0:T(1,128)}', space=vmem, size = 0x12000, scoped, tag = 'internal scratch']
  %s0 = inlined_call_operand.vmem [shape: f32[2,16,3], index: 0, kind: input, shape index: {}]
  %s1 = inlined_call_operand.vmem [shape: f32[2,3,16], index: 1, kind: input, shape index: {}]
  %s2 = inlined_call_operand.vmem [shape: f32[2,16,1], index: 2, kind: input, shape index: {}]
  %s3 = inlined_call_operand.vmem [shape: f32[2,1,16], index: 3, kind: input, shape index: {}]
  %s4 = inlined_call_operand.vmem [shape: f32[2,16,16], index: 4, kind: output, shape index: {}]
  %s5 = sld [smem:[#allocation0]]
  $region49: #{model_forward.23} parent=0
    _
  %s7 = ssub.s32 1, %s5
  %s8 = scalar_select 0, %s7, %s5
  loop: start=0, step=1, limit=4
  $region2: #{model_forward.23} parent=0 // loop_pre_header
    _
  $region3: #{model_forward.23} parent=0 // loop_header
    %s10 = sphi 0, %s14
    %p11 = scmp.ge.s32.totalorder %s10, 4
    %s17 = sphi 0, %s29
    %s18 = sphi 0, %s25
    %s19 = sphi 0, %s17
    %s20 = sphi 0, %s18
    %s21 = sphi 0, %s19
    %s22 = sphi 0, %s20
    %s34 = sphi 0, %s36
    %s37 = sphi 0, %s34
    %s38 = sphi 0, %s37
    %s54 = sphi 0, %s38
    %s60 = sphi 0, %s62
    %s63 = sphi 0, %s60
    %s64 = sphi 0, %s63
    %s80 = sphi 0, %s64
    %s88 = sphi 0, %s90
    %s91 = sphi 0, %s88
    %s92 = sphi 0, %s91
    %s108 = sphi 0, %s92
    %s114 = sphi 0, %s116
    %s117 = sphi 0, %s114
    %s118 = sphi 0, %s117
    %s134 = sphi 0, %s118
    %s142 = sphi 0, %s144
    %s145 = sphi 0, %s142
    %s146 = sphi 0, %s145
    %s162 = sphi 0, %s146
  $region4: #{model_forward.23} parent=0 // loop_header_branch
    %13 = sbr.rel (%p11) target = $region8
  $region5: #{model_forward.23} parent=0 // loop_body
    %s15 = ssub.s32 %s10, 1
    %s16 = ssub.s32 %s10, 2
    %s23 = sadd.s32 1, %s18
    %p24 = scmp.ge.s32.totalorder %s23, 1
    %s25 = scalar_select %p24, 0, %s23
    %s26 = sadd.s32 1, %s17
    %s27 = scalar_select %p24, %s26, %s17
    %p28 = scmp.ge.s32.totalorder %s27, 2
    %s29 = scalar_select %p28, 0, %s27
    %s30 = ssub.s32 %s17, %s29
    %s31 = ssub.s32 %s18, %s25
    %s32 = sor.u32 %s30, %s31
    %p33 = scmp.eq.s32.totalorder %s32, 0
    %s35 = sadd.s32 %s34, 1
    %s36 = scalar_select %p33, %s34, %s35
    %p39 = pneg %p33
    %p40 = scmp.eq.s32.totalorder %s10, 1
    %p41 = por %p39, %p40
    %p42 = scmp.ne.s32.totalorder %s34, %s37
    %p43 = scmp.eq.s32.totalorder %s10, 0
    %p44 = por %p42, %p43
    %p45 = scmp.ne.s32.totalorder %s34, %s37
    %p46 = scmp.eq.s32.totalorder %s15, 1
    %p47 = por %p45, %p46
    %p48 = scmp.ne.s32.totalorder %s37, %s38
    %p49 = scmp.eq.s32.totalorder %s15, 0
    %p50 = por %p48, %p49
    %p51 = scmp.ne.s32.totalorder %s37, %s38
    %p52 = scmp.eq.s32.totalorder %s16, 1
    %p53 = por %p51, %p52
    %p55 = scmp.ne.s32.totalorder %s38, %s54
    %p56 = scmp.eq.s32.totalorder %s16, 0
    %p57 = por %p55, %p56
    %s58 = ssub.s32 %s17, %s29
    %p59 = scmp.eq.s32.totalorder %s58, 0
    %s61 = sadd.s32 %s60, 1
    %s62 = scalar_select %p59, %s60, %s61
    %p65 = pneg %p59
    %p66 = scmp.eq.s32.totalorder %s10, 1
    %p67 = por %p65, %p66
    %p68 = scmp.ne.s32.totalorder %s60, %s63
    %p69 = scmp.eq.s32.totalorder %s10, 0
    %p70 = por %p68, %p69
    %p71 = scmp.ne.s32.totalorder %s60, %s63
    %p72 = scmp.eq.s32.totalorder %s15, 1
    %p73 = por %p71, %p72
    %p74 = scmp.ne.s32.totalorder %s63, %s64
    %p75 = scmp.eq.s32.totalorder %s15, 0
    %p76 = por %p74, %p75
    %p77 = scmp.ne.s32.totalorder %s63, %s64
    %p78 = scmp.eq.s32.totalorder %s16, 1
    %p79 = por %p77, %p78
    %p81 = scmp.ne.s32.totalorder %s64, %s80
    %p82 = scmp.eq.s32.totalorder %s16, 0
    %p83 = por %p81, %p82
    %s84 = ssub.s32 %s17, %s29
    %s85 = ssub.s32 %s18, %s25
    %s86 = sor.u32 %s84, %s85
    %p87 = scmp.eq.s32.totalorder %s86, 0
    %s89 = sadd.s32 %s88, 1
    %s90 = scalar_select %p87, %s88, %s89
    %p93 = pneg %p87
    %p94 = scmp.eq.s32.totalorder %s10, 1
    %p95 = por %p93, %p94
    %p96 = scmp.ne.s32.totalorder %s88, %s91
    %p97 = scmp.eq.s32.totalorder %s10, 0
    %p98 = por %p96, %p97
    %p99 = scmp.ne.s32.totalorder %s88, %s91
    %p100 = scmp.eq.s32.totalorder %s15, 1
    %p101 = por %p99, %p100
    %p102 = scmp.ne.s32.totalorder %s91, %s92
    %p103 = scmp.eq.s32.totalorder %s15, 0
    %p104 = por %p102, %p103
    %p105 = scmp.ne.s32.totalorder %s91, %s92
    %p106 = scmp.eq.s32.totalorder %s16, 1
    %p107 = por %p105, %p106
    %p109 = scmp.ne.s32.totalorder %s92, %s108
    %p110 = scmp.eq.s32.totalorder %s16, 0
    %p111 = por %p109, %p110
    %s112 = ssub.s32 %s17, %s29
    %p113 = scmp.eq.s32.totalorder %s112, 0
    %s115 = sadd.s32 %s114, 1
    %s116 = scalar_select %p113, %s114, %s115
    %p119 = pneg %p113
    %p120 = scmp.eq.s32.totalorder %s10, 1
    %p121 = por %p119, %p120
    %p122 = scmp.ne.s32.totalorder %s114, %s117
    %p123 = scmp.eq.s32.totalorder %s10, 0
    %p124 = por %p122, %p123
    %p125 = scmp.ne.s32.totalorder %s114, %s117
    %p126 = scmp.eq.s32.totalorder %s15, 1
    %p127 = por %p125, %p126
    %p128 = scmp.ne.s32.totalorder %s117, %s118
    %p129 = scmp.eq.s32.totalorder %s15, 0
    %p130 = por %p128, %p129
    %p131 = scmp.ne.s32.totalorder %s117, %s118
    %p132 = scmp.eq.s32.totalorder %s16, 1
    %p133 = por %p131, %p132
    %p135 = scmp.ne.s32.totalorder %s118, %s134
    %p136 = scmp.eq.s32.totalorder %s16, 0
    %p137 = por %p135, %p136
    %s138 = ssub.s32 %s17, %s29
    %s139 = ssub.s32 %s18, %s25
    %s140 = sor.u32 %s138, %s139
    %p141 = scmp.eq.s32.totalorder %s140, 0
    %s143 = sadd.s32 %s142, 1
    %s144 = scalar_select %p141, %s142, %s143
    %p147 = pneg %p141
    %p148 = scmp.eq.s32.totalorder %s10, 1
    %p149 = por %p147, %p148
    %p150 = scmp.ne.s32.totalorder %s142, %s145
    %p151 = scmp.eq.s32.totalorder %s10, 0
    %p152 = por %p150, %p151
    %p153 = scmp.ne.s32.totalorder %s142, %s145
    %p154 = scmp.eq.s32.totalorder %s15, 1
    %p155 = por %p153, %p154
    %p156 = scmp.ne.s32.totalorder %s145, %s146
    %p157 = scmp.eq.s32.totalorder %s15, 0
    %p158 = por %p156, %p157
    %p159 = scmp.ne.s32.totalorder %s145, %s146
    %p160 = scmp.eq.s32.totalorder %s16, 1
    %p161 = por %p159, %p160
    %p163 = scmp.ne.s32.totalorder %s146, %s162
    %p164 = scmp.eq.s32.totalorder %s16, 0
    %p165 = por %p163, %p164
    %p166 = scmp.le.s32.totalorder 1, %s10
    %p167 = scmp.lt.s32.totalorder %s10, 3
    %p168 = pnand %p166, %p167
    %p169 = pneg %p168
    // Predicated region
    $region9: #{model_forward.23} parent=5 // pred_check
      _
    $region10: #{model_forward.23} parent=5 // pred_check_branch
      %171 = sbr.rel (%p168) target = $region12
    $region11: #{model_forward.23} parent=5 // pred_region
      %s172 = ssub.s32 %s10, 1
    $region12: #{model_forward.23} parent=5 // pred_fallthru
      _
    %p173 = scmp.lt.s32.totalorder %s10, 2
    // Predicated region
    $region13: #{model_forward.23} parent=5 // pred_check
      %p174 = pneg %p173
    $region14: #{model_forward.23} parent=5 // pred_check_branch
      %176 = sbr.rel (%p174) target = $region16
    $region15: #{model_forward.23} parent=5 // pred_region
      // Predicated region
      $region17: #{model_forward.23} parent=15 // pred_check
        %p177 = pneg %p44
      $region18: #{model_forward.23} parent=15 // pred_check_branch
        %179 = sbr.rel (%p177) target = $region20
      $region19: #{model_forward.23} parent=15 // pred_region
        %s180 = smul.u32 2, %s18
        %p181 = scmp.lt.s32.totalorder %s17, 1
        %s182 = scalar_select %p181, %s17, 1
        %p183 = scmp.lt.s32.totalorder %s180, 1
        %s184 = scalar_select %p183, %s180, 1
        %s185 = smul.addr %s182, 2
        %s186 = sadd.s32 %s184, %s185
        %s187 = smul.addr %s186, 8
        %s188 = scalar_lea.vmem %s0, %s187
        %s189 = smul.u32 2, %s18
      $region20: #{model_forward.23} parent=15 // pred_fallthru
        _
      // Predicated region
      $region21: #{model_forward.23} parent=15 // pred_check
        %p190 = pneg %p70
      $region22: #{model_forward.23} parent=15 // pred_check_branch
        %192 = sbr.rel (%p190) target = $region24
      $region23: #{model_forward.23} parent=15 // pred_region
        %p193 = scmp.lt.s32.totalorder %s17, 1
        %s194 = scalar_select %p193, %s17, 1
        %s195 = smul.addr %s194, 4
        %s196 = scalar_lea.vmem %s1, %s195
      $region24: #{model_forward.23} parent=15 // pred_fallthru
        _
      // Predicated region
      $region25: #{model_forward.23} parent=15 // pred_check
        %p197 = pneg %p98
      $region26: #{model_forward.23} parent=15 // pred_check_branch
        %199 = sbr.rel (%p197) target = $region28
      $region27: #{model_forward.23} parent=15 // pred_region
        %s200 = smul.u32 2, %s18
        %p201 = scmp.lt.s32.totalorder %s17, 1
        %s202 = scalar_select %p201, %s17, 1
        %p203 = scmp.lt.s32.totalorder %s200, 1
        %s204 = scalar_select %p203, %s200, 1
        %s205 = smul.addr %s202, 2
        %s206 = sadd.s32 %s204, %s205
        %s207 = smul.addr %s206, 8
        %s208 = scalar_lea.vmem %s2, %s207
        %s209 = smul.u32 2, %s18
      $region28: #{model_forward.23} parent=15 // pred_fallthru
        _
      // Predicated region
      $region29: #{model_forward.23} parent=15 // pred_check
        %p210 = pneg %p124
      $region30: #{model_forward.23} parent=15 // pred_check_branch
        %212 = sbr.rel (%p210) target = $region32
      $region31: #{model_forward.23} parent=15 // pred_region
        %p213 = scmp.lt.s32.totalorder %s17, 1
        %s214 = scalar_select %p213, %s17, 1
        %s215 = scalar_lea.vmem %s3, %s214
      $region32: #{model_forward.23} parent=15 // pred_fallthru
        _
    $region16: #{model_forward.23} parent=5 // pred_fallthru
      _
    %p216 = scmp.le.s32.totalorder 1, %s10
    %p217 = scmp.lt.s32.totalorder %s10, 3
    %p218 = pnand %p216, %p217
    %p219 = pneg %p218
    // Predicated region
    $region33: #{model_forward.23} parent=5 // pred_check
      _
    $region34: #{model_forward.23} parent=5 // pred_check_branch
      %221 = sbr.rel (%p218) target = $region36
    $region35: #{model_forward.23} parent=5 // pred_region
      %s222 = ssub.s32 %s10, 1
      %s223 = smul.u32 2, %s20
      %p224 = scmp.lt.s32.totalorder %s19, 1
      %s225 = scalar_select %p224, %s19, 1
      %p226 = scmp.lt.s32.totalorder %s223, 1
      %s227 = scalar_select %p226, %s223, 1
      %s228 = smul.addr %s225, 2
      %s229 = sadd.s32 %s227, %s228
      %s230 = smul.addr %s229, 8
      %s231 = scalar_lea.vmem %s0, %s230
      %p232 = pneg %p50
      %p233 = pneg %p47
      %p234 = scmp.lt.s32.totalorder %s19, 1
      %s235 = scalar_select %p234, %s19, 1
      %s236 = smul.addr %s235, 4
      %s237 = scalar_lea.vmem %s1, %s236
      %p238 = pneg %p76
      %p239 = pneg %p73
      %s240 = smul.u32 2, %s20
      %p241 = scmp.lt.s32.totalorder %s19, 1
      %s242 = scalar_select %p241, %s19, 1
      %p243 = scmp.lt.s32.totalorder %s240, 1
      %s244 = scalar_select %p243, %s240, 1
      %s245 = smul.addr %s242, 2
      %s246 = sadd.s32 %s244, %s245
      %s247 = smul.addr %s246, 8
      %s248 = scalar_lea.vmem %s2, %s247
      %p249 = pneg %p104
      %p250 = pneg %p101
      %p251 = scmp.lt.s32.totalorder %s19, 1
      %s252 = scalar_select %p251, %s19, 1
      %s253 = scalar_lea.vmem %s3, %s252
      %p254 = pneg %p130
      %p255 = pneg %p127
      %p256 = pneg %p158
      %p257 = pneg %p155
      %s258 = smul.u32 2, %s20
      %p259 = scmp.lt.s32.totalorder %s19, 1
      %s260 = scalar_select %p259, %s19, 1
      %p261 = scmp.lt.s32.totalorder %s258, 1
      %s262 = scalar_select %p261, %s258, 1
      %s263 = smul.addr %s260, 2
      %s264 = sadd.s32 %s262, %s263
      %s265 = smul.addr %s264, 8
      %s266 = scalar_lea.vmem %s4, %s265
      %s267 = smul.u32 2, %s20
      %p268 = scmp.lt.s32.totalorder %s19, 1
      %s269 = scalar_select %p268, %s19, 1
      %p270 = scmp.lt.s32.totalorder %s267, 1
      %s271 = scalar_select %p270, %s267, 1
      %s272 = smul.addr %s269, 2
      %s273 = sadd.s32 %s271, %s272
      %s274 = smul.addr %s273, 8
      %s275 = scalar_lea.vmem %s0, %s274
      %s276 = smul.u32 2, %s20
      %p277 = scmp.lt.s32.totalorder %s19, 1
      %s278 = scalar_select %p277, %s19, 1
      %s279 = smul.addr %s278, 4
      %s280 = scalar_lea.vmem %s1, %s279
      %s281 = smul.u32 2, %s20
      %p282 = scmp.lt.s32.totalorder %s19, 1
      %s283 = scalar_select %p282, %s19, 1
      %p284 = scmp.lt.s32.totalorder %s281, 1
      %s285 = scalar_select %p284, %s281, 1
      %s286 = smul.addr %s283, 2
      %s287 = sadd.s32 %s285, %s286
      %s288 = smul.addr %s287, 8
      %s289 = scalar_lea.vmem %s2, %s288
      %s290 = smul.u32 2, %s20
      %p291 = scmp.lt.s32.totalorder %s19, 1
      %s292 = scalar_select %p291, %s19, 1
      %s293 = scalar_lea.vmem %s3, %s292
      %s294 = smul.u32 2, %s20
      %p295 = scmp.lt.s32.totalorder %s19, 1
      %s296 = scalar_select %p295, %s19, 1
      %p297 = scmp.lt.s32.totalorder %s294, 1
      %s298 = scalar_select %p297, %s294, 1
      %s299 = smul.addr %s296, 2
      %s300 = sadd.s32 %s298, %s299
      %s301 = smul.addr %s300, 8
      %s302 = scalar_lea.vmem %s4, %s301
      %s303 = smul.u32 2, %s20
      %v304 = vld [vmem:[%s275] sm:$0xff]
      %v305 = vld [vmem:[%s275 + $0x8] sm:$0xff]
      %v306 = vld [vmem:[%s280] sm:$0x7]
      %vm307 = vcmask 23552
      %v309 = vsel %vm307, %v304, 0
      %v312 = vsel %vm307, %v305, 0
      %vm314 = vcmask 1042432
      %v316 = vsel %vm314, %v306, 0
      %318 = vmatprep.subr.mxu0 0.0
      %319 = vmatpush1.msra.mxu0 0.0
      %320 = vmatprep.subr.mxu0 0.0
      %321 = vmatpush1.msra.mxu0 0.0
      %322 = vmatprep.subr.mxu0 0.0
      %323 = vmatpush1.msra.mxu0 0.0
      %324 = vmatprep.subr.mxu0 0.0
      %325 = vmatpush1.msra.mxu0 0.0
      %326 = vmatprep.subr.mxu0 0.0
      %327 = vmatpush1.msra.mxu0 0.0
      %328 = vmatprep.subr.mxu0 0.0
      %329 = vmatpush1.msra.mxu0 0.0
      %330 = vmatprep.subr.mxu0 0.0
      %331 = vmatpush1.msra.mxu0 0.0
      %332 = vmatprep.subr.mxu0 0.0
      %333 = vmatpush1.msra.mxu0 0.0
      %334 = vmatprep.subr.mxu0 0.0
      %335 = vmatpush1.msra.mxu0 0.0
      %336 = vmatprep.subr.mxu0 0.0
      %337 = vmatpush1.msra.mxu0 0.0
      %338 = vmatprep.subr.mxu0 0.0
      %339 = vmatpush1.msra.mxu0 0.0
      %340 = vmatprep.subr.mxu0 0.0
      %341 = vmatpush1.msra.mxu0 0.0
      %342 = vmatprep.subr.mxu0 0.0
      %343 = vmatpush1.msra.mxu0 0.0
      %344 = vmatprep.subr.mxu0 0.0
      %345 = vmatpush1.msra.mxu0 0.0
      %346 = vmatprep.subr.mxu0 0.0
      %347 = vmatpush1.msra.mxu0 0.0
      %348 = vmatprep.subr.mxu0 0.0
      %349 = vmatpush1.msra.mxu0 %v316
      %350 = vmatprep.subr.mxu0 0.0
      %351 = vmatpush2.msra.mxu0 0.0
      %352 = vmatprep.subr.mxu0 0.0
      %353 = vmatpush2.msra.mxu0 0.0
      %354 = vmatprep.subr.mxu0 0.0
      %355 = vmatpush2.msra.mxu0 0.0
      %356 = vmatprep.subr.mxu0 0.0
      %357 = vmatpush2.msra.mxu0 0.0
      %358 = vmatprep.subr.mxu0 0.0
      %359 = vmatpush2.msra.mxu0 0.0
      %360 = vmatprep.subr.mxu0 0.0
      %361 = vmatpush2.msra.mxu0 0.0
      %362 = vmatprep.subr.mxu0 0.0
      %363 = vmatpush2.msra.mxu0 0.0
      %364 = vmatprep.subr.mxu0 0.0
      %365 = vmatpush2.msra.mxu0 0.0
      %366 = vmatprep.subr.mxu0 0.0
      %367 = vmatpush2.msra.mxu0 0.0
      %368 = vmatprep.subr.mxu0 0.0
      %369 = vmatpush2.msra.mxu0 0.0
      %370 = vmatprep.subr.mxu0 0.0
      %371 = vmatpush2.msra.mxu0 0.0
      %372 = vmatprep.subr.mxu0 0.0
      %373 = vmatpush2.msra.mxu0 0.0
      %374 = vmatprep.subr.mxu0 0.0
      %375 = vmatpush2.msra.mxu0 0.0
      %376 = vmatprep.subr.mxu0 0.0
      %377 = vmatpush2.msra.mxu0 0.0
      %378 = vmatprep.subr.mxu0 0.0
      %379 = vmatpush2.msra.mxu0 0.0
      %380 = vmatprep.subr.mxu0 0.0
      %381 = vmatpush2.msra.mxu0 0.0
      %382 = vmatprep.mubr.f32.mxu0 0.0
      %383 = vmatmul.mubr.f32.gmra.mxu0 %v309
      %v384 = vpop.f32.mrf.mxu0
      %v385 = vadd.f32 0.0, %v384
      %v386 = vpop.f32.mrf.mxu0
      %387 = vmatprep.mubr.f32.mxu0 0.0
      %388 = vmatmul.mubr.f32.gmra.mxu0 %v312
      %v389 = vpop.f32.mrf.mxu0
      %v390 = vadd.f32 0.0, %v389
      %v391 = vpop.f32.mrf.mxu0
      %392 = vdwg.mxu0
      %v393 = vmul.f32 %v385, 2.0
      %v394 = vmul.f32 %v390, 2.0
      %v395 = vld [vmem:[%s289] sm:$0xff]
      %v396 = vld [vmem:[%s289 + $0x8] sm:$0xff]
      %398 = vset.pattern.permute.xlu0 0
      %399 = vperm.xlu0 %398, %v395
      %v400 = vpop.permute.xlu0 %399
      %403 = vset.pattern.permute.xlu0 0
      %404 = vperm.xlu0 %403, %v396
      %v405 = vpop.permute.xlu0 %404
      %v407 = vsub.f32 %v393, %v400
      %v408 = vsub.f32 %v394, %v405
      %v409 = vld [vmem:[%s293] sm:$0x1]
      %v411 = vlaneseq
      %v412 = vshrl.u32 %v411, 7
      %v413 = vsub.s32 0, %v412
      %v414 = vrot.slane %v409, %v413
      %v416 = vsub.f32 %v407, %v414
      %v417 = vsub.f32 %v408, %v414
      %vm418 = vcmask 130048
      %419 = vst.msk [vmem:[%s302] sm:$0xff] %vm418, %v416
      %420 = vst.msk [vmem:[%s302 + $0x8] sm:$0xff] %vm418, %v417
      %s421 = smul.u32 2, %s20
      %p422 = scmp.lt.s32.totalorder %s19, 1
      %s423 = scalar_select %p422, %s19, 1
      %p424 = scmp.lt.s32.totalorder %s421, 1
      %s425 = scalar_select %p424, %s421, 1
      %s426 = smul.addr %s423, 2
      %s427 = sadd.s32 %s425, %s426
      %s428 = smul.addr %s427, 8
      %s429 = scalar_lea.vmem %s4, %s428
      // Predicated region
      $region37: #{model_forward.23} parent=35 // pred_check
        %p430 = pneg %p155
      $region38: #{model_forward.23} parent=35 // pred_check_branch
        %432 = sbr.rel (%p430) target = $region40
      $region39: #{model_forward.23} parent=35 // pred_region
        %s433 = smul.u32 2, %s20
      $region40: #{model_forward.23} parent=35 // pred_fallthru
        _
    $region36: #{model_forward.23} parent=5 // pred_fallthru
      _
    %p434 = scmp.le.s32.totalorder 2, %s10
    // Predicated region
    $region41: #{model_forward.23} parent=5 // pred_check
      %p435 = pneg %p434
    $region42: #{model_forward.23} parent=5 // pred_check_branch
      %437 = sbr.rel (%p435) target = $region44
    $region43: #{model_forward.23} parent=5 // pred_region
      %s438 = ssub.s32 %s10, 2
      // Predicated region
      $region45: #{model_forward.23} parent=43 // pred_check
        %p439 = pneg %p161
      $region46: #{model_forward.23} parent=43 // pred_check_branch
        %441 = sbr.rel (%p439) target = $region48
      $region47: #{model_forward.23} parent=43 // pred_region
        %s442 = smul.u32 2, %s22
        %p443 = scmp.lt.s32.totalorder %s21, 1
        %s444 = scalar_select %p443, %s21, 1
        %p445 = scmp.lt.s32.totalorder %s442, 1
        %s446 = scalar_select %p445, %s442, 1
        %s447 = smul.addr %s444, 2
        %s448 = sadd.s32 %s446, %s447
        %s449 = smul.addr %s448, 8
        %s450 = scalar_lea.vmem %s4, %s449
      $region48: #{model_forward.23} parent=43 // pred_fallthru
        _
    $region44: #{model_forward.23} parent=5 // pred_fallthru
      _
  $region6: #{model_forward.23} parent=0 // loop_footer
    %s14 = sadd.s32 1, %s10
  $region7: #{model_forward.23} parent=0 // loop_footer_branch
    %9 = sbr.rel target = $region3
  $region8: #{model_forward.23} parent=0 // loop_exit
    _

// kernel: model_forward.33
$region0: #{model_forward.33}
  #allocation0 [shape = 'u32[]', space=smem, size = 0x4, offset = 0x4, fixed_abs, tag = 'smem constant byte address 0x4 - core index']
  #allocation1 [shape = 'u32[144,128]{1,0:T(1,128)}', space=vmem, size = 0x12000, scoped, tag = 'internal scratch']
  %s0 = inlined_call_operand.vmem [shape: f32[32,128], index: 0, kind: input, shape index: {}]
  %s1 = inlined_call_operand.vmem [shape: f32[1,128], index: 1, kind: input, shape index: {}]
  %s2 = inlined_call_operand.vmem [shape: f32[1,128], index: 2, kind: input, shape index: {}]
  %s3 = inlined_call_operand.vmem [shape: f32[32,128], index: 3, kind: output, shape index: {}]
  %s4 = sld [smem:[#allocation0]]
  $region22: #{model_forward.33} parent=0
    _
  %s6 = ssub.s32 1, %s4
  %s7 = scalar_select 0, %s6, %s4
  // Predicated region
  $region2: #{model_forward.33} parent=0 // pred_check
    _
  $region3: #{model_forward.33} parent=0 // pred_check_branch
    %9 = sbr.rel (0) target = $region5
  $region4: #{model_forward.33} parent=0 // pred_region
    _
  $region5: #{model_forward.33} parent=0 // pred_fallthru
    _
  // Predicated region
  $region6: #{model_forward.33} parent=0 // pred_check
    _
  $region7: #{model_forward.33} parent=0 // pred_check_branch
    %11 = sbr.rel (0) target = $region9
  $region8: #{model_forward.33} parent=0 // pred_region
    _
  $region9: #{model_forward.33} parent=0 // pred_fallthru
    _
  // Predicated region
  $region10: #{model_forward.33} parent=0 // pred_check
    _
  $region11: #{model_forward.33} parent=0 // pred_check_branch
    %13 = sbr.rel (0) target = $region13
  $region12: #{model_forward.33} parent=0 // pred_region
    _
  $region13: #{model_forward.33} parent=0 // pred_fallthru
    _
  %v14 = vld [vmem:[%s0] sm:$0xff]
  %v15 = vld [vmem:[%s0 + $0x8] sm:$0xff]
  %v16 = vld [vmem:[%s0 + $0x10] sm:$0xff]
  %v17 = vld [vmem:[%s0 + $0x18] sm:$0xff]
  %18 = vadd.xlane.f32.xlu0 %v14
  %v19 = vpop.xlane.xlu0 %18
  %20 = vadd.xlane.f32.xlu0 %v15
  %v21 = vpop.xlane.xlu0 %20
  %22 = vadd.xlane.f32.xlu0 %v16
  %v23 = vpop.xlane.xlu0 %22
  %24 = vadd.xlane.f32.xlu0 %v17
  %v25 = vpop.xlane.xlu0 %24
  %v26 = vrcp.pop 128.0
  %v27 = vmul.f32 %v19, %v26
  %v28 = vmul.f32 %v21, %v26
  %v29 = vmul.f32 %v23, %v26
  %v30 = vmul.f32 %v25, %v26
  %v31 = vsub.f32 %v14, %v27
  %v32 = vsub.f32 %v15, %v28
  %v33 = vsub.f32 %v16, %v29
  %v34 = vsub.f32 %v17, %v30
  %v35 = vmul.f32 %v31, %v31
  %v36 = vmul.f32 %v32, %v32
  %v37 = vmul.f32 %v33, %v33
  %v38 = vmul.f32 %v34, %v34
  %39 = vadd.xlane.f32.xlu0 %v35
  %v40 = vpop.xlane.xlu0 %39
  %41 = vadd.xlane.f32.xlu0 %v36
  %v42 = vpop.xlane.xlu0 %41
  %43 = vadd.xlane.f32.xlu0 %v37
  %v44 = vpop.xlane.xlu0 %43
  %45 = vadd.xlane.f32.xlu0 %v38
  %v46 = vpop.xlane.xlu0 %45
  %v47 = vmul.f32 %v40, %v26
  %v48 = vmul.f32 %v42, %v26
  %v49 = vmul.f32 %v44, %v26
  %v50 = vmul.f32 %v46, %v26
  %v51 = vadd.f32 %v47, 1e-05
  %v52 = vadd.f32 %v48, 1e-05
  %v53 = vadd.f32 %v49, 1e-05
  %v54 = vadd.f32 %v50, 1e-05
  %v55 = vrsqrt.pop %v51
  %v56 = vrsqrt.pop %v52
  %v57 = vrsqrt.pop %v53
  %v58 = vrsqrt.pop %v54
  %v59 = vmul.f32 %v31, %v55
  %v60 = vmul.f32 %v32, %v56
  %v61 = vmul.f32 %v33, %v57
  %v62 = vmul.f32 %v34, %v58
  %v63 = vld [vmem:[%s1] sm:$0x1]
  %v65 = vlaneseq
  %v66 = vshrl.u32 %v65, 7
  %v67 = vsub.s32 0, %v66
  %v68 = vrot.slane %v63, %v67
  %v70 = vmul.f32 %v59, %v68
  %v71 = vmul.f32 %v60, %v68
  %v72 = vmul.f32 %v61, %v68
  %v73 = vmul.f32 %v62, %v68
  %v74 = vld [vmem:[%s2] sm:$0x1]
  %v76 = vlaneseq
  %v77 = vshrl.u32 %v76, 7
  %v78 = vsub.s32 0, %v77
  %v79 = vrot.slane %v74, %v78
  %v81 = vadd.f32 %v70, %v79
  %v82 = vadd.f32 %v71, %v79
  %v83 = vadd.f32 %v72, %v79
  %v84 = vadd.f32 %v73, %v79
  %85 = vst [vmem:[%s3] sm:$0xff] %v81
  %86 = vst [vmem:[%s3 + $0x8] sm:$0xff] %v82
  %87 = vst [vmem:[%s3 + $0x10] sm:$0xff] %v83
  %88 = vst [vmem:[%s3 + $0x18] sm:$0xff] %v84
  // Predicated region
  $region14: #{model_forward.33} parent=0 // pred_check
    _
  $region15: #{model_forward.33} parent=0 // pred_check_branch
    %90 = sbr.rel (0) target = $region17
  $region16: #{model_forward.33} parent=0 // pred_region
    _
  $region17: #{model_forward.33} parent=0 // pred_fallthru
    _
  // Predicated region
  $region18: #{model_forward.33} parent=0 // pred_check
    _
  $region19: #{model_forward.33} parent=0 // pred_check_branch
    %92 = sbr.rel (0) target = $region21
  $region20: #{model_forward.33} parent=0 // pred_region
    _
  $region21: #{model_forward.33} parent=0 // pred_fallthru
    _

// kernel: model_forward.24
$region0: #{model_forward.24}
  #allocation0 [shape = 'u32[]', space=smem, size = 0x4, offset = 0x4, fixed_abs, tag = 'smem constant byte address 0x4 - core index']
  #allocation1 [shape = 'u32[144,128]{1,0:T(1,128)}', space=vmem, size = 0x12000, scoped, tag = 'internal scratch']
  %s0 = inlined_call_operand.vmem [shape: f32[4,32,6], index: 0, kind: input, shape index: {}]
  %s1 = inlined_call_operand.vmem [shape: bf16[6,64], index: 1, kind: input, shape index: {}]
  %s2 = inlined_call_operand.vmem [shape: f32[1,64], index: 2, kind: input, shape index: {}]
  %s3 = inlined_call_operand.vmem [shape: bf16[64,64], index: 3, kind: input, shape index: {}]
  %s4 = inlined_call_operand.vmem [shape: f32[1,64], index: 4, kind: input, shape index: {}]
  %s5 = inlined_call_operand.vmem [shape: bf16[64,128], index: 5, kind: input, shape index: {}]
  %s6 = inlined_call_operand.vmem [shape: f32[1,128], index: 6, kind: input, shape index: {}]
  %s7 = inlined_call_operand.vmem [shape: bf16[128,256], index: 7, kind: input, shape index: {}]
  %s8 = inlined_call_operand.vmem [shape: f32[1,256], index: 8, kind: input, shape index: {}]
  %s9 = inlined_call_operand.vmem [shape: bf16[512,128], index: 9, kind: input, shape index: {}]
  %s10 = inlined_call_operand.vmem [shape: f32[1,128], index: 10, kind: input, shape index: {}]
  %s11 = inlined_call_operand.vmem [shape: f32[32,128], index: 11, kind: output, shape index: {}]
  %s12 = sld [smem:[#allocation0]]
  $region54: #{model_forward.24} parent=0
    _
  %s14 = ssub.s32 1, %s12
  %s15 = scalar_select 0, %s14, %s12
  // Predicated region
  $region2: #{model_forward.24} parent=0 // pred_check
    _
  $region3: #{model_forward.24} parent=0 // pred_check_branch
    %17 = sbr.rel (0) target = $region5
  $region4: #{model_forward.24} parent=0 // pred_region
    _
  $region5: #{model_forward.24} parent=0 // pred_fallthru
    _
  // Predicated region
  $region6: #{model_forward.24} parent=0 // pred_check
    _
  $region7: #{model_forward.24} parent=0 // pred_check_branch
    %19 = sbr.rel (0) target = $region9
  $region8: #{model_forward.24} parent=0 // pred_region
    _
  $region9: #{model_forward.24} parent=0 // pred_fallthru
    _
  // Predicated region
  $region10: #{model_forward.24} parent=0 // pred_check
    _
  $region11: #{model_forward.24} parent=0 // pred_check_branch
    %21 = sbr.rel (0) target = $region13
  $region12: #{model_forward.24} parent=0 // pred_region
    _
  $region13: #{model_forward.24} parent=0 // pred_fallthru
    _
  // Predicated region
  $region14: #{model_forward.24} parent=0 // pred_check
    _
  $region15: #{model_forward.24} parent=0 // pred_check_branch
    %23 = sbr.rel (0) target = $region17
  $region16: #{model_forward.24} parent=0 // pred_region
    _
  $region17: #{model_forward.24} parent=0 // pred_fallthru
    _
  // Predicated region
  $region18: #{model_forward.24} parent=0 // pred_check
    _
  $region19: #{model_forward.24} parent=0 // pred_check_branch
    %25 = sbr.rel (0) target = $region21
  $region20: #{model_forward.24} parent=0 // pred_region
    _
  $region21: #{model_forward.24} parent=0 // pred_fallthru
    _
  // Predicated region
  $region22: #{model_forward.24} parent=0 // pred_check
    _
  $region23: #{model_forward.24} parent=0 // pred_check_branch
    %27 = sbr.rel (0) target = $region25
  $region24: #{model_forward.24} parent=0 // pred_region
    _
  $region25: #{model_forward.24} parent=0 // pred_fallthru
    _
  // Predicated region
  $region26: #{model_forward.24} parent=0 // pred_check
    _
  $region27: #{model_forward.24} parent=0 // pred_check_branch
    %29 = sbr.rel (0) target = $region29
  $region28: #{model_forward.24} parent=0 // pred_region
    _
  $region29: #{model_forward.24} parent=0 // pred_fallthru
    _
  // Predicated region
  $region30: #{model_forward.24} parent=0 // pred_check
    _
  $region31: #{model_forward.24} parent=0 // pred_check_branch
    %31 = sbr.rel (0) target = $region33
  $region32: #{model_forward.24} parent=0 // pred_region
    _
  $region33: #{model_forward.24} parent=0 // pred_fallthru
    _
  // Predicated region
  $region34: #{model_forward.24} parent=0 // pred_check
    _
  $region35: #{model_forward.24} parent=0 // pred_check_branch
    %33 = sbr.rel (0) target = $region37
  $region36: #{model_forward.24} parent=0 // pred_region
    _
  $region37: #{model_forward.24} parent=0 // pred_fallthru
    _
  // Predicated region
  $region38: #{model_forward.24} parent=0 // pred_check
    _
  $region39: #{model_forward.24} parent=0 // pred_check_branch
    %35 = sbr.rel (0) target = $region41
  $region40: #{model_forward.24} parent=0 // pred_region
    _
  $region41: #{model_forward.24} parent=0 // pred_fallthru
    _
  // Predicated region
  $region42: #{model_forward.24} parent=0 // pred_check
    _
  $region43: #{model_forward.24} parent=0 // pred_check_branch
    %37 = sbr.rel (0) target = $region45
  $region44: #{model_forward.24} parent=0 // pred_region
    _
  $region45: #{model_forward.24} parent=0 // pred_fallthru
    _
  %v39 = vld [vmem:[%s0] sm:$0xff]
  %v40 = vld [vmem:[%s0 + $0x8] sm:$0xff]
  %v41 = vld [vmem:[%s0 + $0x10] sm:$0xff]
  %v42 = vld [vmem:[%s0 + $0x18] sm:$0xff]
  %s43 = scalar_lea.vmem %s0, 32
  %v44 = vld [vmem:[%s43] sm:$0xff]
  %v45 = vld [vmem:[%s43 + $0x8] sm:$0xff]
  %v46 = vld [vmem:[%s43 + $0x10] sm:$0xff]
  %v47 = vld [vmem:[%s43 + $0x18] sm:$0xff]
  %s48 = scalar_lea.vmem %s0, 64
  %v49 = vld [vmem:[%s48] sm:$0xff]
  %v50 = vld [vmem:[%s48 + $0x8] sm:$0xff]
  %v51 = vld [vmem:[%s48 + $0x10] sm:$0xff]
  %v52 = vld [vmem:[%s48 + $0x18] sm:$0xff]
  %s53 = scalar_lea.vmem %s0, 96
  %v54 = vld [vmem:[%s53] sm:$0xff]
  %v55 = vld [vmem:[%s53 + $0x8] sm:$0xff]
  %v56 = vld [vmem:[%s53 + $0x10] sm:$0xff]
  %v57 = vld [vmem:[%s53 + $0x18] sm:$0xff]
  %v58 = vld [vmem:[%s1] sm:$0x7]
  %v59 = vld [vmem:[%s2] sm:$0x1]
  %v60 = vpack.c.bf16 %v40, %v39
  %v61 = vpack.c.bf16 %v42, %v41
  %v63 = vlaneseq
  %v64 = vshrl.u32 %v63, 7
  %v65 = vsub.s32 0, %v64
  %v66 = vrot.slane %v59, %v65
  %vm68 = vcmask 48128
  %v70 = vsel %vm68, %v60, 0
  %v73 = vsel %vm68, %v61, 0
  %vm75 = vcmask 1042432
  %v77 = vsel %vm75, %v58, 0
  %79 = vmatprep.subr.bf16.mxu0 0
  %80 = vmatpush1.bf16.msra.mxu0 0
  %81 = vmatprep.subr.bf16.mxu0 0
  %82 = vmatpush1.bf16.msra.mxu0 0
  %83 = vmatprep.subr.bf16.mxu0 0
  %84 = vmatpush1.bf16.msra.mxu0 0
  %85 = vmatprep.subr.bf16.mxu0 0
  %86 = vmatpush1.bf16.msra.mxu0 0
  %87 = vmatprep.subr.bf16.mxu0 0
  %88 = vmatpush1.bf16.msra.mxu0 0
  %89 = vmatprep.subr.bf16.mxu0 0
  %90 = vmatpush1.bf16.msra.mxu0 0
  %91 = vmatprep.subr.bf16.mxu0 0
  %92 = vmatpush1.bf16.msra.mxu0 0
  %93 = vmatprep.subr.bf16.mxu0 0
  %94 = vmatpush1.bf16.msra.mxu0 %v77
  %95 = vmatprep.subr.bf16.mxu0 0
  %96 = vmatpush2.bf16.msra.mxu0 0
  %97 = vmatprep.subr.bf16.mxu0 0
  %98 = vmatpush2.bf16.msra.mxu0 0
  %99 = vmatprep.subr.bf16.mxu0 0
  %100 = vmatpush2.bf16.msra.mxu0 0
  %101 = vmatprep.subr.bf16.mxu0 0
  %102 = vmatpush2.bf16.msra.mxu0 0
  %103 = vmatprep.subr.bf16.mxu0 0
  %104 = vmatpush2.bf16.msra.mxu0 0
  %105 = vmatprep.subr.bf16.mxu0 0
  %106 = vmatpush2.bf16.msra.mxu0 0
  %107 = vmatprep.subr.bf16.mxu0 0
  %108 = vmatpush2.bf16.msra.mxu0 0
  %109 = vmatprep.subr.bf16.mxu0 0
  %110 = vmatpush2.bf16.msra.mxu0 0
  %111 = vmatprep.mubr.bf16.mxu0 0
  %112 = vmatmul.mubr.bf16.gmra.mxu0 %v70
  %v113 = vpop.f32.mrf.mxu0
  %v114 = vadd.f32 %v66, %v113
  %v115 = vpop.f32.mrf.mxu0
  %v116 = vpop.f32.mrf.mxu0
  %v117 = vadd.f32 %v66, %v116
  %v118 = vpop.f32.mrf.mxu0
  %119 = vmatprep.mubr.bf16.mxu0 0
  %120 = vmatmul.mubr.bf16.gmra.mxu0 %v73
  %v121 = vpop.f32.mrf.mxu0
  %v122 = vadd.f32 %v66, %v121
  %v123 = vpop.f32.mrf.mxu0
  %v124 = vpop.f32.mrf.mxu0
  %v125 = vadd.f32 %v66, %v124
  %v126 = vpop.f32.mrf.mxu0
  %127 = vdwg.mxu0
  %vm128 = vcmp.gt.f32.partialorder %v114, 0.0
  %vm129 = vcmp.gt.f32.partialorder %v117, 0.0
  %vm130 = vcmp.gt.f32.partialorder %v122, 0.0
  %vm131 = vcmp.gt.f32.partialorder %v125, 0.0
  %v132 = vmul.f32 %v114, 0.2
  %v133 = vmul.f32 %v117, 0.2
  %v134 = vmul.f32 %v122, 0.2
  %v135 = vmul.f32 %v125, 0.2
  %v136 = vsel %vm128, %v114, %v132
  %v137 = vsel %vm129, %v117, %v133
  %v138 = vsel %vm130, %v122, %v134
  %v139 = vsel %vm131, %v125, %v135
  %v140 = vpack.c.bf16 %v45, %v44
  %v141 = vpack.c.bf16 %v47, %v46
  %v143 = vsel %vm68, %v140, 0
  %v146 = vsel %vm68, %v141, 0
  %148 = vmatprep.subr.bf16.mxu0 0
  %149 = vmatpush1.bf16.msra.mxu0 0
  %150 = vmatprep.subr.bf16.mxu0 0
  %151 = vmatpush1.bf16.msra.mxu0 0
  %152 = vmatprep.subr.bf16.mxu0 0
  %153 = vmatpush1.bf16.msra.mxu0 0
  %154 = vmatprep.subr.bf16.mxu0 0
  %155 = vmatpush1.bf16.msra.mxu0 0
  %156 = vmatprep.subr.bf16.mxu0 0
  %157 = vmatpush1.bf16.msra.mxu0 0
  %158 = vmatprep.subr.bf16.mxu0 0
  %159 = vmatpush1.bf16.msra.mxu0 0
  %160 = vmatprep.subr.bf16.mxu0 0
  %161 = vmatpush1.bf16.msra.mxu0 0
  %162 = vmatprep.subr.bf16.mxu0 0
  %163 = vmatpush1.bf16.msra.mxu0 %v77
  %164 = vmatprep.subr.bf16.mxu0 0
  %165 = vmatpush2.bf16.msra.mxu0 0
  %166 = vmatprep.subr.bf16.mxu0 0
  %167 = vmatpush2.bf16.msra.mxu0 0
  %168 = vmatprep.subr.bf16.mxu0 0
  %169 = vmatpush2.bf16.msra.mxu0 0
  %170 = vmatprep.subr.bf16.mxu0 0
  %171 = vmatpush2.bf16.msra.mxu0 0
  %172 = vmatprep.subr.bf16.mxu0 0
  %173 = vmatpush2.bf16.msra.mxu0 0
  %174 = vmatprep.subr.bf16.mxu0 0
  %175 = vmatpush2.bf16.msra.mxu0 0
  %176 = vmatprep.subr.bf16.mxu0 0
  %177 = vmatpush2.bf16.msra.mxu0 0
  %178 = vmatprep.subr.bf16.mxu0 0
  %179 = vmatpush2.bf16.msra.mxu0 0
  %180 = vmatprep.mubr.bf16.mxu0 0
  %181 = vmatmul.mubr.bf16.gmra.mxu0 %v143
  %v182 = vpop.f32.mrf.mxu0
  %v183 = vadd.f32 %v66, %v182
  %v184 = vpop.f32.mrf.mxu0
  %v185 = vpop.f32.mrf.mxu0
  %v186 = vadd.f32 %v66, %v185
  %v187 = vpop.f32.mrf.mxu0
  %188 = vmatprep.mubr.bf16.mxu0 0
  %189 = vmatmul.mubr.bf16.gmra.mxu0 %v146
  %v190 = vpop.f32.mrf.mxu0
  %v191 = vadd.f32 %v66, %v190
  %v192 = vpop.f32.mrf.mxu0
  %v193 = vpop.f32.mrf.mxu0
  %v194 = vadd.f32 %v66, %v193
  %v195 = vpop.f32.mrf.mxu0
  %196 = vdwg.mxu0
  %vm197 = vcmp.gt.f32.partialorder %v183, 0.0
  %vm198 = vcmp.gt.f32.partialorder %v186, 0.0
  %vm199 = vcmp.gt.f32.partialorder %v191, 0.0
  %vm200 = vcmp.gt.f32.partialorder %v194, 0.0
  %v201 = vmul.f32 %v183, 0.2
  %v202 = vmul.f32 %v186, 0.2
  %v203 = vmul.f32 %v191, 0.2
  %v204 = vmul.f32 %v194, 0.2
  %v205 = vsel %vm197, %v183, %v201
  %v206 = vsel %vm198, %v186, %v202
  %v207 = vsel %vm199, %v191, %v203
  %v208 = vsel %vm200, %v194, %v204
  %v209 = vpack.c.bf16 %v50, %v49
  %v210 = vpack.c.bf16 %v52, %v51
  %v212 = vsel %vm68, %v209, 0
  %v215 = vsel %vm68, %v210, 0
  %217 = vmatprep.subr.bf16.mxu0 0
  %218 = vmatpush1.bf16.msra.mxu0 0
  %219 = vmatprep.subr.bf16.mxu0 0
  %220 = vmatpush1.bf16.msra.mxu0 0
  %221 = vmatprep.subr.bf16.mxu0 0
  %222 = vmatpush1.bf16.msra.mxu0 0
  %223 = vmatprep.subr.bf16.mxu0 0
  %224 = vmatpush1.bf16.msra.mxu0 0
  %225 = vmatprep.subr.bf16.mxu0 0
  %226 = vmatpush1.bf16.msra.mxu0 0
  %227 = vmatprep.subr.bf16.mxu0 0
  %228 = vmatpush1.bf16.msra.mxu0 0
  %229 = vmatprep.subr.bf16.mxu0 0
  %230 = vmatpush1.bf16.msra.mxu0 0
  %231 = vmatprep.subr.bf16.mxu0 0
  %232 = vmatpush1.bf16.msra.mxu0 %v77
  %233 = vmatprep.subr.bf16.mxu0 0
  %234 = vmatpush2.bf16.msra.mxu0 0
  %235 = vmatprep.subr.bf16.mxu0 0
  %236 = vmatpush2.bf16.msra.mxu0 0
  %237 = vmatprep.subr.bf16.mxu0 0
  %238 = vmatpush2.bf16.msra.mxu0 0
  %239 = vmatprep.subr.bf16.mxu0 0
  %240 = vmatpush2.bf16.msra.mxu0 0
  %241 = vmatprep.subr.bf16.mxu0 0
  %242 = vmatpush2.bf16.msra.mxu0 0
  %243 = vmatprep.subr.bf16.mxu0 0
  %244 = vmatpush2.bf16.msra.mxu0 0
  %245 = vmatprep.subr.bf16.mxu0 0
  %246 = vmatpush2.bf16.msra.mxu0 0
  %247 = vmatprep.subr.bf16.mxu0 0
  %248 = vmatpush2.bf16.msra.mxu0 0
  %249 = vmatprep.mubr.bf16.mxu0 0
  %250 = vmatmul.mubr.bf16.gmra.mxu0 %v212
  %v251 = vpop.f32.mrf.mxu0
  %v252 = vadd.f32 %v66, %v251
  %v253 = vpop.f32.mrf.mxu0
  %v254 = vpop.f32.mrf.mxu0
  %v255 = vadd.f32 %v66, %v254
  %v256 = vpop.f32.mrf.mxu0
  %257 = vmatprep.mubr.bf16.mxu0 0
  %258 = vmatmul.mubr.bf16.gmra.mxu0 %v215
  %v259 = vpop.f32.mrf.mxu0
  %v260 = vadd.f32 %v66, %v259
  %v261 = vpop.f32.mrf.mxu0
  %v262 = vpop.f32.mrf.mxu0
  %v263 = vadd.f32 %v66, %v262
  %v264 = vpop.f32.mrf.mxu0
  %265 = vdwg.mxu0
  %vm266 = vcmp.gt.f32.partialorder %v252, 0.0
  %vm267 = vcmp.gt.f32.partialorder %v255, 0.0
  %vm268 = vcmp.gt.f32.partialorder %v260, 0.0
  %vm269 = vcmp.gt.f32.partialorder %v263, 0.0
  %v270 = vmul.f32 %v252, 0.2
  %v271 = vmul.f32 %v255, 0.2
  %v272 = vmul.f32 %v260, 0.2
  %v273 = vmul.f32 %v263, 0.2
  %v274 = vsel %vm266, %v252, %v270
  %v275 = vsel %vm267, %v255, %v271
  %v276 = vsel %vm268, %v260, %v272
  %v277 = vsel %vm269, %v263, %v273
  %v278 = vpack.c.bf16 %v55, %v54
  %v279 = vpack.c.bf16 %v57, %v56
  %v281 = vsel %vm68, %v278, 0
  %v284 = vsel %vm68, %v279, 0
  %286 = vmatprep.subr.bf16.mxu0 0
  %287 = vmatpush1.bf16.msra.mxu0 0
  %288 = vmatprep.subr.bf16.mxu0 0
  %289 = vmatpush1.bf16.msra.mxu0 0
  %290 = vmatprep.subr.bf16.mxu0 0
  %291 = vmatpush1.bf16.msra.mxu0 0
  %292 = vmatprep.subr.bf16.mxu0 0
  %293 = vmatpush1.bf16.msra.mxu0 0
  %294 = vmatprep.subr.bf16.mxu0 0
  %295 = vmatpush1.bf16.msra.mxu0 0
  %296 = vmatprep.subr.bf16.mxu0 0
  %297 = vmatpush1.bf16.msra.mxu0 0
  %298 = vmatprep.subr.bf16.mxu0 0
  %299 = vmatpush1.bf16.msra.mxu0 0
  %300 = vmatprep.subr.bf16.mxu0 0
  %301 = vmatpush1.bf16.msra.mxu0 %v77
  %302 = vmatprep.subr.bf16.mxu0 0
  %303 = vmatpush2.bf16.msra.mxu0 0
  %304 = vmatprep.subr.bf16.mxu0 0
  %305 = vmatpush2.bf16.msra.mxu0 0
  %306 = vmatprep.subr.bf16.mxu0 0
  %307 = vmatpush2.bf16.msra.mxu0 0
  %308 = vmatprep.subr.bf16.mxu0 0
  %309 = vmatpush2.bf16.msra.mxu0 0
  %310 = vmatprep.subr.bf16.mxu0 0
  %311 = vmatpush2.bf16.msra.mxu0 0
  %312 = vmatprep.subr.bf16.mxu0 0
  %313 = vmatpush2.bf16.msra.mxu0 0
  %314 = vmatprep.subr.bf16.mxu0 0
  %315 = vmatpush2.bf16.msra.mxu0 0
  %316 = vmatprep.subr.bf16.mxu0 0
  %317 = vmatpush2.bf16.msra.mxu0 0
  %318 = vmatprep.mubr.bf16.mxu0 0
  %319 = vmatmul.mubr.bf16.gmra.mxu0 %v281
  %v320 = vpop.f32.mrf.mxu0
  %v321 = vadd.f32 %v66, %v320
  %v322 = vpop.f32.mrf.mxu0
  %v323 = vpop.f32.mrf.mxu0
  %v324 = vadd.f32 %v66, %v323
  %v325 = vpop.f32.mrf.mxu0
  %326 = vmatprep.mubr.bf16.mxu0 0
  %327 = vmatmul.mubr.bf16.gmra.mxu0 %v284
  %v328 = vpop.f32.mrf.mxu0
  %v329 = vadd.f32 %v66, %v328
  %v330 = vpop.f32.mrf.mxu0
  %v331 = vpop.f32.mrf.mxu0
  %v332 = vadd.f32 %v66, %v331
  %v333 = vpop.f32.mrf.mxu0
  %334 = vdwg.mxu0
  %vm335 = vcmp.gt.f32.partialorder %v321, 0.0
  %vm336 = vcmp.gt.f32.partialorder %v324, 0.0
  %vm337 = vcmp.gt.f32.partialorder %v329, 0.0
  %vm338 = vcmp.gt.f32.partialorder %v332, 0.0
  %v339 = vmul.f32 %v321, 0.2
  %v340 = vmul.f32 %v324, 0.2
  %v341 = vmul.f32 %v329, 0.2
  %v342 = vmul.f32 %v332, 0.2
  %v343 = vsel %vm335, %v321, %v339
  %v344 = vsel %vm336, %v324, %v340
  %v345 = vsel %vm337, %v329, %v341
  %v346 = vsel %vm338, %v332, %v342
  %v347 = vmax.f32 %v136, %v205
  %v348 = vmax.f32 %v137, %v206
  %v349 = vmax.f32 %v138, %v207
  %v350 = vmax.f32 %v139, %v208
  %v351 = vmax.f32 %v347, %v274
  %v352 = vmax.f32 %v348, %v275
  %v353 = vmax.f32 %v349, %v276
  %v354 = vmax.f32 %v350, %v277
  %v355 = vmax.f32 %v351, %v343
  %v356 = vmax.f32 %v352, %v344
  %v357 = vmax.f32 %v353, %v345
  %v358 = vmax.f32 %v354, %v346
  %v359 = vld [vmem:[%s3] sm:$0xf]
  %v360 = vld [vmem:[%s3 + $0x4] sm:$0xf]
  %v361 = vld [vmem:[%s3 + $0x8] sm:$0xf]
  %v362 = vld [vmem:[%s3 + $0xc] sm:$0xf]
  %v363 = vld [vmem:[%s3 + $0x10] sm:$0xf]
  %v364 = vld [vmem:[%s3 + $0x14] sm:$0xf]
  %v365 = vld [vmem:[%s3 + $0x18] sm:$0xf]
  %v366 = vld [vmem:[%s3 + $0x1c] sm:$0xf]
  %v367 = vld [vmem:[%s4] sm:$0x1]
  %v368 = vpack.c.bf16 %v137, %v136
  %v369 = vpack.c.bf16 %v139, %v138
  %v371 = vlaneseq
  %v372 = vshrl.u32 %v371, 7
  %v373 = vsub.s32 0, %v372
  %v374 = vrot.slane %v367, %v373
  %v384 = vunpack.c.l.b16 %v359
  %v385 = vunpack.c.l.b16 %v360
  %v386 = vunpack.c.l.b16 %v361
  %v387 = vunpack.c.l.b16 %v362
  %v388 = vunpack.c.l.b16 %v363
  %v389 = vunpack.c.l.b16 %v364
  %v390 = vunpack.c.l.b16 %v365
  %v391 = vunpack.c.l.b16 %v366
  %v392 = vpack.c.b16 %v385, %v384
  %v393 = vpack.c.b16 %v387, %v386
  %v394 = vpack.c.b16 %v389, %v388
  %v395 = vpack.c.b16 %v391, %v390
  %vm400 = vcmask 523264
  %v402 = vsel %vm400, %v368, 0
  %v405 = vsel %vm400, %v369, 0
  %407 = vmatprep.subr.bf16.mxu0 0
  %408 = vmatpush1.bf16.msra.mxu0 0
  %409 = vmatprep.subr.bf16.mxu0 0
  %410 = vmatpush1.bf16.msra.mxu0 0
  %411 = vmatprep.subr.bf16.mxu0 0
  %412 = vmatpush1.bf16.msra.mxu0 0
  %413 = vmatprep.subr.bf16.mxu0 0
  %414 = vmatpush1.bf16.msra.mxu0 0
  %415 = vmatprep.subr.bf16.mxu0 0
  %416 = vmatpush1.bf16.msra.mxu0 %v395
  %417 = vmatprep.subr.bf16.mxu0 0
  %418 = vmatpush1.bf16.msra.mxu0 %v394
  %419 = vmatprep.subr.bf16.mxu0 0
  %420 = vmatpush1.bf16.msra.mxu0 %v393
  %421 = vmatprep.subr.bf16.mxu0 0
  %422 = vmatpush1.bf16.msra.mxu0 %v392
  %423 = vmatprep.subr.bf16.mxu0 0
  %424 = vmatpush2.bf16.msra.mxu0 0
  %425 = vmatprep.subr.bf16.mxu0 0
  %426 = vmatpush2.bf16.msra.mxu0 0
  %427 = vmatprep.subr.bf16.mxu0 0
  %428 = vmatpush2.bf16.msra.mxu0 0
  %429 = vmatprep.subr.bf16.mxu0 0
  %430 = vmatpush2.bf16.msra.mxu0 0
  %431 = vmatprep.subr.bf16.mxu0 0
  %432 = vmatpush2.bf16.msra.mxu0 0
  %433 = vmatprep.subr.bf16.mxu0 0
  %434 = vmatpush2.bf16.msra.mxu0 0
  %435 = vmatprep.subr.bf16.mxu0 0
  %436 = vmatpush2.bf16.msra.mxu0 0
  %437 = vmatprep.subr.bf16.mxu0 0
  %438 = vmatpush2.bf16.msra.mxu0 0
  %439 = vmatprep.mubr.bf16.mxu0 0
  %440 = vmatmul.mubr.bf16.gmra.mxu0 %v402
  %v441 = vpop.f32.mrf.mxu0
  %v442 = vadd.f32 %v374, %v441
  %v443 = vpop.f32.mrf.mxu0
  %v444 = vpop.f32.mrf.mxu0
  %v445 = vadd.f32 %v374, %v444
  %v446 = vpop.f32.mrf.mxu0
  %447 = vmatprep.mubr.bf16.mxu0 0
  %448 = vmatmul.mubr.bf16.gmra.mxu0 %v405
  %v449 = vpop.f32.mrf.mxu0
  %v450 = vadd.f32 %v374, %v449
  %v451 = vpop.f32.mrf.mxu0
  %v452 = vpop.f32.mrf.mxu0
  %v453 = vadd.f32 %v374, %v452
  %v454 = vpop.f32.mrf.mxu0
  %455 = vdwg.mxu0
  %vm456 = vcmp.gt.f32.partialorder %v442, 0.0
  %vm457 = vcmp.gt.f32.partialorder %v445, 0.0
  %vm458 = vcmp.gt.f32.partialorder %v450, 0.0
  %vm459 = vcmp.gt.f32.partialorder %v453, 0.0
  %v460 = vmul.f32 %v442, 0.2
  %v461 = vmul.f32 %v445, 0.2
  %v462 = vmul.f32 %v450, 0.2
  %v463 = vmul.f32 %v453, 0.2
  %v464 = vsel %vm456, %v442, %v460
  %v465 = vsel %vm457, %v445, %v461
  %v466 = vsel %vm458, %v450, %v462
  %v467 = vsel %vm459, %v453, %v463
  %v468 = vpack.c.bf16 %v206, %v205
  %v469 = vpack.c.bf16 %v208, %v207
  %v471 = vsel %vm400, %v468, 0
  %v474 = vsel %vm400, %v469, 0
  %476 = vmatprep.subr.bf16.mxu0 0
  %477 = vmatpush1.bf16.msra.mxu0 0
  %478 = vmatprep.subr.bf16.mxu0 0
  %479 = vmatpush1.bf16.msra.mxu0 0
  %480 = vmatprep.subr.bf16.mxu0 0
  %481 = vmatpush1.bf16.msra.mxu0 0
  %482 = vmatprep.subr.bf16.mxu0 0
  %483 = vmatpush1.bf16.msra.mxu0 0
  %484 = vmatprep.subr.bf16.mxu0 0
  %485 = vmatpush1.bf16.msra.mxu0 %v395
  %486 = vmatprep.subr.bf16.mxu0 0
  %487 = vmatpush1.bf16.msra.mxu0 %v394
  %488 = vmatprep.subr.bf16.mxu0 0
  %489 = vmatpush1.bf16.msra.mxu0 %v393
  %490 = vmatprep.subr.bf16.mxu0 0
  %491 = vmatpush1.bf16.msra.mxu0 %v392
  %492 = vmatprep.subr.bf16.mxu0 0
  %493 = vmatpush2.bf16.msra.mxu0 0
  %494 = vmatprep.subr.bf16.mxu0 0
  %495 = vmatpush2.bf16.msra.mxu0 0
  %496 = vmatprep.subr.bf16.mxu0 0
  %497 = vmatpush2.bf16.msra.mxu0 0
  %498 = vmatprep.subr.bf16.mxu0 0
  %499 = vmatpush2.bf16.msra.mxu0 0
  %500 = vmatprep.subr.bf16.mxu0 0
  %501 = vmatpush2.bf16.msra.mxu0 0
  %502 = vmatprep.subr.bf16.mxu0 0
  %503 = vmatpush2.bf16.msra.mxu0 0
  %504 = vmatprep.subr.bf16.mxu0 0
  %505 = vmatpush2.bf16.msra.mxu0 0
  %506 = vmatprep.subr.bf16.mxu0 0
  %507 = vmatpush2.bf16.msra.mxu0 0
  %508 = vmatprep.mubr.bf16.mxu0 0
  %509 = vmatmul.mubr.bf16.gmra.mxu0 %v471
  %v510 = vpop.f32.mrf.mxu0
  %v511 = vadd.f32 %v374, %v510
  %v512 = vpop.f32.mrf.mxu0
  %v513 = vpop.f32.mrf.mxu0
  %v514 = vadd.f32 %v374, %v513
  %v515 = vpop.f32.mrf.mxu0
  %516 = vmatprep.mubr.bf16.mxu0 0
  %517 = vmatmul.mubr.bf16.gmra.mxu0 %v474
  %v518 = vpop.f32.mrf.mxu0
  %v519 = vadd.f32 %v374, %v518
  %v520 = vpop.f32.mrf.mxu0
  %v521 = vpop.f32.mrf.mxu0
  %v522 = vadd.f32 %v374, %v521
  %v523 = vpop.f32.mrf.mxu0
  %524 = vdwg.mxu0
  %vm525 = vcmp.gt.f32.partialorder %v511, 0.0
  %vm526 = vcmp.gt.f32.partialorder %v514, 0.0
  %vm527 = vcmp.gt.f32.partialorder %v519, 0.0
  %vm528 = vcmp.gt.f32.partialorder %v522, 0.0
  %v529 = vmul.f32 %v511, 0.2
  %v530 = vmul.f32 %v514, 0.2
  %v531 = vmul.f32 %v519, 0.2
  %v532 = vmul.f32 %v522, 0.2
  %v533 = vsel %vm525, %v511, %v529
  %v534 = vsel %vm526, %v514, %v530
  %v535 = vsel %vm527, %v519, %v531
  %v536 = vsel %vm528, %v522, %v532
  %v537 = vpack.c.bf16 %v275, %v274
  %v538 = vpack.c.bf16 %v277, %v276
  %v540 = vsel %vm400, %v537, 0
  %v543 = vsel %vm400, %v538, 0
  %545 = vmatprep.subr.bf16.mxu0 0
  %546 = vmatpush1.bf16.msra.mxu0 0
  %547 = vmatprep.subr.bf16.mxu0 0
  %548 = vmatpush1.bf16.msra.mxu0 0
  %549 = vmatprep.subr.bf16.mxu0 0
  %550 = vmatpush1.bf16.msra.mxu0 0
  %551 = vmatprep.subr.bf16.mxu0 0
  %552 = vmatpush1.bf16.msra.mxu0 0
  %553 = vmatprep.subr.bf16.mxu0 0
  %554 = vmatpush1.bf16.msra.mxu0 %v395
  %555 = vmatprep.subr.bf16.mxu0 0
  %556 = vmatpush1.bf16.msra.mxu0 %v394
  %557 = vmatprep.subr.bf16.mxu0 0
  %558 = vmatpush1.bf16.msra.mxu0 %v393
  %559 = vmatprep.subr.bf16.mxu0 0
  %560 = vmatpush1.bf16.msra.mxu0 %v392
  %561 = vmatprep.subr.bf16.mxu0 0
  %562 = vmatpush2.bf16.msra.mxu0 0
  %563 = vmatprep.subr.bf16.mxu0 0
  %564 = vmatpush2.bf16.msra.mxu0 0
  %565 = vmatprep.subr.bf16.mxu0 0
  %566 = vmatpush2.bf16.msra.mxu0 0
  %567 = vmatprep.subr.bf16.mxu0 0
  %568 = vmatpush2.bf16.msra.mxu0 0
  %569 = vmatprep.subr.bf16.mxu0 0
  %570 = vmatpush2.bf16.msra.mxu0 0
  %571 = vmatprep.subr.bf16.mxu0 0
  %572 = vmatpush2.bf16.msra.mxu0 0
  %573 = vmatprep.subr.bf16.mxu0 0
  %574 = vmatpush2.bf16.msra.mxu0 0
  %575 = vmatprep.subr.bf16.mxu0 0
  %576 = vmatpush2.bf16.msra.mxu0 0
  %577 = vmatprep.mubr.bf16.mxu0 0
  %578 = vmatmul.mubr.bf16.gmra.mxu0 %v540
  %v579 = vpop.f32.mrf.mxu0
  %v580 = vadd.f32 %v374, %v579
  %v581 = vpop.f32.mrf.mxu0
  %v582 = vpop.f32.mrf.mxu0
  %v583 = vadd.f32 %v374, %v582
  %v584 = vpop.f32.mrf.mxu0
  %585 = vmatprep.mubr.bf16.mxu0 0
  %586 = vmatmul.mubr.bf16.gmra.mxu0 %v543
  %v587 = vpop.f32.mrf.mxu0
  %v588 = vadd.f32 %v374, %v587
  %v589 = vpop.f32.mrf.mxu0
  %v590 = vpop.f32.mrf.mxu0
  %v591 = vadd.f32 %v374, %v590
  %v592 = vpop.f32.mrf.mxu0
  %593 = vdwg.mxu0
  %vm594 = vcmp.gt.f32.partialorder %v580, 0.0
  %vm595 = vcmp.gt.f32.partialorder %v583, 0.0
  %vm596 = vcmp.gt.f32.partialorder %v588, 0.0
  %vm597 = vcmp.gt.f32.partialorder %v591, 0.0
  %v598 = vmul.f32 %v580, 0.2
  %v599 = vmul.f32 %v583, 0.2
  %v600 = vmul.f32 %v588, 0.2
  %v601 = vmul.f32 %v591, 0.2
  %v602 = vsel %vm594, %v580, %v598
  %v603 = vsel %vm595, %v583, %v599
  %v604 = vsel %vm596, %v588, %v600
  %v605 = vsel %vm597, %v591, %v601
  %v606 = vpack.c.bf16 %v344, %v343
  %v607 = vpack.c.bf16 %v346, %v345
  %v609 = vsel %vm400, %v606, 0
  %v612 = vsel %vm400, %v607, 0
  %614 = vmatprep.subr.bf16.mxu0 0
  %615 = vmatpush1.bf16.msra.mxu0 0
  %616 = vmatprep.subr.bf16.mxu0 0
  %617 = vmatpush1.bf16.msra.mxu0 0
  %618 = vmatprep.subr.bf16.mxu0 0
  %619 = vmatpush1.bf16.msra.mxu0 0
  %620 = vmatprep.subr.bf16.mxu0 0
  %621 = vmatpush1.bf16.msra.mxu0 0
  %622 = vmatprep.subr.bf16.mxu0 0
  %623 = vmatpush1.bf16.msra.mxu0 %v395
  %624 = vmatprep.subr.bf16.mxu0 0
  %625 = vmatpush1.bf16.msra.mxu0 %v394
  %626 = vmatprep.subr.bf16.mxu0 0
  %627 = vmatpush1.bf16.msra.mxu0 %v393
  %628 = vmatprep.subr.bf16.mxu0 0
  %629 = vmatpush1.bf16.msra.mxu0 %v392
  %630 = vmatprep.subr.bf16.mxu0 0
  %631 = vmatpush2.bf16.msra.mxu0 0
  %632 = vmatprep.subr.bf16.mxu0 0
  %633 = vmatpush2.bf16.msra.mxu0 0
  %634 = vmatprep.subr.bf16.mxu0 0
  %635 = vmatpush2.bf16.msra.mxu0 0
  %636 = vmatprep.subr.bf16.mxu0 0
  %637 = vmatpush2.bf16.msra.mxu0 0
  %638 = vmatprep.subr.bf16.mxu0 0
  %639 = vmatpush2.bf16.msra.mxu0 0
  %640 = vmatprep.subr.bf16.mxu0 0
  %641 = vmatpush2.bf16.msra.mxu0 0
  %642 = vmatprep.subr.bf16.mxu0 0
  %643 = vmatpush2.bf16.msra.mxu0 0
  %644 = vmatprep.subr.bf16.mxu0 0
  %645 = vmatpush2.bf16.msra.mxu0 0
  %646 = vmatprep.mubr.bf16.mxu0 0
  %647 = vmatmul.mubr.bf16.gmra.mxu0 %v609
  %v648 = vpop.f32.mrf.mxu0
  %v649 = vadd.f32 %v374, %v648
  %v650 = vpop.f32.mrf.mxu0
  %v651 = vpop.f32.mrf.mxu0
  %v652 = vadd.f32 %v374, %v651
  %v653 = vpop.f32.mrf.mxu0
  %654 = vmatprep.mubr.bf16.mxu0 0
  %655 = vmatmul.mubr.bf16.gmra.mxu0 %v612
  %v656 = vpop.f32.mrf.mxu0
  %v657 = vadd.f32 %v374, %v656
  %v658 = vpop.f32.mrf.mxu0
  %v659 = vpop.f32.mrf.mxu0
  %v660 = vadd.f32 %v374, %v659
  %v661 = vpop.f32.mrf.mxu0
  %662 = vdwg.mxu0
  %vm663 = vcmp.gt.f32.partialorder %v649, 0.0
  %vm664 = vcmp.gt.f32.partialorder %v652, 0.0
  %vm665 = vcmp.gt.f32.partialorder %v657, 0.0
  %vm666 = vcmp.gt.f32.partialorder %v660, 0.0
  %v667 = vmul.f32 %v649, 0.2
  %v668 = vmul.f32 %v652, 0.2
  %v669 = vmul.f32 %v657, 0.2
  %v670 = vmul.f32 %v660, 0.2
  %v671 = vsel %vm663, %v649, %v667
  %v672 = vsel %vm664, %v652, %v668
  %v673 = vsel %vm665, %v657, %v669
  %v674 = vsel %vm666, %v660, %v670
  %v675 = vmax.f32 %v464, %v533
  %v676 = vmax.f32 %v465, %v534
  %v677 = vmax.f32 %v466, %v535
  %v678 = vmax.f32 %v467, %v536
  %v679 = vmax.f32 %v675, %v602
  %v680 = vmax.f32 %v676, %v603
  %v681 = vmax.f32 %v677, %v604
  %v682 = vmax.f32 %v678, %v605
  %v683 = vmax.f32 %v679, %v671
  %v684 = vmax.f32 %v680, %v672
  %v685 = vmax.f32 %v681, %v673
  %v686 = vmax.f32 %v682, %v674
  %v687 = vld [vmem:[%s5] sm:$0xf]
  %v688 = vld [vmem:[%s5 + $0x4] sm:$0xf]
  %v689 = vld [vmem:[%s5 + $0x8] sm:$0xf]
  %v690 = vld [vmem:[%s5 + $0xc] sm:$0xf]
  %v691 = vld [vmem:[%s5 + $0x10] sm:$0xf]
  %v692 = vld [vmem:[%s5 + $0x14] sm:$0xf]
  %v693 = vld [vmem:[%s5 + $0x18] sm:$0xf]
  %v694 = vld [vmem:[%s5 + $0x1c] sm:$0xf]
  %v695 = vld [vmem:[%s6] sm:$0x1]
  %v696 = vpack.c.bf16 %v465, %v464
  %v697 = vpack.c.bf16 %v467, %v466
  %v699 = vlaneseq
  %v700 = vshrl.u32 %v699, 7
  %v701 = vsub.s32 0, %v700
  %v702 = vrot.slane %v695, %v701
  %v712 = vunpack.c.l.b16 %v687
  %v713 = vunpack.c.l.b16 %v688
  %v714 = vunpack.c.l.b16 %v689
  %v715 = vunpack.c.l.b16 %v690
  %v716 = vunpack.c.l.b16 %v691
  %v717 = vunpack.c.l.b16 %v692
  %v718 = vunpack.c.l.b16 %v693
  %v719 = vunpack.c.l.b16 %v694
  %v720 = vpack.c.b16 %v713, %v712
  %v721 = vpack.c.b16 %v715, %v714
  %v722 = vpack.c.b16 %v717, %v716
  %v723 = vpack.c.b16 %v719, %v718
  %v729 = vsel %vm400, %v696, 0
  %v732 = vsel %vm400, %v697, 0
  %734 = vmatprep.subr.bf16.mxu0 0
  %735 = vmatpush1.bf16.msra.mxu0 0
  %736 = vmatprep.subr.bf16.mxu0 0
  %737 = vmatpush1.bf16.msra.mxu0 0
  %738 = vmatprep.subr.bf16.mxu0 0
  %739 = vmatpush1.bf16.msra.mxu0 0
  %740 = vmatprep.subr.bf16.mxu0 0
  %741 = vmatpush1.bf16.msra.mxu0 0
  %742 = vmatprep.subr.bf16.mxu0 0
  %743 = vmatpush1.bf16.msra.mxu0 %v723
  %744 = vmatprep.subr.bf16.mxu0 0
  %745 = vmatpush1.bf16.msra.mxu0 %v722
  %746 = vmatprep.subr.bf16.mxu0 0
  %747 = vmatpush1.bf16.msra.mxu0 %v721
  %748 = vmatprep.subr.bf16.mxu0 0
  %749 = vmatpush1.bf16.msra.mxu0 %v720
  %750 = vmatprep.subr.bf16.mxu0 0
  %751 = vmatpush2.bf16.msra.mxu0 0
  %752 = vmatprep.subr.bf16.mxu0 0
  %753 = vmatpush2.bf16.msra.mxu0 0
  %754 = vmatprep.subr.bf16.mxu0 0
  %755 = vmatpush2.bf16.msra.mxu0 0
  %756 = vmatprep.subr.bf16.mxu0 0
  %757 = vmatpush2.bf16.msra.mxu0 0
  %758 = vmatprep.subr.bf16.mxu0 0
  %759 = vmatpush2.bf16.msra.mxu0 0
  %760 = vmatprep.subr.bf16.mxu0 0
  %761 = vmatpush2.bf16.msra.mxu0 0
  %762 = vmatprep.subr.bf16.mxu0 0
  %763 = vmatpush2.bf16.msra.mxu0 0
  %764 = vmatprep.subr.bf16.mxu0 0
  %765 = vmatpush2.bf16.msra.mxu0 0
  %766 = vmatprep.mubr.bf16.mxu0 0
  %767 = vmatmul.mubr.bf16.gmra.mxu0 %v729
  %v768 = vpop.f32.mrf.mxu0
  %v769 = vadd.f32 %v702, %v768
  %v770 = vpop.f32.mrf.mxu0
  %v771 = vpop.f32.mrf.mxu0
  %v772 = vadd.f32 %v702, %v771
  %v773 = vpop.f32.mrf.mxu0
  %774 = vmatprep.mubr.bf16.mxu0 0
  %775 = vmatmul.mubr.bf16.gmra.mxu0 %v732
  %v776 = vpop.f32.mrf.mxu0
  %v777 = vadd.f32 %v702, %v776
  %v778 = vpop.f32.mrf.mxu0
  %v779 = vpop.f32.mrf.mxu0
  %v780 = vadd.f32 %v702, %v779
  %v781 = vpop.f32.mrf.mxu0
  %782 = vdwg.mxu0
  %vm783 = vcmp.gt.f32.partialorder %v769, 0.0
  %vm784 = vcmp.gt.f32.partialorder %v772, 0.0
  %vm785 = vcmp.gt.f32.partialorder %v777, 0.0
  %vm786 = vcmp.gt.f32.partialorder %v780, 0.0
  %v787 = vmul.f32 %v769, 0.2
  %v788 = vmul.f32 %v772, 0.2
  %v789 = vmul.f32 %v777, 0.2
  %v790 = vmul.f32 %v780, 0.2
  %v791 = vsel %vm783, %v769, %v787
  %v792 = vsel %vm784, %v772, %v788
  %v793 = vsel %vm785, %v777, %v789
  %v794 = vsel %vm786, %v780, %v790
  %v795 = vpack.c.bf16 %v534, %v533
  %v796 = vpack.c.bf16 %v536, %v535
  %v798 = vsel %vm400, %v795, 0
  %v801 = vsel %vm400, %v796, 0
  %803 = vmatprep.subr.bf16.mxu0 0
  %804 = vmatpush1.bf16.msra.mxu0 0
  %805 = vmatprep.subr.bf16.mxu0 0
  %806 = vmatpush1.bf16.msra.mxu0 0
  %807 = vmatprep.subr.bf16.mxu0 0
  %808 = vmatpush1.bf16.msra.mxu0 0
  %809 = vmatprep.subr.bf16.mxu0 0
  %810 = vmatpush1.bf16.msra.mxu0 0
  %811 = vmatprep.subr.bf16.mxu0 0
  %812 = vmatpush1.bf16.msra.mxu0 %v723
  %813 = vmatprep.subr.bf16.mxu0 0
  %814 = vmatpush1.bf16.msra.mxu0 %v722
  %815 = vmatprep.subr.bf16.mxu0 0
  %816 = vmatpush1.bf16.msra.mxu0 %v721
  %817 = vmatprep.subr.bf16.mxu0 0
  %818 = vmatpush1.bf16.msra.mxu0 %v720
  %819 = vmatprep.subr.bf16.mxu0 0
  %820 = vmatpush2.bf16.msra.mxu0 0
  %821 = vmatprep.subr.bf16.mxu0 0
  %822 = vmatpush2.bf16.msra.mxu0 0
  %823 = vmatprep.subr.bf16.mxu0 0
  %824 = vmatpush2.bf16.msra.mxu0 0
  %825 = vmatprep.subr.bf16.mxu0 0
  %826 = vmatpush2.bf16.msra.mxu0 0
  %827 = vmatprep.subr.bf16.mxu0 0
  %828 = vmatpush2.bf16.msra.mxu0 0
  %829 = vmatprep.subr.bf16.mxu0 0
  %830 = vmatpush2.bf16.msra.mxu0 0
  %831 = vmatprep.subr.bf16.mxu0 0
  %832 = vmatpush2.bf16.msra.mxu0 0
  %833 = vmatprep.subr.bf16.mxu0 0
  %834 = vmatpush2.bf16.msra.mxu0 0
  %835 = vmatprep.mubr.bf16.mxu0 0
  %836 = vmatmul.mubr.bf16.gmra.mxu0 %v798
  %v837 = vpop.f32.mrf.mxu0
  %v838 = vadd.f32 %v702, %v837
  %v839 = vpop.f32.mrf.mxu0
  %v840 = vpop.f32.mrf.mxu0
  %v841 = vadd.f32 %v702, %v840
  %v842 = vpop.f32.mrf.mxu0
  %843 = vmatprep.mubr.bf16.mxu0 0
  %844 = vmatmul.mubr.bf16.gmra.mxu0 %v801
  %v845 = vpop.f32.mrf.mxu0
  %v846 = vadd.f32 %v702, %v845
  %v847 = vpop.f32.mrf.mxu0
  %v848 = vpop.f32.mrf.mxu0
  %v849 = vadd.f32 %v702, %v848
  %v850 = vpop.f32.mrf.mxu0
  %851 = vdwg.mxu0
  %vm852 = vcmp.gt.f32.partialorder %v838, 0.0
  %vm853 = vcmp.gt.f32.partialorder %v841, 0.0
  %vm854 = vcmp.gt.f32.partialorder %v846, 0.0
  %vm855 = vcmp.gt.f32.partialorder %v849, 0.0
  %v856 = vmul.f32 %v838, 0.2
  %v857 = vmul.f32 %v841, 0.2
  %v858 = vmul.f32 %v846, 0.2
  %v859 = vmul.f32 %v849, 0.2
  %v860 = vsel %vm852, %v838, %v856
  %v861 = vsel %vm853, %v841, %v857
  %v862 = vsel %vm854, %v846, %v858
  %v863 = vsel %vm855, %v849, %v859
  %v864 = vpack.c.bf16 %v603, %v602
  %v865 = vpack.c.bf16 %v605, %v604
  %v867 = vsel %vm400, %v864, 0
  %v870 = vsel %vm400, %v865, 0
  %872 = vmatprep.subr.bf16.mxu0 0
  %873 = vmatpush1.bf16.msra.mxu0 0
  %874 = vmatprep.subr.bf16.mxu0 0
  %875 = vmatpush1.bf16.msra.mxu0 0
  %876 = vmatprep.subr.bf16.mxu0 0
  %877 = vmatpush1.bf16.msra.mxu0 0
  %878 = vmatprep.subr.bf16.mxu0 0
  %879 = vmatpush1.bf16.msra.mxu0 0
  %880 = vmatprep.subr.bf16.mxu0 0
  %881 = vmatpush1.bf16.msra.mxu0 %v723
  %882 = vmatprep.subr.bf16.mxu0 0
  %883 = vmatpush1.bf16.msra.mxu0 %v722
  %884 = vmatprep.subr.bf16.mxu0 0
  %885 = vmatpush1.bf16.msra.mxu0 %v721
  %886 = vmatprep.subr.bf16.mxu0 0
  %887 = vmatpush1.bf16.msra.mxu0 %v720
  %888 = vmatprep.subr.bf16.mxu0 0
  %889 = vmatpush2.bf16.msra.mxu0 0
  %890 = vmatprep.subr.bf16.mxu0 0
  %891 = vmatpush2.bf16.msra.mxu0 0
  %892 = vmatprep.subr.bf16.mxu0 0
  %893 = vmatpush2.bf16.msra.mxu0 0
  %894 = vmatprep.subr.bf16.mxu0 0
  %895 = vmatpush2.bf16.msra.mxu0 0
  %896 = vmatprep.subr.bf16.mxu0 0
  %897 = vmatpush2.bf16.msra.mxu0 0
  %898 = vmatprep.subr.bf16.mxu0 0
  %899 = vmatpush2.bf16.msra.mxu0 0
  %900 = vmatprep.subr.bf16.mxu0 0
  %901 = vmatpush2.bf16.msra.mxu0 0
  %902 = vmatprep.subr.bf16.mxu0 0
  %903 = vmatpush2.bf16.msra.mxu0 0
  %904 = vmatprep.mubr.bf16.mxu0 0
  %905 = vmatmul.mubr.bf16.gmra.mxu0 %v867
  %v906 = vpop.f32.mrf.mxu0
  %v907 = vadd.f32 %v702, %v906
  %v908 = vpop.f32.mrf.mxu0
  %v909 = vpop.f32.mrf.mxu0
  %v910 = vadd.f32 %v702, %v909
  %v911 = vpop.f32.mrf.mxu0
  %912 = vmatprep.mubr.bf16.mxu0 0
  %913 = vmatmul.mubr.bf16.gmra.mxu0 %v870
  %v914 = vpop.f32.mrf.mxu0
  %v915 = vadd.f32 %v702, %v914
  %v916 = vpop.f32.mrf.mxu0
  %v917 = vpop.f32.mrf.mxu0
  %v918 = vadd.f32 %v702, %v917
  %v919 = vpop.f32.mrf.mxu0
  %920 = vdwg.mxu0
  %vm921 = vcmp.gt.f32.partialorder %v907, 0.0
  %vm922 = vcmp.gt.f32.partialorder %v910, 0.0
  %vm923 = vcmp.gt.f32.partialorder %v915, 0.0
  %vm924 = vcmp.gt.f32.partialorder %v918, 0.0
  %v925 = vmul.f32 %v907, 0.2
  %v926 = vmul.f32 %v910, 0.2
  %v927 = vmul.f32 %v915, 0.2
  %v928 = vmul.f32 %v918, 0.2
  %v929 = vsel %vm921, %v907, %v925
  %v930 = vsel %vm922, %v910, %v926
  %v931 = vsel %vm923, %v915, %v927
  %v932 = vsel %vm924, %v918, %v928
  %v933 = vpack.c.bf16 %v672, %v671
  %v934 = vpack.c.bf16 %v674, %v673
  %v936 = vsel %vm400, %v933, 0
  %v939 = vsel %vm400, %v934, 0
  %941 = vmatprep.subr.bf16.mxu0 0
  %942 = vmatpush1.bf16.msra.mxu0 0
  %943 = vmatprep.subr.bf16.mxu0 0
  %944 = vmatpush1.bf16.msra.mxu0 0
  %945 = vmatprep.subr.bf16.mxu0 0
  %946 = vmatpush1.bf16.msra.mxu0 0
  %947 = vmatprep.subr.bf16.mxu0 0
  %948 = vmatpush1.bf16.msra.mxu0 0
  %949 = vmatprep.subr.bf16.mxu0 0
  %950 = vmatpush1.bf16.msra.mxu0 %v723
  %951 = vmatprep.subr.bf16.mxu0 0
  %952 = vmatpush1.bf16.msra.mxu0 %v722
  %953 = vmatprep.subr.bf16.mxu0 0
  %954 = vmatpush1.bf16.msra.mxu0 %v721
  %955 = vmatprep.subr.bf16.mxu0 0
  %956 = vmatpush1.bf16.msra.mxu0 %v720
  %957 = vmatprep.subr.bf16.mxu0 0
  %958 = vmatpush2.bf16.msra.mxu0 0
  %959 = vmatprep.subr.bf16.mxu0 0
  %960 = vmatpush2.bf16.msra.mxu0 0
  %961 = vmatprep.subr.bf16.mxu0 0
  %962 = vmatpush2.bf16.msra.mxu0 0
  %963 = vmatprep.subr.bf16.mxu0 0
  %964 = vmatpush2.bf16.msra.mxu0 0
  %965 = vmatprep.subr.bf16.mxu0 0
  %966 = vmatpush2.bf16.msra.mxu0 0
  %967 = vmatprep.subr.bf16.mxu0 0
  %968 = vmatpush2.bf16.msra.mxu0 0
  %969 = vmatprep.subr.bf16.mxu0 0
  %970 = vmatpush2.bf16.msra.mxu0 0
  %971 = vmatprep.subr.bf16.mxu0 0
  %972 = vmatpush2.bf16.msra.mxu0 0
  %973 = vmatprep.mubr.bf16.mxu0 0
  %974 = vmatmul.mubr.bf16.gmra.mxu0 %v936
  %v975 = vpop.f32.mrf.mxu0
  %v976 = vadd.f32 %v702, %v975
  %v977 = vpop.f32.mrf.mxu0
  %v978 = vpop.f32.mrf.mxu0
  %v979 = vadd.f32 %v702, %v978
  %v980 = vpop.f32.mrf.mxu0
  %981 = vmatprep.mubr.bf16.mxu0 0
  %982 = vmatmul.mubr.bf16.gmra.mxu0 %v939
  %v983 = vpop.f32.mrf.mxu0
  %v984 = vadd.f32 %v702, %v983
  %v985 = vpop.f32.mrf.mxu0
  %v986 = vpop.f32.mrf.mxu0
  %v987 = vadd.f32 %v702, %v986
  %v988 = vpop.f32.mrf.mxu0
  %989 = vdwg.mxu0
  %vm990 = vcmp.gt.f32.partialorder %v976, 0.0
  %vm991 = vcmp.gt.f32.partialorder %v979, 0.0
  %vm992 = vcmp.gt.f32.partialorder %v984, 0.0
  %vm993 = vcmp.gt.f32.partialorder %v987, 0.0
  %v994 = vmul.f32 %v976, 0.2
  %v995 = vmul.f32 %v979, 0.2
  %v996 = vmul.f32 %v984, 0.2
  %v997 = vmul.f32 %v987, 0.2
  %v998 = vsel %vm990, %v976, %v994
  %v999 = vsel %vm991, %v979, %v995
  %v1000 = vsel %vm992, %v984, %v996
  %v1001 = vsel %vm993, %v987, %v997
  %v1002 = vmax.f32 %v791, %v860
  %v1003 = vmax.f32 %v792, %v861
  %v1004 = vmax.f32 %v793, %v862
  %v1005 = vmax.f32 %v794, %v863
  %v1006 = vmax.f32 %v1002, %v929
  %v1007 = vmax.f32 %v1003, %v930
  %v1008 = vmax.f32 %v1004, %v931
  %v1009 = vmax.f32 %v1005, %v932
  %v1010 = vmax.f32 %v1006, %v998
  %v1011 = vmax.f32 %v1007, %v999
  %v1012 = vmax.f32 %v1008, %v1000
  %v1013 = vmax.f32 %v1009, %v1001
  %v1014 = vld [vmem:[%s7] sm:$0xff]
  %v1015 = vld [vmem:[%s7 + $0x8] sm:$0xff]
  %v1016 = vld [vmem:[%s7 + $0x10] sm:$0xff]
  %v1017 = vld [vmem:[%s7 + $0x18] sm:$0xff]
  %v1018 = vld [vmem:[%s7 + $0x20] sm:$0xff]
  %v1019 = vld [vmem:[%s7 + $0x28] sm:$0xff]
  %v1020 = vld [vmem:[%s7 + $0x30] sm:$0xff]
  %v1021 = vld [vmem:[%s7 + $0x38] sm:$0xff]
  %v1022 = vld [vmem:[%s7 + $0x40] sm:$0xff]
  %v1023 = vld [vmem:[%s7 + $0x48] sm:$0xff]
  %v1024 = vld [vmem:[%s7 + $0x50] sm:$0xff]
  %v1025 = vld [vmem:[%s7 + $0x58] sm:$0xff]
  %v1026 = vld [vmem:[%s7 + $0x60] sm:$0xff]
  %v1027 = vld [vmem:[%s7 + $0x68] sm:$0xff]
  %v1028 = vld [vmem:[%s7 + $0x70] sm:$0xff]
  %v1029 = vld [vmem:[%s7 + $0x78] sm:$0xff]
  %v1030 = vld [vmem:[%s8] sm:$0x3]
  %v1031 = vpack.c.bf16 %v792, %v791
  %v1032 = vpack.c.bf16 %v794, %v793
  %v1034 = vlaneseq
  %v1035 = vshrl.u32 %v1034, 7
  %v1036 = vsub.s32 0, %v1035
  %v1037 = vrot.slane %v1030, %v1036
  %v1038 = vlaneseq
  %v1039 = vshrl.u32 %v1038, 7
  %v1040 = vsub.s32 1, %v1039
  %v1041 = vrot.slane %v1030, %v1040
  %v1060 = vunpack.c.l.b16 %v1014
  %v1061 = vunpack.c.h.b16 %v1014
  %v1062 = vunpack.c.l.b16 %v1015
  %v1063 = vunpack.c.h.b16 %v1015
  %v1064 = vunpack.c.l.b16 %v1016
  %v1065 = vunpack.c.h.b16 %v1016
  %v1066 = vunpack.c.l.b16 %v1017
  %v1067 = vunpack.c.h.b16 %v1017
  %v1068 = vunpack.c.l.b16 %v1018
  %v1069 = vunpack.c.h.b16 %v1018
  %v1070 = vunpack.c.l.b16 %v1019
  %v1071 = vunpack.c.h.b16 %v1019
  %v1072 = vunpack.c.l.b16 %v1020
  %v1073 = vunpack.c.h.b16 %v1020
  %v1074 = vunpack.c.l.b16 %v1021
  %v1075 = vunpack.c.h.b16 %v1021
  %v1076 = vunpack.c.l.b16 %v1022
  %v1077 = vunpack.c.h.b16 %v1022
  %v1078 = vunpack.c.l.b16 %v1023
  %v1079 = vunpack.c.h.b16 %v1023
  %v1080 = vunpack.c.l.b16 %v1024
  %v1081 = vunpack.c.h.b16 %v1024
  %v1082 = vunpack.c.l.b16 %v1025
  %v1083 = vunpack.c.h.b16 %v1025
  %v1084 = vunpack.c.l.b16 %v1026
  %v1085 = vunpack.c.h.b16 %v1026
  %v1086 = vunpack.c.l.b16 %v1027
  %v1087 = vunpack.c.h.b16 %v1027
  %v1088 = vunpack.c.l.b16 %v1028
  %v1089 = vunpack.c.h.b16 %v1028
  %v1090 = vunpack.c.l.b16 %v1029
  %v1091 = vunpack.c.h.b16 %v1029
  %v1092 = vpack.c.b16 %v1062, %v1060
  %v1093 = vpack.c.b16 %v1063, %v1061
  %v1094 = vpack.c.b16 %v1066, %v1064
  %v1095 = vpack.c.b16 %v1067, %v1065
  %v1096 = vpack.c.b16 %v1070, %v1068
  %v1097 = vpack.c.b16 %v1071, %v1069
  %v1098 = vpack.c.b16 %v1074, %v1072
  %v1099 = vpack.c.b16 %v1075, %v1073
  %v1100 = vpack.c.b16 %v1078, %v1076
  %v1101 = vpack.c.b16 %v1079, %v1077
  %v1102 = vpack.c.b16 %v1082, %v1080
  %v1103 = vpack.c.b16 %v1083, %v1081
  %v1104 = vpack.c.b16 %v1086, %v1084
  %v1105 = vpack.c.b16 %v1087, %v1085
  %v1106 = vpack.c.b16 %v1090, %v1088
  %v1107 = vpack.c.b16 %v1091, %v1089
  %1124 = vmatprep.subr.bf16.mxu0 %v1107
  %1125 = vmatpush1.bf16.msra.mxu0 %v1106
  %1126 = vmatprep.subr.bf16.mxu0 %v1105
  %1127 = vmatpush1.bf16.msra.mxu0 %v1104
  %1128 = vmatprep.subr.bf16.mxu0 %v1103
  %1129 = vmatpush1.bf16.msra.mxu0 %v1102
  %1130 = vmatprep.subr.bf16.mxu0 %v1101
  %1131 = vmatpush1.bf16.msra.mxu0 %v1100
  %1132 = vmatprep.subr.bf16.mxu0 %v1099
  %1133 = vmatpush1.bf16.msra.mxu0 %v1098
  %1134 = vmatprep.subr.bf16.mxu0 %v1097
  %1135 = vmatpush1.bf16.msra.mxu0 %v1096
  %1136 = vmatprep.subr.bf16.mxu0 %v1095
  %1137 = vmatpush1.bf16.msra.mxu0 %v1094
  %1138 = vmatprep.subr.bf16.mxu0 %v1093
  %1139 = vmatpush1.bf16.msra.mxu0 %v1092
  %1140 = vmatprep.subr.bf16.mxu0 0
  %1141 = vmatpush2.bf16.msra.mxu0 0
  %1142 = vmatprep.subr.bf16.mxu0 0
  %1143 = vmatpush2.bf16.msra.mxu0 0
  %1144 = vmatprep.subr.bf16.mxu0 0
  %1145 = vmatpush2.bf16.msra.mxu0 0
  %1146 = vmatprep.subr.bf16.mxu0 0
  %1147 = vmatpush2.bf16.msra.mxu0 0
  %1148 = vmatprep.subr.bf16.mxu0 0
  %1149 = vmatpush2.bf16.msra.mxu0 0
  %1150 = vmatprep.subr.bf16.mxu0 0
  %1151 = vmatpush2.bf16.msra.mxu0 0
  %1152 = vmatprep.subr.bf16.mxu0 0
  %1153 = vmatpush2.bf16.msra.mxu0 0
  %1154 = vmatprep.subr.bf16.mxu0 0
  %1155 = vmatpush2.bf16.msra.mxu0 0
  %1156 = vmatprep.mubr.bf16.mxu0 0
  %1157 = vmatmul.mubr.bf16.gmra.mxu0 %v1031
  %v1158 = vpop.f32.mrf.mxu0
  %v1159 = vadd.f32 %v1037, %v1158
  %v1160 = vpop.f32.mrf.mxu0
  %v1161 = vadd.f32 %v1041, %v1160
  %v1162 = vpop.f32.mrf.mxu0
  %v1163 = vadd.f32 %v1037, %v1162
  %v1164 = vpop.f32.mrf.mxu0
  %v1165 = vadd.f32 %v1041, %v1164
  %1166 = vmatprep.mubr.bf16.mxu0 0
  %1167 = vmatmul.mubr.bf16.gmra.mxu0 %v1032
  %v1168 = vpop.f32.mrf.mxu0
  %v1169 = vadd.f32 %v1037, %v1168
  %v1170 = vpop.f32.mrf.mxu0
  %v1171 = vadd.f32 %v1041, %v1170
  %v1172 = vpop.f32.mrf.mxu0
  %v1173 = vadd.f32 %v1037, %v1172
  %v1174 = vpop.f32.mrf.mxu0
  %v1175 = vadd.f32 %v1041, %v1174
  %1176 = vdwg.mxu0
  %vm1177 = vcmp.gt.f32.partialorder %v1159, 0.0
  %vm1178 = vcmp.gt.f32.partialorder %v1161, 0.0
  %vm1179 = vcmp.gt.f32.partialorder %v1163, 0.0
  %vm1180 = vcmp.gt.f32.partialorder %v1165, 0.0
  %vm1181 = vcmp.gt.f32.partialorder %v1169, 0.0
  %vm1182 = vcmp.gt.f32.partialorder %v1171, 0.0
  %vm1183 = vcmp.gt.f32.partialorder %v1173, 0.0
  %vm1184 = vcmp.gt.f32.partialorder %v1175, 0.0
  %v1185 = vmul.f32 %v1159, 0.2
  %v1186 = vmul.f32 %v1161, 0.2
  %v1187 = vmul.f32 %v1163, 0.2
  %v1188 = vmul.f32 %v1165, 0.2
  %v1189 = vmul.f32 %v1169, 0.2
  %v1190 = vmul.f32 %v1171, 0.2
  %v1191 = vmul.f32 %v1173, 0.2
  %v1192 = vmul.f32 %v1175, 0.2
  %v1193 = vsel %vm1177, %v1159, %v1185
  %v1194 = vsel %vm1178, %v1161, %v1186
  %v1195 = vsel %vm1179, %v1163, %v1187
  %v1196 = vsel %vm1180, %v1165, %v1188
  %v1197 = vsel %vm1181, %v1169, %v1189
  %v1198 = vsel %vm1182, %v1171, %v1190
  %v1199 = vsel %vm1183, %v1173, %v1191
  %v1200 = vsel %vm1184, %v1175, %v1192
  %v1201 = vpack.c.bf16 %v861, %v860
  %v1202 = vpack.c.bf16 %v863, %v862
  %1203 = vmatprep.subr.bf16.mxu0 %v1107
  %1204 = vmatpush1.bf16.msra.mxu0 %v1106
  %1205 = vmatprep.subr.bf16.mxu0 %v1105
  %1206 = vmatpush1.bf16.msra.mxu0 %v1104
  %1207 = vmatprep.subr.bf16.mxu0 %v1103
  %1208 = vmatpush1.bf16.msra.mxu0 %v1102
  %1209 = vmatprep.subr.bf16.mxu0 %v1101
  %1210 = vmatpush1.bf16.msra.mxu0 %v1100
  %1211 = vmatprep.subr.bf16.mxu0 %v1099
  %1212 = vmatpush1.bf16.msra.mxu0 %v1098
  %1213 = vmatprep.subr.bf16.mxu0 %v1097
  %1214 = vmatpush1.bf16.msra.mxu0 %v1096
  %1215 = vmatprep.subr.bf16.mxu0 %v1095
  %1216 = vmatpush1.bf16.msra.mxu0 %v1094
  %1217 = vmatprep.subr.bf16.mxu0 %v1093
  %1218 = vmatpush1.bf16.msra.mxu0 %v1092
  %1219 = vmatprep.subr.bf16.mxu0 0
  %1220 = vmatpush2.bf16.msra.mxu0 0
  %1221 = vmatprep.subr.bf16.mxu0 0
  %1222 = vmatpush2.bf16.msra.mxu0 0
  %1223 = vmatprep.subr.bf16.mxu0 0
  %1224 = vmatpush2.bf16.msra.mxu0 0
  %1225 = vmatprep.subr.bf16.mxu0 0
  %1226 = vmatpush2.bf16.msra.mxu0 0
  %1227 = vmatprep.subr.bf16.mxu0 0
  %1228 = vmatpush2.bf16.msra.mxu0 0
  %1229 = vmatprep.subr.bf16.mxu0 0
  %1230 = vmatpush2.bf16.msra.mxu0 0
  %1231 = vmatprep.subr.bf16.mxu0 0
  %1232 = vmatpush2.bf16.msra.mxu0 0
  %1233 = vmatprep.subr.bf16.mxu0 0
  %1234 = vmatpush2.bf16.msra.mxu0 0
  %1235 = vmatprep.mubr.bf16.mxu0 0
  %1236 = vmatmul.mubr.bf16.gmra.mxu0 %v1201
  %v1237 = vpop.f32.mrf.mxu0
  %v1238 = vadd.f32 %v1037, %v1237
  %v1239 = vpop.f32.mrf.mxu0
  %v1240 = vadd.f32 %v1041, %v1239
  %v1241 = vpop.f32.mrf.mxu0
  %v1242 = vadd.f32 %v1037, %v1241
  %v1243 = vpop.f32.mrf.mxu0
  %v1244 = vadd.f32 %v1041, %v1243
  %1245 = vmatprep.mubr.bf16.mxu0 0
  %1246 = vmatmul.mubr.bf16.gmra.mxu0 %v1202
  %v1247 = vpop.f32.mrf.mxu0
  %v1248 = vadd.f32 %v1037, %v1247
  %v1249 = vpop.f32.mrf.mxu0
  %v1250 = vadd.f32 %v1041, %v1249
  %v1251 = vpop.f32.mrf.mxu0
  %v1252 = vadd.f32 %v1037, %v1251
  %v1253 = vpop.f32.mrf.mxu0
  %v1254 = vadd.f32 %v1041, %v1253
  %1255 = vdwg.mxu0
  %vm1256 = vcmp.gt.f32.partialorder %v1238, 0.0
  %vm1257 = vcmp.gt.f32.partialorder %v1240, 0.0
  %vm1258 = vcmp.gt.f32.partialorder %v1242, 0.0
  %vm1259 = vcmp.gt.f32.partialorder %v1244, 0.0
  %vm1260 = vcmp.gt.f32.partialorder %v1248, 0.0
  %vm1261 = vcmp.gt.f32.partialorder %v1250, 0.0
  %vm1262 = vcmp.gt.f32.partialorder %v1252, 0.0
  %vm1263 = vcmp.gt.f32.partialorder %v1254, 0.0
  %v1264 = vmul.f32 %v1238, 0.2
  %v1265 = vmul.f32 %v1240, 0.2
  %v1266 = vmul.f32 %v1242, 0.2
  %v1267 = vmul.f32 %v1244, 0.2
  %v1268 = vmul.f32 %v1248, 0.2
  %v1269 = vmul.f32 %v1250, 0.2
  %v1270 = vmul.f32 %v1252, 0.2
  %v1271 = vmul.f32 %v1254, 0.2
  %v1272 = vsel %vm1256, %v1238, %v1264
  %v1273 = vsel %vm1257, %v1240, %v1265
  %v1274 = vsel %vm1258, %v1242, %v1266
  %v1275 = vsel %vm1259, %v1244, %v1267
  %v1276 = vsel %vm1260, %v1248, %v1268
  %v1277 = vsel %vm1261, %v1250, %v1269
  %v1278 = vsel %vm1262, %v1252, %v1270
  %v1279 = vsel %vm1263, %v1254, %v1271
  %v1280 = vpack.c.bf16 %v930, %v929
  %v1281 = vpack.c.bf16 %v932, %v931
  %1282 = vmatprep.subr.bf16.mxu0 %v1107
  %1283 = vmatpush1.bf16.msra.mxu0 %v1106
  %1284 = vmatprep.subr.bf16.mxu0 %v1105
  %1285 = vmatpush1.bf16.msra.mxu0 %v1104
  %1286 = vmatprep.subr.bf16.mxu0 %v1103
  %1287 = vmatpush1.bf16.msra.mxu0 %v1102
  %1288 = vmatprep.subr.bf16.mxu0 %v1101
  %1289 = vmatpush1.bf16.msra.mxu0 %v1100
  %1290 = vmatprep.subr.bf16.mxu0 %v1099
  %1291 = vmatpush1.bf16.msra.mxu0 %v1098
  %1292 = vmatprep.subr.bf16.mxu0 %v1097
  %1293 = vmatpush1.bf16.msra.mxu0 %v1096
  %1294 = vmatprep.subr.bf16.mxu0 %v1095
  %1295 = vmatpush1.bf16.msra.mxu0 %v1094
  %1296 = vmatprep.subr.bf16.mxu0 %v1093
  %1297 = vmatpush1.bf16.msra.mxu0 %v1092
  %1298 = vmatprep.subr.bf16.mxu0 0
  %1299 = vmatpush2.bf16.msra.mxu0 0
  %1300 = vmatprep.subr.bf16.mxu0 0
  %1301 = vmatpush2.bf16.msra.mxu0 0
  %1302 = vmatprep.subr.bf16.mxu0 0
  %1303 = vmatpush2.bf16.msra.mxu0 0
  %1304 = vmatprep.subr.bf16.mxu0 0
  %1305 = vmatpush2.bf16.msra.mxu0 0
  %1306 = vmatprep.subr.bf16.mxu0 0
  %1307 = vmatpush2.bf16.msra.mxu0 0
  %1308 = vmatprep.subr.bf16.mxu0 0
  %1309 = vmatpush2.bf16.msra.mxu0 0
  %1310 = vmatprep.subr.bf16.mxu0 0
  %1311 = vmatpush2.bf16.msra.mxu0 0
  %1312 = vmatprep.subr.bf16.mxu0 0
  %1313 = vmatpush2.bf16.msra.mxu0 0
  %1314 = vmatprep.mubr.bf16.mxu0 0
  %1315 = vmatmul.mubr.bf16.gmra.mxu0 %v1280
  %v1316 = vpop.f32.mrf.mxu0
  %v1317 = vadd.f32 %v1037, %v1316
  %v1318 = vpop.f32.mrf.mxu0
  %v1319 = vadd.f32 %v1041, %v1318
  %v1320 = vpop.f32.mrf.mxu0
  %v1321 = vadd.f32 %v1037, %v1320
  %v1322 = vpop.f32.mrf.mxu0
  %v1323 = vadd.f32 %v1041, %v1322
  %1324 = vmatprep.mubr.bf16.mxu0 0
  %1325 = vmatmul.mubr.bf16.gmra.mxu0 %v1281
  %v1326 = vpop.f32.mrf.mxu0
  %v1327 = vadd.f32 %v1037, %v1326
  %v1328 = vpop.f32.mrf.mxu0
  %v1329 = vadd.f32 %v1041, %v1328
  %v1330 = vpop.f32.mrf.mxu0
  %v1331 = vadd.f32 %v1037, %v1330
  %v1332 = vpop.f32.mrf.mxu0
  %v1333 = vadd.f32 %v1041, %v1332
  %1334 = vdwg.mxu0
  %vm1335 = vcmp.gt.f32.partialorder %v1317, 0.0
  %vm1336 = vcmp.gt.f32.partialorder %v1319, 0.0
  %vm1337 = vcmp.gt.f32.partialorder %v1321, 0.0
  %vm1338 = vcmp.gt.f32.partialorder %v1323, 0.0
  %vm1339 = vcmp.gt.f32.partialorder %v1327, 0.0
  %vm1340 = vcmp.gt.f32.partialorder %v1329, 0.0
  %vm1341 = vcmp.gt.f32.partialorder %v1331, 0.0
  %vm1342 = vcmp.gt.f32.partialorder %v1333, 0.0
  %v1343 = vmul.f32 %v1317, 0.2
  %v1344 = vmul.f32 %v1319, 0.2
  %v1345 = vmul.f32 %v1321, 0.2
  %v1346 = vmul.f32 %v1323, 0.2
  %v1347 = vmul.f32 %v1327, 0.2
  %v1348 = vmul.f32 %v1329, 0.2
  %v1349 = vmul.f32 %v1331, 0.2
  %v1350 = vmul.f32 %v1333, 0.2
  %v1351 = vsel %vm1335, %v1317, %v1343
  %v1352 = vsel %vm1336, %v1319, %v1344
  %v1353 = vsel %vm1337, %v1321, %v1345
  %v1354 = vsel %vm1338, %v1323, %v1346
  %v1355 = vsel %vm1339, %v1327, %v1347
  %v1356 = vsel %vm1340, %v1329, %v1348
  %v1357 = vsel %vm1341, %v1331, %v1349
  %v1358 = vsel %vm1342, %v1333, %v1350
  %v1359 = vpack.c.bf16 %v999, %v998
  %v1360 = vpack.c.bf16 %v1001, %v1000
  %1361 = vmatprep.subr.bf16.mxu0 %v1107
  %1362 = vmatpush1.bf16.msra.mxu0 %v1106
  %1363 = vmatprep.subr.bf16.mxu0 %v1105
  %1364 = vmatpush1.bf16.msra.mxu0 %v1104
  %1365 = vmatprep.subr.bf16.mxu0 %v1103
  %1366 = vmatpush1.bf16.msra.mxu0 %v1102
  %1367 = vmatprep.subr.bf16.mxu0 %v1101
  %1368 = vmatpush1.bf16.msra.mxu0 %v1100
  %1369 = vmatprep.subr.bf16.mxu0 %v1099
  %1370 = vmatpush1.bf16.msra.mxu0 %v1098
  %1371 = vmatprep.subr.bf16.mxu0 %v1097
  %1372 = vmatpush1.bf16.msra.mxu0 %v1096
  %1373 = vmatprep.subr.bf16.mxu0 %v1095
  %1374 = vmatpush1.bf16.msra.mxu0 %v1094
  %1375 = vmatprep.subr.bf16.mxu0 %v1093
  %1376 = vmatpush1.bf16.msra.mxu0 %v1092
  %1377 = vmatprep.subr.bf16.mxu0 0
  %1378 = vmatpush2.bf16.msra.mxu0 0
  %1379 = vmatprep.subr.bf16.mxu0 0
  %1380 = vmatpush2.bf16.msra.mxu0 0
  %1381 = vmatprep.subr.bf16.mxu0 0
  %1382 = vmatpush2.bf16.msra.mxu0 0
  %1383 = vmatprep.subr.bf16.mxu0 0
  %1384 = vmatpush2.bf16.msra.mxu0 0
  %1385 = vmatprep.subr.bf16.mxu0 0
  %1386 = vmatpush2.bf16.msra.mxu0 0
  %1387 = vmatprep.subr.bf16.mxu0 0
  %1388 = vmatpush2.bf16.msra.mxu0 0
  %1389 = vmatprep.subr.bf16.mxu0 0
  %1390 = vmatpush2.bf16.msra.mxu0 0
  %1391 = vmatprep.subr.bf16.mxu0 0
  %1392 = vmatpush2.bf16.msra.mxu0 0
  %1393 = vmatprep.mubr.bf16.mxu0 0
  %1394 = vmatmul.mubr.bf16.gmra.mxu0 %v1359
  %v1395 = vpop.f32.mrf.mxu0
  %v1396 = vadd.f32 %v1037, %v1395
  %v1397 = vpop.f32.mrf.mxu0
  %v1398 = vadd.f32 %v1041, %v1397
  %v1399 = vpop.f32.mrf.mxu0
  %v1400 = vadd.f32 %v1037, %v1399
  %v1401 = vpop.f32.mrf.mxu0
  %v1402 = vadd.f32 %v1041, %v1401
  %1403 = vmatprep.mubr.bf16.mxu0 0
  %1404 = vmatmul.mubr.bf16.gmra.mxu0 %v1360
  %v1405 = vpop.f32.mrf.mxu0
  %v1406 = vadd.f32 %v1037, %v1405
  %v1407 = vpop.f32.mrf.mxu0
  %v1408 = vadd.f32 %v1041, %v1407
  %v1409 = vpop.f32.mrf.mxu0
  %v1410 = vadd.f32 %v1037, %v1409
  %v1411 = vpop.f32.mrf.mxu0
  %v1412 = vadd.f32 %v1041, %v1411
  %1413 = vdwg.mxu0
  %vm1414 = vcmp.gt.f32.partialorder %v1396, 0.0
  %vm1415 = vcmp.gt.f32.partialorder %v1398, 0.0
  %vm1416 = vcmp.gt.f32.partialorder %v1400, 0.0
  %vm1417 = vcmp.gt.f32.partialorder %v1402, 0.0
  %vm1418 = vcmp.gt.f32.partialorder %v1406, 0.0
  %vm1419 = vcmp.gt.f32.partialorder %v1408, 0.0
  %vm1420 = vcmp.gt.f32.partialorder %v1410, 0.0
  %vm1421 = vcmp.gt.f32.partialorder %v1412, 0.0
  %v1422 = vmul.f32 %v1396, 0.2
  %v1423 = vmul.f32 %v1398, 0.2
  %v1424 = vmul.f32 %v1400, 0.2
  %v1425 = vmul.f32 %v1402, 0.2
  %v1426 = vmul.f32 %v1406, 0.2
  %v1427 = vmul.f32 %v1408, 0.2
  %v1428 = vmul.f32 %v1410, 0.2
  %v1429 = vmul.f32 %v1412, 0.2
  %v1430 = vsel %vm1414, %v1396, %v1422
  %v1431 = vsel %vm1415, %v1398, %v1423
  %v1432 = vsel %vm1416, %v1400, %v1424
  %v1433 = vsel %vm1417, %v1402, %v1425
  %v1434 = vsel %vm1418, %v1406, %v1426
  %v1435 = vsel %vm1419, %v1408, %v1427
  %v1436 = vsel %vm1420, %v1410, %v1428
  %v1437 = vsel %vm1421, %v1412, %v1429
  %v1438 = vmax.f32 %v1193, %v1272
  %v1439 = vmax.f32 %v1194, %v1273
  %v1440 = vmax.f32 %v1195, %v1274
  %v1441 = vmax.f32 %v1196, %v1275
  %v1442 = vmax.f32 %v1197, %v1276
  %v1443 = vmax.f32 %v1198, %v1277
  %v1444 = vmax.f32 %v1199, %v1278
  %v1445 = vmax.f32 %v1200, %v1279
  %v1446 = vmax.f32 %v1438, %v1351
  %v1447 = vmax.f32 %v1439, %v1352
  %v1448 = vmax.f32 %v1440, %v1353
  %v1449 = vmax.f32 %v1441, %v1354
  %v1450 = vmax.f32 %v1442, %v1355
  %v1451 = vmax.f32 %v1443, %v1356
  %v1452 = vmax.f32 %v1444, %v1357
  %v1453 = vmax.f32 %v1445, %v1358
  %v1454 = vmax.f32 %v1446, %v1430
  %v1455 = vmax.f32 %v1447, %v1431
  %v1456 = vmax.f32 %v1448, %v1432
  %v1457 = vmax.f32 %v1449, %v1433
  %v1458 = vmax.f32 %v1450, %v1434
  %v1459 = vmax.f32 %v1451, %v1435
  %v1460 = vmax.f32 %v1452, %v1436
  %v1461 = vmax.f32 %v1453, %v1437
  %1466 = vrot.lane.b32.xlu0 %v683, 64
  %v1467 = vpop.permute.xlu0 %1466
  %1468 = vrot.lane.b32.xlu0 %v684, 64
  %v1469 = vpop.permute.xlu0 %1468
  %1470 = vrot.lane.b32.xlu0 %v685, 64
  %v1471 = vpop.permute.xlu0 %1470
  %1472 = vrot.lane.b32.xlu0 %v686, 64
  %v1473 = vpop.permute.xlu0 %1472
  %v1478 = vsel %vm400, %v355, %v1467
  %v1479 = vsel %vm400, %v356, %v1469
  %v1480 = vsel %vm400, %v357, %v1471
  %v1481 = vsel %vm400, %v358, %v1473
  %v1482 = vpack.c.bf16 %v1479, %v1478
  %v1483 = vpack.c.bf16 %v1011, %v1010
  %v1484 = vpack.c.bf16 %v1456, %v1454
  %v1485 = vpack.c.bf16 %v1457, %v1455
  %v1486 = vpack.c.bf16 %v1481, %v1480
  %v1487 = vpack.c.bf16 %v1013, %v1012
  %v1488 = vpack.c.bf16 %v1460, %v1458
  %v1489 = vpack.c.bf16 %v1461, %v1459
  %v1490 = vld [vmem:[%s9] sm:$0xf]
  %v1491 = vld [vmem:[%s9 + $0x4] sm:$0xf]
  %v1492 = vld [vmem:[%s9 + $0x8] sm:$0xf]
  %v1493 = vld [vmem:[%s9 + $0xc] sm:$0xf]
  %v1494 = vld [vmem:[%s9 + $0x10] sm:$0xf]
  %v1495 = vld [vmem:[%s9 + $0x14] sm:$0xf]
  %v1496 = vld [vmem:[%s9 + $0x18] sm:$0xf]
  %v1497 = vld [vmem:[%s9 + $0x1c] sm:$0xf]
  %v1498 = vld [vmem:[%s9 + $0x20] sm:$0xf]
  %v1499 = vld [vmem:[%s9 + $0x24] sm:$0xf]
  %v1500 = vld [vmem:[%s9 + $0x28] sm:$0xf]
  %v1501 = vld [vmem:[%s9 + $0x2c] sm:$0xf]
  %v1502 = vld [vmem:[%s9 + $0x30] sm:$0xf]
  %v1503 = vld [vmem:[%s9 + $0x34] sm:$0xf]
  %v1504 = vld [vmem:[%s9 + $0x38] sm:$0xf]
  %v1505 = vld [vmem:[%s9 + $0x3c] sm:$0xf]
  %v1506 = vld [vmem:[%s9 + $0x40] sm:$0xf]
  %v1507 = vld [vmem:[%s9 + $0x44] sm:$0xf]
  %v1508 = vld [vmem:[%s9 + $0x48] sm:$0xf]
  %v1509 = vld [vmem:[%s9 + $0x4c] sm:$0xf]
  %v1510 = vld [vmem:[%s9 + $0x50] sm:$0xf]
  %v1511 = vld [vmem:[%s9 + $0x54] sm:$0xf]
  %v1512 = vld [vmem:[%s9 + $0x58] sm:$0xf]
  %v1513 = vld [vmem:[%s9 + $0x5c] sm:$0xf]
  %v1514 = vld [vmem:[%s9 + $0x60] sm:$0xf]
  %v1515 = vld [vmem:[%s9 + $0x64] sm:$0xf]
  %v1516 = vld [vmem:[%s9 + $0x68] sm:$0xf]
  %v1517 = vld [vmem:[%s9 + $0x6c] sm:$0xf]
  %v1518 = vld [vmem:[%s9 + $0x70] sm:$0xf]
  %v1519 = vld [vmem:[%s9 + $0x74] sm:$0xf]
  %v1520 = vld [vmem:[%s9 + $0x78] sm:$0xf]
  %v1521 = vld [vmem:[%s9 + $0x7c] sm:$0xf]
  %v1522 = vld [vmem:[%s9 + $0x80] sm:$0xf]
  %v1523 = vld [vmem:[%s9 + $0x84] sm:$0xf]
  %v1524 = vld [vmem:[%s9 + $0x88] sm:$0xf]
  %v1525 = vld [vmem:[%s9 + $0x8c] sm:$0xf]
  %v1526 = vld [vmem:[%s9 + $0x90] sm:$0xf]
  %v1527 = vld [vmem:[%s9 + $0x94] sm:$0xf]
  %v1528 = vld [vmem:[%s9 + $0x98] sm:$0xf]
  %v1529 = vld [vmem:[%s9 + $0x9c] sm:$0xf]
  %v1530 = vld [vmem:[%s9 + $0xa0] sm:$0xf]
  %v1531 = vld [vmem:[%s9 + $0xa4] sm:$0xf]
  %v1532 = vld [vmem:[%s9 + $0xa8] sm:$0xf]
  %v1533 = vld [vmem:[%s9 + $0xac] sm:$0xf]
  %v1534 = vld [vmem:[%s9 + $0xb0] sm:$0xf]
  %v1535 = vld [vmem:[%s9 + $0xb4] sm:$0xf]
  %v1536 = vld [vmem:[%s9 + $0xb8] sm:$0xf]
  %v1537 = vld [vmem:[%s9 + $0xbc] sm:$0xf]
  %v1538 = vld [vmem:[%s9 + $0xc0] sm:$0xf]
  %v1539 = vld [vmem:[%s9 + $0xc4] sm:$0xf]
  %v1540 = vld [vmem:[%s9 + $0xc8] sm:$0xf]
  %v1541 = vld [vmem:[%s9 + $0xcc] sm:$0xf]
  %v1542 = vld [vmem:[%s9 + $0xd0] sm:$0xf]
  %v1543 = vld [vmem:[%s9 + $0xd4] sm:$0xf]
  %v1544 = vld [vmem:[%s9 + $0xd8] sm:$0xf]
  %v1545 = vld [vmem:[%s9 + $0xdc] sm:$0xf]
  %v1546 = vld [vmem:[%s9 + $0xe0] sm:$0xf]
  %v1547 = vld [vmem:[%s9 + $0xe4] sm:$0xf]
  %v1548 = vld [vmem:[%s9 + $0xe8] sm:$0xf]
  %v1549 = vld [vmem:[%s9 + $0xec] sm:$0xf]
  %v1550 = vld [vmem:[%s9 + $0xf0] sm:$0xf]
  %v1551 = vld [vmem:[%s9 + $0xf4] sm:$0xf]
  %v1552 = vld [vmem:[%s9 + $0xf8] sm:$0xf]
  %v1553 = vld [vmem:[%s9 + $0xfc] sm:$0xf]
  %v1554 = vld [vmem:[%s10] sm:$0x1]
  %v1556 = vlaneseq
  %v1557 = vshrl.u32 %v1556, 7
  %v1558 = vsub.s32 0, %v1557
  %v1559 = vrot.slane %v1554, %v1558
  %v1625 = vunpack.c.l.b16 %v1490
  %v1626 = vunpack.c.l.b16 %v1491
  %v1627 = vunpack.c.l.b16 %v1492
  %v1628 = vunpack.c.l.b16 %v1493
  %v1629 = vunpack.c.l.b16 %v1494
  %v1630 = vunpack.c.l.b16 %v1495
  %v1631 = vunpack.c.l.b16 %v1496
  %v1632 = vunpack.c.l.b16 %v1497
  %v1633 = vunpack.c.l.b16 %v1498
  %v1634 = vunpack.c.l.b16 %v1499
  %v1635 = vunpack.c.l.b16 %v1500
  %v1636 = vunpack.c.l.b16 %v1501
  %v1637 = vunpack.c.l.b16 %v1502
  %v1638 = vunpack.c.l.b16 %v1503
  %v1639 = vunpack.c.l.b16 %v1504
  %v1640 = vunpack.c.l.b16 %v1505
  %v1641 = vunpack.c.l.b16 %v1506
  %v1642 = vunpack.c.l.b16 %v1507
  %v1643 = vunpack.c.l.b16 %v1508
  %v1644 = vunpack.c.l.b16 %v1509
  %v1645 = vunpack.c.l.b16 %v1510
  %v1646 = vunpack.c.l.b16 %v1511
  %v1647 = vunpack.c.l.b16 %v1512
  %v1648 = vunpack.c.l.b16 %v1513
  %v1649 = vunpack.c.l.b16 %v1514
  %v1650 = vunpack.c.l.b16 %v1515
  %v1651 = vunpack.c.l.b16 %v1516
  %v1652 = vunpack.c.l.b16 %v1517
  %v1653 = vunpack.c.l.b16 %v1518
  %v1654 = vunpack.c.l.b16 %v1519
  %v1655 = vunpack.c.l.b16 %v1520
  %v1656 = vunpack.c.l.b16 %v1521
  %v1657 = vunpack.c.l.b16 %v1522
  %v1658 = vunpack.c.l.b16 %v1523
  %v1659 = vunpack.c.l.b16 %v1524
  %v1660 = vunpack.c.l.b16 %v1525
  %v1661 = vunpack.c.l.b16 %v1526
  %v1662 = vunpack.c.l.b16 %v1527
  %v1663 = vunpack.c.l.b16 %v1528
  %v1664 = vunpack.c.l.b16 %v1529
  %v1665 = vunpack.c.l.b16 %v1530
  %v1666 = vunpack.c.l.b16 %v1531
  %v1667 = vunpack.c.l.b16 %v1532
  %v1668 = vunpack.c.l.b16 %v1533
  %v1669 = vunpack.c.l.b16 %v1534
  %v1670 = vunpack.c.l.b16 %v1535
  %v1671 = vunpack.c.l.b16 %v1536
  %v1672 = vunpack.c.l.b16 %v1537
  %v1673 = vunpack.c.l.b16 %v1538
  %v1674 = vunpack.c.l.b16 %v1539
  %v1675 = vunpack.c.l.b16 %v1540
  %v1676 = vunpack.c.l.b16 %v1541
  %v1677 = vunpack.c.l.b16 %v1542
  %v1678 = vunpack.c.l.b16 %v1543
  %v1679 = vunpack.c.l.b16 %v1544
  %v1680 = vunpack.c.l.b16 %v1545
  %v1681 = vunpack.c.l.b16 %v1546
  %v1682 = vunpack.c.l.b16 %v1547
  %v1683 = vunpack.c.l.b16 %v1548
  %v1684 = vunpack.c.l.b16 %v1549
  %v1685 = vunpack.c.l.b16 %v1550
  %v1686 = vunpack.c.l.b16 %v1551
  %v1687 = vunpack.c.l.b16 %v1552
  %v1688 = vunpack.c.l.b16 %v1553
  %v1689 = vpack.c.b16 %v1626, %v1625
  %v1690 = vpack.c.b16 %v1628, %v1627
  %v1691 = vpack.c.b16 %v1630, %v1629
  %v1692 = vpack.c.b16 %v1632, %v1631
  %v1693 = vpack.c.b16 %v1634, %v1633
  %v1694 = vpack.c.b16 %v1636, %v1635
  %v1695 = vpack.c.b16 %v1638, %v1637
  %v1696 = vpack.c.b16 %v1640, %v1639
  %v1697 = vpack.c.b16 %v1642, %v1641
  %v1698 = vpack.c.b16 %v1644, %v1643
  %v1699 = vpack.c.b16 %v1646, %v1645
  %v1700 = vpack.c.b16 %v1648, %v1647
  %v1701 = vpack.c.b16 %v1650, %v1649
  %v1702 = vpack.c.b16 %v1652, %v1651
  %v1703 = vpack.c.b16 %v1654, %v1653
  %v1704 = vpack.c.b16 %v1656, %v1655
  %v1705 = vpack.c.b16 %v1658, %v1657
  %v1706 = vpack.c.b16 %v1660, %v1659
  %v1707 = vpack.c.b16 %v1662, %v1661
  %v1708 = vpack.c.b16 %v1664, %v1663
  %v1709 = vpack.c.b16 %v1666, %v1665
  %v1710 = vpack.c.b16 %v1668, %v1667
  %v1711 = vpack.c.b16 %v1670, %v1669
  %v1712 = vpack.c.b16 %v1672, %v1671
  %v1713 = vpack.c.b16 %v1674, %v1673
  %v1714 = vpack.c.b16 %v1676, %v1675
  %v1715 = vpack.c.b16 %v1678, %v1677
  %v1716 = vpack.c.b16 %v1680, %v1679
  %v1717 = vpack.c.b16 %v1682, %v1681
  %v1718 = vpack.c.b16 %v1684, %v1683
  %v1719 = vpack.c.b16 %v1686, %v1685
  %v1720 = vpack.c.b16 %v1688, %v1687
  %1753 = vmatprep.subr.bf16.mxu0 0
  %1754 = vmatpush1.bf16.msra.mxu0 %v1696
  %1755 = vmatprep.subr.bf16.mxu0 0
  %1756 = vmatpush1.bf16.msra.mxu0 %v1695
  %1757 = vmatprep.subr.bf16.mxu0 0
  %1758 = vmatpush1.bf16.msra.mxu0 %v1694
  %1759 = vmatprep.subr.bf16.mxu0 0
  %1760 = vmatpush1.bf16.msra.mxu0 %v1693
  %1761 = vmatprep.subr.bf16.mxu0 0
  %1762 = vmatpush1.bf16.msra.mxu0 %v1692
  %1763 = vmatprep.subr.bf16.mxu0 0
  %1764 = vmatpush1.bf16.msra.mxu0 %v1691
  %1765 = vmatprep.subr.bf16.mxu0 0
  %1766 = vmatpush1.bf16.msra.mxu0 %v1690
  %1767 = vmatprep.subr.bf16.mxu0 0
  %1768 = vmatpush1.bf16.msra.mxu0 %v1689
  %1769 = vmatprep.subr.bf16.mxu0 0
  %1770 = vmatpush2.bf16.msra.mxu0 %v1704
  %1771 = vmatprep.subr.bf16.mxu0 0
  %1772 = vmatpush2.bf16.msra.mxu0 %v1703
  %1773 = vmatprep.subr.bf16.mxu0 0
  %1774 = vmatpush2.bf16.msra.mxu0 %v1702
  %1775 = vmatprep.subr.bf16.mxu0 0
  %1776 = vmatpush2.bf16.msra.mxu0 %v1701
  %1777 = vmatprep.subr.bf16.mxu0 0
  %1778 = vmatpush2.bf16.msra.mxu0 %v1700
  %1779 = vmatprep.subr.bf16.mxu0 0
  %1780 = vmatpush2.bf16.msra.mxu0 %v1699
  %1781 = vmatprep.subr.bf16.mxu0 0
  %1782 = vmatpush2.bf16.msra.mxu0 %v1698
  %1783 = vmatprep.subr.bf16.mxu0 0
  %1784 = vmatpush2.bf16.msra.mxu0 %v1697
  %1785 = vmatprep.mubr.bf16.mxu0 %v1483
  %1786 = vmatmul.mubr.bf16.gmra.mxu0 %v1482
  %v1787 = vpop.f32.mrf.mxu0
  %v1788 = vadd.f32 %v1559, %v1787
  %v1789 = vpop.f32.mrf.mxu0
  %v1790 = vpop.f32.mrf.mxu0
  %v1791 = vadd.f32 %v1559, %v1790
  %v1792 = vpop.f32.mrf.mxu0
  %1793 = vmatprep.mubr.bf16.mxu0 %v1487
  %1794 = vmatmul.mubr.bf16.gmra.mxu0 %v1486
  %v1795 = vpop.f32.mrf.mxu0
  %v1796 = vadd.f32 %v1559, %v1795
  %v1797 = vpop.f32.mrf.mxu0
  %v1798 = vpop.f32.mrf.mxu0
  %v1799 = vadd.f32 %v1559, %v1798
  %v1800 = vpop.f32.mrf.mxu0
  %1801 = vdwg.mxu0
  %1802 = vmatprep.subr.bf16.mxu0 0
  %1803 = vmatpush1.bf16.msra.mxu0 %v1712
  %1804 = vmatprep.subr.bf16.mxu0 0
  %1805 = vmatpush1.bf16.msra.mxu0 %v1711
  %1806 = vmatprep.subr.bf16.mxu0 0
  %1807 = vmatpush1.bf16.msra.mxu0 %v1710
  %1808 = vmatprep.subr.bf16.mxu0 0
  %1809 = vmatpush1.bf16.msra.mxu0 %v1709
  %1810 = vmatprep.subr.bf16.mxu0 0
  %1811 = vmatpush1.bf16.msra.mxu0 %v1708
  %1812 = vmatprep.subr.bf16.mxu0 0
  %1813 = vmatpush1.bf16.msra.mxu0 %v1707
  %1814 = vmatprep.subr.bf16.mxu0 0
  %1815 = vmatpush1.bf16.msra.mxu0 %v1706
  %1816 = vmatprep.subr.bf16.mxu0 0
  %1817 = vmatpush1.bf16.msra.mxu0 %v1705
  %1818 = vmatprep.subr.bf16.mxu0 0
  %1819 = vmatpush2.bf16.msra.mxu0 %v1720
  %1820 = vmatprep.subr.bf16.mxu0 0
  %1821 = vmatpush2.bf16.msra.mxu0 %v1719
  %1822 = vmatprep.subr.bf16.mxu0 0
  %1823 = vmatpush2.bf16.msra.mxu0 %v1718
  %1824 = vmatprep.subr.bf16.mxu0 0
  %1825 = vmatpush2.bf16.msra.mxu0 %v1717
  %1826 = vmatprep.subr.bf16.mxu0 0
  %1827 = vmatpush2.bf16.msra.mxu0 %v1716
  %1828 = vmatprep.subr.bf16.mxu0 0
  %1829 = vmatpush2.bf16.msra.mxu0 %v1715
  %1830 = vmatprep.subr.bf16.mxu0 0
  %1831 = vmatpush2.bf16.msra.mxu0 %v1714
  %1832 = vmatprep.subr.bf16.mxu0 0
  %1833 = vmatpush2.bf16.msra.mxu0 %v1713
  %1834 = vmatprep.mubr.bf16.mxu0 %v1485
  %1835 = vmatmul.mubr.bf16.gmra.mxu0 %v1484
  %v1836 = vpop.f32.mrf.mxu0
  %v1837 = vadd.f32 %v1788, %v1836
  %v1838 = vpop.f32.mrf.mxu0
  %v1839 = vpop.f32.mrf.mxu0
  %v1840 = vadd.f32 %v1791, %v1839
  %v1841 = vpop.f32.mrf.mxu0
  %1842 = vmatprep.mubr.bf16.mxu0 %v1489
  %1843 = vmatmul.mubr.bf16.gmra.mxu0 %v1488
  %v1844 = vpop.f32.mrf.mxu0
  %v1845 = vadd.f32 %v1796, %v1844
  %v1846 = vpop.f32.mrf.mxu0
  %v1847 = vpop.f32.mrf.mxu0
  %v1848 = vadd.f32 %v1799, %v1847
  %v1849 = vpop.f32.mrf.mxu0
  %1850 = vdwg.mxu0
  %vm1851 = vcmp.gt.f32.partialorder %v1837, 0.0
  %vm1852 = vcmp.gt.f32.partialorder %v1840, 0.0
  %vm1853 = vcmp.gt.f32.partialorder %v1845, 0.0
  %vm1854 = vcmp.gt.f32.partialorder %v1848, 0.0
  %v1855 = vmul.f32 %v1837, 0.2
  %v1856 = vmul.f32 %v1840, 0.2
  %v1857 = vmul.f32 %v1845, 0.2
  %v1858 = vmul.f32 %v1848, 0.2
  %v1859 = vsel %vm1851, %v1837, %v1855
  %v1860 = vsel %vm1852, %v1840, %v1856
  %v1861 = vsel %vm1853, %v1845, %v1857
  %v1862 = vsel %vm1854, %v1848, %v1858
  %1863 = vst [vmem:[%s11] sm:$0xff] %v1859
  %1864 = vst [vmem:[%s11 + $0x8] sm:$0xff] %v1860
  %1865 = vst [vmem:[%s11 + $0x10] sm:$0xff] %v1861
  %1866 = vst [vmem:[%s11 + $0x18] sm:$0xff] %v1862
  // Predicated region
  $region46: #{model_forward.24} parent=0 // pred_check
    _
  $region47: #{model_forward.24} parent=0 // pred_check_branch
    %1868 = sbr.rel (0) target = $region49
  $region48: #{model_forward.24} parent=0 // pred_region
    _
  $region49: #{model_forward.24} parent=0 // pred_fallthru
    _
  // Predicated region
  $region50: #{model_forward.24} parent=0 // pred_check
    _
  $region51: #{model_forward.24} parent=0 // pred_check_branch
    %1870 = sbr.rel (0) target = $region53
  $region52: #{model_forward.24} parent=0 // pred_region
    _
  $region53: #{model_forward.24} parent=0 // pred_fallthru
    _

// kernel: model_forward.44
$region0: #{model_forward.44}
  #allocation0 [shape = 'u32[]', space=smem, size = 0x4, offset = 0x4, fixed_abs, tag = 'smem constant byte address 0x4 - core index']
  #allocation1 [shape = 'u32[144,128]{1,0:T(1,128)}', space=vmem, size = 0x12000, scoped, tag = 'internal scratch']
  %s0 = inlined_call_operand.vmem [shape: f32[32,128], index: 0, kind: input, shape index: {}]
  %s1 = inlined_call_operand.vmem [shape: bf16[128,128], index: 1, kind: input, shape index: {}]
  %s2 = inlined_call_operand.vmem [shape: f32[1,128], index: 2, kind: input, shape index: {}]
  %s3 = inlined_call_operand.vmem [shape: bf16[128,64], index: 3, kind: input, shape index: {}]
  %s4 = inlined_call_operand.vmem [shape: f32[1,64], index: 4, kind: input, shape index: {}]
  %s5 = inlined_call_operand.vmem [shape: bf16[64,128], index: 5, kind: input, shape index: {}]
  %s6 = inlined_call_operand.vmem [shape: f32[1,128], index: 6, kind: input, shape index: {}]
  %s7 = inlined_call_operand.vmem [shape: f32[32,128], index: 7, kind: output, shape index: {}]
  %s8 = sld [smem:[#allocation0]]
  $region38: #{model_forward.44} parent=0
    _
  %s10 = ssub.s32 1, %s8
  %s11 = scalar_select 0, %s10, %s8
  // Predicated region
  $region2: #{model_forward.44} parent=0 // pred_check
    _
  $region3: #{model_forward.44} parent=0 // pred_check_branch
    %13 = sbr.rel (0) target = $region5
  $region4: #{model_forward.44} parent=0 // pred_region
    _
  $region5: #{model_forward.44} parent=0 // pred_fallthru
    _
  // Predicated region
  $region6: #{model_forward.44} parent=0 // pred_check
    _
  $region7: #{model_forward.44} parent=0 // pred_check_branch
    %15 = sbr.rel (0) target = $region9
  $region8: #{model_forward.44} parent=0 // pred_region
    _
  $region9: #{model_forward.44} parent=0 // pred_fallthru
    _
  // Predicated region
  $region10: #{model_forward.44} parent=0 // pred_check
    _
  $region11: #{model_forward.44} parent=0 // pred_check_branch
    %17 = sbr.rel (0) target = $region13
  $region12: #{model_forward.44} parent=0 // pred_region
    _
  $region13: #{model_forward.44} parent=0 // pred_fallthru
    _
  // Predicated region
  $region14: #{model_forward.44} parent=0 // pred_check
    _
  $region15: #{model_forward.44} parent=0 // pred_check_branch
    %19 = sbr.rel (0) target = $region17
  $region16: #{model_forward.44} parent=0 // pred_region
    _
  $region17: #{model_forward.44} parent=0 // pred_fallthru
    _
  // Predicated region
  $region18: #{model_forward.44} parent=0 // pred_check
    _
  $region19: #{model_forward.44} parent=0 // pred_check_branch
    %21 = sbr.rel (0) target = $region21
  $region20: #{model_forward.44} parent=0 // pred_region
    _
  $region21: #{model_forward.44} parent=0 // pred_fallthru
    _
  // Predicated region
  $region22: #{model_forward.44} parent=0 // pred_check
    _
  $region23: #{model_forward.44} parent=0 // pred_check_branch
    %23 = sbr.rel (0) target = $region25
  $region24: #{model_forward.44} parent=0 // pred_region
    _
  $region25: #{model_forward.44} parent=0 // pred_fallthru
    _
  // Predicated region
  $region26: #{model_forward.44} parent=0 // pred_check
    _
  $region27: #{model_forward.44} parent=0 // pred_check_branch
    %25 = sbr.rel (0) target = $region29
  $region28: #{model_forward.44} parent=0 // pred_region
    _
  $region29: #{model_forward.44} parent=0 // pred_fallthru
    _
  %v27 = vld [vmem:[%s0] sm:$0xff]
  %v28 = vld [vmem:[%s0 + $0x8] sm:$0xff]
  %v29 = vld [vmem:[%s0 + $0x10] sm:$0xff]
  %v30 = vld [vmem:[%s0 + $0x18] sm:$0xff]
  %v31 = vpack.c.bf16 %v28, %v27
  %v32 = vpack.c.bf16 %v30, %v29
  %v33 = vld [vmem:[%s1] sm:$0xf]
  %v34 = vld [vmem:[%s1 + $0x4] sm:$0xf]
  %v35 = vld [vmem:[%s1 + $0x8] sm:$0xf]
  %v36 = vld [vmem:[%s1 + $0xc] sm:$0xf]
  %v37 = vld [vmem:[%s1 + $0x10] sm:$0xf]
  %v38 = vld [vmem:[%s1 + $0x14] sm:$0xf]
  %v39 = vld [vmem:[%s1 + $0x18] sm:$0xf]
  %v40 = vld [vmem:[%s1 + $0x1c] sm:$0xf]
  %v41 = vld [vmem:[%s1 + $0x20] sm:$0xf]
  %v42 = vld [vmem:[%s1 + $0x24] sm:$0xf]
  %v43 = vld [vmem:[%s1 + $0x28] sm:$0xf]
  %v44 = vld [vmem:[%s1 + $0x2c] sm:$0xf]
  %v45 = vld [vmem:[%s1 + $0x30] sm:$0xf]
  %v46 = vld [vmem:[%s1 + $0x34] sm:$0xf]
  %v47 = vld [vmem:[%s1 + $0x38] sm:$0xf]
  %v48 = vld [vmem:[%s1 + $0x3c] sm:$0xf]
  %v49 = vld [vmem:[%s2] sm:$0x1]
  %v51 = vlaneseq
  %v52 = vshrl.u32 %v51, 7
  %v53 = vsub.s32 0, %v52
  %v54 = vrot.slane %v49, %v53
  %v72 = vunpack.c.l.b16 %v33
  %v73 = vunpack.c.l.b16 %v34
  %v74 = vunpack.c.l.b16 %v35
  %v75 = vunpack.c.l.b16 %v36
  %v76 = vunpack.c.l.b16 %v37
  %v77 = vunpack.c.l.b16 %v38
  %v78 = vunpack.c.l.b16 %v39
  %v79 = vunpack.c.l.b16 %v40
  %v80 = vunpack.c.l.b16 %v41
  %v81 = vunpack.c.l.b16 %v42
  %v82 = vunpack.c.l.b16 %v43
  %v83 = vunpack.c.l.b16 %v44
  %v84 = vunpack.c.l.b16 %v45
  %v85 = vunpack.c.l.b16 %v46
  %v86 = vunpack.c.l.b16 %v47
  %v87 = vunpack.c.l.b16 %v48
  %v88 = vpack.c.b16 %v73, %v72
  %v89 = vpack.c.b16 %v75, %v74
  %v90 = vpack.c.b16 %v77, %v76
  %v91 = vpack.c.b16 %v79, %v78
  %v92 = vpack.c.b16 %v81, %v80
  %v93 = vpack.c.b16 %v83, %v82
  %v94 = vpack.c.b16 %v85, %v84
  %v95 = vpack.c.b16 %v87, %v86
  %104 = vmatprep.subr.bf16.mxu0 0
  %105 = vmatpush1.bf16.msra.mxu0 %v95
  %106 = vmatprep.subr.bf16.mxu0 0
  %107 = vmatpush1.bf16.msra.mxu0 %v94
  %108 = vmatprep.subr.bf16.mxu0 0
  %109 = vmatpush1.bf16.msra.mxu0 %v93
  %110 = vmatprep.subr.bf16.mxu0 0
  %111 = vmatpush1.bf16.msra.mxu0 %v92
  %112 = vmatprep.subr.bf16.mxu0 0
  %113 = vmatpush1.bf16.msra.mxu0 %v91
  %114 = vmatprep.subr.bf16.mxu0 0
  %115 = vmatpush1.bf16.msra.mxu0 %v90
  %116 = vmatprep.subr.bf16.mxu0 0
  %117 = vmatpush1.bf16.msra.mxu0 %v89
  %118 = vmatprep.subr.bf16.mxu0 0
  %119 = vmatpush1.bf16.msra.mxu0 %v88
  %120 = vmatprep.subr.bf16.mxu0 0
  %121 = vmatpush2.bf16.msra.mxu0 0
  %122 = vmatprep.subr.bf16.mxu0 0
  %123 = vmatpush2.bf16.msra.mxu0 0
  %124 = vmatprep.subr.bf16.mxu0 0
  %125 = vmatpush2.bf16.msra.mxu0 0
  %126 = vmatprep.subr.bf16.mxu0 0
  %127 = vmatpush2.bf16.msra.mxu0 0
  %128 = vmatprep.subr.bf16.mxu0 0
  %129 = vmatpush2.bf16.msra.mxu0 0
  %130 = vmatprep.subr.bf16.mxu0 0
  %131 = vmatpush2.bf16.msra.mxu0 0
  %132 = vmatprep.subr.bf16.mxu0 0
  %133 = vmatpush2.bf16.msra.mxu0 0
  %134 = vmatprep.subr.bf16.mxu0 0
  %135 = vmatpush2.bf16.msra.mxu0 0
  %136 = vmatprep.mubr.bf16.mxu0 0
  %137 = vmatmul.mubr.bf16.gmra.mxu0 %v31
  %v138 = vpop.f32.mrf.mxu0
  %v139 = vadd.f32 %v54, %v138
  %v140 = vpop.f32.mrf.mxu0
  %v141 = vpop.f32.mrf.mxu0
  %v142 = vadd.f32 %v54, %v141
  %v143 = vpop.f32.mrf.mxu0
  %144 = vmatprep.mubr.bf16.mxu0 0
  %145 = vmatmul.mubr.bf16.gmra.mxu0 %v32
  %v146 = vpop.f32.mrf.mxu0
  %v147 = vadd.f32 %v54, %v146
  %v148 = vpop.f32.mrf.mxu0
  %v149 = vpop.f32.mrf.mxu0
  %v150 = vadd.f32 %v54, %v149
  %v151 = vpop.f32.mrf.mxu0
  %152 = vdwg.mxu0
  %v153 = vmax.f32 %v139, 0.0
  %v154 = vmax.f32 %v142, 0.0
  %v155 = vmax.f32 %v147, 0.0
  %v156 = vmax.f32 %v150, 0.0
  %v157 = vpack.c.bf16 %v154, %v153
  %v158 = vpack.c.bf16 %v156, %v155
  %v159 = vld [vmem:[%s3] sm:$0xf]
  %v160 = vld [vmem:[%s3 + $0x4] sm:$0xf]
  %v161 = vld [vmem:[%s3 + $0x8] sm:$0xf]
  %v162 = vld [vmem:[%s3 + $0xc] sm:$0xf]
  %v163 = vld [vmem:[%s3 + $0x10] sm:$0xf]
  %v164 = vld [vmem:[%s3 + $0x14] sm:$0xf]
  %v165 = vld [vmem:[%s3 + $0x18] sm:$0xf]
  %v166 = vld [vmem:[%s3 + $0x1c] sm:$0xf]
  %v167 = vld [vmem:[%s3 + $0x20] sm:$0xf]
  %v168 = vld [vmem:[%s3 + $0x24] sm:$0xf]
  %v169 = vld [vmem:[%s3 + $0x28] sm:$0xf]
  %v170 = vld [vmem:[%s3 + $0x2c] sm:$0xf]
  %v171 = vld [vmem:[%s3 + $0x30] sm:$0xf]
  %v172 = vld [vmem:[%s3 + $0x34] sm:$0xf]
  %v173 = vld [vmem:[%s3 + $0x38] sm:$0xf]
  %v174 = vld [vmem:[%s3 + $0x3c] sm:$0xf]
  %v175 = vld [vmem:[%s4] sm:$0x1]
  %v177 = vlaneseq
  %v178 = vshrl.u32 %v177, 7
  %v179 = vsub.s32 0, %v178
  %v180 = vrot.slane %v175, %v179
  %v198 = vunpack.c.l.b16 %v159
  %v199 = vunpack.c.l.b16 %v160
  %v200 = vunpack.c.l.b16 %v161
  %v201 = vunpack.c.l.b16 %v162
  %v202 = vunpack.c.l.b16 %v163
  %v203 = vunpack.c.l.b16 %v164
  %v204 = vunpack.c.l.b16 %v165
  %v205 = vunpack.c.l.b16 %v166
  %v206 = vunpack.c.l.b16 %v167
  %v207 = vunpack.c.l.b16 %v168
  %v208 = vunpack.c.l.b16 %v169
  %v209 = vunpack.c.l.b16 %v170
  %v210 = vunpack.c.l.b16 %v171
  %v211 = vunpack.c.l.b16 %v172
  %v212 = vunpack.c.l.b16 %v173
  %v213 = vunpack.c.l.b16 %v174
  %v214 = vpack.c.b16 %v199, %v198
  %v215 = vpack.c.b16 %v201, %v200
  %v216 = vpack.c.b16 %v203, %v202
  %v217 = vpack.c.b16 %v205, %v204
  %v218 = vpack.c.b16 %v207, %v206
  %v219 = vpack.c.b16 %v209, %v208
  %v220 = vpack.c.b16 %v211, %v210
  %v221 = vpack.c.b16 %v213, %v212
  %230 = vmatprep.subr.bf16.mxu0 0
  %231 = vmatpush1.bf16.msra.mxu0 %v221
  %232 = vmatprep.subr.bf16.mxu0 0
  %233 = vmatpush1.bf16.msra.mxu0 %v220
  %234 = vmatprep.subr.bf16.mxu0 0
  %235 = vmatpush1.bf16.msra.mxu0 %v219
  %236 = vmatprep.subr.bf16.mxu0 0
  %237 = vmatpush1.bf16.msra.mxu0 %v218
  %238 = vmatprep.subr.bf16.mxu0 0
  %239 = vmatpush1.bf16.msra.mxu0 %v217
  %240 = vmatprep.subr.bf16.mxu0 0
  %241 = vmatpush1.bf16.msra.mxu0 %v216
  %242 = vmatprep.subr.bf16.mxu0 0
  %243 = vmatpush1.bf16.msra.mxu0 %v215
  %244 = vmatprep.subr.bf16.mxu0 0
  %245 = vmatpush1.bf16.msra.mxu0 %v214
  %246 = vmatprep.subr.bf16.mxu0 0
  %247 = vmatpush2.bf16.msra.mxu0 0
  %248 = vmatprep.subr.bf16.mxu0 0
  %249 = vmatpush2.bf16.msra.mxu0 0
  %250 = vmatprep.subr.bf16.mxu0 0
  %251 = vmatpush2.bf16.msra.mxu0 0
  %252 = vmatprep.subr.bf16.mxu0 0
  %253 = vmatpush2.bf16.msra.mxu0 0
  %254 = vmatprep.subr.bf16.mxu0 0
  %255 = vmatpush2.bf16.msra.mxu0 0
  %256 = vmatprep.subr.bf16.mxu0 0
  %257 = vmatpush2.bf16.msra.mxu0 0
  %258 = vmatprep.subr.bf16.mxu0 0
  %259 = vmatpush2.bf16.msra.mxu0 0
  %260 = vmatprep.subr.bf16.mxu0 0
  %261 = vmatpush2.bf16.msra.mxu0 0
  %262 = vmatprep.mubr.bf16.mxu0 0
  %263 = vmatmul.mubr.bf16.gmra.mxu0 %v157
  %v264 = vpop.f32.mrf.mxu0
  %v265 = vadd.f32 %v180, %v264
  %v266 = vpop.f32.mrf.mxu0
  %v267 = vpop.f32.mrf.mxu0
  %v268 = vadd.f32 %v180, %v267
  %v269 = vpop.f32.mrf.mxu0
  %270 = vmatprep.mubr.bf16.mxu0 0
  %271 = vmatmul.mubr.bf16.gmra.mxu0 %v158
  %v272 = vpop.f32.mrf.mxu0
  %v273 = vadd.f32 %v180, %v272
  %v274 = vpop.f32.mrf.mxu0
  %v275 = vpop.f32.mrf.mxu0
  %v276 = vadd.f32 %v180, %v275
  %v277 = vpop.f32.mrf.mxu0
  %278 = vdwg.mxu0
  %v279 = vmax.f32 %v265, 0.0
  %v280 = vmax.f32 %v268, 0.0
  %v281 = vmax.f32 %v273, 0.0
  %v282 = vmax.f32 %v276, 0.0
  %v283 = vpack.c.bf16 %v280, %v279
  %v284 = vpack.c.bf16 %v282, %v281
  %v285 = vld [vmem:[%s5] sm:$0xf]
  %v286 = vld [vmem:[%s5 + $0x4] sm:$0xf]
  %v287 = vld [vmem:[%s5 + $0x8] sm:$0xf]
  %v288 = vld [vmem:[%s5 + $0xc] sm:$0xf]
  %v289 = vld [vmem:[%s5 + $0x10] sm:$0xf]
  %v290 = vld [vmem:[%s5 + $0x14] sm:$0xf]
  %v291 = vld [vmem:[%s5 + $0x18] sm:$0xf]
  %v292 = vld [vmem:[%s5 + $0x1c] sm:$0xf]
  %v293 = vld [vmem:[%s6] sm:$0x1]
  %v295 = vlaneseq
  %v296 = vshrl.u32 %v295, 7
  %v297 = vsub.s32 0, %v296
  %v298 = vrot.slane %v293, %v297
  %v308 = vunpack.c.l.b16 %v285
  %v309 = vunpack.c.l.b16 %v286
  %v310 = vunpack.c.l.b16 %v287
  %v311 = vunpack.c.l.b16 %v288
  %v312 = vunpack.c.l.b16 %v289
  %v313 = vunpack.c.l.b16 %v290
  %v314 = vunpack.c.l.b16 %v291
  %v315 = vunpack.c.l.b16 %v292
  %v316 = vpack.c.b16 %v309, %v308
  %v317 = vpack.c.b16 %v311, %v310
  %v318 = vpack.c.b16 %v313, %v312
  %v319 = vpack.c.b16 %v315, %v314
  %vm324 = vcmask 523264
  %v326 = vsel %vm324, %v283, 0
  %v329 = vsel %vm324, %v284, 0
  %331 = vmatprep.subr.bf16.mxu0 0
  %332 = vmatpush1.bf16.msra.mxu0 0
  %333 = vmatprep.subr.bf16.mxu0 0
  %334 = vmatpush1.bf16.msra.mxu0 0
  %335 = vmatprep.subr.bf16.mxu0 0
  %336 = vmatpush1.bf16.msra.mxu0 0
  %337 = vmatprep.subr.bf16.mxu0 0
  %338 = vmatpush1.bf16.msra.mxu0 0
  %339 = vmatprep.subr.bf16.mxu0 0
  %340 = vmatpush1.bf16.msra.mxu0 %v319
  %341 = vmatprep.subr.bf16.mxu0 0
  %342 = vmatpush1.bf16.msra.mxu0 %v318
  %343 = vmatprep.subr.bf16.mxu0 0
  %344 = vmatpush1.bf16.msra.mxu0 %v317
  %345 = vmatprep.subr.bf16.mxu0 0
  %346 = vmatpush1.bf16.msra.mxu0 %v316
  %347 = vmatprep.subr.bf16.mxu0 0
  %348 = vmatpush2.bf16.msra.mxu0 0
  %349 = vmatprep.subr.bf16.mxu0 0
  %350 = vmatpush2.bf16.msra.mxu0 0
  %351 = vmatprep.subr.bf16.mxu0 0
  %352 = vmatpush2.bf16.msra.mxu0 0
  %353 = vmatprep.subr.bf16.mxu0 0
  %354 = vmatpush2.bf16.msra.mxu0 0
  %355 = vmatprep.subr.bf16.mxu0 0
  %356 = vmatpush2.bf16.msra.mxu0 0
  %357 = vmatprep.subr.bf16.mxu0 0
  %358 = vmatpush2.bf16.msra.mxu0 0
  %359 = vmatprep.subr.bf16.mxu0 0
  %360 = vmatpush2.bf16.msra.mxu0 0
  %361 = vmatprep.subr.bf16.mxu0 0
  %362 = vmatpush2.bf16.msra.mxu0 0
  %363 = vmatprep.mubr.bf16.mxu0 0
  %364 = vmatmul.mubr.bf16.gmra.mxu0 %v326
  %v365 = vpop.f32.mrf.mxu0
  %v366 = vadd.f32 %v298, %v365
  %v367 = vpop.f32.mrf.mxu0
  %v368 = vpop.f32.mrf.mxu0
  %v369 = vadd.f32 %v298, %v368
  %v370 = vpop.f32.mrf.mxu0
  %371 = vmatprep.mubr.bf16.mxu0 0
  %372 = vmatmul.mubr.bf16.gmra.mxu0 %v329
  %v373 = vpop.f32.mrf.mxu0
  %v374 = vadd.f32 %v298, %v373
  %v375 = vpop.f32.mrf.mxu0
  %v376 = vpop.f32.mrf.mxu0
  %v377 = vadd.f32 %v298, %v376
  %v378 = vpop.f32.mrf.mxu0
  %379 = vdwg.mxu0
  %380 = vst [vmem:[%s7] sm:$0xff] %v366
  %381 = vst [vmem:[%s7 + $0x8] sm:$0xff] %v369
  %382 = vst [vmem:[%s7 + $0x10] sm:$0xff] %v374
  %383 = vst [vmem:[%s7 + $0x18] sm:$0xff] %v377
  // Predicated region
  $region30: #{model_forward.44} parent=0 // pred_check
    _
  $region31: #{model_forward.44} parent=0 // pred_check_branch
    %385 = sbr.rel (0) target = $region33
  $region32: #{model_forward.44} parent=0 // pred_region
    _
  $region33: #{model_forward.44} parent=0 // pred_fallthru
    _
  // Predicated region
  $region34: #{model_forward.44} parent=0 // pred_check
    _
  $region35: #{model_forward.44} parent=0 // pred_check_branch
    %387 = sbr.rel (0) target = $region37
  $region36: #{model_forward.44} parent=0 // pred_region
    _
  $region37: #{model_forward.44} parent=0 // pred_fallthru
    _

// kernel: model_forward.28
$region0: #{model_forward.28}
  #allocation0 [shape = 'u32[]', space=smem, size = 0x4, offset = 0x4, fixed_abs, tag = 'smem constant byte address 0x4 - core index']
  #allocation1 [shape = 'u32[144,128]{1,0:T(1,128)}', space=vmem, size = 0x12000, scoped, tag = 'internal scratch']
  %s0 = inlined_call_operand.vmem [shape: f32[32,128], index: 0, kind: input, shape index: {}]
  %s1 = inlined_call_operand.vmem [shape: bf16[128,2048], index: 1, kind: input, shape index: {}]
  %s2 = inlined_call_operand.vmem [shape: f32[1,2048], index: 2, kind: input, shape index: {}]
  %s3 = inlined_call_operand.vmem [shape: bf16[2048,128], index: 3, kind: input, shape index: {}]
  %s4 = inlined_call_operand.vmem [shape: f32[1,128], index: 4, kind: input, shape index: {}]
  %s5 = inlined_call_operand.vmem [shape: f32[1,128], index: 5, kind: input, shape index: {}]
  %s6 = inlined_call_operand.vmem [shape: f32[1,128], index: 6, kind: input, shape index: {}]
  %s7 = inlined_call_operand.vmem [shape: f32[32,128], index: 7, kind: output, shape index: {}]
  %s8 = sld [smem:[#allocation0]]
  $region38: #{model_forward.28} parent=0
    _
  %s10 = ssub.s32 1, %s8
  %s11 = scalar_select 0, %s10, %s8
  // Predicated region
  $region2: #{model_forward.28} parent=0 // pred_check
    _
  $region3: #{model_forward.28} parent=0 // pred_check_branch
    %13 = sbr.rel (0) target = $region5
  $region4: #{model_forward.28} parent=0 // pred_region
    _
  $region5: #{model_forward.28} parent=0 // pred_fallthru
    _
  // Predicated region
  $region6: #{model_forward.28} parent=0 // pred_check
    _
  $region7: #{model_forward.28} parent=0 // pred_check_branch
    %15 = sbr.rel (0) target = $region9
  $region8: #{model_forward.28} parent=0 // pred_region
    _
  $region9: #{model_forward.28} parent=0 // pred_fallthru
    _
  // Predicated region
  $region10: #{model_forward.28} parent=0 // pred_check
    _
  $region11: #{model_forward.28} parent=0 // pred_check_branch
    %17 = sbr.rel (0) target = $region13
  $region12: #{model_forward.28} parent=0 // pred_region
    _
  $region13: #{model_forward.28} parent=0 // pred_fallthru
    _
  // Predicated region
  $region14: #{model_forward.28} parent=0 // pred_check
    _
  $region15: #{model_forward.28} parent=0 // pred_check_branch
    %19 = sbr.rel (0) target = $region17
  $region16: #{model_forward.28} parent=0 // pred_region
    _
  $region17: #{model_forward.28} parent=0 // pred_fallthru
    _
  // Predicated region
  $region18: #{model_forward.28} parent=0 // pred_check
    _
  $region19: #{model_forward.28} parent=0 // pred_check_branch
    %21 = sbr.rel (0) target = $region21
  $region20: #{model_forward.28} parent=0 // pred_region
    _
  $region21: #{model_forward.28} parent=0 // pred_fallthru
    _
  // Predicated region
  $region22: #{model_forward.28} parent=0 // pred_check
    _
  $region23: #{model_forward.28} parent=0 // pred_check_branch
    %23 = sbr.rel (0) target = $region25
  $region24: #{model_forward.28} parent=0 // pred_region
    _
  $region25: #{model_forward.28} parent=0 // pred_fallthru
    _
  // Predicated region
  $region26: #{model_forward.28} parent=0 // pred_check
    _
  $region27: #{model_forward.28} parent=0 // pred_check_branch
    %25 = sbr.rel (0) target = $region29
  $region28: #{model_forward.28} parent=0 // pred_region
    _
  $region29: #{model_forward.28} parent=0 // pred_fallthru
    _
  %v27 = vld [vmem:[%s0] sm:$0xff]
  %v28 = vld [vmem:[%s0 + $0x8] sm:$0xff]
  %v29 = vld [vmem:[%s0 + $0x10] sm:$0xff]
  %v30 = vld [vmem:[%s0 + $0x18] sm:$0xff]
  %v31 = vpack.c.bf16 %v28, %v27
  %v32 = vpack.c.bf16 %v30, %v29
  %v33 = vld [vmem:[%s1] sm:$0xff]
  %v34 = vld [vmem:[%s1 + $0x8] sm:$0xff]
  %v35 = vld [vmem:[%s1 + $0x10] sm:$0xff]
  %v36 = vld [vmem:[%s1 + $0x18] sm:$0xff]
  %v37 = vld [vmem:[%s1 + $0x20] sm:$0xff]
  %v38 = vld [vmem:[%s1 + $0x28] sm:$0xff]
  %v39 = vld [vmem:[%s1 + $0x30] sm:$0xff]
  %v40 = vld [vmem:[%s1 + $0x38] sm:$0xff]
  %v41 = vld [vmem:[%s1 + $0x40] sm:$0xff]
  %v42 = vld [vmem:[%s1 + $0x48] sm:$0xff]
  %v43 = vld [vmem:[%s1 + $0x50] sm:$0xff]
  %v44 = vld [vmem:[%s1 + $0x58] sm:$0xff]
  %v45 = vld [vmem:[%s1 + $0x60] sm:$0xff]
  %v46 = vld [vmem:[%s1 + $0x68] sm:$0xff]
  %v47 = vld [vmem:[%s1 + $0x70] sm:$0xff]
  %v48 = vld [vmem:[%s1 + $0x78] sm:$0xff]
  %v49 = vld [vmem:[%s1 + $0x80] sm:$0xff]
  %v50 = vld [vmem:[%s1 + $0x88] sm:$0xff]
  %v51 = vld [vmem:[%s1 + $0x90] sm:$0xff]
  %v52 = vld [vmem:[%s1 + $0x98] sm:$0xff]
  %v53 = vld [vmem:[%s1 + $0xa0] sm:$0xff]
  %v54 = vld [vmem:[%s1 + $0xa8] sm:$0xff]
  %v55 = vld [vmem:[%s1 + $0xb0] sm:$0xff]
  %v56 = vld [vmem:[%s1 + $0xb8] sm:$0xff]
  %v57 = vld [vmem:[%s1 + $0xc0] sm:$0xff]
  %v58 = vld [vmem:[%s1 + $0xc8] sm:$0xff]
  %v59 = vld [vmem:[%s1 + $0xd0] sm:$0xff]
  %v60 = vld [vmem:[%s1 + $0xd8] sm:$0xff]
  %v61 = vld [vmem:[%s1 + $0xe0] sm:$0xff]
  %v62 = vld [vmem:[%s1 + $0xe8] sm:$0xff]
  %v63 = vld [vmem:[%s1 + $0xf0] sm:$0xff]
  %v64 = vld [vmem:[%s1 + $0xf8] sm:$0xff]
  %v65 = vld [vmem:[%s1 + $0x100] sm:$0xff]
  %v66 = vld [vmem:[%s1 + $0x108] sm:$0xff]
  %v67 = vld [vmem:[%s1 + $0x110] sm:$0xff]
  %v68 = vld [vmem:[%s1 + $0x118] sm:$0xff]
  %v69 = vld [vmem:[%s1 + $0x120] sm:$0xff]
  %v70 = vld [vmem:[%s1 + $0x128] sm:$0xff]
  %v71 = vld [vmem:[%s1 + $0x130] sm:$0xff]
  %v72 = vld [vmem:[%s1 + $0x138] sm:$0xff]
  %v73 = vld [vmem:[%s1 + $0x140] sm:$0xff]
  %v74 = vld [vmem:[%s1 + $0x148] sm:$0xff]
  %v75 = vld [vmem:[%s1 + $0x150] sm:$0xff]
  %v76 = vld [vmem:[%s1 + $0x158] sm:$0xff]
  %v77 = vld [vmem:[%s1 + $0x160] sm:$0xff]
  %v78 = vld [vmem:[%s1 + $0x168] sm:$0xff]
  %v79 = vld [vmem:[%s1 + $0x170] sm:$0xff]
  %v80 = vld [vmem:[%s1 + $0x178] sm:$0xff]
  %v81 = vld [vmem:[%s1 + $0x180] sm:$0xff]
  %v82 = vld [vmem:[%s1 + $0x188] sm:$0xff]
  %v83 = vld [vmem:[%s1 + $0x190] sm:$0xff]
  %v84 = vld [vmem:[%s1 + $0x198] sm:$0xff]
  %v85 = vld [vmem:[%s1 + $0x1a0] sm:$0xff]
  %v86 = vld [vmem:[%s1 + $0x1a8] sm:$0xff]
  %v87 = vld [vmem:[%s1 + $0x1b0] sm:$0xff]
  %v88 = vld [vmem:[%s1 + $0x1b8] sm:$0xff]
  %v89 = vld [vmem:[%s1 + $0x1c0] sm:$0xff]
  %v90 = vld [vmem:[%s1 + $0x1c8] sm:$0xff]
  %v91 = vld [vmem:[%s1 + $0x1d0] sm:$0xff]
  %v92 = vld [vmem:[%s1 + $0x1d8] sm:$0xff]
  %v93 = vld [vmem:[%s1 + $0x1e0] sm:$0xff]
  %v94 = vld [vmem:[%s1 + $0x1e8] sm:$0xff]
  %v95 = vld [vmem:[%s1 + $0x1f0] sm:$0xff]
  %v96 = vld [vmem:[%s1 + $0x1f8] sm:$0xff]
  %v97 = vld [vmem:[%s1 + $0x200] sm:$0xff]
  %v98 = vld [vmem:[%s1 + $0x208] sm:$0xff]
  %v99 = vld [vmem:[%s1 + $0x210] sm:$0xff]
  %v100 = vld [vmem:[%s1 + $0x218] sm:$0xff]
  %v101 = vld [vmem:[%s1 + $0x220] sm:$0xff]
  %v102 = vld [vmem:[%s1 + $0x228] sm:$0xff]
  %v103 = vld [vmem:[%s1 + $0x230] sm:$0xff]
  %v104 = vld [vmem:[%s1 + $0x238] sm:$0xff]
  %v105 = vld [vmem:[%s1 + $0x240] sm:$0xff]
  %v106 = vld [vmem:[%s1 + $0x248] sm:$0xff]
  %v107 = vld [vmem:[%s1 + $0x250] sm:$0xff]
  %v108 = vld [vmem:[%s1 + $0x258] sm:$0xff]
  %v109 = vld [vmem:[%s1 + $0x260] sm:$0xff]
  %v110 = vld [vmem:[%s1 + $0x268] sm:$0xff]
  %v111 = vld [vmem:[%s1 + $0x270] sm:$0xff]
  %v112 = vld [vmem:[%s1 + $0x278] sm:$0xff]
  %v113 = vld [vmem:[%s1 + $0x280] sm:$0xff]
  %v114 = vld [vmem:[%s1 + $0x288] sm:$0xff]
  %v115 = vld [vmem:[%s1 + $0x290] sm:$0xff]
  %v116 = vld [vmem:[%s1 + $0x298] sm:$0xff]
  %v117 = vld [vmem:[%s1 + $0x2a0] sm:$0xff]
  %v118 = vld [vmem:[%s1 + $0x2a8] sm:$0xff]
  %v119 = vld [vmem:[%s1 + $0x2b0] sm:$0xff]
  %v120 = vld [vmem:[%s1 + $0x2b8] sm:$0xff]
  %v121 = vld [vmem:[%s1 + $0x2c0] sm:$0xff]
  %v122 = vld [vmem:[%s1 + $0x2c8] sm:$0xff]
  %v123 = vld [vmem:[%s1 + $0x2d0] sm:$0xff]
  %v124 = vld [vmem:[%s1 + $0x2d8] sm:$0xff]
  %v125 = vld [vmem:[%s1 + $0x2e0] sm:$0xff]
  %v126 = vld [vmem:[%s1 + $0x2e8] sm:$0xff]
  %v127 = vld [vmem:[%s1 + $0x2f0] sm:$0xff]
  %v128 = vld [vmem:[%s1 + $0x2f8] sm:$0xff]
  %v129 = vld [vmem:[%s1 + $0x300] sm:$0xff]
  %v130 = vld [vmem:[%s1 + $0x308] sm:$0xff]
  %v131 = vld [vmem:[%s1 + $0x310] sm:$0xff]
  %v132 = vld [vmem:[%s1 + $0x318] sm:$0xff]
  %v133 = vld [vmem:[%s1 + $0x320] sm:$0xff]
  %v134 = vld [vmem:[%s1 + $0x328] sm:$0xff]
  %v135 = vld [vmem:[%s1 + $0x330] sm:$0xff]
  %v136 = vld [vmem:[%s1 + $0x338] sm:$0xff]
  %v137 = vld [vmem:[%s1 + $0x340] sm:$0xff]
  %v138 = vld [vmem:[%s1 + $0x348] sm:$0xff]
  %v139 = vld [vmem:[%s1 + $0x350] sm:$0xff]
  %v140 = vld [vmem:[%s1 + $0x358] sm:$0xff]
  %v141 = vld [vmem:[%s1 + $0x360] sm:$0xff]
  %v142 = vld [vmem:[%s1 + $0x368] sm:$0xff]
  %v143 = vld [vmem:[%s1 + $0x370] sm:$0xff]
  %v144 = vld [vmem:[%s1 + $0x378] sm:$0xff]
  %v145 = vld [vmem:[%s1 + $0x380] sm:$0xff]
  %v146 = vld [vmem:[%s1 + $0x388] sm:$0xff]
  %v147 = vld [vmem:[%s1 + $0x390] sm:$0xff]
  %v148 = vld [vmem:[%s1 + $0x398] sm:$0xff]
  %v149 = vld [vmem:[%s1 + $0x3a0] sm:$0xff]
  %v150 = vld [vmem:[%s1 + $0x3a8] sm:$0xff]
  %v151 = vld [vmem:[%s1 + $0x3b0] sm:$0xff]
  %v152 = vld [vmem:[%s1 + $0x3b8] sm:$0xff]
  %v153 = vld [vmem:[%s1 + $0x3c0] sm:$0xff]
  %v154 = vld [vmem:[%s1 + $0x3c8] sm:$0xff]
  %v155 = vld [vmem:[%s1 + $0x3d0] sm:$0xff]
  %v156 = vld [vmem:[%s1 + $0x3d8] sm:$0xff]
  %v157 = vld [vmem:[%s1 + $0x3e0] sm:$0xff]
  %v158 = vld [vmem:[%s1 + $0x3e8] sm:$0xff]
  %v159 = vld [vmem:[%s1 + $0x3f0] sm:$0xff]
  %v160 = vld [vmem:[%s1 + $0x3f8] sm:$0xff]
  %v161 = vld [vmem:[%s2] sm:$0xff]
  %v162 = vld [vmem:[%s2 + $0x8] sm:$0xff]
  %v165 = vlaneseq
  %v166 = vshrl.u32 %v165, 7
  %v167 = vsub.s32 0, %v166
  %v168 = vrot.slane %v161, %v167
  %v169 = vlaneseq
  %v170 = vshrl.u32 %v169, 7
  %v171 = vsub.s32 1, %v170
  %v172 = vrot.slane %v161, %v171
  %v173 = vlaneseq
  %v174 = vshrl.u32 %v173, 7
  %v175 = vsub.s32 2, %v174
  %v176 = vrot.slane %v161, %v175
  %v177 = vlaneseq
  %v178 = vshrl.u32 %v177, 7
  %v179 = vsub.s32 3, %v178
  %v180 = vrot.slane %v161, %v179
  %v181 = vlaneseq
  %v182 = vshrl.u32 %v181, 7
  %v183 = vsub.s32 4, %v182
  %v184 = vrot.slane %v161, %v183
  %v185 = vlaneseq
  %v186 = vshrl.u32 %v185, 7
  %v187 = vsub.s32 5, %v186
  %v188 = vrot.slane %v161, %v187
  %v189 = vlaneseq
  %v190 = vshrl.u32 %v189, 7
  %v191 = vsub.s32 6, %v190
  %v192 = vrot.slane %v161, %v191
  %v193 = vlaneseq
  %v194 = vshrl.u32 %v193, 7
  %v195 = vsub.s32 7, %v194
  %v196 = vrot.slane %v161, %v195
  %v197 = vlaneseq
  %v198 = vshrl.u32 %v197, 7
  %v199 = vsub.s32 0, %v198
  %v200 = vrot.slane %v162, %v199
  %v201 = vlaneseq
  %v202 = vshrl.u32 %v201, 7
  %v203 = vsub.s32 1, %v202
  %v204 = vrot.slane %v162, %v203
  %v205 = vlaneseq
  %v206 = vshrl.u32 %v205, 7
  %v207 = vsub.s32 2, %v206
  %v208 = vrot.slane %v162, %v207
  %v209 = vlaneseq
  %v210 = vshrl.u32 %v209, 7
  %v211 = vsub.s32 3, %v210
  %v212 = vrot.slane %v162, %v211
  %v213 = vlaneseq
  %v214 = vshrl.u32 %v213, 7
  %v215 = vsub.s32 4, %v214
  %v216 = vrot.slane %v162, %v215
  %v217 = vlaneseq
  %v218 = vshrl.u32 %v217, 7
  %v219 = vsub.s32 5, %v218
  %v220 = vrot.slane %v162, %v219
  %v221 = vlaneseq
  %v222 = vshrl.u32 %v221, 7
  %v223 = vsub.s32 6, %v222
  %v224 = vrot.slane %v162, %v223
  %v225 = vlaneseq
  %v226 = vshrl.u32 %v225, 7
  %v227 = vsub.s32 7, %v226
  %v228 = vrot.slane %v162, %v227
  %v373 = vunpack.c.l.b16 %v33
  %v374 = vunpack.c.h.b16 %v33
  %v375 = vunpack.c.l.b16 %v34
  %v376 = vunpack.c.h.b16 %v34
  %v377 = vunpack.c.l.b16 %v35
  %v378 = vunpack.c.h.b16 %v35
  %v379 = vunpack.c.l.b16 %v36
  %v380 = vunpack.c.h.b16 %v36
  %v381 = vunpack.c.l.b16 %v37
  %v382 = vunpack.c.h.b16 %v37
  %v383 = vunpack.c.l.b16 %v38
  %v384 = vunpack.c.h.b16 %v38
  %v385 = vunpack.c.l.b16 %v39
  %v386 = vunpack.c.h.b16 %v39
  %v387 = vunpack.c.l.b16 %v40
  %v388 = vunpack.c.h.b16 %v40
  %v389 = vunpack.c.l.b16 %v41
  %v390 = vunpack.c.h.b16 %v41
  %v391 = vunpack.c.l.b16 %v42
  %v392 = vunpack.c.h.b16 %v42
  %v393 = vunpack.c.l.b16 %v43
  %v394 = vunpack.c.h.b16 %v43
  %v395 = vunpack.c.l.b16 %v44
  %v396 = vunpack.c.h.b16 %v44
  %v397 = vunpack.c.l.b16 %v45
  %v398 = vunpack.c.h.b16 %v45
  %v399 = vunpack.c.l.b16 %v46
  %v400 = vunpack.c.h.b16 %v46
  %v401 = vunpack.c.l.b16 %v47
  %v402 = vunpack.c.h.b16 %v47
  %v403 = vunpack.c.l.b16 %v48
  %v404 = vunpack.c.h.b16 %v48
  %v405 = vunpack.c.l.b16 %v49
  %v406 = vunpack.c.h.b16 %v49
  %v407 = vunpack.c.l.b16 %v50
  %v408 = vunpack.c.h.b16 %v50
  %v409 = vunpack.c.l.b16 %v51
  %v410 = vunpack.c.h.b16 %v51
  %v411 = vunpack.c.l.b16 %v52
  %v412 = vunpack.c.h.b16 %v52
  %v413 = vunpack.c.l.b16 %v53
  %v414 = vunpack.c.h.b16 %v53
  %v415 = vunpack.c.l.b16 %v54
  %v416 = vunpack.c.h.b16 %v54
  %v417 = vunpack.c.l.b16 %v55
  %v418 = vunpack.c.h.b16 %v55
  %v419 = vunpack.c.l.b16 %v56
  %v420 = vunpack.c.h.b16 %v56
  %v421 = vunpack.c.l.b16 %v57
  %v422 = vunpack.c.h.b16 %v57
  %v423 = vunpack.c.l.b16 %v58
  %v424 = vunpack.c.h.b16 %v58
  %v425 = vunpack.c.l.b16 %v59
  %v426 = vunpack.c.h.b16 %v59
  %v427 = vunpack.c.l.b16 %v60
  %v428 = vunpack.c.h.b16 %v60
  %v429 = vunpack.c.l.b16 %v61
  %v430 = vunpack.c.h.b16 %v61
  %v431 = vunpack.c.l.b16 %v62
  %v432 = vunpack.c.h.b16 %v62
  %v433 = vunpack.c.l.b16 %v63
  %v434 = vunpack.c.h.b16 %v63
  %v435 = vunpack.c.l.b16 %v64
  %v436 = vunpack.c.h.b16 %v64
  %v437 = vunpack.c.l.b16 %v65
  %v438 = vunpack.c.h.b16 %v65
  %v439 = vunpack.c.l.b16 %v66
  %v440 = vunpack.c.h.b16 %v66
  %v441 = vunpack.c.l.b16 %v67
  %v442 = vunpack.c.h.b16 %v67
  %v443 = vunpack.c.l.b16 %v68
  %v444 = vunpack.c.h.b16 %v68
  %v445 = vunpack.c.l.b16 %v69
  %v446 = vunpack.c.h.b16 %v69
  %v447 = vunpack.c.l.b16 %v70
  %v448 = vunpack.c.h.b16 %v70
  %v449 = vunpack.c.l.b16 %v71
  %v450 = vunpack.c.h.b16 %v71
  %v451 = vunpack.c.l.b16 %v72
  %v452 = vunpack.c.h.b16 %v72
  %v453 = vunpack.c.l.b16 %v73
  %v454 = vunpack.c.h.b16 %v73
  %v455 = vunpack.c.l.b16 %v74
  %v456 = vunpack.c.h.b16 %v74
  %v457 = vunpack.c.l.b16 %v75
  %v458 = vunpack.c.h.b16 %v75
  %v459 = vunpack.c.l.b16 %v76
  %v460 = vunpack.c.h.b16 %v76
  %v461 = vunpack.c.l.b16 %v77
  %v462 = vunpack.c.h.b16 %v77
  %v463 = vunpack.c.l.b16 %v78
  %v464 = vunpack.c.h.b16 %v78
  %v465 = vunpack.c.l.b16 %v79
  %v466 = vunpack.c.h.b16 %v79
  %v467 = vunpack.c.l.b16 %v80
  %v468 = vunpack.c.h.b16 %v80
  %v469 = vunpack.c.l.b16 %v81
  %v470 = vunpack.c.h.b16 %v81
  %v471 = vunpack.c.l.b16 %v82
  %v472 = vunpack.c.h.b16 %v82
  %v473 = vunpack.c.l.b16 %v83
  %v474 = vunpack.c.h.b16 %v83
  %v475 = vunpack.c.l.b16 %v84
  %v476 = vunpack.c.h.b16 %v84
  %v477 = vunpack.c.l.b16 %v85
  %v478 = vunpack.c.h.b16 %v85
  %v479 = vunpack.c.l.b16 %v86
  %v480 = vunpack.c.h.b16 %v86
  %v481 = vunpack.c.l.b16 %v87
  %v482 = vunpack.c.h.b16 %v87
  %v483 = vunpack.c.l.b16 %v88
  %v484 = vunpack.c.h.b16 %v88
  %v485 = vunpack.c.l.b16 %v89
  %v486 = vunpack.c.h.b16 %v89
  %v487 = vunpack.c.l.b16 %v90
  %v488 = vunpack.c.h.b16 %v90
  %v489 = vunpack.c.l.b16 %v91
  %v490 = vunpack.c.h.b16 %v91
  %v491 = vunpack.c.l.b16 %v92
  %v492 = vunpack.c.h.b16 %v92
  %v493 = vunpack.c.l.b16 %v93
  %v494 = vunpack.c.h.b16 %v93
  %v495 = vunpack.c.l.b16 %v94
  %v496 = vunpack.c.h.b16 %v94
  %v497 = vunpack.c.l.b16 %v95
  %v498 = vunpack.c.h.b16 %v95
  %v499 = vunpack.c.l.b16 %v96
  %v500 = vunpack.c.h.b16 %v96
  %v501 = vunpack.c.l.b16 %v97
  %v502 = vunpack.c.h.b16 %v97
  %v503 = vunpack.c.l.b16 %v98
  %v504 = vunpack.c.h.b16 %v98
  %v505 = vunpack.c.l.b16 %v99
  %v506 = vunpack.c.h.b16 %v99
  %v507 = vunpack.c.l.b16 %v100
  %v508 = vunpack.c.h.b16 %v100
  %v509 = vunpack.c.l.b16 %v101
  %v510 = vunpack.c.h.b16 %v101
  %v511 = vunpack.c.l.b16 %v102
  %v512 = vunpack.c.h.b16 %v102
  %v513 = vunpack.c.l.b16 %v103
  %v514 = vunpack.c.h.b16 %v103
  %v515 = vunpack.c.l.b16 %v104
  %v516 = vunpack.c.h.b16 %v104
  %v517 = vunpack.c.l.b16 %v105
  %v518 = vunpack.c.h.b16 %v105
  %v519 = vunpack.c.l.b16 %v106
  %v520 = vunpack.c.h.b16 %v106
  %v521 = vunpack.c.l.b16 %v107
  %v522 = vunpack.c.h.b16 %v107
  %v523 = vunpack.c.l.b16 %v108
  %v524 = vunpack.c.h.b16 %v108
  %v525 = vunpack.c.l.b16 %v109
  %v526 = vunpack.c.h.b16 %v109
  %v527 = vunpack.c.l.b16 %v110
  %v528 = vunpack.c.h.b16 %v110
  %v529 = vunpack.c.l.b16 %v111
  %v530 = vunpack.c.h.b16 %v111
  %v531 = vunpack.c.l.b16 %v112
  %v532 = vunpack.c.h.b16 %v112
  %v533 = vunpack.c.l.b16 %v113
  %v534 = vunpack.c.h.b16 %v113
  %v535 = vunpack.c.l.b16 %v114
  %v536 = vunpack.c.h.b16 %v114
  %v537 = vunpack.c.l.b16 %v115
  %v538 = vunpack.c.h.b16 %v115
  %v539 = vunpack.c.l.b16 %v116
  %v540 = vunpack.c.h.b16 %v116
  %v541 = vunpack.c.l.b16 %v117
  %v542 = vunpack.c.h.b16 %v117
  %v543 = vunpack.c.l.b16 %v118
  %v544 = vunpack.c.h.b16 %v118
  %v545 = vunpack.c.l.b16 %v119
  %v546 = vunpack.c.h.b16 %v119
  %v547 = vunpack.c.l.b16 %v120
  %v548 = vunpack.c.h.b16 %v120
  %v549 = vunpack.c.l.b16 %v121
  %v550 = vunpack.c.h.b16 %v121
  %v551 = vunpack.c.l.b16 %v122
  %v552 = vunpack.c.h.b16 %v122
  %v553 = vunpack.c.l.b16 %v123
  %v554 = vunpack.c.h.b16 %v123
  %v555 = vunpack.c.l.b16 %v124
  %v556 = vunpack.c.h.b16 %v124
  %v557 = vunpack.c.l.b16 %v125
  %v558 = vunpack.c.h.b16 %v125
  %v559 = vunpack.c.l.b16 %v126
  %v560 = vunpack.c.h.b16 %v126
  %v561 = vunpack.c.l.b16 %v127
  %v562 = vunpack.c.h.b16 %v127
  %v563 = vunpack.c.l.b16 %v128
  %v564 = vunpack.c.h.b16 %v128
  %v565 = vunpack.c.l.b16 %v129
  %v566 = vunpack.c.h.b16 %v129
  %v567 = vunpack.c.l.b16 %v130
  %v568 = vunpack.c.h.b16 %v130
  %v569 = vunpack.c.l.b16 %v131
  %v570 = vunpack.c.h.b16 %v131
  %v571 = vunpack.c.l.b16 %v132
  %v572 = vunpack.c.h.b16 %v132
  %v573 = vunpack.c.l.b16 %v133
  %v574 = vunpack.c.h.b16 %v133
  %v575 = vunpack.c.l.b16 %v134
  %v576 = vunpack.c.h.b16 %v134
  %v577 = vunpack.c.l.b16 %v135
  %v578 = vunpack.c.h.b16 %v135
  %v579 = vunpack.c.l.b16 %v136
  %v580 = vunpack.c.h.b16 %v136
  %v581 = vunpack.c.l.b16 %v137
  %v582 = vunpack.c.h.b16 %v137
  %v583 = vunpack.c.l.b16 %v138
  %v584 = vunpack.c.h.b16 %v138
  %v585 = vunpack.c.l.b16 %v139
  %v586 = vunpack.c.h.b16 %v139
  %v587 = vunpack.c.l.b16 %v140
  %v588 = vunpack.c.h.b16 %v140
  %v589 = vunpack.c.l.b16 %v141
  %v590 = vunpack.c.h.b16 %v141
  %v591 = vunpack.c.l.b16 %v142
  %v592 = vunpack.c.h.b16 %v142
  %v593 = vunpack.c.l.b16 %v143
  %v594 = vunpack.c.h.b16 %v143
  %v595 = vunpack.c.l.b16 %v144
  %v596 = vunpack.c.h.b16 %v144
  %v597 = vunpack.c.l.b16 %v145
  %v598 = vunpack.c.h.b16 %v145
  %v599 = vunpack.c.l.b16 %v146
  %v600 = vunpack.c.h.b16 %v146
  %v601 = vunpack.c.l.b16 %v147
  %v602 = vunpack.c.h.b16 %v147
  %v603 = vunpack.c.l.b16 %v148
  %v604 = vunpack.c.h.b16 %v148
  %v605 = vunpack.c.l.b16 %v149
  %v606 = vunpack.c.h.b16 %v149
  %v607 = vunpack.c.l.b16 %v150
  %v608 = vunpack.c.h.b16 %v150
  %v609 = vunpack.c.l.b16 %v151
  %v610 = vunpack.c.h.b16 %v151
  %v611 = vunpack.c.l.b16 %v152
  %v612 = vunpack.c.h.b16 %v152
  %v613 = vunpack.c.l.b16 %v153
  %v614 = vunpack.c.h.b16 %v153
  %v615 = vunpack.c.l.b16 %v154
  %v616 = vunpack.c.h.b16 %v154
  %v617 = vunpack.c.l.b16 %v155
  %v618 = vunpack.c.h.b16 %v155
  %v619 = vunpack.c.l.b16 %v156
  %v620 = vunpack.c.h.b16 %v156
  %v621 = vunpack.c.l.b16 %v157
  %v622 = vunpack.c.h.b16 %v157
  %v623 = vunpack.c.l.b16 %v158
  %v624 = vunpack.c.h.b16 %v158
  %v625 = vunpack.c.l.b16 %v159
  %v626 = vunpack.c.h.b16 %v159
  %v627 = vunpack.c.l.b16 %v160
  %v628 = vunpack.c.h.b16 %v160
  %v629 = vpack.c.b16 %v389, %v373
  %v630 = vpack.c.b16 %v390, %v374
  %v631 = vpack.c.b16 %v391, %v375
  %v632 = vpack.c.b16 %v392, %v376
  %v633 = vpack.c.b16 %v393, %v377
  %v634 = vpack.c.b16 %v394, %v378
  %v635 = vpack.c.b16 %v395, %v379
  %v636 = vpack.c.b16 %v396, %v380
  %v637 = vpack.c.b16 %v397, %v381
  %v638 = vpack.c.b16 %v398, %v382
  %v639 = vpack.c.b16 %v399, %v383
  %v640 = vpack.c.b16 %v400, %v384
  %v641 = vpack.c.b16 %v401, %v385
  %v642 = vpack.c.b16 %v402, %v386
  %v643 = vpack.c.b16 %v403, %v387
  %v644 = vpack.c.b16 %v404, %v388
  %v645 = vpack.c.b16 %v421, %v405
  %v646 = vpack.c.b16 %v422, %v406
  %v647 = vpack.c.b16 %v423, %v407
  %v648 = vpack.c.b16 %v424, %v408
  %v649 = vpack.c.b16 %v425, %v409
  %v650 = vpack.c.b16 %v426, %v410
  %v651 = vpack.c.b16 %v427, %v411
  %v652 = vpack.c.b16 %v428, %v412
  %v653 = vpack.c.b16 %v429, %v413
  %v654 = vpack.c.b16 %v430, %v414
  %v655 = vpack.c.b16 %v431, %v415
  %v656 = vpack.c.b16 %v432, %v416
  %v657 = vpack.c.b16 %v433, %v417
  %v658 = vpack.c.b16 %v434, %v418
  %v659 = vpack.c.b16 %v435, %v419
  %v660 = vpack.c.b16 %v436, %v420
  %v661 = vpack.c.b16 %v453, %v437
  %v662 = vpack.c.b16 %v454, %v438
  %v663 = vpack.c.b16 %v455, %v439
  %v664 = vpack.c.b16 %v456, %v440
  %v665 = vpack.c.b16 %v457, %v441
  %v666 = vpack.c.b16 %v458, %v442
  %v667 = vpack.c.b16 %v459, %v443
  %v668 = vpack.c.b16 %v460, %v444
  %v669 = vpack.c.b16 %v461, %v445
  %v670 = vpack.c.b16 %v462, %v446
  %v671 = vpack.c.b16 %v463, %v447
  %v672 = vpack.c.b16 %v464, %v448
  %v673 = vpack.c.b16 %v465, %v449
  %v674 = vpack.c.b16 %v466, %v450
  %v675 = vpack.c.b16 %v467, %v451
  %v676 = vpack.c.b16 %v468, %v452
  %v677 = vpack.c.b16 %v485, %v469
  %v678 = vpack.c.b16 %v486, %v470
  %v679 = vpack.c.b16 %v487, %v471
  %v680 = vpack.c.b16 %v488, %v472
  %v681 = vpack.c.b16 %v489, %v473
  %v682 = vpack.c.b16 %v490, %v474
  %v683 = vpack.c.b16 %v491, %v475
  %v684 = vpack.c.b16 %v492, %v476
  %v685 = vpack.c.b16 %v493, %v477
  %v686 = vpack.c.b16 %v494, %v478
  %v687 = vpack.c.b16 %v495, %v479
  %v688 = vpack.c.b16 %v496, %v480
  %v689 = vpack.c.b16 %v497, %v481
  %v690 = vpack.c.b16 %v498, %v482
  %v691 = vpack.c.b16 %v499, %v483
  %v692 = vpack.c.b16 %v500, %v484
  %v693 = vpack.c.b16 %v517, %v501
  %v694 = vpack.c.b16 %v518, %v502
  %v695 = vpack.c.b16 %v519, %v503
  %v696 = vpack.c.b16 %v520, %v504
  %v697 = vpack.c.b16 %v521, %v505
  %v698 = vpack.c.b16 %v522, %v506
  %v699 = vpack.c.b16 %v523, %v507
  %v700 = vpack.c.b16 %v524, %v508
  %v701 = vpack.c.b16 %v525, %v509
  %v702 = vpack.c.b16 %v526, %v510
  %v703 = vpack.c.b16 %v527, %v511
  %v704 = vpack.c.b16 %v528, %v512
  %v705 = vpack.c.b16 %v529, %v513
  %v706 = vpack.c.b16 %v530, %v514
  %v707 = vpack.c.b16 %v531, %v515
  %v708 = vpack.c.b16 %v532, %v516
  %v709 = vpack.c.b16 %v549, %v533
  %v710 = vpack.c.b16 %v550, %v534
  %v711 = vpack.c.b16 %v551, %v535
  %v712 = vpack.c.b16 %v552, %v536
  %v713 = vpack.c.b16 %v553, %v537
  %v714 = vpack.c.b16 %v554, %v538
  %v715 = vpack.c.b16 %v555, %v539
  %v716 = vpack.c.b16 %v556, %v540
  %v717 = vpack.c.b16 %v557, %v541
  %v718 = vpack.c.b16 %v558, %v542
  %v719 = vpack.c.b16 %v559, %v543
  %v720 = vpack.c.b16 %v560, %v544
  %v721 = vpack.c.b16 %v561, %v545
  %v722 = vpack.c.b16 %v562, %v546
  %v723 = vpack.c.b16 %v563, %v547
  %v724 = vpack.c.b16 %v564, %v548
  %v725 = vpack.c.b16 %v581, %v565
  %v726 = vpack.c.b16 %v582, %v566
  %v727 = vpack.c.b16 %v583, %v567
  %v728 = vpack.c.b16 %v584, %v568
  %v729 = vpack.c.b16 %v585, %v569
  %v730 = vpack.c.b16 %v586, %v570
  %v731 = vpack.c.b16 %v587, %v571
  %v732 = vpack.c.b16 %v588, %v572
  %v733 = vpack.c.b16 %v589, %v573
  %v734 = vpack.c.b16 %v590, %v574
  %v735 = vpack.c.b16 %v591, %v575
  %v736 = vpack.c.b16 %v592, %v576
  %v737 = vpack.c.b16 %v593, %v577
  %v738 = vpack.c.b16 %v594, %v578
  %v739 = vpack.c.b16 %v595, %v579
  %v740 = vpack.c.b16 %v596, %v580
  %v741 = vpack.c.b16 %v613, %v597
  %v742 = vpack.c.b16 %v614, %v598
  %v743 = vpack.c.b16 %v615, %v599
  %v744 = vpack.c.b16 %v616, %v600
  %v745 = vpack.c.b16 %v617, %v601
  %v746 = vpack.c.b16 %v618, %v602
  %v747 = vpack.c.b16 %v619, %v603
  %v748 = vpack.c.b16 %v620, %v604
  %v749 = vpack.c.b16 %v621, %v605
  %v750 = vpack.c.b16 %v622, %v606
  %v751 = vpack.c.b16 %v623, %v607
  %v752 = vpack.c.b16 %v624, %v608
  %v753 = vpack.c.b16 %v625, %v609
  %v754 = vpack.c.b16 %v626, %v610
  %v755 = vpack.c.b16 %v627, %v611
  %v756 = vpack.c.b16 %v628, %v612
  %885 = vmatprep.subr.bf16.mxu0 %v742
  %886 = vmatpush1.bf16.msra.mxu0 %v741
  %887 = vmatprep.subr.bf16.mxu0 %v726
  %888 = vmatpush1.bf16.msra.mxu0 %v725
  %889 = vmatprep.subr.bf16.mxu0 %v710
  %890 = vmatpush1.bf16.msra.mxu0 %v709
  %891 = vmatprep.subr.bf16.mxu0 %v694
  %892 = vmatpush1.bf16.msra.mxu0 %v693
  %893 = vmatprep.subr.bf16.mxu0 %v678
  %894 = vmatpush1.bf16.msra.mxu0 %v677
  %895 = vmatprep.subr.bf16.mxu0 %v662
  %896 = vmatpush1.bf16.msra.mxu0 %v661
  %897 = vmatprep.subr.bf16.mxu0 %v646
  %898 = vmatpush1.bf16.msra.mxu0 %v645
  %899 = vmatprep.subr.bf16.mxu0 %v630
  %900 = vmatpush1.bf16.msra.mxu0 %v629
  %901 = vmatprep.subr.bf16.mxu0 0
  %902 = vmatpush2.bf16.msra.mxu0 0
  %903 = vmatprep.subr.bf16.mxu0 0
  %904 = vmatpush2.bf16.msra.mxu0 0
  %905 = vmatprep.subr.bf16.mxu0 0
  %906 = vmatpush2.bf16.msra.mxu0 0
  %907 = vmatprep.subr.bf16.mxu0 0
  %908 = vmatpush2.bf16.msra.mxu0 0
  %909 = vmatprep.subr.bf16.mxu0 0
  %910 = vmatpush2.bf16.msra.mxu0 0
  %911 = vmatprep.subr.bf16.mxu0 0
  %912 = vmatpush2.bf16.msra.mxu0 0
  %913 = vmatprep.subr.bf16.mxu0 0
  %914 = vmatpush2.bf16.msra.mxu0 0
  %915 = vmatprep.subr.bf16.mxu0 0
  %916 = vmatpush2.bf16.msra.mxu0 0
  %917 = vmatprep.mubr.bf16.mxu0 0
  %918 = vmatmul.mubr.bf16.gmra.mxu0 %v31
  %v919 = vpop.f32.mrf.mxu0
  %v920 = vadd.f32 %v168, %v919
  %v921 = vpop.f32.mrf.mxu0
  %v922 = vadd.f32 %v172, %v921
  %v923 = vpop.f32.mrf.mxu0
  %v924 = vadd.f32 %v168, %v923
  %v925 = vpop.f32.mrf.mxu0
  %v926 = vadd.f32 %v172, %v925
  %927 = vmatprep.mubr.bf16.mxu0 0
  %928 = vmatmul.mubr.bf16.gmra.mxu0 %v32
  %v929 = vpop.f32.mrf.mxu0
  %v930 = vadd.f32 %v168, %v929
  %v931 = vpop.f32.mrf.mxu0
  %v932 = vadd.f32 %v172, %v931
  %v933 = vpop.f32.mrf.mxu0
  %v934 = vadd.f32 %v168, %v933
  %v935 = vpop.f32.mrf.mxu0
  %v936 = vadd.f32 %v172, %v935
  %937 = vdwg.mxu0
  %938 = vmatprep.subr.bf16.mxu0 %v744
  %939 = vmatpush1.bf16.msra.mxu0 %v743
  %940 = vmatprep.subr.bf16.mxu0 %v728
  %941 = vmatpush1.bf16.msra.mxu0 %v727
  %942 = vmatprep.subr.bf16.mxu0 %v712
  %943 = vmatpush1.bf16.msra.mxu0 %v711
  %944 = vmatprep.subr.bf16.mxu0 %v696
  %945 = vmatpush1.bf16.msra.mxu0 %v695
  %946 = vmatprep.subr.bf16.mxu0 %v680
  %947 = vmatpush1.bf16.msra.mxu0 %v679
  %948 = vmatprep.subr.bf16.mxu0 %v664
  %949 = vmatpush1.bf16.msra.mxu0 %v663
  %950 = vmatprep.subr.bf16.mxu0 %v648
  %951 = vmatpush1.bf16.msra.mxu0 %v647
  %952 = vmatprep.subr.bf16.mxu0 %v632
  %953 = vmatpush1.bf16.msra.mxu0 %v631
  %954 = vmatprep.subr.bf16.mxu0 0
  %955 = vmatpush2.bf16.msra.mxu0 0
  %956 = vmatprep.subr.bf16.mxu0 0
  %957 = vmatpush2.bf16.msra.mxu0 0
  %958 = vmatprep.subr.bf16.mxu0 0
  %959 = vmatpush2.bf16.msra.mxu0 0
  %960 = vmatprep.subr.bf16.mxu0 0
  %961 = vmatpush2.bf16.msra.mxu0 0
  %962 = vmatprep.subr.bf16.mxu0 0
  %963 = vmatpush2.bf16.msra.mxu0 0
  %964 = vmatprep.subr.bf16.mxu0 0
  %965 = vmatpush2.bf16.msra.mxu0 0
  %966 = vmatprep.subr.bf16.mxu0 0
  %967 = vmatpush2.bf16.msra.mxu0 0
  %968 = vmatprep.subr.bf16.mxu0 0
  %969 = vmatpush2.bf16.msra.mxu0 0
  %970 = vmatprep.mubr.bf16.mxu0 0
  %971 = vmatmul.mubr.bf16.gmra.mxu0 %v31
  %v972 = vpop.f32.mrf.mxu0
  %v973 = vadd.f32 %v176, %v972
  %v974 = vpop.f32.mrf.mxu0
  %v975 = vadd.f32 %v180, %v974
  %v976 = vpop.f32.mrf.mxu0
  %v977 = vadd.f32 %v176, %v976
  %v978 = vpop.f32.mrf.mxu0
  %v979 = vadd.f32 %v180, %v978
  %980 = vmatprep.mubr.bf16.mxu0 0
  %981 = vmatmul.mubr.bf16.gmra.mxu0 %v32
  %v982 = vpop.f32.mrf.mxu0
  %v983 = vadd.f32 %v176, %v982
  %v984 = vpop.f32.mrf.mxu0
  %v985 = vadd.f32 %v180, %v984
  %v986 = vpop.f32.mrf.mxu0
  %v987 = vadd.f32 %v176, %v986
  %v988 = vpop.f32.mrf.mxu0
  %v989 = vadd.f32 %v180, %v988
  %990 = vdwg.mxu0
  %991 = vmatprep.subr.bf16.mxu0 %v746
  %992 = vmatpush1.bf16.msra.mxu0 %v745
  %993 = vmatprep.subr.bf16.mxu0 %v730
  %994 = vmatpush1.bf16.msra.mxu0 %v729
  %995 = vmatprep.subr.bf16.mxu0 %v714
  %996 = vmatpush1.bf16.msra.mxu0 %v713
  %997 = vmatprep.subr.bf16.mxu0 %v698
  %998 = vmatpush1.bf16.msra.mxu0 %v697
  %999 = vmatprep.subr.bf16.mxu0 %v682
  %1000 = vmatpush1.bf16.msra.mxu0 %v681
  %1001 = vmatprep.subr.bf16.mxu0 %v666
  %1002 = vmatpush1.bf16.msra.mxu0 %v665
  %1003 = vmatprep.subr.bf16.mxu0 %v650
  %1004 = vmatpush1.bf16.msra.mxu0 %v649
  %1005 = vmatprep.subr.bf16.mxu0 %v634
  %1006 = vmatpush1.bf16.msra.mxu0 %v633
  %1007 = vmatprep.subr.bf16.mxu0 0
  %1008 = vmatpush2.bf16.msra.mxu0 0
  %1009 = vmatprep.subr.bf16.mxu0 0
  %1010 = vmatpush2.bf16.msra.mxu0 0
  %1011 = vmatprep.subr.bf16.mxu0 0
  %1012 = vmatpush2.bf16.msra.mxu0 0
  %1013 = vmatprep.subr.bf16.mxu0 0
  %1014 = vmatpush2.bf16.msra.mxu0 0
  %1015 = vmatprep.subr.bf16.mxu0 0
  %1016 = vmatpush2.bf16.msra.mxu0 0
  %1017 = vmatprep.subr.bf16.mxu0 0
  %1018 = vmatpush2.bf16.msra.mxu0 0
  %1019 = vmatprep.subr.bf16.mxu0 0
  %1020 = vmatpush2.bf16.msra.mxu0 0
  %1021 = vmatprep.subr.bf16.mxu0 0
  %1022 = vmatpush2.bf16.msra.mxu0 0
  %1023 = vmatprep.mubr.bf16.mxu0 0
  %1024 = vmatmul.mubr.bf16.gmra.mxu0 %v31
  %v1025 = vpop.f32.mrf.mxu0
  %v1026 = vadd.f32 %v184, %v1025
  %v1027 = vpop.f32.mrf.mxu0
  %v1028 = vadd.f32 %v188, %v1027
  %v1029 = vpop.f32.mrf.mxu0
  %v1030 = vadd.f32 %v184, %v1029
  %v1031 = vpop.f32.mrf.mxu0
  %v1032 = vadd.f32 %v188, %v1031
  %1033 = vmatprep.mubr.bf16.mxu0 0
  %1034 = vmatmul.mubr.bf16.gmra.mxu0 %v32
  %v1035 = vpop.f32.mrf.mxu0
  %v1036 = vadd.f32 %v184, %v1035
  %v1037 = vpop.f32.mrf.mxu0
  %v1038 = vadd.f32 %v188, %v1037
  %v1039 = vpop.f32.mrf.mxu0
  %v1040 = vadd.f32 %v184, %v1039
  %v1041 = vpop.f32.mrf.mxu0
  %v1042 = vadd.f32 %v188, %v1041
  %1043 = vdwg.mxu0
  %1044 = vmatprep.subr.bf16.mxu0 %v748
  %1045 = vmatpush1.bf16.msra.mxu0 %v747
  %1046 = vmatprep.subr.bf16.mxu0 %v732
  %1047 = vmatpush1.bf16.msra.mxu0 %v731
  %1048 = vmatprep.subr.bf16.mxu0 %v716
  %1049 = vmatpush1.bf16.msra.mxu0 %v715
  %1050 = vmatprep.subr.bf16.mxu0 %v700
  %1051 = vmatpush1.bf16.msra.mxu0 %v699
  %1052 = vmatprep.subr.bf16.mxu0 %v684
  %1053 = vmatpush1.bf16.msra.mxu0 %v683
  %1054 = vmatprep.subr.bf16.mxu0 %v668
  %1055 = vmatpush1.bf16.msra.mxu0 %v667
  %1056 = vmatprep.subr.bf16.mxu0 %v652
  %1057 = vmatpush1.bf16.msra.mxu0 %v651
  %1058 = vmatprep.subr.bf16.mxu0 %v636
  %1059 = vmatpush1.bf16.msra.mxu0 %v635
  %1060 = vmatprep.subr.bf16.mxu0 0
  %1061 = vmatpush2.bf16.msra.mxu0 0
  %1062 = vmatprep.subr.bf16.mxu0 0
  %1063 = vmatpush2.bf16.msra.mxu0 0
  %1064 = vmatprep.subr.bf16.mxu0 0
  %1065 = vmatpush2.bf16.msra.mxu0 0
  %1066 = vmatprep.subr.bf16.mxu0 0
  %1067 = vmatpush2.bf16.msra.mxu0 0
  %1068 = vmatprep.subr.bf16.mxu0 0
  %1069 = vmatpush2.bf16.msra.mxu0 0
  %1070 = vmatprep.subr.bf16.mxu0 0
  %1071 = vmatpush2.bf16.msra.mxu0 0
  %1072 = vmatprep.subr.bf16.mxu0 0
  %1073 = vmatpush2.bf16.msra.mxu0 0
  %1074 = vmatprep.subr.bf16.mxu0 0
  %1075 = vmatpush2.bf16.msra.mxu0 0
  %1076 = vmatprep.mubr.bf16.mxu0 0
  %1077 = vmatmul.mubr.bf16.gmra.mxu0 %v31
  %v1078 = vpop.f32.mrf.mxu0
  %v1079 = vadd.f32 %v192, %v1078
  %v1080 = vpop.f32.mrf.mxu0
  %v1081 = vadd.f32 %v196, %v1080
  %v1082 = vpop.f32.mrf.mxu0
  %v1083 = vadd.f32 %v192, %v1082
  %v1084 = vpop.f32.mrf.mxu0
  %v1085 = vadd.f32 %v196, %v1084
  %1086 = vmatprep.mubr.bf16.mxu0 0
  %1087 = vmatmul.mubr.bf16.gmra.mxu0 %v32
  %v1088 = vpop.f32.mrf.mxu0
  %v1089 = vadd.f32 %v192, %v1088
  %v1090 = vpop.f32.mrf.mxu0
  %v1091 = vadd.f32 %v196, %v1090
  %v1092 = vpop.f32.mrf.mxu0
  %v1093 = vadd.f32 %v192, %v1092
  %v1094 = vpop.f32.mrf.mxu0
  %v1095 = vadd.f32 %v196, %v1094
  %1096 = vdwg.mxu0
  %1097 = vmatprep.subr.bf16.mxu0 %v750
  %1098 = vmatpush1.bf16.msra.mxu0 %v749
  %1099 = vmatprep.subr.bf16.mxu0 %v734
  %1100 = vmatpush1.bf16.msra.mxu0 %v733
  %1101 = vmatprep.subr.bf16.mxu0 %v718
  %1102 = vmatpush1.bf16.msra.mxu0 %v717
  %1103 = vmatprep.subr.bf16.mxu0 %v702
  %1104 = vmatpush1.bf16.msra.mxu0 %v701
  %1105 = vmatprep.subr.bf16.mxu0 %v686
  %1106 = vmatpush1.bf16.msra.mxu0 %v685
  %1107 = vmatprep.subr.bf16.mxu0 %v670
  %1108 = vmatpush1.bf16.msra.mxu0 %v669
  %1109 = vmatprep.subr.bf16.mxu0 %v654
  %1110 = vmatpush1.bf16.msra.mxu0 %v653
  %1111 = vmatprep.subr.bf16.mxu0 %v638
  %1112 = vmatpush1.bf16.msra.mxu0 %v637
  %1113 = vmatprep.subr.bf16.mxu0 0
  %1114 = vmatpush2.bf16.msra.mxu0 0
  %1115 = vmatprep.subr.bf16.mxu0 0
  %1116 = vmatpush2.bf16.msra.mxu0 0
  %1117 = vmatprep.subr.bf16.mxu0 0
  %1118 = vmatpush2.bf16.msra.mxu0 0
  %1119 = vmatprep.subr.bf16.mxu0 0
  %1120 = vmatpush2.bf16.msra.mxu0 0
  %1121 = vmatprep.subr.bf16.mxu0 0
  %1122 = vmatpush2.bf16.msra.mxu0 0
  %1123 = vmatprep.subr.bf16.mxu0 0
  %1124 = vmatpush2.bf16.msra.mxu0 0
  %1125 = vmatprep.subr.bf16.mxu0 0
  %1126 = vmatpush2.bf16.msra.mxu0 0
  %1127 = vmatprep.subr.bf16.mxu0 0
  %1128 = vmatpush2.bf16.msra.mxu0 0
  %1129 = vmatprep.mubr.bf16.mxu0 0
  %1130 = vmatmul.mubr.bf16.gmra.mxu0 %v31
  %v1131 = vpop.f32.mrf.mxu0
  %v1132 = vadd.f32 %v200, %v1131
  %v1133 = vpop.f32.mrf.mxu0
  %v1134 = vadd.f32 %v204, %v1133
  %v1135 = vpop.f32.mrf.mxu0
  %v1136 = vadd.f32 %v200, %v1135
  %v1137 = vpop.f32.mrf.mxu0
  %v1138 = vadd.f32 %v204, %v1137
  %1139 = vmatprep.mubr.bf16.mxu0 0
  %1140 = vmatmul.mubr.bf16.gmra.mxu0 %v32
  %v1141 = vpop.f32.mrf.mxu0
  %v1142 = vadd.f32 %v200, %v1141
  %v1143 = vpop.f32.mrf.mxu0
  %v1144 = vadd.f32 %v204, %v1143
  %v1145 = vpop.f32.mrf.mxu0
  %v1146 = vadd.f32 %v200, %v1145
  %v1147 = vpop.f32.mrf.mxu0
  %v1148 = vadd.f32 %v204, %v1147
  %1149 = vdwg.mxu0
  %1150 = vmatprep.subr.bf16.mxu0 %v752
  %1151 = vmatpush1.bf16.msra.mxu0 %v751
  %1152 = vmatprep.subr.bf16.mxu0 %v736
  %1153 = vmatpush1.bf16.msra.mxu0 %v735
  %1154 = vmatprep.subr.bf16.mxu0 %v720
  %1155 = vmatpush1.bf16.msra.mxu0 %v719
  %1156 = vmatprep.subr.bf16.mxu0 %v704
  %1157 = vmatpush1.bf16.msra.mxu0 %v703
  %1158 = vmatprep.subr.bf16.mxu0 %v688
  %1159 = vmatpush1.bf16.msra.mxu0 %v687
  %1160 = vmatprep.subr.bf16.mxu0 %v672
  %1161 = vmatpush1.bf16.msra.mxu0 %v671
  %1162 = vmatprep.subr.bf16.mxu0 %v656
  %1163 = vmatpush1.bf16.msra.mxu0 %v655
  %1164 = vmatprep.subr.bf16.mxu0 %v640
  %1165 = vmatpush1.bf16.msra.mxu0 %v639
  %1166 = vmatprep.subr.bf16.mxu0 0
  %1167 = vmatpush2.bf16.msra.mxu0 0
  %1168 = vmatprep.subr.bf16.mxu0 0
  %1169 = vmatpush2.bf16.msra.mxu0 0
  %1170 = vmatprep.subr.bf16.mxu0 0
  %1171 = vmatpush2.bf16.msra.mxu0 0
  %1172 = vmatprep.subr.bf16.mxu0 0
  %1173 = vmatpush2.bf16.msra.mxu0 0
  %1174 = vmatprep.subr.bf16.mxu0 0
  %1175 = vmatpush2.bf16.msra.mxu0 0
  %1176 = vmatprep.subr.bf16.mxu0 0
  %1177 = vmatpush2.bf16.msra.mxu0 0
  %1178 = vmatprep.subr.bf16.mxu0 0
  %1179 = vmatpush2.bf16.msra.mxu0 0
  %1180 = vmatprep.subr.bf16.mxu0 0
  %1181 = vmatpush2.bf16.msra.mxu0 0
  %1182 = vmatprep.mubr.bf16.mxu0 0
  %1183 = vmatmul.mubr.bf16.gmra.mxu0 %v31
  %v1184 = vpop.f32.mrf.mxu0
  %v1185 = vadd.f32 %v208, %v1184
  %v1186 = vpop.f32.mrf.mxu0
  %v1187 = vadd.f32 %v212, %v1186
  %v1188 = vpop.f32.mrf.mxu0
  %v1189 = vadd.f32 %v208, %v1188
  %v1190 = vpop.f32.mrf.mxu0
  %v1191 = vadd.f32 %v212, %v1190
  %1192 = vmatprep.mubr.bf16.mxu0 0
  %1193 = vmatmul.mubr.bf16.gmra.mxu0 %v32
  %v1194 = vpop.f32.mrf.mxu0
  %v1195 = vadd.f32 %v208, %v1194
  %v1196 = vpop.f32.mrf.mxu0
  %v1197 = vadd.f32 %v212, %v1196
  %v1198 = vpop.f32.mrf.mxu0
  %v1199 = vadd.f32 %v208, %v1198
  %v1200 = vpop.f32.mrf.mxu0
  %v1201 = vadd.f32 %v212, %v1200
  %1202 = vdwg.mxu0
  %1203 = vmatprep.subr.bf16.mxu0 %v754
  %1204 = vmatpush1.bf16.msra.mxu0 %v753
  %1205 = vmatprep.subr.bf16.mxu0 %v738
  %1206 = vmatpush1.bf16.msra.mxu0 %v737
  %1207 = vmatprep.subr.bf16.mxu0 %v722
  %1208 = vmatpush1.bf16.msra.mxu0 %v721
  %1209 = vmatprep.subr.bf16.mxu0 %v706
  %1210 = vmatpush1.bf16.msra.mxu0 %v705
  %1211 = vmatprep.subr.bf16.mxu0 %v690
  %1212 = vmatpush1.bf16.msra.mxu0 %v689
  %1213 = vmatprep.subr.bf16.mxu0 %v674
  %1214 = vmatpush1.bf16.msra.mxu0 %v673
  %1215 = vmatprep.subr.bf16.mxu0 %v658
  %1216 = vmatpush1.bf16.msra.mxu0 %v657
  %1217 = vmatprep.subr.bf16.mxu0 %v642
  %1218 = vmatpush1.bf16.msra.mxu0 %v641
  %1219 = vmatprep.subr.bf16.mxu0 0
  %1220 = vmatpush2.bf16.msra.mxu0 0
  %1221 = vmatprep.subr.bf16.mxu0 0
  %1222 = vmatpush2.bf16.msra.mxu0 0
  %1223 = vmatprep.subr.bf16.mxu0 0
  %1224 = vmatpush2.bf16.msra.mxu0 0
  %1225 = vmatprep.subr.bf16.mxu0 0
  %1226 = vmatpush2.bf16.msra.mxu0 0
  %1227 = vmatprep.subr.bf16.mxu0 0
  %1228 = vmatpush2.bf16.msra.mxu0 0
  %1229 = vmatprep.subr.bf16.mxu0 0
  %1230 = vmatpush2.bf16.msra.mxu0 0
  %1231 = vmatprep.subr.bf16.mxu0 0
  %1232 = vmatpush2.bf16.msra.mxu0 0
  %1233 = vmatprep.subr.bf16.mxu0 0
  %1234 = vmatpush2.bf16.msra.mxu0 0
  %1235 = vmatprep.mubr.bf16.mxu0 0
  %1236 = vmatmul.mubr.bf16.gmra.mxu0 %v31
  %v1237 = vpop.f32.mrf.mxu0
  %v1238 = vadd.f32 %v216, %v1237
  %v1239 = vpop.f32.mrf.mxu0
  %v1240 = vadd.f32 %v220, %v1239
  %v1241 = vpop.f32.mrf.mxu0
  %v1242 = vadd.f32 %v216, %v1241
  %v1243 = vpop.f32.mrf.mxu0
  %v1244 = vadd.f32 %v220, %v1243
  %1245 = vmatprep.mubr.bf16.mxu0 0
  %1246 = vmatmul.mubr.bf16.gmra.mxu0 %v32
  %v1247 = vpop.f32.mrf.mxu0
  %v1248 = vadd.f32 %v216, %v1247
  %v1249 = vpop.f32.mrf.mxu0
  %v1250 = vadd.f32 %v220, %v1249
  %v1251 = vpop.f32.mrf.mxu0
  %v1252 = vadd.f32 %v216, %v1251
  %v1253 = vpop.f32.mrf.mxu0
  %v1254 = vadd.f32 %v220, %v1253
  %1255 = vdwg.mxu0
  %1256 = vmatprep.subr.bf16.mxu0 %v756
  %1257 = vmatpush1.bf16.msra.mxu0 %v755
  %1258 = vmatprep.subr.bf16.mxu0 %v740
  %1259 = vmatpush1.bf16.msra.mxu0 %v739
  %1260 = vmatprep.subr.bf16.mxu0 %v724
  %1261 = vmatpush1.bf16.msra.mxu0 %v723
  %1262 = vmatprep.subr.bf16.mxu0 %v708
  %1263 = vmatpush1.bf16.msra.mxu0 %v707
  %1264 = vmatprep.subr.bf16.mxu0 %v692
  %1265 = vmatpush1.bf16.msra.mxu0 %v691
  %1266 = vmatprep.subr.bf16.mxu0 %v676
  %1267 = vmatpush1.bf16.msra.mxu0 %v675
  %1268 = vmatprep.subr.bf16.mxu0 %v660
  %1269 = vmatpush1.bf16.msra.mxu0 %v659
  %1270 = vmatprep.subr.bf16.mxu0 %v644
  %1271 = vmatpush1.bf16.msra.mxu0 %v643
  %1272 = vmatprep.subr.bf16.mxu0 0
  %1273 = vmatpush2.bf16.msra.mxu0 0
  %1274 = vmatprep.subr.bf16.mxu0 0
  %1275 = vmatpush2.bf16.msra.mxu0 0
  %1276 = vmatprep.subr.bf16.mxu0 0
  %1277 = vmatpush2.bf16.msra.mxu0 0
  %1278 = vmatprep.subr.bf16.mxu0 0
  %1279 = vmatpush2.bf16.msra.mxu0 0
  %1280 = vmatprep.subr.bf16.mxu0 0
  %1281 = vmatpush2.bf16.msra.mxu0 0
  %1282 = vmatprep.subr.bf16.mxu0 0
  %1283 = vmatpush2.bf16.msra.mxu0 0
  %1284 = vmatprep.subr.bf16.mxu0 0
  %1285 = vmatpush2.bf16.msra.mxu0 0
  %1286 = vmatprep.subr.bf16.mxu0 0
  %1287 = vmatpush2.bf16.msra.mxu0 0
  %1288 = vmatprep.mubr.bf16.mxu0 0
  %1289 = vmatmul.mubr.bf16.gmra.mxu0 %v31
  %v1290 = vpop.f32.mrf.mxu0
  %v1291 = vadd.f32 %v224, %v1290
  %v1292 = vpop.f32.mrf.mxu0
  %v1293 = vadd.f32 %v228, %v1292
  %v1294 = vpop.f32.mrf.mxu0
  %v1295 = vadd.f32 %v224, %v1294
  %v1296 = vpop.f32.mrf.mxu0
  %v1297 = vadd.f32 %v228, %v1296
  %1298 = vmatprep.mubr.bf16.mxu0 0
  %1299 = vmatmul.mubr.bf16.gmra.mxu0 %v32
  %v1300 = vpop.f32.mrf.mxu0
  %v1301 = vadd.f32 %v224, %v1300
  %v1302 = vpop.f32.mrf.mxu0
  %v1303 = vadd.f32 %v228, %v1302
  %v1304 = vpop.f32.mrf.mxu0
  %v1305 = vadd.f32 %v224, %v1304
  %v1306 = vpop.f32.mrf.mxu0
  %v1307 = vadd.f32 %v228, %v1306
  %1308 = vdwg.mxu0
  %v1309 = vmax.f32 %v920, 0.0
  %v1310 = vmax.f32 %v922, 0.0
  %v1311 = vmax.f32 %v973, 0.0
  %v1312 = vmax.f32 %v975, 0.0
  %v1313 = vmax.f32 %v1026, 0.0
  %v1314 = vmax.f32 %v1028, 0.0
  %v1315 = vmax.f32 %v1079, 0.0
  %v1316 = vmax.f32 %v1081, 0.0
  %v1317 = vmax.f32 %v1132, 0.0
  %v1318 = vmax.f32 %v1134, 0.0
  %v1319 = vmax.f32 %v1185, 0.0
  %v1320 = vmax.f32 %v1187, 0.0
  %v1321 = vmax.f32 %v1238, 0.0
  %v1322 = vmax.f32 %v1240, 0.0
  %v1323 = vmax.f32 %v1291, 0.0
  %v1324 = vmax.f32 %v1293, 0.0
  %v1325 = vmax.f32 %v924, 0.0
  %v1326 = vmax.f32 %v926, 0.0
  %v1327 = vmax.f32 %v977, 0.0
  %v1328 = vmax.f32 %v979, 0.0
  %v1329 = vmax.f32 %v1030, 0.0
  %v1330 = vmax.f32 %v1032, 0.0
  %v1331 = vmax.f32 %v1083, 0.0
  %v1332 = vmax.f32 %v1085, 0.0
  %v1333 = vmax.f32 %v1136, 0.0
  %v1334 = vmax.f32 %v1138, 0.0
  %v1335 = vmax.f32 %v1189, 0.0
  %v1336 = vmax.f32 %v1191, 0.0
  %v1337 = vmax.f32 %v1242, 0.0
  %v1338 = vmax.f32 %v1244, 0.0
  %v1339 = vmax.f32 %v1295, 0.0
  %v1340 = vmax.f32 %v1297, 0.0
  %v1341 = vmax.f32 %v930, 0.0
  %v1342 = vmax.f32 %v932, 0.0
  %v1343 = vmax.f32 %v983, 0.0
  %v1344 = vmax.f32 %v985, 0.0
  %v1345 = vmax.f32 %v1036, 0.0
  %v1346 = vmax.f32 %v1038, 0.0
  %v1347 = vmax.f32 %v1089, 0.0
  %v1348 = vmax.f32 %v1091, 0.0
  %v1349 = vmax.f32 %v1142, 0.0
  %v1350 = vmax.f32 %v1144, 0.0
  %v1351 = vmax.f32 %v1195, 0.0
  %v1352 = vmax.f32 %v1197, 0.0
  %v1353 = vmax.f32 %v1248, 0.0
  %v1354 = vmax.f32 %v1250, 0.0
  %v1355 = vmax.f32 %v1301, 0.0
  %v1356 = vmax.f32 %v1303, 0.0
  %v1357 = vmax.f32 %v934, 0.0
  %v1358 = vmax.f32 %v936, 0.0
  %v1359 = vmax.f32 %v987, 0.0
  %v1360 = vmax.f32 %v989, 0.0
  %v1361 = vmax.f32 %v1040, 0.0
  %v1362 = vmax.f32 %v1042, 0.0
  %v1363 = vmax.f32 %v1093, 0.0
  %v1364 = vmax.f32 %v1095, 0.0
  %v1365 = vmax.f32 %v1146, 0.0
  %v1366 = vmax.f32 %v1148, 0.0
  %v1367 = vmax.f32 %v1199, 0.0
  %v1368 = vmax.f32 %v1201, 0.0
  %v1369 = vmax.f32 %v1252, 0.0
  %v1370 = vmax.f32 %v1254, 0.0
  %v1371 = vmax.f32 %v1305, 0.0
  %v1372 = vmax.f32 %v1307, 0.0
  %v1373 = vpack.c.bf16 %v1325, %v1309
  %v1374 = vpack.c.bf16 %v1326, %v1310
  %v1375 = vpack.c.bf16 %v1327, %v1311
  %v1376 = vpack.c.bf16 %v1328, %v1312
  %v1377 = vpack.c.bf16 %v1329, %v1313
  %v1378 = vpack.c.bf16 %v1330, %v1314
  %v1379 = vpack.c.bf16 %v1331, %v1315
  %v1380 = vpack.c.bf16 %v1332, %v1316
  %v1381 = vpack.c.bf16 %v1333, %v1317
  %v1382 = vpack.c.bf16 %v1334, %v1318
  %v1383 = vpack.c.bf16 %v1335, %v1319
  %v1384 = vpack.c.bf16 %v1336, %v1320
  %v1385 = vpack.c.bf16 %v1337, %v1321
  %v1386 = vpack.c.bf16 %v1338, %v1322
  %v1387 = vpack.c.bf16 %v1339, %v1323
  %v1388 = vpack.c.bf16 %v1340, %v1324
  %v1389 = vpack.c.bf16 %v1357, %v1341
  %v1390 = vpack.c.bf16 %v1358, %v1342
  %v1391 = vpack.c.bf16 %v1359, %v1343
  %v1392 = vpack.c.bf16 %v1360, %v1344
  %v1393 = vpack.c.bf16 %v1361, %v1345
  %v1394 = vpack.c.bf16 %v1362, %v1346
  %v1395 = vpack.c.bf16 %v1363, %v1347
  %v1396 = vpack.c.bf16 %v1364, %v1348
  %v1397 = vpack.c.bf16 %v1365, %v1349
  %v1398 = vpack.c.bf16 %v1366, %v1350
  %v1399 = vpack.c.bf16 %v1367, %v1351
  %v1400 = vpack.c.bf16 %v1368, %v1352
  %v1401 = vpack.c.bf16 %v1369, %v1353
  %v1402 = vpack.c.bf16 %v1370, %v1354
  %v1403 = vpack.c.bf16 %v1371, %v1355
  %v1404 = vpack.c.bf16 %v1372, %v1356
  %v1405 = vld [vmem:[%s3] sm:$0xf]
  %v1406 = vld [vmem:[%s3 + $0x4] sm:$0xf]
  %v1407 = vld [vmem:[%s3 + $0x8] sm:$0xf]
  %v1408 = vld [vmem:[%s3 + $0xc] sm:$0xf]
  %v1409 = vld [vmem:[%s3 + $0x10] sm:$0xf]
  %v1410 = vld [vmem:[%s3 + $0x14] sm:$0xf]
  %v1411 = vld [vmem:[%s3 + $0x18] sm:$0xf]
  %v1412 = vld [vmem:[%s3 + $0x1c] sm:$0xf]
  %v1413 = vld [vmem:[%s3 + $0x20] sm:$0xf]
  %v1414 = vld [vmem:[%s3 + $0x24] sm:$0xf]
  %v1415 = vld [vmem:[%s3 + $0x28] sm:$0xf]
  %v1416 = vld [vmem:[%s3 + $0x2c] sm:$0xf]
  %v1417 = vld [vmem:[%s3 + $0x30] sm:$0xf]
  %v1418 = vld [vmem:[%s3 + $0x34] sm:$0xf]
  %v1419 = vld [vmem:[%s3 + $0x38] sm:$0xf]
  %v1420 = vld [vmem:[%s3 + $0x3c] sm:$0xf]
  %v1421 = vld [vmem:[%s3 + $0x40] sm:$0xf]
  %v1422 = vld [vmem:[%s3 + $0x44] sm:$0xf]
  %v1423 = vld [vmem:[%s3 + $0x48] sm:$0xf]
  %v1424 = vld [vmem:[%s3 + $0x4c] sm:$0xf]
  %v1425 = vld [vmem:[%s3 + $0x50] sm:$0xf]
  %v1426 = vld [vmem:[%s3 + $0x54] sm:$0xf]
  %v1427 = vld [vmem:[%s3 + $0x58] sm:$0xf]
  %v1428 = vld [vmem:[%s3 + $0x5c] sm:$0xf]
  %v1429 = vld [vmem:[%s3 + $0x60] sm:$0xf]
  %v1430 = vld [vmem:[%s3 + $0x64] sm:$0xf]
  %v1431 = vld [vmem:[%s3 + $0x68] sm:$0xf]
  %v1432 = vld [vmem:[%s3 + $0x6c] sm:$0xf]
  %v1433 = vld [vmem:[%s3 + $0x70] sm:$0xf]
  %v1434 = vld [vmem:[%s3 + $0x74] sm:$0xf]
  %v1435 = vld [vmem:[%s3 + $0x78] sm:$0xf]
  %v1436 = vld [vmem:[%s3 + $0x7c] sm:$0xf]
  %v1437 = vld [vmem:[%s3 + $0x80] sm:$0xf]
  %v1438 = vld [vmem:[%s3 + $0x84] sm:$0xf]
  %v1439 = vld [vmem:[%s3 + $0x88] sm:$0xf]
  %v1440 = vld [vmem:[%s3 + $0x8c] sm:$0xf]
  %v1441 = vld [vmem:[%s3 + $0x90] sm:$0xf]
  %v1442 = vld [vmem:[%s3 + $0x94] sm:$0xf]
  %v1443 = vld [vmem:[%s3 + $0x98] sm:$0xf]
  %v1444 = vld [vmem:[%s3 + $0x9c] sm:$0xf]
  %v1445 = vld [vmem:[%s3 + $0xa0] sm:$0xf]
  %v1446 = vld [vmem:[%s3 + $0xa4] sm:$0xf]
  %v1447 = vld [vmem:[%s3 + $0xa8] sm:$0xf]
  %v1448 = vld [vmem:[%s3 + $0xac] sm:$0xf]
  %v1449 = vld [vmem:[%s3 + $0xb0] sm:$0xf]
  %v1450 = vld [vmem:[%s3 + $0xb4] sm:$0xf]
  %v1451 = vld [vmem:[%s3 + $0xb8] sm:$0xf]
  %v1452 = vld [vmem:[%s3 + $0xbc] sm:$0xf]
  %v1453 = vld [vmem:[%s3 + $0xc0] sm:$0xf]
  %v1454 = vld [vmem:[%s3 + $0xc4] sm:$0xf]
  %v1455 = vld [vmem:[%s3 + $0xc8] sm:$0xf]
  %v1456 = vld [vmem:[%s3 + $0xcc] sm:$0xf]
  %v1457 = vld [vmem:[%s3 + $0xd0] sm:$0xf]
  %v1458 = vld [vmem:[%s3 + $0xd4] sm:$0xf]
  %v1459 = vld [vmem:[%s3 + $0xd8] sm:$0xf]
  %v1460 = vld [vmem:[%s3 + $0xdc] sm:$0xf]
  %v1461 = vld [vmem:[%s3 + $0xe0] sm:$0xf]
  %v1462 = vld [vmem:[%s3 + $0xe4] sm:$0xf]
  %v1463 = vld [vmem:[%s3 + $0xe8] sm:$0xf]
  %v1464 = vld [vmem:[%s3 + $0xec] sm:$0xf]
  %v1465 = vld [vmem:[%s3 + $0xf0] sm:$0xf]
  %v1466 = vld [vmem:[%s3 + $0xf4] sm:$0xf]
  %v1467 = vld [vmem:[%s3 + $0xf8] sm:$0xf]
  %v1468 = vld [vmem:[%s3 + $0xfc] sm:$0xf]
  %v1469 = vld [vmem:[%s3 + $0x100] sm:$0xf]
  %v1470 = vld [vmem:[%s3 + $0x104] sm:$0xf]
  %v1471 = vld [vmem:[%s3 + $0x108] sm:$0xf]
  %v1472 = vld [vmem:[%s3 + $0x10c] sm:$0xf]
  %v1473 = vld [vmem:[%s3 + $0x110] sm:$0xf]
  %v1474 = vld [vmem:[%s3 + $0x114] sm:$0xf]
  %v1475 = vld [vmem:[%s3 + $0x118] sm:$0xf]
  %v1476 = vld [vmem:[%s3 + $0x11c] sm:$0xf]
  %v1477 = vld [vmem:[%s3 + $0x120] sm:$0xf]
  %v1478 = vld [vmem:[%s3 + $0x124] sm:$0xf]
  %v1479 = vld [vmem:[%s3 + $0x128] sm:$0xf]
  %v1480 = vld [vmem:[%s3 + $0x12c] sm:$0xf]
  %v1481 = vld [vmem:[%s3 + $0x130] sm:$0xf]
  %v1482 = vld [vmem:[%s3 + $0x134] sm:$0xf]
  %v1483 = vld [vmem:[%s3 + $0x138] sm:$0xf]
  %v1484 = vld [vmem:[%s3 + $0x13c] sm:$0xf]
  %v1485 = vld [vmem:[%s3 + $0x140] sm:$0xf]
  %v1486 = vld [vmem:[%s3 + $0x144] sm:$0xf]
  %v1487 = vld [vmem:[%s3 + $0x148] sm:$0xf]
  %v1488 = vld [vmem:[%s3 + $0x14c] sm:$0xf]
  %v1489 = vld [vmem:[%s3 + $0x150] sm:$0xf]
  %v1490 = vld [vmem:[%s3 + $0x154] sm:$0xf]
  %v1491 = vld [vmem:[%s3 + $0x158] sm:$0xf]
  %v1492 = vld [vmem:[%s3 + $0x15c] sm:$0xf]
  %v1493 = vld [vmem:[%s3 + $0x160] sm:$0xf]
  %v1494 = vld [vmem:[%s3 + $0x164] sm:$0xf]
  %v1495 = vld [vmem:[%s3 + $0x168] sm:$0xf]
  %v1496 = vld [vmem:[%s3 + $0x16c] sm:$0xf]
  %v1497 = vld [vmem:[%s3 + $0x170] sm:$0xf]
  %v1498 = vld [vmem:[%s3 + $0x174] sm:$0xf]
  %v1499 = vld [vmem:[%s3 + $0x178] sm:$0xf]
  %v1500 = vld [vmem:[%s3 + $0x17c] sm:$0xf]
  %v1501 = vld [vmem:[%s3 + $0x180] sm:$0xf]
  %v1502 = vld [vmem:[%s3 + $0x184] sm:$0xf]
  %v1503 = vld [vmem:[%s3 + $0x188] sm:$0xf]
  %v1504 = vld [vmem:[%s3 + $0x18c] sm:$0xf]
  %v1505 = vld [vmem:[%s3 + $0x190] sm:$0xf]
  %v1506 = vld [vmem:[%s3 + $0x194] sm:$0xf]
  %v1507 = vld [vmem:[%s3 + $0x198] sm:$0xf]
  %v1508 = vld [vmem:[%s3 + $0x19c] sm:$0xf]
  %v1509 = vld [vmem:[%s3 + $0x1a0] sm:$0xf]
  %v1510 = vld [vmem:[%s3 + $0x1a4] sm:$0xf]
  %v1511 = vld [vmem:[%s3 + $0x1a8] sm:$0xf]
  %v1512 = vld [vmem:[%s3 + $0x1ac] sm:$0xf]
  %v1513 = vld [vmem:[%s3 + $0x1b0] sm:$0xf]
  %v1514 = vld [vmem:[%s3 + $0x1b4] sm:$0xf]
  %v1515 = vld [vmem:[%s3 + $0x1b8] sm:$0xf]
  %v1516 = vld [vmem:[%s3 + $0x1bc] sm:$0xf]
  %v1517 = vld [vmem:[%s3 + $0x1c0] sm:$0xf]
  %v1518 = vld [vmem:[%s3 + $0x1c4] sm:$0xf]
  %v1519 = vld [vmem:[%s3 + $0x1c8] sm:$0xf]
  %v1520 = vld [vmem:[%s3 + $0x1cc] sm:$0xf]
  %v1521 = vld [vmem:[%s3 + $0x1d0] sm:$0xf]
  %v1522 = vld [vmem:[%s3 + $0x1d4] sm:$0xf]
  %v1523 = vld [vmem:[%s3 + $0x1d8] sm:$0xf]
  %v1524 = vld [vmem:[%s3 + $0x1dc] sm:$0xf]
  %v1525 = vld [vmem:[%s3 + $0x1e0] sm:$0xf]
  %v1526 = vld [vmem:[%s3 + $0x1e4] sm:$0xf]
  %v1527 = vld [vmem:[%s3 + $0x1e8] sm:$0xf]
  %v1528 = vld [vmem:[%s3 + $0x1ec] sm:$0xf]
  %v1529 = vld [vmem:[%s3 + $0x1f0] sm:$0xf]
  %v1530 = vld [vmem:[%s3 + $0x1f4] sm:$0xf]
  %v1531 = vld [vmem:[%s3 + $0x1f8] sm:$0xf]
  %v1532 = vld [vmem:[%s3 + $0x1fc] sm:$0xf]
  %v1533 = vld [vmem:[%s3 + $0x200] sm:$0xf]
  %v1534 = vld [vmem:[%s3 + $0x204] sm:$0xf]
  %v1535 = vld [vmem:[%s3 + $0x208] sm:$0xf]
  %v1536 = vld [vmem:[%s3 + $0x20c] sm:$0xf]
  %v1537 = vld [vmem:[%s3 + $0x210] sm:$0xf]
  %v1538 = vld [vmem:[%s3 + $0x214] sm:$0xf]
  %v1539 = vld [vmem:[%s3 + $0x218] sm:$0xf]
  %v1540 = vld [vmem:[%s3 + $0x21c] sm:$0xf]
  %v1541 = vld [vmem:[%s3 + $0x220] sm:$0xf]
  %v1542 = vld [vmem:[%s3 + $0x224] sm:$0xf]
  %v1543 = vld [vmem:[%s3 + $0x228] sm:$0xf]
  %v1544 = vld [vmem:[%s3 + $0x22c] sm:$0xf]
  %v1545 = vld [vmem:[%s3 + $0x230] sm:$0xf]
  %v1546 = vld [vmem:[%s3 + $0x234] sm:$0xf]
  %v1547 = vld [vmem:[%s3 + $0x238] sm:$0xf]
  %v1548 = vld [vmem:[%s3 + $0x23c] sm:$0xf]
  %v1549 = vld [vmem:[%s3 + $0x240] sm:$0xf]
  %v1550 = vld [vmem:[%s3 + $0x244] sm:$0xf]
  %v1551 = vld [vmem:[%s3 + $0x248] sm:$0xf]
  %v1552 = vld [vmem:[%s3 + $0x24c] sm:$0xf]
  %v1553 = vld [vmem:[%s3 + $0x250] sm:$0xf]
  %v1554 = vld [vmem:[%s3 + $0x254] sm:$0xf]
  %v1555 = vld [vmem:[%s3 + $0x258] sm:$0xf]
  %v1556 = vld [vmem:[%s3 + $0x25c] sm:$0xf]
  %v1557 = vld [vmem:[%s3 + $0x260] sm:$0xf]
  %v1558 = vld [vmem:[%s3 + $0x264] sm:$0xf]
  %v1559 = vld [vmem:[%s3 + $0x268] sm:$0xf]
  %v1560 = vld [vmem:[%s3 + $0x26c] sm:$0xf]
  %v1561 = vld [vmem:[%s3 + $0x270] sm:$0xf]
  %v1562 = vld [vmem:[%s3 + $0x274] sm:$0xf]
  %v1563 = vld [vmem:[%s3 + $0x278] sm:$0xf]
  %v1564 = vld [vmem:[%s3 + $0x27c] sm:$0xf]
  %v1565 = vld [vmem:[%s3 + $0x280] sm:$0xf]
  %v1566 = vld [vmem:[%s3 + $0x284] sm:$0xf]
  %v1567 = vld [vmem:[%s3 + $0x288] sm:$0xf]
  %v1568 = vld [vmem:[%s3 + $0x28c] sm:$0xf]
  %v1569 = vld [vmem:[%s3 + $0x290] sm:$0xf]
  %v1570 = vld [vmem:[%s3 + $0x294] sm:$0xf]
  %v1571 = vld [vmem:[%s3 + $0x298] sm:$0xf]
  %v1572 = vld [vmem:[%s3 + $0x29c] sm:$0xf]
  %v1573 = vld [vmem:[%s3 + $0x2a0] sm:$0xf]
  %v1574 = vld [vmem:[%s3 + $0x2a4] sm:$0xf]
  %v1575 = vld [vmem:[%s3 + $0x2a8] sm:$0xf]
  %v1576 = vld [vmem:[%s3 + $0x2ac] sm:$0xf]
  %v1577 = vld [vmem:[%s3 + $0x2b0] sm:$0xf]
  %v1578 = vld [vmem:[%s3 + $0x2b4] sm:$0xf]
  %v1579 = vld [vmem:[%s3 + $0x2b8] sm:$0xf]
  %v1580 = vld [vmem:[%s3 + $0x2bc] sm:$0xf]
  %v1581 = vld [vmem:[%s3 + $0x2c0] sm:$0xf]
  %v1582 = vld [vmem:[%s3 + $0x2c4] sm:$0xf]
  %v1583 = vld [vmem:[%s3 + $0x2c8] sm:$0xf]
  %v1584 = vld [vmem:[%s3 + $0x2cc] sm:$0xf]
  %v1585 = vld [vmem:[%s3 + $0x2d0] sm:$0xf]
  %v1586 = vld [vmem:[%s3 + $0x2d4] sm:$0xf]
  %v1587 = vld [vmem:[%s3 + $0x2d8] sm:$0xf]
  %v1588 = vld [vmem:[%s3 + $0x2dc] sm:$0xf]
  %v1589 = vld [vmem:[%s3 + $0x2e0] sm:$0xf]
  %v1590 = vld [vmem:[%s3 + $0x2e4] sm:$0xf]
  %v1591 = vld [vmem:[%s3 + $0x2e8] sm:$0xf]
  %v1592 = vld [vmem:[%s3 + $0x2ec] sm:$0xf]
  %v1593 = vld [vmem:[%s3 + $0x2f0] sm:$0xf]
  %v1594 = vld [vmem:[%s3 + $0x2f4] sm:$0xf]
  %v1595 = vld [vmem:[%s3 + $0x2f8] sm:$0xf]
  %v1596 = vld [vmem:[%s3 + $0x2fc] sm:$0xf]
  %v1597 = vld [vmem:[%s3 + $0x300] sm:$0xf]
  %v1598 = vld [vmem:[%s3 + $0x304] sm:$0xf]
  %v1599 = vld [vmem:[%s3 + $0x308] sm:$0xf]
  %v1600 = vld [vmem:[%s3 + $0x30c] sm:$0xf]
  %v1601 = vld [vmem:[%s3 + $0x310] sm:$0xf]
  %v1602 = vld [vmem:[%s3 + $0x314] sm:$0xf]
  %v1603 = vld [vmem:[%s3 + $0x318] sm:$0xf]
  %v1604 = vld [vmem:[%s3 + $0x31c] sm:$0xf]
  %v1605 = vld [vmem:[%s3 + $0x320] sm:$0xf]
  %v1606 = vld [vmem:[%s3 + $0x324] sm:$0xf]
  %v1607 = vld [vmem:[%s3 + $0x328] sm:$0xf]
  %v1608 = vld [vmem:[%s3 + $0x32c] sm:$0xf]
  %v1609 = vld [vmem:[%s3 + $0x330] sm:$0xf]
  %v1610 = vld [vmem:[%s3 + $0x334] sm:$0xf]
  %v1611 = vld [vmem:[%s3 + $0x338] sm:$0xf]
  %v1612 = vld [vmem:[%s3 + $0x33c] sm:$0xf]
  %v1613 = vld [vmem:[%s3 + $0x340] sm:$0xf]
  %v1614 = vld [vmem:[%s3 + $0x344] sm:$0xf]
  %v1615 = vld [vmem:[%s3 + $0x348] sm:$0xf]
  %v1616 = vld [vmem:[%s3 + $0x34c] sm:$0xf]
  %v1617 = vld [vmem:[%s3 + $0x350] sm:$0xf]
  %v1618 = vld [vmem:[%s3 + $0x354] sm:$0xf]
  %v1619 = vld [vmem:[%s3 + $0x358] sm:$0xf]
  %v1620 = vld [vmem:[%s3 + $0x35c] sm:$0xf]
  %v1621 = vld [vmem:[%s3 + $0x360] sm:$0xf]
  %v1622 = vld [vmem:[%s3 + $0x364] sm:$0xf]
  %v1623 = vld [vmem:[%s3 + $0x368] sm:$0xf]
  %v1624 = vld [vmem:[%s3 + $0x36c] sm:$0xf]
  %v1625 = vld [vmem:[%s3 + $0x370] sm:$0xf]
  %v1626 = vld [vmem:[%s3 + $0x374] sm:$0xf]
  %v1627 = vld [vmem:[%s3 + $0x378] sm:$0xf]
  %v1628 = vld [vmem:[%s3 + $0x37c] sm:$0xf]
  %v1629 = vld [vmem:[%s3 + $0x380] sm:$0xf]
  %v1630 = vld [vmem:[%s3 + $0x384] sm:$0xf]
  %v1631 = vld [vmem:[%s3 + $0x388] sm:$0xf]
  %v1632 = vld [vmem:[%s3 + $0x38c] sm:$0xf]
  %v1633 = vld [vmem:[%s3 + $0x390] sm:$0xf]
  %v1634 = vld [vmem:[%s3 + $0x394] sm:$0xf]
  %v1635 = vld [vmem:[%s3 + $0x398] sm:$0xf]
  %v1636 = vld [vmem:[%s3 + $0x39c] sm:$0xf]
  %v1637 = vld [vmem:[%s3 + $0x3a0] sm:$0xf]
  %v1638 = vld [vmem:[%s3 + $0x3a4] sm:$0xf]
  %v1639 = vld [vmem:[%s3 + $0x3a8] sm:$0xf]
  %v1640 = vld [vmem:[%s3 + $0x3ac] sm:$0xf]
  %v1641 = vld [vmem:[%s3 + $0x3b0] sm:$0xf]
  %v1642 = vld [vmem:[%s3 + $0x3b4] sm:$0xf]
  %v1643 = vld [vmem:[%s3 + $0x3b8] sm:$0xf]
  %v1644 = vld [vmem:[%s3 + $0x3bc] sm:$0xf]
  %v1645 = vld [vmem:[%s3 + $0x3c0] sm:$0xf]
  %v1646 = vld [vmem:[%s3 + $0x3c4] sm:$0xf]
  %v1647 = vld [vmem:[%s3 + $0x3c8] sm:$0xf]
  %v1648 = vld [vmem:[%s3 + $0x3cc] sm:$0xf]
  %v1649 = vld [vmem:[%s3 + $0x3d0] sm:$0xf]
  %v1650 = vld [vmem:[%s3 + $0x3d4] sm:$0xf]
  %v1651 = vld [vmem:[%s3 + $0x3d8] sm:$0xf]
  %v1652 = vld [vmem:[%s3 + $0x3dc] sm:$0xf]
  %v1653 = vld [vmem:[%s3 + $0x3e0] sm:$0xf]
  %v1654 = vld [vmem:[%s3 + $0x3e4] sm:$0xf]
  %v1655 = vld [vmem:[%s3 + $0x3e8] sm:$0xf]
  %v1656 = vld [vmem:[%s3 + $0x3ec] sm:$0xf]
  %v1657 = vld [vmem:[%s3 + $0x3f0] sm:$0xf]
  %v1658 = vld [vmem:[%s3 + $0x3f4] sm:$0xf]
  %v1659 = vld [vmem:[%s3 + $0x3f8] sm:$0xf]
  %v1660 = vld [vmem:[%s3 + $0x3fc] sm:$0xf]
  %v1661 = vld [vmem:[%s4] sm:$0x1]
  %v1663 = vlaneseq
  %v1664 = vshrl.u32 %v1663, 7
  %v1665 = vsub.s32 0, %v1664
  %v1666 = vrot.slane %v1661, %v1665
  %v1924 = vunpack.c.l.b16 %v1405
  %v1925 = vunpack.c.l.b16 %v1406
  %v1926 = vunpack.c.l.b16 %v1407
  %v1927 = vunpack.c.l.b16 %v1408
  %v1928 = vunpack.c.l.b16 %v1409
  %v1929 = vunpack.c.l.b16 %v1410
  %v1930 = vunpack.c.l.b16 %v1411
  %v1931 = vunpack.c.l.b16 %v1412
  %v1932 = vunpack.c.l.b16 %v1413
  %v1933 = vunpack.c.l.b16 %v1414
  %v1934 = vunpack.c.l.b16 %v1415
  %v1935 = vunpack.c.l.b16 %v1416
  %v1936 = vunpack.c.l.b16 %v1417
  %v1937 = vunpack.c.l.b16 %v1418
  %v1938 = vunpack.c.l.b16 %v1419
  %v1939 = vunpack.c.l.b16 %v1420
  %v1940 = vunpack.c.l.b16 %v1421
  %v1941 = vunpack.c.l.b16 %v1422
  %v1942 = vunpack.c.l.b16 %v1423
  %v1943 = vunpack.c.l.b16 %v1424
  %v1944 = vunpack.c.l.b16 %v1425
  %v1945 = vunpack.c.l.b16 %v1426
  %v1946 = vunpack.c.l.b16 %v1427
  %v1947 = vunpack.c.l.b16 %v1428
  %v1948 = vunpack.c.l.b16 %v1429
  %v1949 = vunpack.c.l.b16 %v1430
  %v1950 = vunpack.c.l.b16 %v1431
  %v1951 = vunpack.c.l.b16 %v1432
  %v1952 = vunpack.c.l.b16 %v1433
  %v1953 = vunpack.c.l.b16 %v1434
  %v1954 = vunpack.c.l.b16 %v1435
  %v1955 = vunpack.c.l.b16 %v1436
  %v1956 = vunpack.c.l.b16 %v1437
  %v1957 = vunpack.c.l.b16 %v1438
  %v1958 = vunpack.c.l.b16 %v1439
  %v1959 = vunpack.c.l.b16 %v1440
  %v1960 = vunpack.c.l.b16 %v1441
  %v1961 = vunpack.c.l.b16 %v1442
  %v1962 = vunpack.c.l.b16 %v1443
  %v1963 = vunpack.c.l.b16 %v1444
  %v1964 = vunpack.c.l.b16 %v1445
  %v1965 = vunpack.c.l.b16 %v1446
  %v1966 = vunpack.c.l.b16 %v1447
  %v1967 = vunpack.c.l.b16 %v1448
  %v1968 = vunpack.c.l.b16 %v1449
  %v1969 = vunpack.c.l.b16 %v1450
  %v1970 = vunpack.c.l.b16 %v1451
  %v1971 = vunpack.c.l.b16 %v1452
  %v1972 = vunpack.c.l.b16 %v1453
  %v1973 = vunpack.c.l.b16 %v1454
  %v1974 = vunpack.c.l.b16 %v1455
  %v1975 = vunpack.c.l.b16 %v1456
  %v1976 = vunpack.c.l.b16 %v1457
  %v1977 = vunpack.c.l.b16 %v1458
  %v1978 = vunpack.c.l.b16 %v1459
  %v1979 = vunpack.c.l.b16 %v1460
  %v1980 = vunpack.c.l.b16 %v1461
  %v1981 = vunpack.c.l.b16 %v1462
  %v1982 = vunpack.c.l.b16 %v1463
  %v1983 = vunpack.c.l.b16 %v1464
  %v1984 = vunpack.c.l.b16 %v1465
  %v1985 = vunpack.c.l.b16 %v1466
  %v1986 = vunpack.c.l.b16 %v1467
  %v1987 = vunpack.c.l.b16 %v1468
  %v1988 = vunpack.c.l.b16 %v1469
  %v1989 = vunpack.c.l.b16 %v1470
  %v1990 = vunpack.c.l.b16 %v1471
  %v1991 = vunpack.c.l.b16 %v1472
  %v1992 = vunpack.c.l.b16 %v1473
  %v1993 = vunpack.c.l.b16 %v1474
  %v1994 = vunpack.c.l.b16 %v1475
  %v1995 = vunpack.c.l.b16 %v1476
  %v1996 = vunpack.c.l.b16 %v1477
  %v1997 = vunpack.c.l.b16 %v1478
  %v1998 = vunpack.c.l.b16 %v1479
  %v1999 = vunpack.c.l.b16 %v1480
  %v2000 = vunpack.c.l.b16 %v1481
  %v2001 = vunpack.c.l.b16 %v1482
  %v2002 = vunpack.c.l.b16 %v1483
  %v2003 = vunpack.c.l.b16 %v1484
  %v2004 = vunpack.c.l.b16 %v1485
  %v2005 = vunpack.c.l.b16 %v1486
  %v2006 = vunpack.c.l.b16 %v1487
  %v2007 = vunpack.c.l.b16 %v1488
  %v2008 = vunpack.c.l.b16 %v1489
  %v2009 = vunpack.c.l.b16 %v1490
  %v2010 = vunpack.c.l.b16 %v1491
  %v2011 = vunpack.c.l.b16 %v1492
  %v2012 = vunpack.c.l.b16 %v1493
  %v2013 = vunpack.c.l.b16 %v1494
  %v2014 = vunpack.c.l.b16 %v1495
  %v2015 = vunpack.c.l.b16 %v1496
  %v2016 = vunpack.c.l.b16 %v1497
  %v2017 = vunpack.c.l.b16 %v1498
  %v2018 = vunpack.c.l.b16 %v1499
  %v2019 = vunpack.c.l.b16 %v1500
  %v2020 = vunpack.c.l.b16 %v1501
  %v2021 = vunpack.c.l.b16 %v1502
  %v2022 = vunpack.c.l.b16 %v1503
  %v2023 = vunpack.c.l.b16 %v1504
  %v2024 = vunpack.c.l.b16 %v1505
  %v2025 = vunpack.c.l.b16 %v1506
  %v2026 = vunpack.c.l.b16 %v1507
  %v2027 = vunpack.c.l.b16 %v1508
  %v2028 = vunpack.c.l.b16 %v1509
  %v2029 = vunpack.c.l.b16 %v1510
  %v2030 = vunpack.c.l.b16 %v1511
  %v2031 = vunpack.c.l.b16 %v1512
  %v2032 = vunpack.c.l.b16 %v1513
  %v2033 = vunpack.c.l.b16 %v1514
  %v2034 = vunpack.c.l.b16 %v1515
  %v2035 = vunpack.c.l.b16 %v1516
  %v2036 = vunpack.c.l.b16 %v1517
  %v2037 = vunpack.c.l.b16 %v1518
  %v2038 = vunpack.c.l.b16 %v1519
  %v2039 = vunpack.c.l.b16 %v1520
  %v2040 = vunpack.c.l.b16 %v1521
  %v2041 = vunpack.c.l.b16 %v1522
  %v2042 = vunpack.c.l.b16 %v1523
  %v2043 = vunpack.c.l.b16 %v1524
  %v2044 = vunpack.c.l.b16 %v1525
  %v2045 = vunpack.c.l.b16 %v1526
  %v2046 = vunpack.c.l.b16 %v1527
  %v2047 = vunpack.c.l.b16 %v1528
  %v2048 = vunpack.c.l.b16 %v1529
  %v2049 = vunpack.c.l.b16 %v1530
  %v2050 = vunpack.c.l.b16 %v1531
  %v2051 = vunpack.c.l.b16 %v1532
  %v2052 = vunpack.c.l.b16 %v1533
  %v2053 = vunpack.c.l.b16 %v1534
  %v2054 = vunpack.c.l.b16 %v1535
  %v2055 = vunpack.c.l.b16 %v1536
  %v2056 = vunpack.c.l.b16 %v1537
  %v2057 = vunpack.c.l.b16 %v1538
  %v2058 = vunpack.c.l.b16 %v1539
  %v2059 = vunpack.c.l.b16 %v1540
  %v2060 = vunpack.c.l.b16 %v1541
  %v2061 = vunpack.c.l.b16 %v1542
  %v2062 = vunpack.c.l.b16 %v1543
  %v2063 = vunpack.c.l.b16 %v1544
  %v2064 = vunpack.c.l.b16 %v1545
  %v2065 = vunpack.c.l.b16 %v1546
  %v2066 = vunpack.c.l.b16 %v1547
  %v2067 = vunpack.c.l.b16 %v1548
  %v2068 = vunpack.c.l.b16 %v1549
  %v2069 = vunpack.c.l.b16 %v1550
  %v2070 = vunpack.c.l.b16 %v1551
  %v2071 = vunpack.c.l.b16 %v1552
  %v2072 = vunpack.c.l.b16 %v1553
  %v2073 = vunpack.c.l.b16 %v1554
  %v2074 = vunpack.c.l.b16 %v1555
  %v2075 = vunpack.c.l.b16 %v1556
  %v2076 = vunpack.c.l.b16 %v1557
  %v2077 = vunpack.c.l.b16 %v1558
  %v2078 = vunpack.c.l.b16 %v1559
  %v2079 = vunpack.c.l.b16 %v1560
  %v2080 = vunpack.c.l.b16 %v1561
  %v2081 = vunpack.c.l.b16 %v1562
  %v2082 = vunpack.c.l.b16 %v1563
  %v2083 = vunpack.c.l.b16 %v1564
  %v2084 = vunpack.c.l.b16 %v1565
  %v2085 = vunpack.c.l.b16 %v1566
  %v2086 = vunpack.c.l.b16 %v1567
  %v2087 = vunpack.c.l.b16 %v1568
  %v2088 = vunpack.c.l.b16 %v1569
  %v2089 = vunpack.c.l.b16 %v1570
  %v2090 = vunpack.c.l.b16 %v1571
  %v2091 = vunpack.c.l.b16 %v1572
  %v2092 = vunpack.c.l.b16 %v1573
  %v2093 = vunpack.c.l.b16 %v1574
  %v2094 = vunpack.c.l.b16 %v1575
  %v2095 = vunpack.c.l.b16 %v1576
  %v2096 = vunpack.c.l.b16 %v1577
  %v2097 = vunpack.c.l.b16 %v1578
  %v2098 = vunpack.c.l.b16 %v1579
  %v2099 = vunpack.c.l.b16 %v1580
  %v2100 = vunpack.c.l.b16 %v1581
  %v2101 = vunpack.c.l.b16 %v1582
  %v2102 = vunpack.c.l.b16 %v1583
  %v2103 = vunpack.c.l.b16 %v1584
  %v2104 = vunpack.c.l.b16 %v1585
  %v2105 = vunpack.c.l.b16 %v1586
  %v2106 = vunpack.c.l.b16 %v1587
  %v2107 = vunpack.c.l.b16 %v1588
  %v2108 = vunpack.c.l.b16 %v1589
  %v2109 = vunpack.c.l.b16 %v1590
  %v2110 = vunpack.c.l.b16 %v1591
  %v2111 = vunpack.c.l.b16 %v1592
  %v2112 = vunpack.c.l.b16 %v1593
  %v2113 = vunpack.c.l.b16 %v1594
  %v2114 = vunpack.c.l.b16 %v1595
  %v2115 = vunpack.c.l.b16 %v1596
  %v2116 = vunpack.c.l.b16 %v1597
  %v2117 = vunpack.c.l.b16 %v1598
  %v2118 = vunpack.c.l.b16 %v1599
  %v2119 = vunpack.c.l.b16 %v1600
  %v2120 = vunpack.c.l.b16 %v1601
  %v2121 = vunpack.c.l.b16 %v1602
  %v2122 = vunpack.c.l.b16 %v1603
  %v2123 = vunpack.c.l.b16 %v1604
  %v2124 = vunpack.c.l.b16 %v1605
  %v2125 = vunpack.c.l.b16 %v1606
  %v2126 = vunpack.c.l.b16 %v1607
  %v2127 = vunpack.c.l.b16 %v1608
  %v2128 = vunpack.c.l.b16 %v1609
  %v2129 = vunpack.c.l.b16 %v1610
  %v2130 = vunpack.c.l.b16 %v1611
  %v2131 = vunpack.c.l.b16 %v1612
  %v2132 = vunpack.c.l.b16 %v1613
  %v2133 = vunpack.c.l.b16 %v1614
  %v2134 = vunpack.c.l.b16 %v1615
  %v2135 = vunpack.c.l.b16 %v1616
  %v2136 = vunpack.c.l.b16 %v1617
  %v2137 = vunpack.c.l.b16 %v1618
  %v2138 = vunpack.c.l.b16 %v1619
  %v2139 = vunpack.c.l.b16 %v1620
  %v2140 = vunpack.c.l.b16 %v1621
  %v2141 = vunpack.c.l.b16 %v1622
  %v2142 = vunpack.c.l.b16 %v1623
  %v2143 = vunpack.c.l.b16 %v1624
  %v2144 = vunpack.c.l.b16 %v1625
  %v2145 = vunpack.c.l.b16 %v1626
  %v2146 = vunpack.c.l.b16 %v1627
  %v2147 = vunpack.c.l.b16 %v1628
  %v2148 = vunpack.c.l.b16 %v1629
  %v2149 = vunpack.c.l.b16 %v1630
  %v2150 = vunpack.c.l.b16 %v1631
  %v2151 = vunpack.c.l.b16 %v1632
  %v2152 = vunpack.c.l.b16 %v1633
  %v2153 = vunpack.c.l.b16 %v1634
  %v2154 = vunpack.c.l.b16 %v1635
  %v2155 = vunpack.c.l.b16 %v1636
  %v2156 = vunpack.c.l.b16 %v1637
  %v2157 = vunpack.c.l.b16 %v1638
  %v2158 = vunpack.c.l.b16 %v1639
  %v2159 = vunpack.c.l.b16 %v1640
  %v2160 = vunpack.c.l.b16 %v1641
  %v2161 = vunpack.c.l.b16 %v1642
  %v2162 = vunpack.c.l.b16 %v1643
  %v2163 = vunpack.c.l.b16 %v1644
  %v2164 = vunpack.c.l.b16 %v1645
  %v2165 = vunpack.c.l.b16 %v1646
  %v2166 = vunpack.c.l.b16 %v1647
  %v2167 = vunpack.c.l.b16 %v1648
  %v2168 = vunpack.c.l.b16 %v1649
  %v2169 = vunpack.c.l.b16 %v1650
  %v2170 = vunpack.c.l.b16 %v1651
  %v2171 = vunpack.c.l.b16 %v1652
  %v2172 = vunpack.c.l.b16 %v1653
  %v2173 = vunpack.c.l.b16 %v1654
  %v2174 = vunpack.c.l.b16 %v1655
  %v2175 = vunpack.c.l.b16 %v1656
  %v2176 = vunpack.c.l.b16 %v1657
  %v2177 = vunpack.c.l.b16 %v1658
  %v2178 = vunpack.c.l.b16 %v1659
  %v2179 = vunpack.c.l.b16 %v1660
  %v2180 = vpack.c.b16 %v1925, %v1924
  %v2181 = vpack.c.b16 %v1927, %v1926
  %v2182 = vpack.c.b16 %v1929, %v1928
  %v2183 = vpack.c.b16 %v1931, %v1930
  %v2184 = vpack.c.b16 %v1933, %v1932
  %v2185 = vpack.c.b16 %v1935, %v1934
  %v2186 = vpack.c.b16 %v1937, %v1936
  %v2187 = vpack.c.b16 %v1939, %v1938
  %v2188 = vpack.c.b16 %v1941, %v1940
  %v2189 = vpack.c.b16 %v1943, %v1942
  %v2190 = vpack.c.b16 %v1945, %v1944
  %v2191 = vpack.c.b16 %v1947, %v1946
  %v2192 = vpack.c.b16 %v1949, %v1948
  %v2193 = vpack.c.b16 %v1951, %v1950
  %v2194 = vpack.c.b16 %v1953, %v1952
  %v2195 = vpack.c.b16 %v1955, %v1954
  %v2196 = vpack.c.b16 %v1957, %v1956
  %v2197 = vpack.c.b16 %v1959, %v1958
  %v2198 = vpack.c.b16 %v1961, %v1960
  %v2199 = vpack.c.b16 %v1963, %v1962
  %v2200 = vpack.c.b16 %v1965, %v1964
  %v2201 = vpack.c.b16 %v1967, %v1966
  %v2202 = vpack.c.b16 %v1969, %v1968
  %v2203 = vpack.c.b16 %v1971, %v1970
  %v2204 = vpack.c.b16 %v1973, %v1972
  %v2205 = vpack.c.b16 %v1975, %v1974
  %v2206 = vpack.c.b16 %v1977, %v1976
  %v2207 = vpack.c.b16 %v1979, %v1978
  %v2208 = vpack.c.b16 %v1981, %v1980
  %v2209 = vpack.c.b16 %v1983, %v1982
  %v2210 = vpack.c.b16 %v1985, %v1984
  %v2211 = vpack.c.b16 %v1987, %v1986
  %v2212 = vpack.c.b16 %v1989, %v1988
  %v2213 = vpack.c.b16 %v1991, %v1990
  %v2214 = vpack.c.b16 %v1993, %v1992
  %v2215 = vpack.c.b16 %v1995, %v1994
  %v2216 = vpack.c.b16 %v1997, %v1996
  %v2217 = vpack.c.b16 %v1999, %v1998
  %v2218 = vpack.c.b16 %v2001, %v2000
  %v2219 = vpack.c.b16 %v2003, %v2002
  %v2220 = vpack.c.b16 %v2005, %v2004
  %v2221 = vpack.c.b16 %v2007, %v2006
  %v2222 = vpack.c.b16 %v2009, %v2008
  %v2223 = vpack.c.b16 %v2011, %v2010
  %v2224 = vpack.c.b16 %v2013, %v2012
  %v2225 = vpack.c.b16 %v2015, %v2014
  %v2226 = vpack.c.b16 %v2017, %v2016
  %v2227 = vpack.c.b16 %v2019, %v2018
  %v2228 = vpack.c.b16 %v2021, %v2020
  %v2229 = vpack.c.b16 %v2023, %v2022
  %v2230 = vpack.c.b16 %v2025, %v2024
  %v2231 = vpack.c.b16 %v2027, %v2026
  %v2232 = vpack.c.b16 %v2029, %v2028
  %v2233 = vpack.c.b16 %v2031, %v2030
  %v2234 = vpack.c.b16 %v2033, %v2032
  %v2235 = vpack.c.b16 %v2035, %v2034
  %v2236 = vpack.c.b16 %v2037, %v2036
  %v2237 = vpack.c.b16 %v2039, %v2038
  %v2238 = vpack.c.b16 %v2041, %v2040
  %v2239 = vpack.c.b16 %v2043, %v2042
  %v2240 = vpack.c.b16 %v2045, %v2044
  %v2241 = vpack.c.b16 %v2047, %v2046
  %v2242 = vpack.c.b16 %v2049, %v2048
  %v2243 = vpack.c.b16 %v2051, %v2050
  %v2244 = vpack.c.b16 %v2053, %v2052
  %v2245 = vpack.c.b16 %v2055, %v2054
  %v2246 = vpack.c.b16 %v2057, %v2056
  %v2247 = vpack.c.b16 %v2059, %v2058
  %v2248 = vpack.c.b16 %v2061, %v2060
  %v2249 = vpack.c.b16 %v2063, %v2062
  %v2250 = vpack.c.b16 %v2065, %v2064
  %v2251 = vpack.c.b16 %v2067, %v2066
  %v2252 = vpack.c.b16 %v2069, %v2068
  %v2253 = vpack.c.b16 %v2071, %v2070
  %v2254 = vpack.c.b16 %v2073, %v2072
  %v2255 = vpack.c.b16 %v2075, %v2074
  %v2256 = vpack.c.b16 %v2077, %v2076
  %v2257 = vpack.c.b16 %v2079, %v2078
  %v2258 = vpack.c.b16 %v2081, %v2080
  %v2259 = vpack.c.b16 %v2083, %v2082
  %v2260 = vpack.c.b16 %v2085, %v2084
  %v2261 = vpack.c.b16 %v2087, %v2086
  %v2262 = vpack.c.b16 %v2089, %v2088
  %v2263 = vpack.c.b16 %v2091, %v2090
  %v2264 = vpack.c.b16 %v2093, %v2092
  %v2265 = vpack.c.b16 %v2095, %v2094
  %v2266 = vpack.c.b16 %v2097, %v2096
  %v2267 = vpack.c.b16 %v2099, %v2098
  %v2268 = vpack.c.b16 %v2101, %v2100
  %v2269 = vpack.c.b16 %v2103, %v2102
  %v2270 = vpack.c.b16 %v2105, %v2104
  %v2271 = vpack.c.b16 %v2107, %v2106
  %v2272 = vpack.c.b16 %v2109, %v2108
  %v2273 = vpack.c.b16 %v2111, %v2110
  %v2274 = vpack.c.b16 %v2113, %v2112
  %v2275 = vpack.c.b16 %v2115, %v2114
  %v2276 = vpack.c.b16 %v2117, %v2116
  %v2277 = vpack.c.b16 %v2119, %v2118
  %v2278 = vpack.c.b16 %v2121, %v2120
  %v2279 = vpack.c.b16 %v2123, %v2122
  %v2280 = vpack.c.b16 %v2125, %v2124
  %v2281 = vpack.c.b16 %v2127, %v2126
  %v2282 = vpack.c.b16 %v2129, %v2128
  %v2283 = vpack.c.b16 %v2131, %v2130
  %v2284 = vpack.c.b16 %v2133, %v2132
  %v2285 = vpack.c.b16 %v2135, %v2134
  %v2286 = vpack.c.b16 %v2137, %v2136
  %v2287 = vpack.c.b16 %v2139, %v2138
  %v2288 = vpack.c.b16 %v2141, %v2140
  %v2289 = vpack.c.b16 %v2143, %v2142
  %v2290 = vpack.c.b16 %v2145, %v2144
  %v2291 = vpack.c.b16 %v2147, %v2146
  %v2292 = vpack.c.b16 %v2149, %v2148
  %v2293 = vpack.c.b16 %v2151, %v2150
  %v2294 = vpack.c.b16 %v2153, %v2152
  %v2295 = vpack.c.b16 %v2155, %v2154
  %v2296 = vpack.c.b16 %v2157, %v2156
  %v2297 = vpack.c.b16 %v2159, %v2158
  %v2298 = vpack.c.b16 %v2161, %v2160
  %v2299 = vpack.c.b16 %v2163, %v2162
  %v2300 = vpack.c.b16 %v2165, %v2164
  %v2301 = vpack.c.b16 %v2167, %v2166
  %v2302 = vpack.c.b16 %v2169, %v2168
  %v2303 = vpack.c.b16 %v2171, %v2170
  %v2304 = vpack.c.b16 %v2173, %v2172
  %v2305 = vpack.c.b16 %v2175, %v2174
  %v2306 = vpack.c.b16 %v2177, %v2176
  %v2307 = vpack.c.b16 %v2179, %v2178
  %2436 = vmatprep.subr.bf16.mxu0 0
  %2437 = vmatpush1.bf16.msra.mxu0 %v2187
  %2438 = vmatprep.subr.bf16.mxu0 0
  %2439 = vmatpush1.bf16.msra.mxu0 %v2186
  %2440 = vmatprep.subr.bf16.mxu0 0
  %2441 = vmatpush1.bf16.msra.mxu0 %v2185
  %2442 = vmatprep.subr.bf16.mxu0 0
  %2443 = vmatpush1.bf16.msra.mxu0 %v2184
  %2444 = vmatprep.subr.bf16.mxu0 0
  %2445 = vmatpush1.bf16.msra.mxu0 %v2183
  %2446 = vmatprep.subr.bf16.mxu0 0
  %2447 = vmatpush1.bf16.msra.mxu0 %v2182
  %2448 = vmatprep.subr.bf16.mxu0 0
  %2449 = vmatpush1.bf16.msra.mxu0 %v2181
  %2450 = vmatprep.subr.bf16.mxu0 0
  %2451 = vmatpush1.bf16.msra.mxu0 %v2180
  %2452 = vmatprep.subr.bf16.mxu0 0
  %2453 = vmatpush2.bf16.msra.mxu0 %v2195
  %2454 = vmatprep.subr.bf16.mxu0 0
  %2455 = vmatpush2.bf16.msra.mxu0 %v2194
  %2456 = vmatprep.subr.bf16.mxu0 0
  %2457 = vmatpush2.bf16.msra.mxu0 %v2193
  %2458 = vmatprep.subr.bf16.mxu0 0
  %2459 = vmatpush2.bf16.msra.mxu0 %v2192
  %2460 = vmatprep.subr.bf16.mxu0 0
  %2461 = vmatpush2.bf16.msra.mxu0 %v2191
  %2462 = vmatprep.subr.bf16.mxu0 0
  %2463 = vmatpush2.bf16.msra.mxu0 %v2190
  %2464 = vmatprep.subr.bf16.mxu0 0
  %2465 = vmatpush2.bf16.msra.mxu0 %v2189
  %2466 = vmatprep.subr.bf16.mxu0 0
  %2467 = vmatpush2.bf16.msra.mxu0 %v2188
  %2468 = vmatprep.mubr.bf16.mxu0 %v1374
  %2469 = vmatmul.mubr.bf16.gmra.mxu0 %v1373
  %v2470 = vpop.f32.mrf.mxu0
  %v2471 = vadd.f32 %v1666, %v2470
  %v2472 = vpop.f32.mrf.mxu0
  %v2473 = vpop.f32.mrf.mxu0
  %v2474 = vadd.f32 %v1666, %v2473
  %v2475 = vpop.f32.mrf.mxu0
  %2476 = vmatprep.mubr.bf16.mxu0 %v1390
  %2477 = vmatmul.mubr.bf16.gmra.mxu0 %v1389
  %v2478 = vpop.f32.mrf.mxu0
  %v2479 = vadd.f32 %v1666, %v2478
  %v2480 = vpop.f32.mrf.mxu0
  %v2481 = vpop.f32.mrf.mxu0
  %v2482 = vadd.f32 %v1666, %v2481
  %v2483 = vpop.f32.mrf.mxu0
  %2484 = vdwg.mxu0
  %2485 = vmatprep.subr.bf16.mxu0 0
  %2486 = vmatpush1.bf16.msra.mxu0 %v2203
  %2487 = vmatprep.subr.bf16.mxu0 0
  %2488 = vmatpush1.bf16.msra.mxu0 %v2202
  %2489 = vmatprep.subr.bf16.mxu0 0
  %2490 = vmatpush1.bf16.msra.mxu0 %v2201
  %2491 = vmatprep.subr.bf16.mxu0 0
  %2492 = vmatpush1.bf16.msra.mxu0 %v2200
  %2493 = vmatprep.subr.bf16.mxu0 0
  %2494 = vmatpush1.bf16.msra.mxu0 %v2199
  %2495 = vmatprep.subr.bf16.mxu0 0
  %2496 = vmatpush1.bf16.msra.mxu0 %v2198
  %2497 = vmatprep.subr.bf16.mxu0 0
  %2498 = vmatpush1.bf16.msra.mxu0 %v2197
  %2499 = vmatprep.subr.bf16.mxu0 0
  %2500 = vmatpush1.bf16.msra.mxu0 %v2196
  %2501 = vmatprep.subr.bf16.mxu0 0
  %2502 = vmatpush2.bf16.msra.mxu0 %v2211
  %2503 = vmatprep.subr.bf16.mxu0 0
  %2504 = vmatpush2.bf16.msra.mxu0 %v2210
  %2505 = vmatprep.subr.bf16.mxu0 0
  %2506 = vmatpush2.bf16.msra.mxu0 %v2209
  %2507 = vmatprep.subr.bf16.mxu0 0
  %2508 = vmatpush2.bf16.msra.mxu0 %v2208
  %2509 = vmatprep.subr.bf16.mxu0 0
  %2510 = vmatpush2.bf16.msra.mxu0 %v2207
  %2511 = vmatprep.subr.bf16.mxu0 0
  %2512 = vmatpush2.bf16.msra.mxu0 %v2206
  %2513 = vmatprep.subr.bf16.mxu0 0
  %2514 = vmatpush2.bf16.msra.mxu0 %v2205
  %2515 = vmatprep.subr.bf16.mxu0 0
  %2516 = vmatpush2.bf16.msra.mxu0 %v2204
  %2517 = vmatprep.mubr.bf16.mxu0 %v1376
  %2518 = vmatmul.mubr.bf16.gmra.mxu0 %v1375
  %v2519 = vpop.f32.mrf.mxu0
  %v2520 = vadd.f32 %v2471, %v2519
  %v2521 = vpop.f32.mrf.mxu0
  %v2522 = vpop.f32.mrf.mxu0
  %v2523 = vadd.f32 %v2474, %v2522
  %v2524 = vpop.f32.mrf.mxu0
  %2525 = vmatprep.mubr.bf16.mxu0 %v1392
  %2526 = vmatmul.mubr.bf16.gmra.mxu0 %v1391
  %v2527 = vpop.f32.mrf.mxu0
  %v2528 = vadd.f32 %v2479, %v2527
  %v2529 = vpop.f32.mrf.mxu0
  %v2530 = vpop.f32.mrf.mxu0
  %v2531 = vadd.f32 %v2482, %v2530
  %v2532 = vpop.f32.mrf.mxu0
  %2533 = vdwg.mxu0
  %2534 = vmatprep.subr.bf16.mxu0 0
  %2535 = vmatpush1.bf16.msra.mxu0 %v2219
  %2536 = vmatprep.subr.bf16.mxu0 0
  %2537 = vmatpush1.bf16.msra.mxu0 %v2218
  %2538 = vmatprep.subr.bf16.mxu0 0
  %2539 = vmatpush1.bf16.msra.mxu0 %v2217
  %2540 = vmatprep.subr.bf16.mxu0 0
  %2541 = vmatpush1.bf16.msra.mxu0 %v2216
  %2542 = vmatprep.subr.bf16.mxu0 0
  %2543 = vmatpush1.bf16.msra.mxu0 %v2215
  %2544 = vmatprep.subr.bf16.mxu0 0
  %2545 = vmatpush1.bf16.msra.mxu0 %v2214
  %2546 = vmatprep.subr.bf16.mxu0 0
  %2547 = vmatpush1.bf16.msra.mxu0 %v2213
  %2548 = vmatprep.subr.bf16.mxu0 0
  %2549 = vmatpush1.bf16.msra.mxu0 %v2212
  %2550 = vmatprep.subr.bf16.mxu0 0
  %2551 = vmatpush2.bf16.msra.mxu0 %v2227
  %2552 = vmatprep.subr.bf16.mxu0 0
  %2553 = vmatpush2.bf16.msra.mxu0 %v2226
  %2554 = vmatprep.subr.bf16.mxu0 0
  %2555 = vmatpush2.bf16.msra.mxu0 %v2225
  %2556 = vmatprep.subr.bf16.mxu0 0
  %2557 = vmatpush2.bf16.msra.mxu0 %v2224
  %2558 = vmatprep.subr.bf16.mxu0 0
  %2559 = vmatpush2.bf16.msra.mxu0 %v2223
  %2560 = vmatprep.subr.bf16.mxu0 0
  %2561 = vmatpush2.bf16.msra.mxu0 %v2222
  %2562 = vmatprep.subr.bf16.mxu0 0
  %2563 = vmatpush2.bf16.msra.mxu0 %v2221
  %2564 = vmatprep.subr.bf16.mxu0 0
  %2565 = vmatpush2.bf16.msra.mxu0 %v2220
  %2566 = vmatprep.mubr.bf16.mxu0 %v1378
  %2567 = vmatmul.mubr.bf16.gmra.mxu0 %v1377
  %v2568 = vpop.f32.mrf.mxu0
  %v2569 = vadd.f32 %v2520, %v2568
  %v2570 = vpop.f32.mrf.mxu0
  %v2571 = vpop.f32.mrf.mxu0
  %v2572 = vadd.f32 %v2523, %v2571
  %v2573 = vpop.f32.mrf.mxu0
  %2574 = vmatprep.mubr.bf16.mxu0 %v1394
  %2575 = vmatmul.mubr.bf16.gmra.mxu0 %v1393
  %v2576 = vpop.f32.mrf.mxu0
  %v2577 = vadd.f32 %v2528, %v2576
  %v2578 = vpop.f32.mrf.mxu0
  %v2579 = vpop.f32.mrf.mxu0
  %v2580 = vadd.f32 %v2531, %v2579
  %v2581 = vpop.f32.mrf.mxu0
  %2582 = vdwg.mxu0
  %2583 = vmatprep.subr.bf16.mxu0 0
  %2584 = vmatpush1.bf16.msra.mxu0 %v2235
  %2585 = vmatprep.subr.bf16.mxu0 0
  %2586 = vmatpush1.bf16.msra.mxu0 %v2234
  %2587 = vmatprep.subr.bf16.mxu0 0
  %2588 = vmatpush1.bf16.msra.mxu0 %v2233
  %2589 = vmatprep.subr.bf16.mxu0 0
  %2590 = vmatpush1.bf16.msra.mxu0 %v2232
  %2591 = vmatprep.subr.bf16.mxu0 0
  %2592 = vmatpush1.bf16.msra.mxu0 %v2231
  %2593 = vmatprep.subr.bf16.mxu0 0
  %2594 = vmatpush1.bf16.msra.mxu0 %v2230
  %2595 = vmatprep.subr.bf16.mxu0 0
  %2596 = vmatpush1.bf16.msra.mxu0 %v2229
  %2597 = vmatprep.subr.bf16.mxu0 0
  %2598 = vmatpush1.bf16.msra.mxu0 %v2228
  %2599 = vmatprep.subr.bf16.mxu0 0
  %2600 = vmatpush2.bf16.msra.mxu0 %v2243
  %2601 = vmatprep.subr.bf16.mxu0 0
  %2602 = vmatpush2.bf16.msra.mxu0 %v2242
  %2603 = vmatprep.subr.bf16.mxu0 0
  %2604 = vmatpush2.bf16.msra.mxu0 %v2241
  %2605 = vmatprep.subr.bf16.mxu0 0
  %2606 = vmatpush2.bf16.msra.mxu0 %v2240
  %2607 = vmatprep.subr.bf16.mxu0 0
  %2608 = vmatpush2.bf16.msra.mxu0 %v2239
  %2609 = vmatprep.subr.bf16.mxu0 0
  %2610 = vmatpush2.bf16.msra.mxu0 %v2238
  %2611 = vmatprep.subr.bf16.mxu0 0
  %2612 = vmatpush2.bf16.msra.mxu0 %v2237
  %2613 = vmatprep.subr.bf16.mxu0 0
  %2614 = vmatpush2.bf16.msra.mxu0 %v2236
  %2615 = vmatprep.mubr.bf16.mxu0 %v1380
  %2616 = vmatmul.mubr.bf16.gmra.mxu0 %v1379
  %v2617 = vpop.f32.mrf.mxu0
  %v2618 = vadd.f32 %v2569, %v2617
  %v2619 = vpop.f32.mrf.mxu0
  %v2620 = vpop.f32.mrf.mxu0
  %v2621 = vadd.f32 %v2572, %v2620
  %v2622 = vpop.f32.mrf.mxu0
  %2623 = vmatprep.mubr.bf16.mxu0 %v1396
  %2624 = vmatmul.mubr.bf16.gmra.mxu0 %v1395
  %v2625 = vpop.f32.mrf.mxu0
  %v2626 = vadd.f32 %v2577, %v2625
  %v2627 = vpop.f32.mrf.mxu0
  %v2628 = vpop.f32.mrf.mxu0
  %v2629 = vadd.f32 %v2580, %v2628
  %v2630 = vpop.f32.mrf.mxu0
  %2631 = vdwg.mxu0
  %2632 = vmatprep.subr.bf16.mxu0 0
  %2633 = vmatpush1.bf16.msra.mxu0 %v2251
  %2634 = vmatprep.subr.bf16.mxu0 0
  %2635 = vmatpush1.bf16.msra.mxu0 %v2250
  %2636 = vmatprep.subr.bf16.mxu0 0
  %2637 = vmatpush1.bf16.msra.mxu0 %v2249
  %2638 = vmatprep.subr.bf16.mxu0 0
  %2639 = vmatpush1.bf16.msra.mxu0 %v2248
  %2640 = vmatprep.subr.bf16.mxu0 0
  %2641 = vmatpush1.bf16.msra.mxu0 %v2247
  %2642 = vmatprep.subr.bf16.mxu0 0
  %2643 = vmatpush1.bf16.msra.mxu0 %v2246
  %2644 = vmatprep.subr.bf16.mxu0 0
  %2645 = vmatpush1.bf16.msra.mxu0 %v2245
  %2646 = vmatprep.subr.bf16.mxu0 0
  %2647 = vmatpush1.bf16.msra.mxu0 %v2244
  %2648 = vmatprep.subr.bf16.mxu0 0
  %2649 = vmatpush2.bf16.msra.mxu0 %v2259
  %2650 = vmatprep.subr.bf16.mxu0 0
  %2651 = vmatpush2.bf16.msra.mxu0 %v2258
  %2652 = vmatprep.subr.bf16.mxu0 0
  %2653 = vmatpush2.bf16.msra.mxu0 %v2257
  %2654 = vmatprep.subr.bf16.mxu0 0
  %2655 = vmatpush2.bf16.msra.mxu0 %v2256
  %2656 = vmatprep.subr.bf16.mxu0 0
  %2657 = vmatpush2.bf16.msra.mxu0 %v2255
  %2658 = vmatprep.subr.bf16.mxu0 0
  %2659 = vmatpush2.bf16.msra.mxu0 %v2254
  %2660 = vmatprep.subr.bf16.mxu0 0
  %2661 = vmatpush2.bf16.msra.mxu0 %v2253
  %2662 = vmatprep.subr.bf16.mxu0 0
  %2663 = vmatpush2.bf16.msra.mxu0 %v2252
  %2664 = vmatprep.mubr.bf16.mxu0 %v1382
  %2665 = vmatmul.mubr.bf16.gmra.mxu0 %v1381
  %v2666 = vpop.f32.mrf.mxu0
  %v2667 = vadd.f32 %v2618, %v2666
  %v2668 = vpop.f32.mrf.mxu0
  %v2669 = vpop.f32.mrf.mxu0
  %v2670 = vadd.f32 %v2621, %v2669
  %v2671 = vpop.f32.mrf.mxu0
  %2672 = vmatprep.mubr.bf16.mxu0 %v1398
  %2673 = vmatmul.mubr.bf16.gmra.mxu0 %v1397
  %v2674 = vpop.f32.mrf.mxu0
  %v2675 = vadd.f32 %v2626, %v2674
  %v2676 = vpop.f32.mrf.mxu0
  %v2677 = vpop.f32.mrf.mxu0
  %v2678 = vadd.f32 %v2629, %v2677
  %v2679 = vpop.f32.mrf.mxu0
  %2680 = vdwg.mxu0
  %2681 = vmatprep.subr.bf16.mxu0 0
  %2682 = vmatpush1.bf16.msra.mxu0 %v2267
  %2683 = vmatprep.subr.bf16.mxu0 0
  %2684 = vmatpush1.bf16.msra.mxu0 %v2266
  %2685 = vmatprep.subr.bf16.mxu0 0
  %2686 = vmatpush1.bf16.msra.mxu0 %v2265
  %2687 = vmatprep.subr.bf16.mxu0 0
  %2688 = vmatpush1.bf16.msra.mxu0 %v2264
  %2689 = vmatprep.subr.bf16.mxu0 0
  %2690 = vmatpush1.bf16.msra.mxu0 %v2263
  %2691 = vmatprep.subr.bf16.mxu0 0
  %2692 = vmatpush1.bf16.msra.mxu0 %v2262
  %2693 = vmatprep.subr.bf16.mxu0 0
  %2694 = vmatpush1.bf16.msra.mxu0 %v2261
  %2695 = vmatprep.subr.bf16.mxu0 0
  %2696 = vmatpush1.bf16.msra.mxu0 %v2260
  %2697 = vmatprep.subr.bf16.mxu0 0
  %2698 = vmatpush2.bf16.msra.mxu0 %v2275
  %2699 = vmatprep.subr.bf16.mxu0 0
  %2700 = vmatpush2.bf16.msra.mxu0 %v2274
  %2701 = vmatprep.subr.bf16.mxu0 0
  %2702 = vmatpush2.bf16.msra.mxu0 %v2273
  %2703 = vmatprep.subr.bf16.mxu0 0
  %2704 = vmatpush2.bf16.msra.mxu0 %v2272
  %2705 = vmatprep.subr.bf16.mxu0 0
  %2706 = vmatpush2.bf16.msra.mxu0 %v2271
  %2707 = vmatprep.subr.bf16.mxu0 0
  %2708 = vmatpush2.bf16.msra.mxu0 %v2270
  %2709 = vmatprep.subr.bf16.mxu0 0
  %2710 = vmatpush2.bf16.msra.mxu0 %v2269
  %2711 = vmatprep.subr.bf16.mxu0 0
  %2712 = vmatpush2.bf16.msra.mxu0 %v2268
  %2713 = vmatprep.mubr.bf16.mxu0 %v1384
  %2714 = vmatmul.mubr.bf16.gmra.mxu0 %v1383
  %v2715 = vpop.f32.mrf.mxu0
  %v2716 = vadd.f32 %v2667, %v2715
  %v2717 = vpop.f32.mrf.mxu0
  %v2718 = vpop.f32.mrf.mxu0
  %v2719 = vadd.f32 %v2670, %v2718
  %v2720 = vpop.f32.mrf.mxu0
  %2721 = vmatprep.mubr.bf16.mxu0 %v1400
  %2722 = vmatmul.mubr.bf16.gmra.mxu0 %v1399
  %v2723 = vpop.f32.mrf.mxu0
  %v2724 = vadd.f32 %v2675, %v2723
  %v2725 = vpop.f32.mrf.mxu0
  %v2726 = vpop.f32.mrf.mxu0
  %v2727 = vadd.f32 %v2678, %v2726
  %v2728 = vpop.f32.mrf.mxu0
  %2729 = vdwg.mxu0
  %2730 = vmatprep.subr.bf16.mxu0 0
  %2731 = vmatpush1.bf16.msra.mxu0 %v2283
  %2732 = vmatprep.subr.bf16.mxu0 0
  %2733 = vmatpush1.bf16.msra.mxu0 %v2282
  %2734 = vmatprep.subr.bf16.mxu0 0
  %2735 = vmatpush1.bf16.msra.mxu0 %v2281
  %2736 = vmatprep.subr.bf16.mxu0 0
  %2737 = vmatpush1.bf16.msra.mxu0 %v2280
  %2738 = vmatprep.subr.bf16.mxu0 0
  %2739 = vmatpush1.bf16.msra.mxu0 %v2279
  %2740 = vmatprep.subr.bf16.mxu0 0
  %2741 = vmatpush1.bf16.msra.mxu0 %v2278
  %2742 = vmatprep.subr.bf16.mxu0 0
  %2743 = vmatpush1.bf16.msra.mxu0 %v2277
  %2744 = vmatprep.subr.bf16.mxu0 0
  %2745 = vmatpush1.bf16.msra.mxu0 %v2276
  %2746 = vmatprep.subr.bf16.mxu0 0
  %2747 = vmatpush2.bf16.msra.mxu0 %v2291
  %2748 = vmatprep.subr.bf16.mxu0 0
  %2749 = vmatpush2.bf16.msra.mxu0 %v2290
  %2750 = vmatprep.subr.bf16.mxu0 0
  %2751 = vmatpush2.bf16.msra.mxu0 %v2289
  %2752 = vmatprep.subr.bf16.mxu0 0
  %2753 = vmatpush2.bf16.msra.mxu0 %v2288
  %2754 = vmatprep.subr.bf16.mxu0 0
  %2755 = vmatpush2.bf16.msra.mxu0 %v2287
  %2756 = vmatprep.subr.bf16.mxu0 0
  %2757 = vmatpush2.bf16.msra.mxu0 %v2286
  %2758 = vmatprep.subr.bf16.mxu0 0
  %2759 = vmatpush2.bf16.msra.mxu0 %v2285
  %2760 = vmatprep.subr.bf16.mxu0 0
  %2761 = vmatpush2.bf16.msra.mxu0 %v2284
  %2762 = vmatprep.mubr.bf16.mxu0 %v1386
  %2763 = vmatmul.mubr.bf16.gmra.mxu0 %v1385
  %v2764 = vpop.f32.mrf.mxu0
  %v2765 = vadd.f32 %v2716, %v2764
  %v2766 = vpop.f32.mrf.mxu0
  %v2767 = vpop.f32.mrf.mxu0
  %v2768 = vadd.f32 %v2719, %v2767
  %v2769 = vpop.f32.mrf.mxu0
  %2770 = vmatprep.mubr.bf16.mxu0 %v1402
  %2771 = vmatmul.mubr.bf16.gmra.mxu0 %v1401
  %v2772 = vpop.f32.mrf.mxu0
  %v2773 = vadd.f32 %v2724, %v2772
  %v2774 = vpop.f32.mrf.mxu0
  %v2775 = vpop.f32.mrf.mxu0
  %v2776 = vadd.f32 %v2727, %v2775
  %v2777 = vpop.f32.mrf.mxu0
  %2778 = vdwg.mxu0
  %2779 = vmatprep.subr.bf16.mxu0 0
  %2780 = vmatpush1.bf16.msra.mxu0 %v2299
  %2781 = vmatprep.subr.bf16.mxu0 0
  %2782 = vmatpush1.bf16.msra.mxu0 %v2298
  %2783 = vmatprep.subr.bf16.mxu0 0
  %2784 = vmatpush1.bf16.msra.mxu0 %v2297
  %2785 = vmatprep.subr.bf16.mxu0 0
  %2786 = vmatpush1.bf16.msra.mxu0 %v2296
  %2787 = vmatprep.subr.bf16.mxu0 0
  %2788 = vmatpush1.bf16.msra.mxu0 %v2295
  %2789 = vmatprep.subr.bf16.mxu0 0
  %2790 = vmatpush1.bf16.msra.mxu0 %v2294
  %2791 = vmatprep.subr.bf16.mxu0 0
  %2792 = vmatpush1.bf16.msra.mxu0 %v2293
  %2793 = vmatprep.subr.bf16.mxu0 0
  %2794 = vmatpush1.bf16.msra.mxu0 %v2292
  %2795 = vmatprep.subr.bf16.mxu0 0
  %2796 = vmatpush2.bf16.msra.mxu0 %v2307
  %2797 = vmatprep.subr.bf16.mxu0 0
  %2798 = vmatpush2.bf16.msra.mxu0 %v2306
  %2799 = vmatprep.subr.bf16.mxu0 0
  %2800 = vmatpush2.bf16.msra.mxu0 %v2305
  %2801 = vmatprep.subr.bf16.mxu0 0
  %2802 = vmatpush2.bf16.msra.mxu0 %v2304
  %2803 = vmatprep.subr.bf16.mxu0 0
  %2804 = vmatpush2.bf16.msra.mxu0 %v2303
  %2805 = vmatprep.subr.bf16.mxu0 0
  %2806 = vmatpush2.bf16.msra.mxu0 %v2302
  %2807 = vmatprep.subr.bf16.mxu0 0
  %2808 = vmatpush2.bf16.msra.mxu0 %v2301
  %2809 = vmatprep.subr.bf16.mxu0 0
  %2810 = vmatpush2.bf16.msra.mxu0 %v2300
  %2811 = vmatprep.mubr.bf16.mxu0 %v1388
  %2812 = vmatmul.mubr.bf16.gmra.mxu0 %v1387
  %v2813 = vpop.f32.mrf.mxu0
  %v2814 = vadd.f32 %v2765, %v2813
  %v2815 = vpop.f32.mrf.mxu0
  %v2816 = vpop.f32.mrf.mxu0
  %v2817 = vadd.f32 %v2768, %v2816
  %v2818 = vpop.f32.mrf.mxu0
  %2819 = vmatprep.mubr.bf16.mxu0 %v1404
  %2820 = vmatmul.mubr.bf16.gmra.mxu0 %v1403
  %v2821 = vpop.f32.mrf.mxu0
  %v2822 = vadd.f32 %v2773, %v2821
  %v2823 = vpop.f32.mrf.mxu0
  %v2824 = vpop.f32.mrf.mxu0
  %v2825 = vadd.f32 %v2776, %v2824
  %v2826 = vpop.f32.mrf.mxu0
  %2827 = vdwg.mxu0
  %v2828 = vadd.f32 %v27, %v2814
  %v2829 = vadd.f32 %v28, %v2817
  %v2830 = vadd.f32 %v29, %v2822
  %v2831 = vadd.f32 %v30, %v2825
  %2832 = vadd.xlane.f32.xlu0 %v2828
  %v2833 = vpop.xlane.xlu0 %2832
  %2834 = vadd.xlane.f32.xlu0 %v2829
  %v2835 = vpop.xlane.xlu0 %2834
  %2836 = vadd.xlane.f32.xlu0 %v2830
  %v2837 = vpop.xlane.xlu0 %2836
  %2838 = vadd.xlane.f32.xlu0 %v2831
  %v2839 = vpop.xlane.xlu0 %2838
  %v2840 = vrcp.pop 128.0
  %v2841 = vmul.f32 %v2833, %v2840
  %v2842 = vmul.f32 %v2835, %v2840
  %v2843 = vmul.f32 %v2837, %v2840
  %v2844 = vmul.f32 %v2839, %v2840
  %v2845 = vsub.f32 %v2828, %v2841
  %v2846 = vsub.f32 %v2829, %v2842
  %v2847 = vsub.f32 %v2830, %v2843
  %v2848 = vsub.f32 %v2831, %v2844
  %v2849 = vmul.f32 %v2845, %v2845
  %v2850 = vmul.f32 %v2846, %v2846
  %v2851 = vmul.f32 %v2847, %v2847
  %v2852 = vmul.f32 %v2848, %v2848
  %2853 = vadd.xlane.f32.xlu0 %v2849
  %v2854 = vpop.xlane.xlu0 %2853
  %2855 = vadd.xlane.f32.xlu0 %v2850
  %v2856 = vpop.xlane.xlu0 %2855
  %2857 = vadd.xlane.f32.xlu0 %v2851
  %v2858 = vpop.xlane.xlu0 %2857
  %2859 = vadd.xlane.f32.xlu0 %v2852
  %v2860 = vpop.xlane.xlu0 %2859
  %v2861 = vmul.f32 %v2854, %v2840
  %v2862 = vmul.f32 %v2856, %v2840
  %v2863 = vmul.f32 %v2858, %v2840
  %v2864 = vmul.f32 %v2860, %v2840
  %v2865 = vadd.f32 %v2861, 1e-05
  %v2866 = vadd.f32 %v2862, 1e-05
  %v2867 = vadd.f32 %v2863, 1e-05
  %v2868 = vadd.f32 %v2864, 1e-05
  %v2869 = vrsqrt.pop %v2865
  %v2870 = vrsqrt.pop %v2866
  %v2871 = vrsqrt.pop %v2867
  %v2872 = vrsqrt.pop %v2868
  %v2873 = vmul.f32 %v2845, %v2869
  %v2874 = vmul.f32 %v2846, %v2870
  %v2875 = vmul.f32 %v2847, %v2871
  %v2876 = vmul.f32 %v2848, %v2872
  %v2877 = vld [vmem:[%s5] sm:$0x1]
  %v2879 = vlaneseq
  %v2880 = vshrl.u32 %v2879, 7
  %v2881 = vsub.s32 0, %v2880
  %v2882 = vrot.slane %v2877, %v2881
  %v2884 = vmul.f32 %v2873, %v2882
  %v2885 = vmul.f32 %v2874, %v2882
  %v2886 = vmul.f32 %v2875, %v2882
  %v2887 = vmul.f32 %v2876, %v2882
  %v2888 = vld [vmem:[%s6] sm:$0x1]
  %v2890 = vlaneseq
  %v2891 = vshrl.u32 %v2890, 7
  %v2892 = vsub.s32 0, %v2891
  %v2893 = vrot.slane %v2888, %v2892
  %v2895 = vadd.f32 %v2884, %v2893
  %v2896 = vadd.f32 %v2885, %v2893
  %v2897 = vadd.f32 %v2886, %v2893
  %v2898 = vadd.f32 %v2887, %v2893
  %2899 = vst [vmem:[%s7] sm:$0xff] %v2895
  %2900 = vst [vmem:[%s7 + $0x8] sm:$0xff] %v2896
  %2901 = vst [vmem:[%s7 + $0x10] sm:$0xff] %v2897
  %2902 = vst [vmem:[%s7 + $0x18] sm:$0xff] %v2898
  // Predicated region
  $region30: #{model_forward.28} parent=0 // pred_check
    _
  $region31: #{model_forward.28} parent=0 // pred_check_branch
    %2904 = sbr.rel (0) target = $region33
  $region32: #{model_forward.28} parent=0 // pred_region
    _
  $region33: #{model_forward.28} parent=0 // pred_fallthru
    _
  // Predicated region
  $region34: #{model_forward.28} parent=0 // pred_check
    _
  $region35: #{model_forward.28} parent=0 // pred_check_branch
    %2906 = sbr.rel (0) target = $region37
  $region36: #{model_forward.28} parent=0 // pred_region
    _
  $region37: #{model_forward.28} parent=0 // pred_fallthru
    _

// kernel: model_forward.45
$region0: #{model_forward.45}
  #allocation0 [shape = 'u32[]', space=smem, size = 0x4, offset = 0x4, fixed_abs, tag = 'smem constant byte address 0x4 - core index']
  #allocation1 [shape = 'u32[144,128]{1,0:T(1,128)}', space=vmem, size = 0x12000, scoped, tag = 'internal scratch']
  %s0 = inlined_call_operand.vmem [shape: f32[32,3], index: 0, kind: input, shape index: {}]
  %s1 = inlined_call_operand.vmem [shape: f32[32,3], index: 1, kind: input, shape index: {}]
  %s2 = inlined_call_operand.hbm [shape: f32[1,1], index: 2, kind: output, shape index: {}]
  %s3 = sld [smem:[#allocation0]]
  $region22: #{model_forward.45} parent=0
    _
  %s5 = ssub.s32 1, %s3
  %s6 = scalar_select 0, %s5, %s3
  $region1: #{model_forward.45} parent=0
    #allocation2 [shape = 'u8[512]{0}', space=vmem, size = 0x400, scoped, tag = 'output window, operand 0, single buffered']
    #allocation3 [shape = 's32[1]{0}', space=sflag, size = 0x4, scoped, tag = 'scoped memory for model_forward.45']
    %7 = vsyncpa [#allocation3], 0
    // Predicated region
    $region2: #{model_forward.45} parent=1 // pred_check
      _
    $region3: #{model_forward.45} parent=1 // pred_check_branch
      %9 = sbr.rel (0) target = $region5
    $region4: #{model_forward.45} parent=1 // pred_region
      _
    $region5: #{model_forward.45} parent=1 // pred_fallthru
      _
    // Predicated region
    $region6: #{model_forward.45} parent=1 // pred_check
      _
    $region7: #{model_forward.45} parent=1 // pred_check_branch
      %11 = sbr.rel (0) target = $region9
    $region8: #{model_forward.45} parent=1 // pred_region
      _
    $region9: #{model_forward.45} parent=1 // pred_fallthru
      _
    %p12 = scmp.eq.s32.totalorder 0, 0
    // Predicated region
    $region10: #{model_forward.45} parent=1 // pred_check
      %p13 = pneg %p12
    $region11: #{model_forward.45} parent=1 // pred_check_branch
      %15 = sbr.rel (%p13) target = $region13
    $region12: #{model_forward.45} parent=1 // pred_region
      %vm16 = vcmask 0
      %17 = vst.msk [vmem:[#allocation2] sm:$0x1] %vm16, 0.0
    $region13: #{model_forward.45} parent=1 // pred_fallthru
      _
    %v18 = vld [vmem:[%s0] sm:$0xff]
    %v19 = vld [vmem:[%s0 + $0x8] sm:$0xff]
    %v20 = vld [vmem:[%s0 + $0x10] sm:$0xff]
    %v21 = vld [vmem:[%s0 + $0x18] sm:$0xff]
    %v22 = vld [vmem:[%s1] sm:$0xff]
    %v23 = vld [vmem:[%s1 + $0x8] sm:$0xff]
    %v24 = vld [vmem:[%s1 + $0x10] sm:$0xff]
    %v25 = vld [vmem:[%s1 + $0x18] sm:$0xff]
    %v26 = vsub.f32 %v18, %v22
    %v27 = vsub.f32 %v19, %v23
    %v28 = vsub.f32 %v20, %v24
    %v29 = vsub.f32 %v21, %v25
    %v30 = vld [vmem:[#allocation2] sm:$0x1]
    %v31 = vmul.f32 %v26, %v26
    %v32 = vmul.f32 %v27, %v27
    %v33 = vmul.f32 %v28, %v28
    %v34 = vmul.f32 %v29, %v29
    %vm35 = vcmask 23552
    %v36 = vsel %vm35, %v31, 0.0
    %v37 = vsel %vm35, %v32, 0.0
    %v38 = vadd.f32 %v36, %v37
    %v39 = vsel %vm35, %v33, 0.0
    %v40 = vadd.f32 %v38, %v39
    %v41 = vsel %vm35, %v34, 0.0
    %v42 = vadd.f32 %v40, %v41
    %43 = vadd.xlane.f32.xlu0 %v42
    %v44 = vpop.xlane.xlu0 %43
    %v45 = vrot.slane %v44, 4
    %v46 = vadd.f32 %v44, %v45
    %v47 = vrot.slane %v46, 2
    %v48 = vadd.f32 %v46, %v47
    %v49 = vrot.slane %v48, 1
    %v50 = vadd.f32 %v48, %v49
    %s51 = vtos %v50
    %v52 = vstv %s51
    %v53 = vadd.f32 %v30, %v52
    %vm54 = vcmask 0
    %55 = vst.msk [vmem:[#allocation2] sm:$0x1] %vm54, %v53
    // Predicated region
    $region14: #{model_forward.45} parent=1 // pred_check
      _
    $region15: #{model_forward.45} parent=1 // pred_check_branch
      %57 = sbr.rel (0) target = $region17
    $region16: #{model_forward.45} parent=1 // pred_region
      %s59 = ssub.s32 16, 16
      %60 = vsyncadd [#allocation3], %s59
      %s62 = sshll.u32 [#allocation2], 4
      %s63 = int_to_ptr.vmem [resolvable:$true] %s62
      %65 = dma.vmem_to_hbm [thread:$0]  %s63, 16, %s2, [#allocation3]
    $region17: #{model_forward.45} parent=1 // pred_fallthru
      _
    // Predicated region
    $region18: #{model_forward.45} parent=1 // pred_check
      _
    $region19: #{model_forward.45} parent=1 // pred_check_branch
      %67 = sbr.rel (0) target = $region21
    $region20: #{model_forward.45} parent=1 // pred_region
      %68 = dma.done [#allocation3], 16
    $region21: #{model_forward.45} parent=1 // pred_fallthru
      _
    %69 = vsyncpa [#allocation3], 1

// kernel: model_forward.27
$region0: #{model_forward.27}
  #allocation0 [shape = 'u32[]', space=smem, size = 0x4, offset = 0x4, fixed_abs, tag = 'smem constant byte address 0x4 - core index']
  #allocation1 [shape = 'u32[144,128]{1,0:T(1,128)}', space=vmem, size = 0x12000, scoped, tag = 'internal scratch']
  %s0 = inlined_call_operand.vmem [shape: f32[2,16,128], index: 0, kind: input, shape index: {}, may-alias: {0,1}]
  %s1 = inlined_call_operand.vmem [shape: f32[2,16,128], index: 1, kind: input, shape index: {}, may-alias: {0,1}]
  %s2 = inlined_call_operand.vmem [shape: bf16[8,128,16], index: 2, kind: input, shape index: {}]
  %s3 = inlined_call_operand.vmem [shape: f32[8,1,16], index: 3, kind: input, shape index: {}]
  %s4 = inlined_call_operand.vmem [shape: bf16[8,128,16], index: 4, kind: input, shape index: {}]
  %s5 = inlined_call_operand.vmem [shape: f32[8,1,16], index: 5, kind: input, shape index: {}]
  %s6 = inlined_call_operand.vmem [shape: bf16[8,128,16], index: 6, kind: input, shape index: {}]
  %s7 = inlined_call_operand.vmem [shape: f32[8,1,16], index: 7, kind: input, shape index: {}]
  %s8 = inlined_call_operand.vmem [shape: bf16[8,16,128], index: 8, kind: input, shape index: {}]
  %s9 = inlined_call_operand.vmem [shape: f32[1,128], index: 9, kind: input, shape index: {}]
  %s10 = inlined_call_operand.vmem [shape: f32[1,128], index: 10, kind: input, shape index: {}]
  %s11 = inlined_call_operand.vmem [shape: f32[1,128], index: 11, kind: input, shape index: {}]
  %s12 = inlined_call_operand.vmem [shape: f32[2,16,128], index: 12, kind: output, shape index: {}]
  %s13 = sld [smem:[#allocation0]]
  $region81: #{model_forward.27} parent=0
    _
  %s15 = ssub.s32 1, %s13
  %s16 = scalar_select 0, %s15, %s13
  loop: start=0, step=1, limit=4
  $region2: #{model_forward.27} parent=0 // loop_pre_header
    _
  $region3: #{model_forward.27} parent=0 // loop_header
    %s18 = sphi 0, %s22
    %p19 = scmp.ge.s32.totalorder %s18, 4
    %s28 = sphi 0, %s30
    %s31 = sphi 0, %s28
    %s32 = sphi 0, %s31
    %s48 = sphi 0, %s32
    %s54 = sphi 0, %s56
    %s57 = sphi 0, %s54
    %s58 = sphi 0, %s57
    %s74 = sphi 0, %s58
    %s78 = sphi 0, %s78
    %s80 = sphi 0, %s78
    %s81 = sphi 0, %s80
    %s95 = sphi 0, %s81
    %s99 = sphi 0, %s99
    %s101 = sphi 0, %s99
    %s102 = sphi 0, %s101
    %s116 = sphi 0, %s102
    %s120 = sphi 0, %s120
    %s122 = sphi 0, %s120
    %s123 = sphi 0, %s122
    %s137 = sphi 0, %s123
    %s141 = sphi 0, %s141
    %s143 = sphi 0, %s141
    %s144 = sphi 0, %s143
    %s158 = sphi 0, %s144
    %s162 = sphi 0, %s162
    %s164 = sphi 0, %s162
    %s165 = sphi 0, %s164
    %s179 = sphi 0, %s165
    %s183 = sphi 0, %s183
    %s185 = sphi 0, %s183
    %s186 = sphi 0, %s185
    %s200 = sphi 0, %s186
    %s204 = sphi 0, %s204
    %s206 = sphi 0, %s204
    %s207 = sphi 0, %s206
    %s221 = sphi 0, %s207
    %s225 = sphi 0, %s225
    %s227 = sphi 0, %s225
    %s228 = sphi 0, %s227
    %s242 = sphi 0, %s228
    %s246 = sphi 0, %s246
    %s248 = sphi 0, %s246
    %s249 = sphi 0, %s248
    %s263 = sphi 0, %s249
    %s267 = sphi 0, %s267
    %s269 = sphi 0, %s267
    %s270 = sphi 0, %s269
    %s284 = sphi 0, %s270
    %s290 = sphi 0, %s292
    %s293 = sphi 0, %s290
    %s294 = sphi 0, %s293
    %s310 = sphi 0, %s294
  $region4: #{model_forward.27} parent=0 // loop_header_branch
    %21 = sbr.rel (%p19) target = $region8
  $region5: #{model_forward.27} parent=0 // loop_body
    %s23 = ssub.s32 %s18, 1
    %s24 = ssub.s32 %s18, 2
    %s25 = sadd.s32 %s18, 1
    %s26 = ssub.s32 %s18, %s25
    %p27 = scmp.eq.s32.totalorder %s26, 0
    %s29 = sadd.s32 %s28, 1
    %s30 = scalar_select %p27, %s28, %s29
    %p33 = pneg %p27
    %p34 = scmp.eq.s32.totalorder %s18, 1
    %p35 = por %p33, %p34
    %p36 = scmp.ne.s32.totalorder %s28, %s31
    %p37 = scmp.eq.s32.totalorder %s18, 0
    %p38 = por %p36, %p37
    %p39 = scmp.ne.s32.totalorder %s28, %s31
    %p40 = scmp.eq.s32.totalorder %s23, 1
    %p41 = por %p39, %p40
    %p42 = scmp.ne.s32.totalorder %s31, %s32
    %p43 = scmp.eq.s32.totalorder %s23, 0
    %p44 = por %p42, %p43
    %p45 = scmp.ne.s32.totalorder %s31, %s32
    %p46 = scmp.eq.s32.totalorder %s24, 1
    %p47 = por %p45, %p46
    %p49 = scmp.ne.s32.totalorder %s32, %s48
    %p50 = scmp.eq.s32.totalorder %s24, 0
    %p51 = por %p49, %p50
    %s52 = ssub.s32 %s18, %s25
    %p53 = scmp.eq.s32.totalorder %s52, 0
    %s55 = sadd.s32 %s54, 1
    %s56 = scalar_select %p53, %s54, %s55
    %p59 = pneg %p53
    %p60 = scmp.eq.s32.totalorder %s18, 1
    %p61 = por %p59, %p60
    %p62 = scmp.ne.s32.totalorder %s54, %s57
    %p63 = scmp.eq.s32.totalorder %s18, 0
    %p64 = por %p62, %p63
    %p65 = scmp.ne.s32.totalorder %s54, %s57
    %p66 = scmp.eq.s32.totalorder %s23, 1
    %p67 = por %p65, %p66
    %p68 = scmp.ne.s32.totalorder %s57, %s58
    %p69 = scmp.eq.s32.totalorder %s23, 0
    %p70 = por %p68, %p69
    %p71 = scmp.ne.s32.totalorder %s57, %s58
    %p72 = scmp.eq.s32.totalorder %s24, 1
    %p73 = por %p71, %p72
    %p75 = scmp.ne.s32.totalorder %s58, %s74
    %p76 = scmp.eq.s32.totalorder %s24, 0
    %p77 = por %p75, %p76
    %s79 = sadd.s32 %s78, 1
    %p82 = scmp.eq.s32.totalorder %s18, 1
    %p83 = scmp.ne.s32.totalorder %s78, %s80
    %p84 = scmp.eq.s32.totalorder %s18, 0
    %p85 = por %p83, %p84
    %p86 = scmp.ne.s32.totalorder %s78, %s80
    %p87 = scmp.eq.s32.totalorder %s23, 1
    %p88 = por %p86, %p87
    %p89 = scmp.ne.s32.totalorder %s80, %s81
    %p90 = scmp.eq.s32.totalorder %s23, 0
    %p91 = por %p89, %p90
    %p92 = scmp.ne.s32.totalorder %s80, %s81
    %p93 = scmp.eq.s32.totalorder %s24, 1
    %p94 = por %p92, %p93
    %p96 = scmp.ne.s32.totalorder %s81, %s95
    %p97 = scmp.eq.s32.totalorder %s24, 0
    %p98 = por %p96, %p97
    %s100 = sadd.s32 %s99, 1
    %p103 = scmp.eq.s32.totalorder %s18, 1
    %p104 = scmp.ne.s32.totalorder %s99, %s101
    %p105 = scmp.eq.s32.totalorder %s18, 0
    %p106 = por %p104, %p105
    %p107 = scmp.ne.s32.totalorder %s99, %s101
    %p108 = scmp.eq.s32.totalorder %s23, 1
    %p109 = por %p107, %p108
    %p110 = scmp.ne.s32.totalorder %s101, %s102
    %p111 = scmp.eq.s32.totalorder %s23, 0
    %p112 = por %p110, %p111
    %p113 = scmp.ne.s32.totalorder %s101, %s102
    %p114 = scmp.eq.s32.totalorder %s24, 1
    %p115 = por %p113, %p114
    %p117 = scmp.ne.s32.totalorder %s102, %s116
    %p118 = scmp.eq.s32.totalorder %s24, 0
    %p119 = por %p117, %p118
    %s121 = sadd.s32 %s120, 1
    %p124 = scmp.eq.s32.totalorder %s18, 1
    %p125 = scmp.ne.s32.totalorder %s120, %s122
    %p126 = scmp.eq.s32.totalorder %s18, 0
    %p127 = por %p125, %p126
    %p128 = scmp.ne.s32.totalorder %s120, %s122
    %p129 = scmp.eq.s32.totalorder %s23, 1
    %p130 = por %p128, %p129
    %p131 = scmp.ne.s32.totalorder %s122, %s123
    %p132 = scmp.eq.s32.totalorder %s23, 0
    %p133 = por %p131, %p132
    %p134 = scmp.ne.s32.totalorder %s122, %s123
    %p135 = scmp.eq.s32.totalorder %s24, 1
    %p136 = por %p134, %p135
    %p138 = scmp.ne.s32.totalorder %s123, %s137
    %p139 = scmp.eq.s32.totalorder %s24, 0
    %p140 = por %p138, %p139
    %s142 = sadd.s32 %s141, 1
    %p145 = scmp.eq.s32.totalorder %s18, 1
    %p146 = scmp.ne.s32.totalorder %s141, %s143
    %p147 = scmp.eq.s32.totalorder %s18, 0
    %p148 = por %p146, %p147
    %p149 = scmp.ne.s32.totalorder %s141, %s143
    %p150 = scmp.eq.s32.totalorder %s23, 1
    %p151 = por %p149, %p150
    %p152 = scmp.ne.s32.totalorder %s143, %s144
    %p153 = scmp.eq.s32.totalorder %s23, 0
    %p154 = por %p152, %p153
    %p155 = scmp.ne.s32.totalorder %s143, %s144
    %p156 = scmp.eq.s32.totalorder %s24, 1
    %p157 = por %p155, %p156
    %p159 = scmp.ne.s32.totalorder %s144, %s158
    %p160 = scmp.eq.s32.totalorder %s24, 0
    %p161 = por %p159, %p160
    %s163 = sadd.s32 %s162, 1
    %p166 = scmp.eq.s32.totalorder %s18, 1
    %p167 = scmp.ne.s32.totalorder %s162, %s164
    %p168 = scmp.eq.s32.totalorder %s18, 0
    %p169 = por %p167, %p168
    %p170 = scmp.ne.s32.totalorder %s162, %s164
    %p171 = scmp.eq.s32.totalorder %s23, 1
    %p172 = por %p170, %p171
    %p173 = scmp.ne.s32.totalorder %s164, %s165
    %p174 = scmp.eq.s32.totalorder %s23, 0
    %p175 = por %p173, %p174
    %p176 = scmp.ne.s32.totalorder %s164, %s165
    %p177 = scmp.eq.s32.totalorder %s24, 1
    %p178 = por %p176, %p177
    %p180 = scmp.ne.s32.totalorder %s165, %s179
    %p181 = scmp.eq.s32.totalorder %s24, 0
    %p182 = por %p180, %p181
    %s184 = sadd.s32 %s183, 1
    %p187 = scmp.eq.s32.totalorder %s18, 1
    %p188 = scmp.ne.s32.totalorder %s183, %s185
    %p189 = scmp.eq.s32.totalorder %s18, 0
    %p190 = por %p188, %p189
    %p191 = scmp.ne.s32.totalorder %s183, %s185
    %p192 = scmp.eq.s32.totalorder %s23, 1
    %p193 = por %p191, %p192
    %p194 = scmp.ne.s32.totalorder %s185, %s186
    %p195 = scmp.eq.s32.totalorder %s23, 0
    %p196 = por %p194, %p195
    %p197 = scmp.ne.s32.totalorder %s185, %s186
    %p198 = scmp.eq.s32.totalorder %s24, 1
    %p199 = por %p197, %p198
    %p201 = scmp.ne.s32.totalorder %s186, %s200
    %p202 = scmp.eq.s32.totalorder %s24, 0
    %p203 = por %p201, %p202
    %s205 = sadd.s32 %s204, 1
    %p208 = scmp.eq.s32.totalorder %s18, 1
    %p209 = scmp.ne.s32.totalorder %s204, %s206
    %p210 = scmp.eq.s32.totalorder %s18, 0
    %p211 = por %p209, %p210
    %p212 = scmp.ne.s32.totalorder %s204, %s206
    %p213 = scmp.eq.s32.totalorder %s23, 1
    %p214 = por %p212, %p213
    %p215 = scmp.ne.s32.totalorder %s206, %s207
    %p216 = scmp.eq.s32.totalorder %s23, 0
    %p217 = por %p215, %p216
    %p218 = scmp.ne.s32.totalorder %s206, %s207
    %p219 = scmp.eq.s32.totalorder %s24, 1
    %p220 = por %p218, %p219
    %p222 = scmp.ne.s32.totalorder %s207, %s221
    %p223 = scmp.eq.s32.totalorder %s24, 0
    %p224 = por %p222, %p223
    %s226 = sadd.s32 %s225, 1
    %p229 = scmp.eq.s32.totalorder %s18, 1
    %p230 = scmp.ne.s32.totalorder %s225, %s227
    %p231 = scmp.eq.s32.totalorder %s18, 0
    %p232 = por %p230, %p231
    %p233 = scmp.ne.s32.totalorder %s225, %s227
    %p234 = scmp.eq.s32.totalorder %s23, 1
    %p235 = por %p233, %p234
    %p236 = scmp.ne.s32.totalorder %s227, %s228
    %p237 = scmp.eq.s32.totalorder %s23, 0
    %p238 = por %p236, %p237
    %p239 = scmp.ne.s32.totalorder %s227, %s228
    %p240 = scmp.eq.s32.totalorder %s24, 1
    %p241 = por %p239, %p240
    %p243 = scmp.ne.s32.totalorder %s228, %s242
    %p244 = scmp.eq.s32.totalorder %s24, 0
    %p245 = por %p243, %p244
    %s247 = sadd.s32 %s246, 1
    %p250 = scmp.eq.s32.totalorder %s18, 1
    %p251 = scmp.ne.s32.totalorder %s246, %s248
    %p252 = scmp.eq.s32.totalorder %s18, 0
    %p253 = por %p251, %p252
    %p254 = scmp.ne.s32.totalorder %s246, %s248
    %p255 = scmp.eq.s32.totalorder %s23, 1
    %p256 = por %p254, %p255
    %p257 = scmp.ne.s32.totalorder %s248, %s249
    %p258 = scmp.eq.s32.totalorder %s23, 0
    %p259 = por %p257, %p258
    %p260 = scmp.ne.s32.totalorder %s248, %s249
    %p261 = scmp.eq.s32.totalorder %s24, 1
    %p262 = por %p260, %p261
    %p264 = scmp.ne.s32.totalorder %s249, %s263
    %p265 = scmp.eq.s32.totalorder %s24, 0
    %p266 = por %p264, %p265
    %s268 = sadd.s32 %s267, 1
    %p271 = scmp.eq.s32.totalorder %s18, 1
    %p272 = scmp.ne.s32.totalorder %s267, %s269
    %p273 = scmp.eq.s32.totalorder %s18, 0
    %p274 = por %p272, %p273
    %p275 = scmp.ne.s32.totalorder %s267, %s269
    %p276 = scmp.eq.s32.totalorder %s23, 1
    %p277 = por %p275, %p276
    %p278 = scmp.ne.s32.totalorder %s269, %s270
    %p279 = scmp.eq.s32.totalorder %s23, 0
    %p280 = por %p278, %p279
    %p281 = scmp.ne.s32.totalorder %s269, %s270
    %p282 = scmp.eq.s32.totalorder %s24, 1
    %p283 = por %p281, %p282
    %p285 = scmp.ne.s32.totalorder %s270, %s284
    %p286 = scmp.eq.s32.totalorder %s24, 0
    %p287 = por %p285, %p286
    %s288 = ssub.s32 %s18, %s25
    %p289 = scmp.eq.s32.totalorder %s288, 0
    %s291 = sadd.s32 %s290, 1
    %s292 = scalar_select %p289, %s290, %s291
    %p295 = pneg %p289
    %p296 = scmp.eq.s32.totalorder %s18, 1
    %p297 = por %p295, %p296
    %p298 = scmp.ne.s32.totalorder %s290, %s293
    %p299 = scmp.eq.s32.totalorder %s18, 0
    %p300 = por %p298, %p299
    %p301 = scmp.ne.s32.totalorder %s290, %s293
    %p302 = scmp.eq.s32.totalorder %s23, 1
    %p303 = por %p301, %p302
    %p304 = scmp.ne.s32.totalorder %s293, %s294
    %p305 = scmp.eq.s32.totalorder %s23, 0
    %p306 = por %p304, %p305
    %p307 = scmp.ne.s32.totalorder %s293, %s294
    %p308 = scmp.eq.s32.totalorder %s24, 1
    %p309 = por %p307, %p308
    %p311 = scmp.ne.s32.totalorder %s294, %s310
    %p312 = scmp.eq.s32.totalorder %s24, 0
    %p313 = por %p311, %p312
    %p314 = scmp.le.s32.totalorder 1, %s18
    %p315 = scmp.lt.s32.totalorder %s18, 3
    %p316 = pnand %p314, %p315
    %p317 = pneg %p316
    // Predicated region
    $region9: #{model_forward.27} parent=5 // pred_check
      _
    $region10: #{model_forward.27} parent=5 // pred_check_branch
      %319 = sbr.rel (%p316) target = $region12
    $region11: #{model_forward.27} parent=5 // pred_region
      %s320 = ssub.s32 %s18, 1
      // Predicated region
      $region13: #{model_forward.27} parent=11 // pred_check
        %p321 = pneg %p91
      $region14: #{model_forward.27} parent=11 // pred_check_branch
        %323 = sbr.rel (%p321) target = $region16
      $region15: #{model_forward.27} parent=11 // pred_region
        _
      $region16: #{model_forward.27} parent=11 // pred_fallthru
        _
      // Predicated region
      $region17: #{model_forward.27} parent=11 // pred_check
        %p324 = pneg %p112
      $region18: #{model_forward.27} parent=11 // pred_check_branch
        %326 = sbr.rel (%p324) target = $region20
      $region19: #{model_forward.27} parent=11 // pred_region
        _
      $region20: #{model_forward.27} parent=11 // pred_fallthru
        _
      // Predicated region
      $region21: #{model_forward.27} parent=11 // pred_check
        %p327 = pneg %p133
      $region22: #{model_forward.27} parent=11 // pred_check_branch
        %329 = sbr.rel (%p327) target = $region24
      $region23: #{model_forward.27} parent=11 // pred_region
        _
      $region24: #{model_forward.27} parent=11 // pred_fallthru
        _
      // Predicated region
      $region25: #{model_forward.27} parent=11 // pred_check
        %p330 = pneg %p154
      $region26: #{model_forward.27} parent=11 // pred_check_branch
        %332 = sbr.rel (%p330) target = $region28
      $region27: #{model_forward.27} parent=11 // pred_region
        _
      $region28: #{model_forward.27} parent=11 // pred_fallthru
        _
      // Predicated region
      $region29: #{model_forward.27} parent=11 // pred_check
        %p333 = pneg %p175
      $region30: #{model_forward.27} parent=11 // pred_check_branch
        %335 = sbr.rel (%p333) target = $region32
      $region31: #{model_forward.27} parent=11 // pred_region
        _
      $region32: #{model_forward.27} parent=11 // pred_fallthru
        _
      // Predicated region
      $region33: #{model_forward.27} parent=11 // pred_check
        %p336 = pneg %p196
      $region34: #{model_forward.27} parent=11 // pred_check_branch
        %338 = sbr.rel (%p336) target = $region36
      $region35: #{model_forward.27} parent=11 // pred_region
        _
      $region36: #{model_forward.27} parent=11 // pred_fallthru
        _
      // Predicated region
      $region37: #{model_forward.27} parent=11 // pred_check
        %p339 = pneg %p217
      $region38: #{model_forward.27} parent=11 // pred_check_branch
        %341 = sbr.rel (%p339) target = $region40
      $region39: #{model_forward.27} parent=11 // pred_region
        _
      $region40: #{model_forward.27} parent=11 // pred_fallthru
        _
      // Predicated region
      $region41: #{model_forward.27} parent=11 // pred_check
        %p342 = pneg %p238
      $region42: #{model_forward.27} parent=11 // pred_check_branch
        %344 = sbr.rel (%p342) target = $region44
      $region43: #{model_forward.27} parent=11 // pred_region
        _
      $region44: #{model_forward.27} parent=11 // pred_fallthru
        _
      // Predicated region
      $region45: #{model_forward.27} parent=11 // pred_check
        %p345 = pneg %p259
      $region46: #{model_forward.27} parent=11 // pred_check_branch
        %347 = sbr.rel (%p345) target = $region48
      $region47: #{model_forward.27} parent=11 // pred_region
        _
      $region48: #{model_forward.27} parent=11 // pred_fallthru
        _
      // Predicated region
      $region49: #{model_forward.27} parent=11 // pred_check
        %p348 = pneg %p280
      $region50: #{model_forward.27} parent=11 // pred_check_branch
        %350 = sbr.rel (%p348) target = $region52
      $region51: #{model_forward.27} parent=11 // pred_region
        _
      $region52: #{model_forward.27} parent=11 // pred_fallthru
        _
    $region12: #{model_forward.27} parent=5 // pred_fallthru
      _
    %p351 = scmp.lt.s32.totalorder %s18, 2
    // Predicated region
    $region53: #{model_forward.27} parent=5 // pred_check
      %p352 = pneg %p351
    $region54: #{model_forward.27} parent=5 // pred_check_branch
      %354 = sbr.rel (%p352) target = $region56
    $region55: #{model_forward.27} parent=5 // pred_region
      // Predicated region
      $region57: #{model_forward.27} parent=55 // pred_check
        %p355 = pneg %p38
      $region58: #{model_forward.27} parent=55 // pred_check_branch
        %357 = sbr.rel (%p355) target = $region60
      $region59: #{model_forward.27} parent=55 // pred_region
        %p358 = scmp.lt.s32.totalorder %s18, 1
        %s359 = scalar_select %p358, %s18, 1
        %s360 = smul.addr %s359, 2
        %s361 = smul.addr %s360, 8
        %s362 = scalar_lea.vmem %s0, %s361
      $region60: #{model_forward.27} parent=55 // pred_fallthru
        _
      // Predicated region
      $region61: #{model_forward.27} parent=55 // pred_check
        %p363 = pneg %p64
      $region62: #{model_forward.27} parent=55 // pred_check_branch
        %365 = sbr.rel (%p363) target = $region64
      $region63: #{model_forward.27} parent=55 // pred_region
        %p366 = scmp.lt.s32.totalorder %s18, 1
        %s367 = scalar_select %p366, %s18, 1
        %s368 = smul.addr %s367, 2
        %s369 = smul.addr %s368, 8
        %s370 = scalar_lea.vmem %s1, %s369
      $region64: #{model_forward.27} parent=55 // pred_fallthru
        _
    $region56: #{model_forward.27} parent=5 // pred_fallthru
      _
    %p371 = scmp.le.s32.totalorder 1, %s18
    %p372 = scmp.lt.s32.totalorder %s18, 3
    %p373 = pnand %p371, %p372
    %p374 = pneg %p373
    // Predicated region
    $region65: #{model_forward.27} parent=5 // pred_check
      _
    $region66: #{model_forward.27} parent=5 // pred_check_branch
      %376 = sbr.rel (%p373) target = $region68
    $region67: #{model_forward.27} parent=5 // pred_region
      %s377 = ssub.s32 %s18, 1
      %p378 = scmp.lt.s32.totalorder %s23, 1
      %s379 = scalar_select %p378, %s23, 1
      %s380 = smul.addr %s379, 2
      %s381 = smul.addr %s380, 8
      %s382 = scalar_lea.vmem %s0, %s381
      %p383 = pneg %p44
      %p384 = pneg %p41
      %p385 = scmp.lt.s32.totalorder %s23, 1
      %s386 = scalar_select %p385, %s23, 1
      %s387 = smul.addr %s386, 2
      %s388 = smul.addr %s387, 8
      %s389 = scalar_lea.vmem %s1, %s388
      %p390 = pneg %p70
      %p391 = pneg %p67
      %p392 = pneg %p91
      %p393 = pneg %p88
      %p394 = pneg %p112
      %p395 = pneg %p109
      %p396 = pneg %p133
      %p397 = pneg %p130
      %p398 = pneg %p154
      %p399 = pneg %p151
      %p400 = pneg %p175
      %p401 = pneg %p172
      %p402 = pneg %p196
      %p403 = pneg %p193
      %p404 = pneg %p217
      %p405 = pneg %p214
      %p406 = pneg %p238
      %p407 = pneg %p235
      %p408 = pneg %p259
      %p409 = pneg %p256
      %p410 = pneg %p280
      %p411 = pneg %p277
      %p412 = pneg %p306
      %p413 = pneg %p303
      %p414 = scmp.lt.s32.totalorder %s23, 1
      %s415 = scalar_select %p414, %s23, 1
      %s416 = smul.addr %s415, 2
      %s417 = smul.addr %s416, 8
      %s418 = scalar_lea.vmem %s12, %s417
      %p419 = scmp.lt.s32.totalorder %s23, 1
      %s420 = scalar_select %p419, %s23, 1
      %s421 = smul.addr %s420, 2
      %s422 = smul.addr %s421, 8
      %s423 = scalar_lea.vmem %s0, %s422
      %p424 = scmp.lt.s32.totalorder %s23, 1
      %s425 = scalar_select %p424, %s23, 1
      %s426 = smul.addr %s425, 2
      %s427 = smul.addr %s426, 8
      %s428 = scalar_lea.vmem %s1, %s427
      %p429 = scmp.lt.s32.totalorder %s23, 1
      %s430 = scalar_select %p429, %s23, 1
      %s431 = smul.addr %s430, 2
      %s432 = smul.addr %s431, 8
      %s433 = scalar_lea.vmem %s12, %s432
      %v435 = vld [vmem:[%s423] sm:$0xff]
      %v436 = vld [vmem:[%s423 + $0x8] sm:$0xff]
      %v437 = vld [vmem:[%s428] sm:$0xff]
      %v438 = vld [vmem:[%s428 + $0x8] sm:$0xff]
      %v439 = vpack.c.bf16 %v436, %v435
      %v440 = vpack.c.bf16 %v438, %v437
      %v441 = vld [vmem:[%s2] sm:$0xf]
      %v442 = vld [vmem:[%s2 + $0x4] sm:$0xf]
      %v443 = vld [vmem:[%s2 + $0x8] sm:$0xf]
      %v444 = vld [vmem:[%s2 + $0xc] sm:$0xf]
      %v445 = vld [vmem:[%s2 + $0x10] sm:$0xf]
      %v446 = vld [vmem:[%s2 + $0x14] sm:$0xf]
      %v447 = vld [vmem:[%s2 + $0x18] sm:$0xf]
      %v448 = vld [vmem:[%s2 + $0x1c] sm:$0xf]
      %v449 = vld [vmem:[%s2 + $0x20] sm:$0xf]
      %v450 = vld [vmem:[%s2 + $0x24] sm:$0xf]
      %v451 = vld [vmem:[%s2 + $0x28] sm:$0xf]
      %v452 = vld [vmem:[%s2 + $0x2c] sm:$0xf]
      %v453 = vld [vmem:[%s2 + $0x30] sm:$0xf]
      %v454 = vld [vmem:[%s2 + $0x34] sm:$0xf]
      %v455 = vld [vmem:[%s2 + $0x38] sm:$0xf]
      %v456 = vld [vmem:[%s2 + $0x3c] sm:$0xf]
      %v457 = vld [vmem:[%s3] sm:$0x1]
      %v459 = vlaneseq
      %v460 = vshrl.u32 %v459, 7
      %v461 = vsub.s32 0, %v460
      %v462 = vrot.slane %v457, %v461
      %v480 = vunpack.c.l.b16 %v441
      %v481 = vunpack.c.l.b16 %v442
      %v482 = vunpack.c.l.b16 %v443
      %v483 = vunpack.c.l.b16 %v444
      %v484 = vunpack.c.l.b16 %v445
      %v485 = vunpack.c.l.b16 %v446
      %v486 = vunpack.c.l.b16 %v447
      %v487 = vunpack.c.l.b16 %v448
      %v488 = vunpack.c.l.b16 %v449
      %v489 = vunpack.c.l.b16 %v450
      %v490 = vunpack.c.l.b16 %v451
      %v491 = vunpack.c.l.b16 %v452
      %v492 = vunpack.c.l.b16 %v453
      %v493 = vunpack.c.l.b16 %v454
      %v494 = vunpack.c.l.b16 %v455
      %v495 = vunpack.c.l.b16 %v456
      %v496 = vpack.c.b16 %v481, %v480
      %v497 = vpack.c.b16 %v483, %v482
      %v498 = vpack.c.b16 %v485, %v484
      %v499 = vpack.c.b16 %v487, %v486
      %v500 = vpack.c.b16 %v489, %v488
      %v501 = vpack.c.b16 %v491, %v490
      %v502 = vpack.c.b16 %v493, %v492
      %v503 = vpack.c.b16 %v495, %v494
      %512 = vmatprep.subr.bf16.mxu0 0
      %513 = vmatpush1.bf16.msra.mxu0 %v503
      %514 = vmatprep.subr.bf16.mxu0 0
      %515 = vmatpush1.bf16.msra.mxu0 %v502
      %516 = vmatprep.subr.bf16.mxu0 0
      %517 = vmatpush1.bf16.msra.mxu0 %v501
      %518 = vmatprep.subr.bf16.mxu0 0
      %519 = vmatpush1.bf16.msra.mxu0 %v500
      %520 = vmatprep.subr.bf16.mxu0 0
      %521 = vmatpush1.bf16.msra.mxu0 %v499
      %522 = vmatprep.subr.bf16.mxu0 0
      %523 = vmatpush1.bf16.msra.mxu0 %v498
      %524 = vmatprep.subr.bf16.mxu0 0
      %525 = vmatpush1.bf16.msra.mxu0 %v497
      %526 = vmatprep.subr.bf16.mxu0 0
      %527 = vmatpush1.bf16.msra.mxu0 %v496
      %528 = vmatprep.subr.bf16.mxu0 0
      %529 = vmatpush2.bf16.msra.mxu0 0
      %530 = vmatprep.subr.bf16.mxu0 0
      %531 = vmatpush2.bf16.msra.mxu0 0
      %532 = vmatprep.subr.bf16.mxu0 0
      %533 = vmatpush2.bf16.msra.mxu0 0
      %534 = vmatprep.subr.bf16.mxu0 0
      %535 = vmatpush2.bf16.msra.mxu0 0
      %536 = vmatprep.subr.bf16.mxu0 0
      %537 = vmatpush2.bf16.msra.mxu0 0
      %538 = vmatprep.subr.bf16.mxu0 0
      %539 = vmatpush2.bf16.msra.mxu0 0
      %540 = vmatprep.subr.bf16.mxu0 0
      %541 = vmatpush2.bf16.msra.mxu0 0
      %542 = vmatprep.subr.bf16.mxu0 0
      %543 = vmatpush2.bf16.msra.mxu0 0
      %544 = vmatprep.mubr.bf16.mxu0 0
      %545 = vmatmul.mubr.bf16.gmra.mxu0 %v439
      %v546 = vpop.f32.mrf.mxu0
      %v547 = vadd.f32 %v462, %v546
      %v548 = vpop.f32.mrf.mxu0
      %v549 = vpop.f32.mrf.mxu0
      %v550 = vadd.f32 %v462, %v549
      %v551 = vpop.f32.mrf.mxu0
      %552 = vdwg.mxu0
      %v553 = vld [vmem:[%s4] sm:$0xf]
      %v554 = vld [vmem:[%s4 + $0x4] sm:$0xf]
      %v555 = vld [vmem:[%s4 + $0x8] sm:$0xf]
      %v556 = vld [vmem:[%s4 + $0xc] sm:$0xf]
      %v557 = vld [vmem:[%s4 + $0x10] sm:$0xf]
      %v558 = vld [vmem:[%s4 + $0x14] sm:$0xf]
      %v559 = vld [vmem:[%s4 + $0x18] sm:$0xf]
      %v560 = vld [vmem:[%s4 + $0x1c] sm:$0xf]
      %v561 = vld [vmem:[%s4 + $0x20] sm:$0xf]
      %v562 = vld [vmem:[%s4 + $0x24] sm:$0xf]
      %v563 = vld [vmem:[%s4 + $0x28] sm:$0xf]
      %v564 = vld [vmem:[%s4 + $0x2c] sm:$0xf]
      %v565 = vld [vmem:[%s4 + $0x30] sm:$0xf]
      %v566 = vld [vmem:[%s4 + $0x34] sm:$0xf]
      %v567 = vld [vmem:[%s4 + $0x38] sm:$0xf]
      %v568 = vld [vmem:[%s4 + $0x3c] sm:$0xf]
      %v569 = vld [vmem:[%s5] sm:$0x1]
      %v571 = vlaneseq
      %v572 = vshrl.u32 %v571, 7
      %v573 = vsub.s32 0, %v572
      %v574 = vrot.slane %v569, %v573
      %v592 = vunpack.c.l.b16 %v553
      %v593 = vunpack.c.l.b16 %v554
      %v594 = vunpack.c.l.b16 %v555
      %v595 = vunpack.c.l.b16 %v556
      %v596 = vunpack.c.l.b16 %v557
      %v597 = vunpack.c.l.b16 %v558
      %v598 = vunpack.c.l.b16 %v559
      %v599 = vunpack.c.l.b16 %v560
      %v600 = vunpack.c.l.b16 %v561
      %v601 = vunpack.c.l.b16 %v562
      %v602 = vunpack.c.l.b16 %v563
      %v603 = vunpack.c.l.b16 %v564
      %v604 = vunpack.c.l.b16 %v565
      %v605 = vunpack.c.l.b16 %v566
      %v606 = vunpack.c.l.b16 %v567
      %v607 = vunpack.c.l.b16 %v568
      %v608 = vpack.c.b16 %v593, %v592
      %v609 = vpack.c.b16 %v595, %v594
      %v610 = vpack.c.b16 %v597, %v596
      %v611 = vpack.c.b16 %v599, %v598
      %v612 = vpack.c.b16 %v601, %v600
      %v613 = vpack.c.b16 %v603, %v602
      %v614 = vpack.c.b16 %v605, %v604
      %v615 = vpack.c.b16 %v607, %v606
      %624 = vmatprep.subr.bf16.mxu0 0
      %625 = vmatpush1.bf16.msra.mxu0 %v615
      %626 = vmatprep.subr.bf16.mxu0 0
      %627 = vmatpush1.bf16.msra.mxu0 %v614
      %628 = vmatprep.subr.bf16.mxu0 0
      %629 = vmatpush1.bf16.msra.mxu0 %v613
      %630 = vmatprep.subr.bf16.mxu0 0
      %631 = vmatpush1.bf16.msra.mxu0 %v612
      %632 = vmatprep.subr.bf16.mxu0 0
      %633 = vmatpush1.bf16.msra.mxu0 %v611
      %634 = vmatprep.subr.bf16.mxu0 0
      %635 = vmatpush1.bf16.msra.mxu0 %v610
      %636 = vmatprep.subr.bf16.mxu0 0
      %637 = vmatpush1.bf16.msra.mxu0 %v609
      %638 = vmatprep.subr.bf16.mxu0 0
      %639 = vmatpush1.bf16.msra.mxu0 %v608
      %640 = vmatprep.subr.bf16.mxu0 0
      %641 = vmatpush2.bf16.msra.mxu0 0
      %642 = vmatprep.subr.bf16.mxu0 0
      %643 = vmatpush2.bf16.msra.mxu0 0
      %644 = vmatprep.subr.bf16.mxu0 0
      %645 = vmatpush2.bf16.msra.mxu0 0
      %646 = vmatprep.subr.bf16.mxu0 0
      %647 = vmatpush2.bf16.msra.mxu0 0
      %648 = vmatprep.subr.bf16.mxu0 0
      %649 = vmatpush2.bf16.msra.mxu0 0
      %650 = vmatprep.subr.bf16.mxu0 0
      %651 = vmatpush2.bf16.msra.mxu0 0
      %652 = vmatprep.subr.bf16.mxu0 0
      %653 = vmatpush2.bf16.msra.mxu0 0
      %654 = vmatprep.subr.bf16.mxu0 0
      %655 = vmatpush2.bf16.msra.mxu0 0
      %656 = vmatprep.mubr.bf16.mxu0 0
      %657 = vmatmul.mubr.bf16.gmra.mxu0 %v440
      %v658 = vpop.f32.mrf.mxu0
      %v659 = vadd.f32 %v574, %v658
      %v660 = vpop.f32.mrf.mxu0
      %v661 = vpop.f32.mrf.mxu0
      %v662 = vadd.f32 %v574, %v661
      %v663 = vpop.f32.mrf.mxu0
      %664 = vdwg.mxu0
      %v665 = vld [vmem:[%s6] sm:$0xf]
      %v666 = vld [vmem:[%s6 + $0x4] sm:$0xf]
      %v667 = vld [vmem:[%s6 + $0x8] sm:$0xf]
      %v668 = vld [vmem:[%s6 + $0xc] sm:$0xf]
      %v669 = vld [vmem:[%s6 + $0x10] sm:$0xf]
      %v670 = vld [vmem:[%s6 + $0x14] sm:$0xf]
      %v671 = vld [vmem:[%s6 + $0x18] sm:$0xf]
      %v672 = vld [vmem:[%s6 + $0x1c] sm:$0xf]
      %v673 = vld [vmem:[%s6 + $0x20] sm:$0xf]
      %v674 = vld [vmem:[%s6 + $0x24] sm:$0xf]
      %v675 = vld [vmem:[%s6 + $0x28] sm:$0xf]
      %v676 = vld [vmem:[%s6 + $0x2c] sm:$0xf]
      %v677 = vld [vmem:[%s6 + $0x30] sm:$0xf]
      %v678 = vld [vmem:[%s6 + $0x34] sm:$0xf]
      %v679 = vld [vmem:[%s6 + $0x38] sm:$0xf]
      %v680 = vld [vmem:[%s6 + $0x3c] sm:$0xf]
      %v681 = vld [vmem:[%s7] sm:$0x1]
      %v683 = vlaneseq
      %v684 = vshrl.u32 %v683, 7
      %v685 = vsub.s32 0, %v684
      %v686 = vrot.slane %v681, %v685
      %v704 = vunpack.c.l.b16 %v665
      %v705 = vunpack.c.l.b16 %v666
      %v706 = vunpack.c.l.b16 %v667
      %v707 = vunpack.c.l.b16 %v668
      %v708 = vunpack.c.l.b16 %v669
      %v709 = vunpack.c.l.b16 %v670
      %v710 = vunpack.c.l.b16 %v671
      %v711 = vunpack.c.l.b16 %v672
      %v712 = vunpack.c.l.b16 %v673
      %v713 = vunpack.c.l.b16 %v674
      %v714 = vunpack.c.l.b16 %v675
      %v715 = vunpack.c.l.b16 %v676
      %v716 = vunpack.c.l.b16 %v677
      %v717 = vunpack.c.l.b16 %v678
      %v718 = vunpack.c.l.b16 %v679
      %v719 = vunpack.c.l.b16 %v680
      %v720 = vpack.c.b16 %v705, %v704
      %v721 = vpack.c.b16 %v707, %v706
      %v722 = vpack.c.b16 %v709, %v708
      %v723 = vpack.c.b16 %v711, %v710
      %v724 = vpack.c.b16 %v713, %v712
      %v725 = vpack.c.b16 %v715, %v714
      %v726 = vpack.c.b16 %v717, %v716
      %v727 = vpack.c.b16 %v719, %v718
      %736 = vmatprep.subr.bf16.mxu0 0
      %737 = vmatpush1.bf16.msra.mxu0 %v727
      %738 = vmatprep.subr.bf16.mxu0 0
      %739 = vmatpush1.bf16.msra.mxu0 %v726
      %740 = vmatprep.subr.bf16.mxu0 0
      %741 = vmatpush1.bf16.msra.mxu0 %v725
      %742 = vmatprep.subr.bf16.mxu0 0
      %743 = vmatpush1.bf16.msra.mxu0 %v724
      %744 = vmatprep.subr.bf16.mxu0 0
      %745 = vmatpush1.bf16.msra.mxu0 %v723
      %746 = vmatprep.subr.bf16.mxu0 0
      %747 = vmatpush1.bf16.msra.mxu0 %v722
      %748 = vmatprep.subr.bf16.mxu0 0
      %749 = vmatpush1.bf16.msra.mxu0 %v721
      %750 = vmatprep.subr.bf16.mxu0 0
      %751 = vmatpush1.bf16.msra.mxu0 %v720
      %752 = vmatprep.subr.bf16.mxu0 0
      %753 = vmatpush2.bf16.msra.mxu0 0
      %754 = vmatprep.subr.bf16.mxu0 0
      %755 = vmatpush2.bf16.msra.mxu0 0
      %756 = vmatprep.subr.bf16.mxu0 0
      %757 = vmatpush2.bf16.msra.mxu0 0
      %758 = vmatprep.subr.bf16.mxu0 0
      %759 = vmatpush2.bf16.msra.mxu0 0
      %760 = vmatprep.subr.bf16.mxu0 0
      %761 = vmatpush2.bf16.msra.mxu0 0
      %762 = vmatprep.subr.bf16.mxu0 0
      %763 = vmatpush2.bf16.msra.mxu0 0
      %764 = vmatprep.subr.bf16.mxu0 0
      %765 = vmatpush2.bf16.msra.mxu0 0
      %766 = vmatprep.subr.bf16.mxu0 0
      %767 = vmatpush2.bf16.msra.mxu0 0
      %768 = vmatprep.mubr.bf16.mxu0 0
      %769 = vmatmul.mubr.bf16.gmra.mxu0 %v440
      %v770 = vpop.f32.mrf.mxu0
      %v771 = vadd.f32 %v686, %v770
      %v772 = vpop.f32.mrf.mxu0
      %v773 = vpop.f32.mrf.mxu0
      %v774 = vadd.f32 %v686, %v773
      %v775 = vpop.f32.mrf.mxu0
      %776 = vdwg.mxu0
      %v777 = vpack.c.bf16 %v550, %v547
      %v778 = vpack.c.bf16 %v662, %v659
      %vm779 = vcmask 130048
      %v781 = vsel %vm779, %v777, 0
      %v784 = vsel %vm779, %v778, 0
      %786 = vmatprep.subr.bf16.mxu0 0
      %787 = vmatpush1.bf16.xpose.msra.mxu0 0
      %788 = vmatprep.subr.bf16.mxu0 0
      %789 = vmatpush1.bf16.xpose.msra.mxu0 0
      %790 = vmatprep.subr.bf16.mxu0 0
      %791 = vmatpush1.bf16.xpose.msra.mxu0 0
      %792 = vmatprep.subr.bf16.mxu0 0
      %793 = vmatpush1.bf16.xpose.msra.mxu0 0
      %794 = vmatprep.subr.bf16.mxu0 0
      %795 = vmatpush1.bf16.xpose.msra.mxu0 0
      %796 = vmatprep.subr.bf16.mxu0 0
      %797 = vmatpush1.bf16.xpose.msra.mxu0 0
      %798 = vmatprep.subr.bf16.mxu0 0
      %799 = vmatpush1.bf16.xpose.msra.mxu0 0
      %800 = vmatprep.subr.bf16.mxu0 0
      %801 = vmatpush1.bf16.xpose.msra.mxu0 %v784
      %802 = vmatprep.subr.bf16.mxu0 0
      %803 = vmatpush2.bf16.xpose.msra.mxu0 0
      %804 = vmatprep.subr.bf16.mxu0 0
      %805 = vmatpush2.bf16.xpose.msra.mxu0 0
      %806 = vmatprep.subr.bf16.mxu0 0
      %807 = vmatpush2.bf16.xpose.msra.mxu0 0
      %808 = vmatprep.subr.bf16.mxu0 0
      %809 = vmatpush2.bf16.xpose.msra.mxu0 0
      %810 = vmatprep.subr.bf16.mxu0 0
      %811 = vmatpush2.bf16.xpose.msra.mxu0 0
      %812 = vmatprep.subr.bf16.mxu0 0
      %813 = vmatpush2.bf16.xpose.msra.mxu0 0
      %814 = vmatprep.subr.bf16.mxu0 0
      %815 = vmatpush2.bf16.xpose.msra.mxu0 0
      %816 = vmatprep.subr.bf16.mxu0 0
      %817 = vmatpush2.bf16.xpose.msra.mxu0 0
      %818 = vmatprep.mubr.bf16.mxu0 0
      %819 = vmatmul.mubr.bf16.gmra.mxu0 %v781
      %v820 = vpop.f32.mrf.mxu0
      %v821 = vadd.f32 0.0, %v820
      %v822 = vpop.f32.mrf.mxu0
      %v823 = vpop.f32.mrf.mxu0
      %v824 = vadd.f32 0.0, %v823
      %v825 = vpop.f32.mrf.mxu0
      %826 = vdwg.mxu0
      %v827 = vmul.f32 %v821, 0.25
      %v828 = vmul.f32 %v824, 0.25
      %v829 = vsel %vm779, %v827, -inf
      %830 = vmax.xlane.f32.xlu0 %v829
      %v831 = vpop.xlane.xlu0 %830
      %v832 = vsel %vm779, %v828, -inf
      %833 = vmax.xlane.f32.xlu0 %v832
      %v834 = vpop.xlane.xlu0 %833
      %v835 = vsub.f32 %v827, %v831
      %v836 = vsub.f32 %v828, %v834
      %v837 = vmul.f32 %v835, 1.442695
      %v838 = vpow.pop %v837
      %v839 = vmul.f32 %v836, 1.442695
      %v840 = vpow.pop %v839
      %v841 = vsel %vm779, %v838, 0.0
      %842 = vadd.xlane.f32.xlu0 %v841
      %v843 = vpop.xlane.xlu0 %842
      %v844 = vsel %vm779, %v840, 0.0
      %845 = vadd.xlane.f32.xlu0 %v844
      %v846 = vpop.xlane.xlu0 %845
      %v847 = vrcp.pop %v843
      %v848 = vmul.f32 %v838, %v847
      %v849 = vrcp.pop %v846
      %v850 = vmul.f32 %v840, %v849
      %v851 = vpack.c.bf16 %v850, %v848
      %v852 = vpack.c.bf16 %v774, %v771
      %v854 = vsel %vm779, %v851, 0
      %856 = vmatprep.subr.bf16.mxu0 0
      %857 = vmatpush1.bf16.msra.mxu0 0
      %858 = vmatprep.subr.bf16.mxu0 0
      %859 = vmatpush1.bf16.msra.mxu0 0
      %860 = vmatprep.subr.bf16.mxu0 0
      %861 = vmatpush1.bf16.msra.mxu0 0
      %862 = vmatprep.subr.bf16.mxu0 0
      %863 = vmatpush1.bf16.msra.mxu0 0
      %864 = vmatprep.subr.bf16.mxu0 0
      %865 = vmatpush1.bf16.msra.mxu0 0
      %866 = vmatprep.subr.bf16.mxu0 0
      %867 = vmatpush1.bf16.msra.mxu0 0
      %868 = vmatprep.subr.bf16.mxu0 0
      %869 = vmatpush1.bf16.msra.mxu0 0
      %870 = vmatprep.subr.bf16.mxu0 0
      %871 = vmatpush1.bf16.msra.mxu0 %v852
      %872 = vmatprep.subr.bf16.mxu0 0
      %873 = vmatpush2.bf16.msra.mxu0 0
      %874 = vmatprep.subr.bf16.mxu0 0
      %875 = vmatpush2.bf16.msra.mxu0 0
      %876 = vmatprep.subr.bf16.mxu0 0
      %877 = vmatpush2.bf16.msra.mxu0 0
      %878 = vmatprep.subr.bf16.mxu0 0
      %879 = vmatpush2.bf16.msra.mxu0 0
      %880 = vmatprep.subr.bf16.mxu0 0
      %881 = vmatpush2.bf16.msra.mxu0 0
      %882 = vmatprep.subr.bf16.mxu0 0
      %883 = vmatpush2.bf16.msra.mxu0 0
      %884 = vmatprep.subr.bf16.mxu0 0
      %885 = vmatpush2.bf16.msra.mxu0 0
      %886 = vmatprep.subr.bf16.mxu0 0
      %887 = vmatpush2.bf16.msra.mxu0 0
      %888 = vmatprep.mubr.bf16.mxu0 0
      %889 = vmatmul.mubr.bf16.gmra.mxu0 %v854
      %v890 = vpop.f32.mrf.mxu0
      %v891 = vadd.f32 0.0, %v890
      %v892 = vpop.f32.mrf.mxu0
      %v893 = vpop.f32.mrf.mxu0
      %v894 = vadd.f32 0.0, %v893
      %v895 = vpop.f32.mrf.mxu0
      %896 = vdwg.mxu0
      %v897 = vpack.c.bf16 %v894, %v891
      %v898 = vld [vmem:[%s8] sm:$0xf]
      %v899 = vld [vmem:[%s8 + $0x4] sm:$0xf]
      %s900 = scalar_lea.vmem %s2, 64
      %v901 = vld [vmem:[%s900] sm:$0xf]
      %v902 = vld [vmem:[%s900 + $0x4] sm:$0xf]
      %v903 = vld [vmem:[%s900 + $0x8] sm:$0xf]
      %v904 = vld [vmem:[%s900 + $0xc] sm:$0xf]
      %v905 = vld [vmem:[%s900 + $0x10] sm:$0xf]
      %v906 = vld [vmem:[%s900 + $0x14] sm:$0xf]
      %v907 = vld [vmem:[%s900 + $0x18] sm:$0xf]
      %v908 = vld [vmem:[%s900 + $0x1c] sm:$0xf]
      %v909 = vld [vmem:[%s900 + $0x20] sm:$0xf]
      %v910 = vld [vmem:[%s900 + $0x24] sm:$0xf]
      %v911 = vld [vmem:[%s900 + $0x28] sm:$0xf]
      %v912 = vld [vmem:[%s900 + $0x2c] sm:$0xf]
      %v913 = vld [vmem:[%s900 + $0x30] sm:$0xf]
      %v914 = vld [vmem:[%s900 + $0x34] sm:$0xf]
      %v915 = vld [vmem:[%s900 + $0x38] sm:$0xf]
      %v916 = vld [vmem:[%s900 + $0x3c] sm:$0xf]
      %s917 = scalar_lea.vmem %s3, 1
      %v918 = vld [vmem:[%s917] sm:$0x1]
      %v920 = vlaneseq
      %v921 = vshrl.u32 %v920, 7
      %v922 = vsub.s32 0, %v921
      %v923 = vrot.slane %v918, %v922
      %v941 = vunpack.c.l.b16 %v901
      %v942 = vunpack.c.l.b16 %v902
      %v943 = vunpack.c.l.b16 %v903
      %v944 = vunpack.c.l.b16 %v904
      %v945 = vunpack.c.l.b16 %v905
      %v946 = vunpack.c.l.b16 %v906
      %v947 = vunpack.c.l.b16 %v907
      %v948 = vunpack.c.l.b16 %v908
      %v949 = vunpack.c.l.b16 %v909
      %v950 = vunpack.c.l.b16 %v910
      %v951 = vunpack.c.l.b16 %v911
      %v952 = vunpack.c.l.b16 %v912
      %v953 = vunpack.c.l.b16 %v913
      %v954 = vunpack.c.l.b16 %v914
      %v955 = vunpack.c.l.b16 %v915
      %v956 = vunpack.c.l.b16 %v916
      %v957 = vpack.c.b16 %v942, %v941
      %v958 = vpack.c.b16 %v944, %v943
      %v959 = vpack.c.b16 %v946, %v945
      %v960 = vpack.c.b16 %v948, %v947
      %v961 = vpack.c.b16 %v950, %v949
      %v962 = vpack.c.b16 %v952, %v951
      %v963 = vpack.c.b16 %v954, %v953
      %v964 = vpack.c.b16 %v956, %v955
      %973 = vmatprep.subr.bf16.mxu0 0
      %974 = vmatpush1.bf16.msra.mxu0 %v964
      %975 = vmatprep.subr.bf16.mxu0 0
      %976 = vmatpush1.bf16.msra.mxu0 %v963
      %977 = vmatprep.subr.bf16.mxu0 0
      %978 = vmatpush1.bf16.msra.mxu0 %v962
      %979 = vmatprep.subr.bf16.mxu0 0
      %980 = vmatpush1.bf16.msra.mxu0 %v961
      %981 = vmatprep.subr.bf16.mxu0 0
      %982 = vmatpush1.bf16.msra.mxu0 %v960
      %983 = vmatprep.subr.bf16.mxu0 0
      %984 = vmatpush1.bf16.msra.mxu0 %v959
      %985 = vmatprep.subr.bf16.mxu0 0
      %986 = vmatpush1.bf16.msra.mxu0 %v958
      %987 = vmatprep.subr.bf16.mxu0 0
      %988 = vmatpush1.bf16.msra.mxu0 %v957
      %989 = vmatprep.subr.bf16.mxu0 0
      %990 = vmatpush2.bf16.msra.mxu0 0
      %991 = vmatprep.subr.bf16.mxu0 0
      %992 = vmatpush2.bf16.msra.mxu0 0
      %993 = vmatprep.subr.bf16.mxu0 0
      %994 = vmatpush2.bf16.msra.mxu0 0
      %995 = vmatprep.subr.bf16.mxu0 0
      %996 = vmatpush2.bf16.msra.mxu0 0
      %997 = vmatprep.subr.bf16.mxu0 0
      %998 = vmatpush2.bf16.msra.mxu0 0
      %999 = vmatprep.subr.bf16.mxu0 0
      %1000 = vmatpush2.bf16.msra.mxu0 0
      %1001 = vmatprep.subr.bf16.mxu0 0
      %1002 = vmatpush2.bf16.msra.mxu0 0
      %1003 = vmatprep.subr.bf16.mxu0 0
      %1004 = vmatpush2.bf16.msra.mxu0 0
      %1005 = vmatprep.mubr.bf16.mxu0 0
      %1006 = vmatmul.mubr.bf16.gmra.mxu0 %v439
      %v1007 = vpop.f32.mrf.mxu0
      %v1008 = vadd.f32 %v923, %v1007
      %v1009 = vpop.f32.mrf.mxu0
      %v1010 = vpop.f32.mrf.mxu0
      %v1011 = vadd.f32 %v923, %v1010
      %v1012 = vpop.f32.mrf.mxu0
      %1013 = vdwg.mxu0
      %s1014 = scalar_lea.vmem %s4, 64
      %v1015 = vld [vmem:[%s1014] sm:$0xf]
      %v1016 = vld [vmem:[%s1014 + $0x4] sm:$0xf]
      %v1017 = vld [vmem:[%s1014 + $0x8] sm:$0xf]
      %v1018 = vld [vmem:[%s1014 + $0xc] sm:$0xf]
      %v1019 = vld [vmem:[%s1014 + $0x10] sm:$0xf]
      %v1020 = vld [vmem:[%s1014 + $0x14] sm:$0xf]
      %v1021 = vld [vmem:[%s1014 + $0x18] sm:$0xf]
      %v1022 = vld [vmem:[%s1014 + $0x1c] sm:$0xf]
      %v1023 = vld [vmem:[%s1014 + $0x20] sm:$0xf]
      %v1024 = vld [vmem:[%s1014 + $0x24] sm:$0xf]
      %v1025 = vld [vmem:[%s1014 + $0x28] sm:$0xf]
      %v1026 = vld [vmem:[%s1014 + $0x2c] sm:$0xf]
      %v1027 = vld [vmem:[%s1014 + $0x30] sm:$0xf]
      %v1028 = vld [vmem:[%s1014 + $0x34] sm:$0xf]
      %v1029 = vld [vmem:[%s1014 + $0x38] sm:$0xf]
      %v1030 = vld [vmem:[%s1014 + $0x3c] sm:$0xf]
      %s1031 = scalar_lea.vmem %s5, 1
      %v1032 = vld [vmem:[%s1031] sm:$0x1]
      %v1034 = vlaneseq
      %v1035 = vshrl.u32 %v1034, 7
      %v1036 = vsub.s32 0, %v1035
      %v1037 = vrot.slane %v1032, %v1036
      %v1055 = vunpack.c.l.b16 %v1015
      %v1056 = vunpack.c.l.b16 %v1016
      %v1057 = vunpack.c.l.b16 %v1017
      %v1058 = vunpack.c.l.b16 %v1018
      %v1059 = vunpack.c.l.b16 %v1019
      %v1060 = vunpack.c.l.b16 %v1020
      %v1061 = vunpack.c.l.b16 %v1021
      %v1062 = vunpack.c.l.b16 %v1022
      %v1063 = vunpack.c.l.b16 %v1023
      %v1064 = vunpack.c.l.b16 %v1024
      %v1065 = vunpack.c.l.b16 %v1025
      %v1066 = vunpack.c.l.b16 %v1026
      %v1067 = vunpack.c.l.b16 %v1027
      %v1068 = vunpack.c.l.b16 %v1028
      %v1069 = vunpack.c.l.b16 %v1029
      %v1070 = vunpack.c.l.b16 %v1030
      %v1071 = vpack.c.b16 %v1056, %v1055
      %v1072 = vpack.c.b16 %v1058, %v1057
      %v1073 = vpack.c.b16 %v1060, %v1059
      %v1074 = vpack.c.b16 %v1062, %v1061
      %v1075 = vpack.c.b16 %v1064, %v1063
      %v1076 = vpack.c.b16 %v1066, %v1065
      %v1077 = vpack.c.b16 %v1068, %v1067
      %v1078 = vpack.c.b16 %v1070, %v1069
      %1087 = vmatprep.subr.bf16.mxu0 0
      %1088 = vmatpush1.bf16.msra.mxu0 %v1078
      %1089 = vmatprep.subr.bf16.mxu0 0
      %1090 = vmatpush1.bf16.msra.mxu0 %v1077
      %1091 = vmatprep.subr.bf16.mxu0 0
      %1092 = vmatpush1.bf16.msra.mxu0 %v1076
      %1093 = vmatprep.subr.bf16.mxu0 0
      %1094 = vmatpush1.bf16.msra.mxu0 %v1075
      %1095 = vmatprep.subr.bf16.mxu0 0
      %1096 = vmatpush1.bf16.msra.mxu0 %v1074
      %1097 = vmatprep.subr.bf16.mxu0 0
      %1098 = vmatpush1.bf16.msra.mxu0 %v1073
      %1099 = vmatprep.subr.bf16.mxu0 0
      %1100 = vmatpush1.bf16.msra.mxu0 %v1072
      %1101 = vmatprep.subr.bf16.mxu0 0
      %1102 = vmatpush1.bf16.msra.mxu0 %v1071
      %1103 = vmatprep.subr.bf16.mxu0 0
      %1104 = vmatpush2.bf16.msra.mxu0 0
      %1105 = vmatprep.subr.bf16.mxu0 0
      %1106 = vmatpush2.bf16.msra.mxu0 0
      %1107 = vmatprep.subr.bf16.mxu0 0
      %1108 = vmatpush2.bf16.msra.mxu0 0
      %1109 = vmatprep.subr.bf16.mxu0 0
      %1110 = vmatpush2.bf16.msra.mxu0 0
      %1111 = vmatprep.subr.bf16.mxu0 0
      %1112 = vmatpush2.bf16.msra.mxu0 0
      %1113 = vmatprep.subr.bf16.mxu0 0
      %1114 = vmatpush2.bf16.msra.mxu0 0
      %1115 = vmatprep.subr.bf16.mxu0 0
      %1116 = vmatpush2.bf16.msra.mxu0 0
      %1117 = vmatprep.subr.bf16.mxu0 0
      %1118 = vmatpush2.bf16.msra.mxu0 0
      %1119 = vmatprep.mubr.bf16.mxu0 0
      %1120 = vmatmul.mubr.bf16.gmra.mxu0 %v440
      %v1121 = vpop.f32.mrf.mxu0
      %v1122 = vadd.f32 %v1037, %v1121
      %v1123 = vpop.f32.mrf.mxu0
      %v1124 = vpop.f32.mrf.mxu0
      %v1125 = vadd.f32 %v1037, %v1124
      %v1126 = vpop.f32.mrf.mxu0
      %1127 = vdwg.mxu0
      %s1128 = scalar_lea.vmem %s6, 64
      %v1129 = vld [vmem:[%s1128] sm:$0xf]
      %v1130 = vld [vmem:[%s1128 + $0x4] sm:$0xf]
      %v1131 = vld [vmem:[%s1128 + $0x8] sm:$0xf]
      %v1132 = vld [vmem:[%s1128 + $0xc] sm:$0xf]
      %v1133 = vld [vmem:[%s1128 + $0x10] sm:$0xf]
      %v1134 = vld [vmem:[%s1128 + $0x14] sm:$0xf]
      %v1135 = vld [vmem:[%s1128 + $0x18] sm:$0xf]
      %v1136 = vld [vmem:[%s1128 + $0x1c] sm:$0xf]
      %v1137 = vld [vmem:[%s1128 + $0x20] sm:$0xf]
      %v1138 = vld [vmem:[%s1128 + $0x24] sm:$0xf]
      %v1139 = vld [vmem:[%s1128 + $0x28] sm:$0xf]
      %v1140 = vld [vmem:[%s1128 + $0x2c] sm:$0xf]
      %v1141 = vld [vmem:[%s1128 + $0x30] sm:$0xf]
      %v1142 = vld [vmem:[%s1128 + $0x34] sm:$0xf]
      %v1143 = vld [vmem:[%s1128 + $0x38] sm:$0xf]
      %v1144 = vld [vmem:[%s1128 + $0x3c] sm:$0xf]
      %s1145 = scalar_lea.vmem %s7, 1
      %v1146 = vld [vmem:[%s1145] sm:$0x1]
      %v1148 = vlaneseq
      %v1149 = vshrl.u32 %v1148, 7
      %v1150 = vsub.s32 0, %v1149
      %v1151 = vrot.slane %v1146, %v1150
      %v1169 = vunpack.c.l.b16 %v1129
      %v1170 = vunpack.c.l.b16 %v1130
      %v1171 = vunpack.c.l.b16 %v1131
      %v1172 = vunpack.c.l.b16 %v1132
      %v1173 = vunpack.c.l.b16 %v1133
      %v1174 = vunpack.c.l.b16 %v1134
      %v1175 = vunpack.c.l.b16 %v1135
      %v1176 = vunpack.c.l.b16 %v1136
      %v1177 = vunpack.c.l.b16 %v1137
      %v1178 = vunpack.c.l.b16 %v1138
      %v1179 = vunpack.c.l.b16 %v1139
      %v1180 = vunpack.c.l.b16 %v1140
      %v1181 = vunpack.c.l.b16 %v1141
      %v1182 = vunpack.c.l.b16 %v1142
      %v1183 = vunpack.c.l.b16 %v1143
      %v1184 = vunpack.c.l.b16 %v1144
      %v1185 = vpack.c.b16 %v1170, %v1169
      %v1186 = vpack.c.b16 %v1172, %v1171
      %v1187 = vpack.c.b16 %v1174, %v1173
      %v1188 = vpack.c.b16 %v1176, %v1175
      %v1189 = vpack.c.b16 %v1178, %v1177
      %v1190 = vpack.c.b16 %v1180, %v1179
      %v1191 = vpack.c.b16 %v1182, %v1181
      %v1192 = vpack.c.b16 %v1184, %v1183
      %1201 = vmatprep.subr.bf16.mxu0 0
      %1202 = vmatpush1.bf16.msra.mxu0 %v1192
      %1203 = vmatprep.subr.bf16.mxu0 0
      %1204 = vmatpush1.bf16.msra.mxu0 %v1191
      %1205 = vmatprep.subr.bf16.mxu0 0
      %1206 = vmatpush1.bf16.msra.mxu0 %v1190
      %1207 = vmatprep.subr.bf16.mxu0 0
      %1208 = vmatpush1.bf16.msra.mxu0 %v1189
      %1209 = vmatprep.subr.bf16.mxu0 0
      %1210 = vmatpush1.bf16.msra.mxu0 %v1188
      %1211 = vmatprep.subr.bf16.mxu0 0
      %1212 = vmatpush1.bf16.msra.mxu0 %v1187
      %1213 = vmatprep.subr.bf16.mxu0 0
      %1214 = vmatpush1.bf16.msra.mxu0 %v1186
      %1215 = vmatprep.subr.bf16.mxu0 0
      %1216 = vmatpush1.bf16.msra.mxu0 %v1185
      %1217 = vmatprep.subr.bf16.mxu0 0
      %1218 = vmatpush2.bf16.msra.mxu0 0
      %1219 = vmatprep.subr.bf16.mxu0 0
      %1220 = vmatpush2.bf16.msra.mxu0 0
      %1221 = vmatprep.subr.bf16.mxu0 0
      %1222 = vmatpush2.bf16.msra.mxu0 0
      %1223 = vmatprep.subr.bf16.mxu0 0
      %1224 = vmatpush2.bf16.msra.mxu0 0
      %1225 = vmatprep.subr.bf16.mxu0 0
      %1226 = vmatpush2.bf16.msra.mxu0 0
      %1227 = vmatprep.subr.bf16.mxu0 0
      %1228 = vmatpush2.bf16.msra.mxu0 0
      %1229 = vmatprep.subr.bf16.mxu0 0
      %1230 = vmatpush2.bf16.msra.mxu0 0
      %1231 = vmatprep.subr.bf16.mxu0 0
      %1232 = vmatpush2.bf16.msra.mxu0 0
      %1233 = vmatprep.mubr.bf16.mxu0 0
      %1234 = vmatmul.mubr.bf16.gmra.mxu0 %v440
      %v1235 = vpop.f32.mrf.mxu0
      %v1236 = vadd.f32 %v1151, %v1235
      %v1237 = vpop.f32.mrf.mxu0
      %v1238 = vpop.f32.mrf.mxu0
      %v1239 = vadd.f32 %v1151, %v1238
      %v1240 = vpop.f32.mrf.mxu0
      %1241 = vdwg.mxu0
      %v1242 = vpack.c.bf16 %v1011, %v1008
      %v1243 = vpack.c.bf16 %v1125, %v1122
      %v1245 = vsel %vm779, %v1242, 0
      %v1248 = vsel %vm779, %v1243, 0
      %1250 = vmatprep.subr.bf16.mxu0 0
      %1251 = vmatpush1.bf16.xpose.msra.mxu0 0
      %1252 = vmatprep.subr.bf16.mxu0 0
      %1253 = vmatpush1.bf16.xpose.msra.mxu0 0
      %1254 = vmatprep.subr.bf16.mxu0 0
      %1255 = vmatpush1.bf16.xpose.msra.mxu0 0
      %1256 = vmatprep.subr.bf16.mxu0 0
      %1257 = vmatpush1.bf16.xpose.msra.mxu0 0
      %1258 = vmatprep.subr.bf16.mxu0 0
      %1259 = vmatpush1.bf16.xpose.msra.mxu0 0
      %1260 = vmatprep.subr.bf16.mxu0 0
      %1261 = vmatpush1.bf16.xpose.msra.mxu0 0
      %1262 = vmatprep.subr.bf16.mxu0 0
      %1263 = vmatpush1.bf16.xpose.msra.mxu0 0
      %1264 = vmatprep.subr.bf16.mxu0 0
      %1265 = vmatpush1.bf16.xpose.msra.mxu0 %v1248
      %1266 = vmatprep.subr.bf16.mxu0 0
      %1267 = vmatpush2.bf16.xpose.msra.mxu0 0
      %1268 = vmatprep.subr.bf16.mxu0 0
      %1269 = vmatpush2.bf16.xpose.msra.mxu0 0
      %1270 = vmatprep.subr.bf16.mxu0 0
      %1271 = vmatpush2.bf16.xpose.msra.mxu0 0
      %1272 = vmatprep.subr.bf16.mxu0 0
      %1273 = vmatpush2.bf16.xpose.msra.mxu0 0
      %1274 = vmatprep.subr.bf16.mxu0 0
      %1275 = vmatpush2.bf16.xpose.msra.mxu0 0
      %1276 = vmatprep.subr.bf16.mxu0 0
      %1277 = vmatpush2.bf16.xpose.msra.mxu0 0
      %1278 = vmatprep.subr.bf16.mxu0 0
      %1279 = vmatpush2.bf16.xpose.msra.mxu0 0
      %1280 = vmatprep.subr.bf16.mxu0 0
      %1281 = vmatpush2.bf16.xpose.msra.mxu0 0
      %1282 = vmatprep.mubr.bf16.mxu0 0
      %1283 = vmatmul.mubr.bf16.gmra.mxu0 %v1245
      %v1284 = vpop.f32.mrf.mxu0
      %v1285 = vadd.f32 0.0, %v1284
      %v1286 = vpop.f32.mrf.mxu0
      %v1287 = vpop.f32.mrf.mxu0
      %v1288 = vadd.f32 0.0, %v1287
      %v1289 = vpop.f32.mrf.mxu0
      %1290 = vdwg.mxu0
      %v1291 = vmul.f32 %v1285, 0.25
      %v1292 = vmul.f32 %v1288, 0.25
      %v1293 = vsel %vm779, %v1291, -inf
      %1294 = vmax.xlane.f32.xlu0 %v1293
      %v1295 = vpop.xlane.xlu0 %1294
      %v1296 = vsel %vm779, %v1292, -inf
      %1297 = vmax.xlane.f32.xlu0 %v1296
      %v1298 = vpop.xlane.xlu0 %1297
      %v1299 = vsub.f32 %v1291, %v1295
      %v1300 = vsub.f32 %v1292, %v1298
      %v1301 = vmul.f32 %v1299, 1.442695
      %v1302 = vpow.pop %v1301
      %v1303 = vmul.f32 %v1300, 1.442695
      %v1304 = vpow.pop %v1303
      %v1305 = vsel %vm779, %v1302, 0.0
      %1306 = vadd.xlane.f32.xlu0 %v1305
      %v1307 = vpop.xlane.xlu0 %1306
      %v1308 = vsel %vm779, %v1304, 0.0
      %1309 = vadd.xlane.f32.xlu0 %v1308
      %v1310 = vpop.xlane.xlu0 %1309
      %v1311 = vrcp.pop %v1307
      %v1312 = vmul.f32 %v1302, %v1311
      %v1313 = vrcp.pop %v1310
      %v1314 = vmul.f32 %v1304, %v1313
      %v1315 = vpack.c.bf16 %v1314, %v1312
      %v1316 = vpack.c.bf16 %v1239, %v1236
      %v1318 = vsel %vm779, %v1315, 0
      %1320 = vmatprep.subr.bf16.mxu0 0
      %1321 = vmatpush1.bf16.msra.mxu0 0
      %1322 = vmatprep.subr.bf16.mxu0 0
      %1323 = vmatpush1.bf16.msra.mxu0 0
      %1324 = vmatprep.subr.bf16.mxu0 0
      %1325 = vmatpush1.bf16.msra.mxu0 0
      %1326 = vmatprep.subr.bf16.mxu0 0
      %1327 = vmatpush1.bf16.msra.mxu0 0
      %1328 = vmatprep.subr.bf16.mxu0 0
      %1329 = vmatpush1.bf16.msra.mxu0 0
      %1330 = vmatprep.subr.bf16.mxu0 0
      %1331 = vmatpush1.bf16.msra.mxu0 0
      %1332 = vmatprep.subr.bf16.mxu0 0
      %1333 = vmatpush1.bf16.msra.mxu0 0
      %1334 = vmatprep.subr.bf16.mxu0 0
      %1335 = vmatpush1.bf16.msra.mxu0 %v1316
      %1336 = vmatprep.subr.bf16.mxu0 0
      %1337 = vmatpush2.bf16.msra.mxu0 0
      %1338 = vmatprep.subr.bf16.mxu0 0
      %1339 = vmatpush2.bf16.msra.mxu0 0
      %1340 = vmatprep.subr.bf16.mxu0 0
      %1341 = vmatpush2.bf16.msra.mxu0 0
      %1342 = vmatprep.subr.bf16.mxu0 0
      %1343 = vmatpush2.bf16.msra.mxu0 0
      %1344 = vmatprep.subr.bf16.mxu0 0
      %1345 = vmatpush2.bf16.msra.mxu0 0
      %1346 = vmatprep.subr.bf16.mxu0 0
      %1347 = vmatpush2.bf16.msra.mxu0 0
      %1348 = vmatprep.subr.bf16.mxu0 0
      %1349 = vmatpush2.bf16.msra.mxu0 0
      %1350 = vmatprep.subr.bf16.mxu0 0
      %1351 = vmatpush2.bf16.msra.mxu0 0
      %1352 = vmatprep.mubr.bf16.mxu0 0
      %1353 = vmatmul.mubr.bf16.gmra.mxu0 %v1318
      %v1354 = vpop.f32.mrf.mxu0
      %v1355 = vadd.f32 0.0, %v1354
      %v1356 = vpop.f32.mrf.mxu0
      %v1357 = vpop.f32.mrf.mxu0
      %v1358 = vadd.f32 0.0, %v1357
      %v1359 = vpop.f32.mrf.mxu0
      %1360 = vdwg.mxu0
      %v1361 = vpack.c.bf16 %v1358, %v1355
      %s1362 = scalar_lea.vmem %s8, 8
      %v1363 = vld [vmem:[%s1362] sm:$0xf]
      %v1364 = vld [vmem:[%s1362 + $0x4] sm:$0xf]
      %v1367 = vunpack.c.l.b16 %v1363
      %v1368 = vunpack.c.l.b16 %v1364
      %v1369 = vpack.c.b16 %v1368, %v1367
      %v1372 = vsel %vm779, %v1361, 0
      %1374 = vmatprep.subr.bf16.mxu0 0
      %1375 = vmatpush1.bf16.msra.mxu0 0
      %1376 = vmatprep.subr.bf16.mxu0 0
      %1377 = vmatpush1.bf16.msra.mxu0 0
      %1378 = vmatprep.subr.bf16.mxu0 0
      %1379 = vmatpush1.bf16.msra.mxu0 0
      %1380 = vmatprep.subr.bf16.mxu0 0
      %1381 = vmatpush1.bf16.msra.mxu0 0
      %1382 = vmatprep.subr.bf16.mxu0 0
      %1383 = vmatpush1.bf16.msra.mxu0 0
      %1384 = vmatprep.subr.bf16.mxu0 0
      %1385 = vmatpush1.bf16.msra.mxu0 0
      %1386 = vmatprep.subr.bf16.mxu0 0
      %1387 = vmatpush1.bf16.msra.mxu0 0
      %1388 = vmatprep.subr.bf16.mxu0 0
      %1389 = vmatpush1.bf16.msra.mxu0 %v1369
      %1390 = vmatprep.subr.bf16.mxu0 0
      %1391 = vmatpush2.bf16.msra.mxu0 0
      %1392 = vmatprep.subr.bf16.mxu0 0
      %1393 = vmatpush2.bf16.msra.mxu0 0
      %1394 = vmatprep.subr.bf16.mxu0 0
      %1395 = vmatpush2.bf16.msra.mxu0 0
      %1396 = vmatprep.subr.bf16.mxu0 0
      %1397 = vmatpush2.bf16.msra.mxu0 0
      %1398 = vmatprep.subr.bf16.mxu0 0
      %1399 = vmatpush2.bf16.msra.mxu0 0
      %1400 = vmatprep.subr.bf16.mxu0 0
      %1401 = vmatpush2.bf16.msra.mxu0 0
      %1402 = vmatprep.subr.bf16.mxu0 0
      %1403 = vmatpush2.bf16.msra.mxu0 0
      %1404 = vmatprep.subr.bf16.mxu0 0
      %1405 = vmatpush2.bf16.msra.mxu0 0
      %1406 = vmatprep.mubr.bf16.mxu0 0
      %1407 = vmatmul.mubr.bf16.gmra.mxu0 %v1372
      %v1408 = vpop.f32.mrf.mxu0
      %v1409 = vadd.f32 0.0, %v1408
      %v1410 = vpop.f32.mrf.mxu0
      %v1411 = vpop.f32.mrf.mxu0
      %v1412 = vadd.f32 0.0, %v1411
      %v1413 = vpop.f32.mrf.mxu0
      %1414 = vdwg.mxu0
      %v1417 = vunpack.c.l.b16 %v898
      %v1418 = vunpack.c.l.b16 %v899
      %v1419 = vpack.c.b16 %v1418, %v1417
      %v1422 = vsel %vm779, %v897, 0
      %1424 = vmatprep.subr.bf16.mxu0 0
      %1425 = vmatpush1.bf16.msra.mxu0 0
      %1426 = vmatprep.subr.bf16.mxu0 0
      %1427 = vmatpush1.bf16.msra.mxu0 0
      %1428 = vmatprep.subr.bf16.mxu0 0
      %1429 = vmatpush1.bf16.msra.mxu0 0
      %1430 = vmatprep.subr.bf16.mxu0 0
      %1431 = vmatpush1.bf16.msra.mxu0 0
      %1432 = vmatprep.subr.bf16.mxu0 0
      %1433 = vmatpush1.bf16.msra.mxu0 0
      %1434 = vmatprep.subr.bf16.mxu0 0
      %1435 = vmatpush1.bf16.msra.mxu0 0
      %1436 = vmatprep.subr.bf16.mxu0 0
      %1437 = vmatpush1.bf16.msra.mxu0 0
      %1438 = vmatprep.subr.bf16.mxu0 0
      %1439 = vmatpush1.bf16.msra.mxu0 %v1419
      %1440 = vmatprep.subr.bf16.mxu0 0
      %1441 = vmatpush2.bf16.msra.mxu0 0
      %1442 = vmatprep.subr.bf16.mxu0 0
      %1443 = vmatpush2.bf16.msra.mxu0 0
      %1444 = vmatprep.subr.bf16.mxu0 0
      %1445 = vmatpush2.bf16.msra.mxu0 0
      %1446 = vmatprep.subr.bf16.mxu0 0
      %1447 = vmatpush2.bf16.msra.mxu0 0
      %1448 = vmatprep.subr.bf16.mxu0 0
      %1449 = vmatpush2.bf16.msra.mxu0 0
      %1450 = vmatprep.subr.bf16.mxu0 0
      %1451 = vmatpush2.bf16.msra.mxu0 0
      %1452 = vmatprep.subr.bf16.mxu0 0
      %1453 = vmatpush2.bf16.msra.mxu0 0
      %1454 = vmatprep.subr.bf16.mxu0 0
      %1455 = vmatpush2.bf16.msra.mxu0 0
      %1456 = vmatprep.mubr.bf16.mxu0 0
      %1457 = vmatmul.mubr.bf16.gmra.mxu0 %v1422
      %v1458 = vpop.f32.mrf.mxu0
      %v1459 = vadd.f32 %v1409, %v1458
      %v1460 = vpop.f32.mrf.mxu0
      %v1461 = vpop.f32.mrf.mxu0
      %v1462 = vadd.f32 %v1412, %v1461
      %v1463 = vpop.f32.mrf.mxu0
      %1464 = vdwg.mxu0
      %s1465 = scalar_lea.vmem %s2, 128
      %v1466 = vld [vmem:[%s1465] sm:$0xf]
      %v1467 = vld [vmem:[%s1465 + $0x4] sm:$0xf]
      %v1468 = vld [vmem:[%s1465 + $0x8] sm:$0xf]
      %v1469 = vld [vmem:[%s1465 + $0xc] sm:$0xf]
      %v1470 = vld [vmem:[%s1465 + $0x10] sm:$0xf]
      %v1471 = vld [vmem:[%s1465 + $0x14] sm:$0xf]
      %v1472 = vld [vmem:[%s1465 + $0x18] sm:$0xf]
      %v1473 = vld [vmem:[%s1465 + $0x1c] sm:$0xf]
      %v1474 = vld [vmem:[%s1465 + $0x20] sm:$0xf]
      %v1475 = vld [vmem:[%s1465 + $0x24] sm:$0xf]
      %v1476 = vld [vmem:[%s1465 + $0x28] sm:$0xf]
      %v1477 = vld [vmem:[%s1465 + $0x2c] sm:$0xf]
      %v1478 = vld [vmem:[%s1465 + $0x30] sm:$0xf]
      %v1479 = vld [vmem:[%s1465 + $0x34] sm:$0xf]
      %v1480 = vld [vmem:[%s1465 + $0x38] sm:$0xf]
      %v1481 = vld [vmem:[%s1465 + $0x3c] sm:$0xf]
      %s1482 = scalar_lea.vmem %s3, 2
      %v1483 = vld [vmem:[%s1482] sm:$0x1]
      %v1485 = vlaneseq
      %v1486 = vshrl.u32 %v1485, 7
      %v1487 = vsub.s32 0, %v1486
      %v1488 = vrot.slane %v1483, %v1487
      %v1506 = vunpack.c.l.b16 %v1466
      %v1507 = vunpack.c.l.b16 %v1467
      %v1508 = vunpack.c.l.b16 %v1468
      %v1509 = vunpack.c.l.b16 %v1469
      %v1510 = vunpack.c.l.b16 %v1470
      %v1511 = vunpack.c.l.b16 %v1471
      %v1512 = vunpack.c.l.b16 %v1472
      %v1513 = vunpack.c.l.b16 %v1473
      %v1514 = vunpack.c.l.b16 %v1474
      %v1515 = vunpack.c.l.b16 %v1475
      %v1516 = vunpack.c.l.b16 %v1476
      %v1517 = vunpack.c.l.b16 %v1477
      %v1518 = vunpack.c.l.b16 %v1478
      %v1519 = vunpack.c.l.b16 %v1479
      %v1520 = vunpack.c.l.b16 %v1480
      %v1521 = vunpack.c.l.b16 %v1481
      %v1522 = vpack.c.b16 %v1507, %v1506
      %v1523 = vpack.c.b16 %v1509, %v1508
      %v1524 = vpack.c.b16 %v1511, %v1510
      %v1525 = vpack.c.b16 %v1513, %v1512
      %v1526 = vpack.c.b16 %v1515, %v1514
      %v1527 = vpack.c.b16 %v1517, %v1516
      %v1528 = vpack.c.b16 %v1519, %v1518
      %v1529 = vpack.c.b16 %v1521, %v1520
      %1538 = vmatprep.subr.bf16.mxu0 0
      %1539 = vmatpush1.bf16.msra.mxu0 %v1529
      %1540 = vmatprep.subr.bf16.mxu0 0
      %1541 = vmatpush1.bf16.msra.mxu0 %v1528
      %1542 = vmatprep.subr.bf16.mxu0 0
      %1543 = vmatpush1.bf16.msra.mxu0 %v1527
      %1544 = vmatprep.subr.bf16.mxu0 0
      %1545 = vmatpush1.bf16.msra.mxu0 %v1526
      %1546 = vmatprep.subr.bf16.mxu0 0
      %1547 = vmatpush1.bf16.msra.mxu0 %v1525
      %1548 = vmatprep.subr.bf16.mxu0 0
      %1549 = vmatpush1.bf16.msra.mxu0 %v1524
      %1550 = vmatprep.subr.bf16.mxu0 0
      %1551 = vmatpush1.bf16.msra.mxu0 %v1523
      %1552 = vmatprep.subr.bf16.mxu0 0
      %1553 = vmatpush1.bf16.msra.mxu0 %v1522
      %1554 = vmatprep.subr.bf16.mxu0 0
      %1555 = vmatpush2.bf16.msra.mxu0 0
      %1556 = vmatprep.subr.bf16.mxu0 0
      %1557 = vmatpush2.bf16.msra.mxu0 0
      %1558 = vmatprep.subr.bf16.mxu0 0
      %1559 = vmatpush2.bf16.msra.mxu0 0
      %1560 = vmatprep.subr.bf16.mxu0 0
      %1561 = vmatpush2.bf16.msra.mxu0 0
      %1562 = vmatprep.subr.bf16.mxu0 0
      %1563 = vmatpush2.bf16.msra.mxu0 0
      %1564 = vmatprep.subr.bf16.mxu0 0
      %1565 = vmatpush2.bf16.msra.mxu0 0
      %1566 = vmatprep.subr.bf16.mxu0 0
      %1567 = vmatpush2.bf16.msra.mxu0 0
      %1568 = vmatprep.subr.bf16.mxu0 0
      %1569 = vmatpush2.bf16.msra.mxu0 0
      %1570 = vmatprep.mubr.bf16.mxu0 0
      %1571 = vmatmul.mubr.bf16.gmra.mxu0 %v439
      %v1572 = vpop.f32.mrf.mxu0
      %v1573 = vadd.f32 %v1488, %v1572
      %v1574 = vpop.f32.mrf.mxu0
      %v1575 = vpop.f32.mrf.mxu0
      %v1576 = vadd.f32 %v1488, %v1575
      %v1577 = vpop.f32.mrf.mxu0
      %1578 = vdwg.mxu0
      %s1579 = scalar_lea.vmem %s4, 128
      %v1580 = vld [vmem:[%s1579] sm:$0xf]
      %v1581 = vld [vmem:[%s1579 + $0x4] sm:$0xf]
      %v1582 = vld [vmem:[%s1579 + $0x8] sm:$0xf]
      %v1583 = vld [vmem:[%s1579 + $0xc] sm:$0xf]
      %v1584 = vld [vmem:[%s1579 + $0x10] sm:$0xf]
      %v1585 = vld [vmem:[%s1579 + $0x14] sm:$0xf]
      %v1586 = vld [vmem:[%s1579 + $0x18] sm:$0xf]
      %v1587 = vld [vmem:[%s1579 + $0x1c] sm:$0xf]
      %v1588 = vld [vmem:[%s1579 + $0x20] sm:$0xf]
      %v1589 = vld [vmem:[%s1579 + $0x24] sm:$0xf]
      %v1590 = vld [vmem:[%s1579 + $0x28] sm:$0xf]
      %v1591 = vld [vmem:[%s1579 + $0x2c] sm:$0xf]
      %v1592 = vld [vmem:[%s1579 + $0x30] sm:$0xf]
      %v1593 = vld [vmem:[%s1579 + $0x34] sm:$0xf]
      %v1594 = vld [vmem:[%s1579 + $0x38] sm:$0xf]
      %v1595 = vld [vmem:[%s1579 + $0x3c] sm:$0xf]
      %s1596 = scalar_lea.vmem %s5, 2
      %v1597 = vld [vmem:[%s1596] sm:$0x1]
      %v1599 = vlaneseq
      %v1600 = vshrl.u32 %v1599, 7
      %v1601 = vsub.s32 0, %v1600
      %v1602 = vrot.slane %v1597, %v1601
      %v1620 = vunpack.c.l.b16 %v1580
      %v1621 = vunpack.c.l.b16 %v1581
      %v1622 = vunpack.c.l.b16 %v1582
      %v1623 = vunpack.c.l.b16 %v1583
      %v1624 = vunpack.c.l.b16 %v1584
      %v1625 = vunpack.c.l.b16 %v1585
      %v1626 = vunpack.c.l.b16 %v1586
      %v1627 = vunpack.c.l.b16 %v1587
      %v1628 = vunpack.c.l.b16 %v1588
      %v1629 = vunpack.c.l.b16 %v1589
      %v1630 = vunpack.c.l.b16 %v1590
      %v1631 = vunpack.c.l.b16 %v1591
      %v1632 = vunpack.c.l.b16 %v1592
      %v1633 = vunpack.c.l.b16 %v1593
      %v1634 = vunpack.c.l.b16 %v1594
      %v1635 = vunpack.c.l.b16 %v1595
      %v1636 = vpack.c.b16 %v1621, %v1620
      %v1637 = vpack.c.b16 %v1623, %v1622
      %v1638 = vpack.c.b16 %v1625, %v1624
      %v1639 = vpack.c.b16 %v1627, %v1626
      %v1640 = vpack.c.b16 %v1629, %v1628
      %v1641 = vpack.c.b16 %v1631, %v1630
      %v1642 = vpack.c.b16 %v1633, %v1632
      %v1643 = vpack.c.b16 %v1635, %v1634
      %1652 = vmatprep.subr.bf16.mxu0 0
      %1653 = vmatpush1.bf16.msra.mxu0 %v1643
      %1654 = vmatprep.subr.bf16.mxu0 0
      %1655 = vmatpush1.bf16.msra.mxu0 %v1642
      %1656 = vmatprep.subr.bf16.mxu0 0
      %1657 = vmatpush1.bf16.msra.mxu0 %v1641
      %1658 = vmatprep.subr.bf16.mxu0 0
      %1659 = vmatpush1.bf16.msra.mxu0 %v1640
      %1660 = vmatprep.subr.bf16.mxu0 0
      %1661 = vmatpush1.bf16.msra.mxu0 %v1639
      %1662 = vmatprep.subr.bf16.mxu0 0
      %1663 = vmatpush1.bf16.msra.mxu0 %v1638
      %1664 = vmatprep.subr.bf16.mxu0 0
      %1665 = vmatpush1.bf16.msra.mxu0 %v1637
      %1666 = vmatprep.subr.bf16.mxu0 0
      %1667 = vmatpush1.bf16.msra.mxu0 %v1636
      %1668 = vmatprep.subr.bf16.mxu0 0
      %1669 = vmatpush2.bf16.msra.mxu0 0
      %1670 = vmatprep.subr.bf16.mxu0 0
      %1671 = vmatpush2.bf16.msra.mxu0 0
      %1672 = vmatprep.subr.bf16.mxu0 0
      %1673 = vmatpush2.bf16.msra.mxu0 0
      %1674 = vmatprep.subr.bf16.mxu0 0
      %1675 = vmatpush2.bf16.msra.mxu0 0
      %1676 = vmatprep.subr.bf16.mxu0 0
      %1677 = vmatpush2.bf16.msra.mxu0 0
      %1678 = vmatprep.subr.bf16.mxu0 0
      %1679 = vmatpush2.bf16.msra.mxu0 0
      %1680 = vmatprep.subr.bf16.mxu0 0
      %1681 = vmatpush2.bf16.msra.mxu0 0
      %1682 = vmatprep.subr.bf16.mxu0 0
      %1683 = vmatpush2.bf16.msra.mxu0 0
      %1684 = vmatprep.mubr.bf16.mxu0 0
      %1685 = vmatmul.mubr.bf16.gmra.mxu0 %v440
      %v1686 = vpop.f32.mrf.mxu0
      %v1687 = vadd.f32 %v1602, %v1686
      %v1688 = vpop.f32.mrf.mxu0
      %v1689 = vpop.f32.mrf.mxu0
      %v1690 = vadd.f32 %v1602, %v1689
      %v1691 = vpop.f32.mrf.mxu0
      %1692 = vdwg.mxu0
      %s1693 = scalar_lea.vmem %s6, 128
      %v1694 = vld [vmem:[%s1693] sm:$0xf]
      %v1695 = vld [vmem:[%s1693 + $0x4] sm:$0xf]
      %v1696 = vld [vmem:[%s1693 + $0x8] sm:$0xf]
      %v1697 = vld [vmem:[%s1693 + $0xc] sm:$0xf]
      %v1698 = vld [vmem:[%s1693 + $0x10] sm:$0xf]
      %v1699 = vld [vmem:[%s1693 + $0x14] sm:$0xf]
      %v1700 = vld [vmem:[%s1693 + $0x18] sm:$0xf]
      %v1701 = vld [vmem:[%s1693 + $0x1c] sm:$0xf]
      %v1702 = vld [vmem:[%s1693 + $0x20] sm:$0xf]
      %v1703 = vld [vmem:[%s1693 + $0x24] sm:$0xf]
      %v1704 = vld [vmem:[%s1693 + $0x28] sm:$0xf]
      %v1705 = vld [vmem:[%s1693 + $0x2c] sm:$0xf]
      %v1706 = vld [vmem:[%s1693 + $0x30] sm:$0xf]
      %v1707 = vld [vmem:[%s1693 + $0x34] sm:$0xf]
      %v1708 = vld [vmem:[%s1693 + $0x38] sm:$0xf]
      %v1709 = vld [vmem:[%s1693 + $0x3c] sm:$0xf]
      %s1710 = scalar_lea.vmem %s7, 2
      %v1711 = vld [vmem:[%s1710] sm:$0x1]
      %v1713 = vlaneseq
      %v1714 = vshrl.u32 %v1713, 7
      %v1715 = vsub.s32 0, %v1714
      %v1716 = vrot.slane %v1711, %v1715
      %v1734 = vunpack.c.l.b16 %v1694
      %v1735 = vunpack.c.l.b16 %v1695
      %v1736 = vunpack.c.l.b16 %v1696
      %v1737 = vunpack.c.l.b16 %v1697
      %v1738 = vunpack.c.l.b16 %v1698
      %v1739 = vunpack.c.l.b16 %v1699
      %v1740 = vunpack.c.l.b16 %v1700
      %v1741 = vunpack.c.l.b16 %v1701
      %v1742 = vunpack.c.l.b16 %v1702
      %v1743 = vunpack.c.l.b16 %v1703
      %v1744 = vunpack.c.l.b16 %v1704
      %v1745 = vunpack.c.l.b16 %v1705
      %v1746 = vunpack.c.l.b16 %v1706
      %v1747 = vunpack.c.l.b16 %v1707
      %v1748 = vunpack.c.l.b16 %v1708
      %v1749 = vunpack.c.l.b16 %v1709
      %v1750 = vpack.c.b16 %v1735, %v1734
      %v1751 = vpack.c.b16 %v1737, %v1736
      %v1752 = vpack.c.b16 %v1739, %v1738
      %v1753 = vpack.c.b16 %v1741, %v1740
      %v1754 = vpack.c.b16 %v1743, %v1742
      %v1755 = vpack.c.b16 %v1745, %v1744
      %v1756 = vpack.c.b16 %v1747, %v1746
      %v1757 = vpack.c.b16 %v1749, %v1748
      %1766 = vmatprep.subr.bf16.mxu0 0
      %1767 = vmatpush1.bf16.msra.mxu0 %v1757
      %1768 = vmatprep.subr.bf16.mxu0 0
      %1769 = vmatpush1.bf16.msra.mxu0 %v1756
      %1770 = vmatprep.subr.bf16.mxu0 0
      %1771 = vmatpush1.bf16.msra.mxu0 %v1755
      %1772 = vmatprep.subr.bf16.mxu0 0
      %1773 = vmatpush1.bf16.msra.mxu0 %v1754
      %1774 = vmatprep.subr.bf16.mxu0 0
      %1775 = vmatpush1.bf16.msra.mxu0 %v1753
      %1776 = vmatprep.subr.bf16.mxu0 0
      %1777 = vmatpush1.bf16.msra.mxu0 %v1752
      %1778 = vmatprep.subr.bf16.mxu0 0
      %1779 = vmatpush1.bf16.msra.mxu0 %v1751
      %1780 = vmatprep.subr.bf16.mxu0 0
      %1781 = vmatpush1.bf16.msra.mxu0 %v1750
      %1782 = vmatprep.subr.bf16.mxu0 0
      %1783 = vmatpush2.bf16.msra.mxu0 0
      %1784 = vmatprep.subr.bf16.mxu0 0
      %1785 = vmatpush2.bf16.msra.mxu0 0
      %1786 = vmatprep.subr.bf16.mxu0 0
      %1787 = vmatpush2.bf16.msra.mxu0 0
      %1788 = vmatprep.subr.bf16.mxu0 0
      %1789 = vmatpush2.bf16.msra.mxu0 0
      %1790 = vmatprep.subr.bf16.mxu0 0
      %1791 = vmatpush2.bf16.msra.mxu0 0
      %1792 = vmatprep.subr.bf16.mxu0 0
      %1793 = vmatpush2.bf16.msra.mxu0 0
      %1794 = vmatprep.subr.bf16.mxu0 0
      %1795 = vmatpush2.bf16.msra.mxu0 0
      %1796 = vmatprep.subr.bf16.mxu0 0
      %1797 = vmatpush2.bf16.msra.mxu0 0
      %1798 = vmatprep.mubr.bf16.mxu0 0
      %1799 = vmatmul.mubr.bf16.gmra.mxu0 %v440
      %v1800 = vpop.f32.mrf.mxu0
      %v1801 = vadd.f32 %v1716, %v1800
      %v1802 = vpop.f32.mrf.mxu0
      %v1803 = vpop.f32.mrf.mxu0
      %v1804 = vadd.f32 %v1716, %v1803
      %v1805 = vpop.f32.mrf.mxu0
      %1806 = vdwg.mxu0
      %v1807 = vpack.c.bf16 %v1576, %v1573
      %v1808 = vpack.c.bf16 %v1690, %v1687
      %v1810 = vsel %vm779, %v1807, 0
      %v1813 = vsel %vm779, %v1808, 0
      %1815 = vmatprep.subr.bf16.mxu0 0
      %1816 = vmatpush1.bf16.xpose.msra.mxu0 0
      %1817 = vmatprep.subr.bf16.mxu0 0
      %1818 = vmatpush1.bf16.xpose.msra.mxu0 0
      %1819 = vmatprep.subr.bf16.mxu0 0
      %1820 = vmatpush1.bf16.xpose.msra.mxu0 0
      %1821 = vmatprep.subr.bf16.mxu0 0
      %1822 = vmatpush1.bf16.xpose.msra.mxu0 0
      %1823 = vmatprep.subr.bf16.mxu0 0
      %1824 = vmatpush1.bf16.xpose.msra.mxu0 0
      %1825 = vmatprep.subr.bf16.mxu0 0
      %1826 = vmatpush1.bf16.xpose.msra.mxu0 0
      %1827 = vmatprep.subr.bf16.mxu0 0
      %1828 = vmatpush1.bf16.xpose.msra.mxu0 0
      %1829 = vmatprep.subr.bf16.mxu0 0
      %1830 = vmatpush1.bf16.xpose.msra.mxu0 %v1813
      %1831 = vmatprep.subr.bf16.mxu0 0
      %1832 = vmatpush2.bf16.xpose.msra.mxu0 0
      %1833 = vmatprep.subr.bf16.mxu0 0
      %1834 = vmatpush2.bf16.xpose.msra.mxu0 0
      %1835 = vmatprep.subr.bf16.mxu0 0
      %1836 = vmatpush2.bf16.xpose.msra.mxu0 0
      %1837 = vmatprep.subr.bf16.mxu0 0
      %1838 = vmatpush2.bf16.xpose.msra.mxu0 0
      %1839 = vmatprep.subr.bf16.mxu0 0
      %1840 = vmatpush2.bf16.xpose.msra.mxu0 0
      %1841 = vmatprep.subr.bf16.mxu0 0
      %1842 = vmatpush2.bf16.xpose.msra.mxu0 0
      %1843 = vmatprep.subr.bf16.mxu0 0
      %1844 = vmatpush2.bf16.xpose.msra.mxu0 0
      %1845 = vmatprep.subr.bf16.mxu0 0
      %1846 = vmatpush2.bf16.xpose.msra.mxu0 0
      %1847 = vmatprep.mubr.bf16.mxu0 0
      %1848 = vmatmul.mubr.bf16.gmra.mxu0 %v1810
      %v1849 = vpop.f32.mrf.mxu0
      %v1850 = vadd.f32 0.0, %v1849
      %v1851 = vpop.f32.mrf.mxu0
      %v1852 = vpop.f32.mrf.mxu0
      %v1853 = vadd.f32 0.0, %v1852
      %v1854 = vpop.f32.mrf.mxu0
      %1855 = vdwg.mxu0
      %v1856 = vmul.f32 %v1850, 0.25
      %v1857 = vmul.f32 %v1853, 0.25
      %v1858 = vsel %vm779, %v1856, -inf
      %1859 = vmax.xlane.f32.xlu0 %v1858
      %v1860 = vpop.xlane.xlu0 %1859
      %v1861 = vsel %vm779, %v1857, -inf
      %1862 = vmax.xlane.f32.xlu0 %v1861
      %v1863 = vpop.xlane.xlu0 %1862
      %v1864 = vsub.f32 %v1856, %v1860
      %v1865 = vsub.f32 %v1857, %v1863
      %v1866 = vmul.f32 %v1864, 1.442695
      %v1867 = vpow.pop %v1866
      %v1868 = vmul.f32 %v1865, 1.442695
      %v1869 = vpow.pop %v1868
      %v1870 = vsel %vm779, %v1867, 0.0
      %1871 = vadd.xlane.f32.xlu0 %v1870
      %v1872 = vpop.xlane.xlu0 %1871
      %v1873 = vsel %vm779, %v1869, 0.0
      %1874 = vadd.xlane.f32.xlu0 %v1873
      %v1875 = vpop.xlane.xlu0 %1874
      %v1876 = vrcp.pop %v1872
      %v1877 = vmul.f32 %v1867, %v1876
      %v1878 = vrcp.pop %v1875
      %v1879 = vmul.f32 %v1869, %v1878
      %v1880 = vpack.c.bf16 %v1879, %v1877
      %v1881 = vpack.c.bf16 %v1804, %v1801
      %v1883 = vsel %vm779, %v1880, 0
      %1885 = vmatprep.subr.bf16.mxu0 0
      %1886 = vmatpush1.bf16.msra.mxu0 0
      %1887 = vmatprep.subr.bf16.mxu0 0
      %1888 = vmatpush1.bf16.msra.mxu0 0
      %1889 = vmatprep.subr.bf16.mxu0 0
      %1890 = vmatpush1.bf16.msra.mxu0 0
      %1891 = vmatprep.subr.bf16.mxu0 0
      %1892 = vmatpush1.bf16.msra.mxu0 0
      %1893 = vmatprep.subr.bf16.mxu0 0
      %1894 = vmatpush1.bf16.msra.mxu0 0
      %1895 = vmatprep.subr.bf16.mxu0 0
      %1896 = vmatpush1.bf16.msra.mxu0 0
      %1897 = vmatprep.subr.bf16.mxu0 0
      %1898 = vmatpush1.bf16.msra.mxu0 0
      %1899 = vmatprep.subr.bf16.mxu0 0
      %1900 = vmatpush1.bf16.msra.mxu0 %v1881
      %1901 = vmatprep.subr.bf16.mxu0 0
      %1902 = vmatpush2.bf16.msra.mxu0 0
      %1903 = vmatprep.subr.bf16.mxu0 0
      %1904 = vmatpush2.bf16.msra.mxu0 0
      %1905 = vmatprep.subr.bf16.mxu0 0
      %1906 = vmatpush2.bf16.msra.mxu0 0
      %1907 = vmatprep.subr.bf16.mxu0 0
      %1908 = vmatpush2.bf16.msra.mxu0 0
      %1909 = vmatprep.subr.bf16.mxu0 0
      %1910 = vmatpush2.bf16.msra.mxu0 0
      %1911 = vmatprep.subr.bf16.mxu0 0
      %1912 = vmatpush2.bf16.msra.mxu0 0
      %1913 = vmatprep.subr.bf16.mxu0 0
      %1914 = vmatpush2.bf16.msra.mxu0 0
      %1915 = vmatprep.subr.bf16.mxu0 0
      %1916 = vmatpush2.bf16.msra.mxu0 0
      %1917 = vmatprep.mubr.bf16.mxu0 0
      %1918 = vmatmul.mubr.bf16.gmra.mxu0 %v1883
      %v1919 = vpop.f32.mrf.mxu0
      %v1920 = vadd.f32 0.0, %v1919
      %v1921 = vpop.f32.mrf.mxu0
      %v1922 = vpop.f32.mrf.mxu0
      %v1923 = vadd.f32 0.0, %v1922
      %v1924 = vpop.f32.mrf.mxu0
      %1925 = vdwg.mxu0
      %v1926 = vpack.c.bf16 %v1923, %v1920
      %s1927 = scalar_lea.vmem %s8, 16
      %v1928 = vld [vmem:[%s1927] sm:$0xf]
      %v1929 = vld [vmem:[%s1927 + $0x4] sm:$0xf]
      %v1932 = vunpack.c.l.b16 %v1928
      %v1933 = vunpack.c.l.b16 %v1929
      %v1934 = vpack.c.b16 %v1933, %v1932
      %v1937 = vsel %vm779, %v1926, 0
      %1939 = vmatprep.subr.bf16.mxu0 0
      %1940 = vmatpush1.bf16.msra.mxu0 0
      %1941 = vmatprep.subr.bf16.mxu0 0
      %1942 = vmatpush1.bf16.msra.mxu0 0
      %1943 = vmatprep.subr.bf16.mxu0 0
      %1944 = vmatpush1.bf16.msra.mxu0 0
      %1945 = vmatprep.subr.bf16.mxu0 0
      %1946 = vmatpush1.bf16.msra.mxu0 0
      %1947 = vmatprep.subr.bf16.mxu0 0
      %1948 = vmatpush1.bf16.msra.mxu0 0
      %1949 = vmatprep.subr.bf16.mxu0 0
      %1950 = vmatpush1.bf16.msra.mxu0 0
      %1951 = vmatprep.subr.bf16.mxu0 0
      %1952 = vmatpush1.bf16.msra.mxu0 0
      %1953 = vmatprep.subr.bf16.mxu0 0
      %1954 = vmatpush1.bf16.msra.mxu0 %v1934
      %1955 = vmatprep.subr.bf16.mxu0 0
      %1956 = vmatpush2.bf16.msra.mxu0 0
      %1957 = vmatprep.subr.bf16.mxu0 0
      %1958 = vmatpush2.bf16.msra.mxu0 0
      %1959 = vmatprep.subr.bf16.mxu0 0
      %1960 = vmatpush2.bf16.msra.mxu0 0
      %1961 = vmatprep.subr.bf16.mxu0 0
      %1962 = vmatpush2.bf16.msra.mxu0 0
      %1963 = vmatprep.subr.bf16.mxu0 0
      %1964 = vmatpush2.bf16.msra.mxu0 0
      %1965 = vmatprep.subr.bf16.mxu0 0
      %1966 = vmatpush2.bf16.msra.mxu0 0
      %1967 = vmatprep.subr.bf16.mxu0 0
      %1968 = vmatpush2.bf16.msra.mxu0 0
      %1969 = vmatprep.subr.bf16.mxu0 0
      %1970 = vmatpush2.bf16.msra.mxu0 0
      %1971 = vmatprep.mubr.bf16.mxu0 0
      %1972 = vmatmul.mubr.bf16.gmra.mxu0 %v1937
      %v1973 = vpop.f32.mrf.mxu0
      %v1974 = vadd.f32 0.0, %v1973
      %v1975 = vpop.f32.mrf.mxu0
      %v1976 = vpop.f32.mrf.mxu0
      %v1977 = vadd.f32 0.0, %v1976
      %v1978 = vpop.f32.mrf.mxu0
      %1979 = vdwg.mxu0
      %v1980 = vadd.f32 %v1459, %v1974
      %v1981 = vadd.f32 %v1462, %v1977
      %s1982 = scalar_lea.vmem %s2, 192
      %v1983 = vld [vmem:[%s1982] sm:$0xf]
      %v1984 = vld [vmem:[%s1982 + $0x4] sm:$0xf]
      %v1985 = vld [vmem:[%s1982 + $0x8] sm:$0xf]
      %v1986 = vld [vmem:[%s1982 + $0xc] sm:$0xf]
      %v1987 = vld [vmem:[%s1982 + $0x10] sm:$0xf]
      %v1988 = vld [vmem:[%s1982 + $0x14] sm:$0xf]
      %v1989 = vld [vmem:[%s1982 + $0x18] sm:$0xf]
      %v1990 = vld [vmem:[%s1982 + $0x1c] sm:$0xf]
      %v1991 = vld [vmem:[%s1982 + $0x20] sm:$0xf]
      %v1992 = vld [vmem:[%s1982 + $0x24] sm:$0xf]
      %v1993 = vld [vmem:[%s1982 + $0x28] sm:$0xf]
      %v1994 = vld [vmem:[%s1982 + $0x2c] sm:$0xf]
      %v1995 = vld [vmem:[%s1982 + $0x30] sm:$0xf]
      %v1996 = vld [vmem:[%s1982 + $0x34] sm:$0xf]
      %v1997 = vld [vmem:[%s1982 + $0x38] sm:$0xf]
      %v1998 = vld [vmem:[%s1982 + $0x3c] sm:$0xf]
      %s1999 = scalar_lea.vmem %s3, 3
      %v2000 = vld [vmem:[%s1999] sm:$0x1]
      %v2002 = vlaneseq
      %v2003 = vshrl.u32 %v2002, 7
      %v2004 = vsub.s32 0, %v2003
      %v2005 = vrot.slane %v2000, %v2004
      %v2023 = vunpack.c.l.b16 %v1983
      %v2024 = vunpack.c.l.b16 %v1984
      %v2025 = vunpack.c.l.b16 %v1985
      %v2026 = vunpack.c.l.b16 %v1986
      %v2027 = vunpack.c.l.b16 %v1987
      %v2028 = vunpack.c.l.b16 %v1988
      %v2029 = vunpack.c.l.b16 %v1989
      %v2030 = vunpack.c.l.b16 %v1990
      %v2031 = vunpack.c.l.b16 %v1991
      %v2032 = vunpack.c.l.b16 %v1992
      %v2033 = vunpack.c.l.b16 %v1993
      %v2034 = vunpack.c.l.b16 %v1994
      %v2035 = vunpack.c.l.b16 %v1995
      %v2036 = vunpack.c.l.b16 %v1996
      %v2037 = vunpack.c.l.b16 %v1997
      %v2038 = vunpack.c.l.b16 %v1998
      %v2039 = vpack.c.b16 %v2024, %v2023
      %v2040 = vpack.c.b16 %v2026, %v2025
      %v2041 = vpack.c.b16 %v2028, %v2027
      %v2042 = vpack.c.b16 %v2030, %v2029
      %v2043 = vpack.c.b16 %v2032, %v2031
      %v2044 = vpack.c.b16 %v2034, %v2033
      %v2045 = vpack.c.b16 %v2036, %v2035
      %v2046 = vpack.c.b16 %v2038, %v2037
      %2055 = vmatprep.subr.bf16.mxu0 0
      %2056 = vmatpush1.bf16.msra.mxu0 %v2046
      %2057 = vmatprep.subr.bf16.mxu0 0
      %2058 = vmatpush1.bf16.msra.mxu0 %v2045
      %2059 = vmatprep.subr.bf16.mxu0 0
      %2060 = vmatpush1.bf16.msra.mxu0 %v2044
      %2061 = vmatprep.subr.bf16.mxu0 0
      %2062 = vmatpush1.bf16.msra.mxu0 %v2043
      %2063 = vmatprep.subr.bf16.mxu0 0
      %2064 = vmatpush1.bf16.msra.mxu0 %v2042
      %2065 = vmatprep.subr.bf16.mxu0 0
      %2066 = vmatpush1.bf16.msra.mxu0 %v2041
      %2067 = vmatprep.subr.bf16.mxu0 0
      %2068 = vmatpush1.bf16.msra.mxu0 %v2040
      %2069 = vmatprep.subr.bf16.mxu0 0
      %2070 = vmatpush1.bf16.msra.mxu0 %v2039
      %2071 = vmatprep.subr.bf16.mxu0 0
      %2072 = vmatpush2.bf16.msra.mxu0 0
      %2073 = vmatprep.subr.bf16.mxu0 0
      %2074 = vmatpush2.bf16.msra.mxu0 0
      %2075 = vmatprep.subr.bf16.mxu0 0
      %2076 = vmatpush2.bf16.msra.mxu0 0
      %2077 = vmatprep.subr.bf16.mxu0 0
      %2078 = vmatpush2.bf16.msra.mxu0 0
      %2079 = vmatprep.subr.bf16.mxu0 0
      %2080 = vmatpush2.bf16.msra.mxu0 0
      %2081 = vmatprep.subr.bf16.mxu0 0
      %2082 = vmatpush2.bf16.msra.mxu0 0
      %2083 = vmatprep.subr.bf16.mxu0 0
      %2084 = vmatpush2.bf16.msra.mxu0 0
      %2085 = vmatprep.subr.bf16.mxu0 0
      %2086 = vmatpush2.bf16.msra.mxu0 0
      %2087 = vmatprep.mubr.bf16.mxu0 0
      %2088 = vmatmul.mubr.bf16.gmra.mxu0 %v439
      %v2089 = vpop.f32.mrf.mxu0
      %v2090 = vadd.f32 %v2005, %v2089
      %v2091 = vpop.f32.mrf.mxu0
      %v2092 = vpop.f32.mrf.mxu0
      %v2093 = vadd.f32 %v2005, %v2092
      %v2094 = vpop.f32.mrf.mxu0
      %2095 = vdwg.mxu0
      %s2096 = scalar_lea.vmem %s4, 192
      %v2097 = vld [vmem:[%s2096] sm:$0xf]
      %v2098 = vld [vmem:[%s2096 + $0x4] sm:$0xf]
      %v2099 = vld [vmem:[%s2096 + $0x8] sm:$0xf]
      %v2100 = vld [vmem:[%s2096 + $0xc] sm:$0xf]
      %v2101 = vld [vmem:[%s2096 + $0x10] sm:$0xf]
      %v2102 = vld [vmem:[%s2096 + $0x14] sm:$0xf]
      %v2103 = vld [vmem:[%s2096 + $0x18] sm:$0xf]
      %v2104 = vld [vmem:[%s2096 + $0x1c] sm:$0xf]
      %v2105 = vld [vmem:[%s2096 + $0x20] sm:$0xf]
      %v2106 = vld [vmem:[%s2096 + $0x24] sm:$0xf]
      %v2107 = vld [vmem:[%s2096 + $0x28] sm:$0xf]
      %v2108 = vld [vmem:[%s2096 + $0x2c] sm:$0xf]
      %v2109 = vld [vmem:[%s2096 + $0x30] sm:$0xf]
      %v2110 = vld [vmem:[%s2096 + $0x34] sm:$0xf]
      %v2111 = vld [vmem:[%s2096 + $0x38] sm:$0xf]
      %v2112 = vld [vmem:[%s2096 + $0x3c] sm:$0xf]
      %s2113 = scalar_lea.vmem %s5, 3
      %v2114 = vld [vmem:[%s2113] sm:$0x1]
      %v2116 = vlaneseq
      %v2117 = vshrl.u32 %v2116, 7
      %v2118 = vsub.s32 0, %v2117
      %v2119 = vrot.slane %v2114, %v2118
      %v2137 = vunpack.c.l.b16 %v2097
      %v2138 = vunpack.c.l.b16 %v2098
      %v2139 = vunpack.c.l.b16 %v2099
      %v2140 = vunpack.c.l.b16 %v2100
      %v2141 = vunpack.c.l.b16 %v2101
      %v2142 = vunpack.c.l.b16 %v2102
      %v2143 = vunpack.c.l.b16 %v2103
      %v2144 = vunpack.c.l.b16 %v2104
      %v2145 = vunpack.c.l.b16 %v2105
      %v2146 = vunpack.c.l.b16 %v2106
      %v2147 = vunpack.c.l.b16 %v2107
      %v2148 = vunpack.c.l.b16 %v2108
      %v2149 = vunpack.c.l.b16 %v2109
      %v2150 = vunpack.c.l.b16 %v2110
      %v2151 = vunpack.c.l.b16 %v2111
      %v2152 = vunpack.c.l.b16 %v2112
      %v2153 = vpack.c.b16 %v2138, %v2137
      %v2154 = vpack.c.b16 %v2140, %v2139
      %v2155 = vpack.c.b16 %v2142, %v2141
      %v2156 = vpack.c.b16 %v2144, %v2143
      %v2157 = vpack.c.b16 %v2146, %v2145
      %v2158 = vpack.c.b16 %v2148, %v2147
      %v2159 = vpack.c.b16 %v2150, %v2149
      %v2160 = vpack.c.b16 %v2152, %v2151
      %2169 = vmatprep.subr.bf16.mxu0 0
      %2170 = vmatpush1.bf16.msra.mxu0 %v2160
      %2171 = vmatprep.subr.bf16.mxu0 0
      %2172 = vmatpush1.bf16.msra.mxu0 %v2159
      %2173 = vmatprep.subr.bf16.mxu0 0
      %2174 = vmatpush1.bf16.msra.mxu0 %v2158
      %2175 = vmatprep.subr.bf16.mxu0 0
      %2176 = vmatpush1.bf16.msra.mxu0 %v2157
      %2177 = vmatprep.subr.bf16.mxu0 0
      %2178 = vmatpush1.bf16.msra.mxu0 %v2156
      %2179 = vmatprep.subr.bf16.mxu0 0
      %2180 = vmatpush1.bf16.msra.mxu0 %v2155
      %2181 = vmatprep.subr.bf16.mxu0 0
      %2182 = vmatpush1.bf16.msra.mxu0 %v2154
      %2183 = vmatprep.subr.bf16.mxu0 0
      %2184 = vmatpush1.bf16.msra.mxu0 %v2153
      %2185 = vmatprep.subr.bf16.mxu0 0
      %2186 = vmatpush2.bf16.msra.mxu0 0
      %2187 = vmatprep.subr.bf16.mxu0 0
      %2188 = vmatpush2.bf16.msra.mxu0 0
      %2189 = vmatprep.subr.bf16.mxu0 0
      %2190 = vmatpush2.bf16.msra.mxu0 0
      %2191 = vmatprep.subr.bf16.mxu0 0
      %2192 = vmatpush2.bf16.msra.mxu0 0
      %2193 = vmatprep.subr.bf16.mxu0 0
      %2194 = vmatpush2.bf16.msra.mxu0 0
      %2195 = vmatprep.subr.bf16.mxu0 0
      %2196 = vmatpush2.bf16.msra.mxu0 0
      %2197 = vmatprep.subr.bf16.mxu0 0
      %2198 = vmatpush2.bf16.msra.mxu0 0
      %2199 = vmatprep.subr.bf16.mxu0 0
      %2200 = vmatpush2.bf16.msra.mxu0 0
      %2201 = vmatprep.mubr.bf16.mxu0 0
      %2202 = vmatmul.mubr.bf16.gmra.mxu0 %v440
      %v2203 = vpop.f32.mrf.mxu0
      %v2204 = vadd.f32 %v2119, %v2203
      %v2205 = vpop.f32.mrf.mxu0
      %v2206 = vpop.f32.mrf.mxu0
      %v2207 = vadd.f32 %v2119, %v2206
      %v2208 = vpop.f32.mrf.mxu0
      %2209 = vdwg.mxu0
      %s2210 = scalar_lea.vmem %s6, 192
      %v2211 = vld [vmem:[%s2210] sm:$0xf]
      %v2212 = vld [vmem:[%s2210 + $0x4] sm:$0xf]
      %v2213 = vld [vmem:[%s2210 + $0x8] sm:$0xf]
      %v2214 = vld [vmem:[%s2210 + $0xc] sm:$0xf]
      %v2215 = vld [vmem:[%s2210 + $0x10] sm:$0xf]
      %v2216 = vld [vmem:[%s2210 + $0x14] sm:$0xf]
      %v2217 = vld [vmem:[%s2210 + $0x18] sm:$0xf]
      %v2218 = vld [vmem:[%s2210 + $0x1c] sm:$0xf]
      %v2219 = vld [vmem:[%s2210 + $0x20] sm:$0xf]
      %v2220 = vld [vmem:[%s2210 + $0x24] sm:$0xf]
      %v2221 = vld [vmem:[%s2210 + $0x28] sm:$0xf]
      %v2222 = vld [vmem:[%s2210 + $0x2c] sm:$0xf]
      %v2223 = vld [vmem:[%s2210 + $0x30] sm:$0xf]
      %v2224 = vld [vmem:[%s2210 + $0x34] sm:$0xf]
      %v2225 = vld [vmem:[%s2210 + $0x38] sm:$0xf]
      %v2226 = vld [vmem:[%s2210 + $0x3c] sm:$0xf]
      %s2227 = scalar_lea.vmem %s7, 3
      %v2228 = vld [vmem:[%s2227] sm:$0x1]
      %v2230 = vlaneseq
      %v2231 = vshrl.u32 %v2230, 7
      %v2232 = vsub.s32 0, %v2231
      %v2233 = vrot.slane %v2228, %v2232
      %v2251 = vunpack.c.l.b16 %v2211
      %v2252 = vunpack.c.l.b16 %v2212
      %v2253 = vunpack.c.l.b16 %v2213
      %v2254 = vunpack.c.l.b16 %v2214
      %v2255 = vunpack.c.l.b16 %v2215
      %v2256 = vunpack.c.l.b16 %v2216
      %v2257 = vunpack.c.l.b16 %v2217
      %v2258 = vunpack.c.l.b16 %v2218
      %v2259 = vunpack.c.l.b16 %v2219
      %v2260 = vunpack.c.l.b16 %v2220
      %v2261 = vunpack.c.l.b16 %v2221
      %v2262 = vunpack.c.l.b16 %v2222
      %v2263 = vunpack.c.l.b16 %v2223
      %v2264 = vunpack.c.l.b16 %v2224
      %v2265 = vunpack.c.l.b16 %v2225
      %v2266 = vunpack.c.l.b16 %v2226
      %v2267 = vpack.c.b16 %v2252, %v2251
      %v2268 = vpack.c.b16 %v2254, %v2253
      %v2269 = vpack.c.b16 %v2256, %v2255
      %v2270 = vpack.c.b16 %v2258, %v2257
      %v2271 = vpack.c.b16 %v2260, %v2259
      %v2272 = vpack.c.b16 %v2262, %v2261
      %v2273 = vpack.c.b16 %v2264, %v2263
      %v2274 = vpack.c.b16 %v2266, %v2265
      %2283 = vmatprep.subr.bf16.mxu0 0
      %2284 = vmatpush1.bf16.msra.mxu0 %v2274
      %2285 = vmatprep.subr.bf16.mxu0 0
      %2286 = vmatpush1.bf16.msra.mxu0 %v2273
      %2287 = vmatprep.subr.bf16.mxu0 0
      %2288 = vmatpush1.bf16.msra.mxu0 %v2272
      %2289 = vmatprep.subr.bf16.mxu0 0
      %2290 = vmatpush1.bf16.msra.mxu0 %v2271
      %2291 = vmatprep.subr.bf16.mxu0 0
      %2292 = vmatpush1.bf16.msra.mxu0 %v2270
      %2293 = vmatprep.subr.bf16.mxu0 0
      %2294 = vmatpush1.bf16.msra.mxu0 %v2269
      %2295 = vmatprep.subr.bf16.mxu0 0
      %2296 = vmatpush1.bf16.msra.mxu0 %v2268
      %2297 = vmatprep.subr.bf16.mxu0 0
      %2298 = vmatpush1.bf16.msra.mxu0 %v2267
      %2299 = vmatprep.subr.bf16.mxu0 0
      %2300 = vmatpush2.bf16.msra.mxu0 0
      %2301 = vmatprep.subr.bf16.mxu0 0
      %2302 = vmatpush2.bf16.msra.mxu0 0
      %2303 = vmatprep.subr.bf16.mxu0 0
      %2304 = vmatpush2.bf16.msra.mxu0 0
      %2305 = vmatprep.subr.bf16.mxu0 0
      %2306 = vmatpush2.bf16.msra.mxu0 0
      %2307 = vmatprep.subr.bf16.mxu0 0
      %2308 = vmatpush2.bf16.msra.mxu0 0
      %2309 = vmatprep.subr.bf16.mxu0 0
      %2310 = vmatpush2.bf16.msra.mxu0 0
      %2311 = vmatprep.subr.bf16.mxu0 0
      %2312 = vmatpush2.bf16.msra.mxu0 0
      %2313 = vmatprep.subr.bf16.mxu0 0
      %2314 = vmatpush2.bf16.msra.mxu0 0
      %2315 = vmatprep.mubr.bf16.mxu0 0
      %2316 = vmatmul.mubr.bf16.gmra.mxu0 %v440
      %v2317 = vpop.f32.mrf.mxu0
      %v2318 = vadd.f32 %v2233, %v2317
      %v2319 = vpop.f32.mrf.mxu0
      %v2320 = vpop.f32.mrf.mxu0
      %v2321 = vadd.f32 %v2233, %v2320
      %v2322 = vpop.f32.mrf.mxu0
      %2323 = vdwg.mxu0
      %v2324 = vpack.c.bf16 %v2093, %v2090
      %v2325 = vpack.c.bf16 %v2207, %v2204
      %v2327 = vsel %vm779, %v2324, 0
      %v2330 = vsel %vm779, %v2325, 0
      %2332 = vmatprep.subr.bf16.mxu0 0
      %2333 = vmatpush1.bf16.xpose.msra.mxu0 0
      %2334 = vmatprep.subr.bf16.mxu0 0
      %2335 = vmatpush1.bf16.xpose.msra.mxu0 0
      %2336 = vmatprep.subr.bf16.mxu0 0
      %2337 = vmatpush1.bf16.xpose.msra.mxu0 0
      %2338 = vmatprep.subr.bf16.mxu0 0
      %2339 = vmatpush1.bf16.xpose.msra.mxu0 0
      %2340 = vmatprep.subr.bf16.mxu0 0
      %2341 = vmatpush1.bf16.xpose.msra.mxu0 0
      %2342 = vmatprep.subr.bf16.mxu0 0
      %2343 = vmatpush1.bf16.xpose.msra.mxu0 0
      %2344 = vmatprep.subr.bf16.mxu0 0
      %2345 = vmatpush1.bf16.xpose.msra.mxu0 0
      %2346 = vmatprep.subr.bf16.mxu0 0
      %2347 = vmatpush1.bf16.xpose.msra.mxu0 %v2330
      %2348 = vmatprep.subr.bf16.mxu0 0
      %2349 = vmatpush2.bf16.xpose.msra.mxu0 0
      %2350 = vmatprep.subr.bf16.mxu0 0
      %2351 = vmatpush2.bf16.xpose.msra.mxu0 0
      %2352 = vmatprep.subr.bf16.mxu0 0
      %2353 = vmatpush2.bf16.xpose.msra.mxu0 0
      %2354 = vmatprep.subr.bf16.mxu0 0
      %2355 = vmatpush2.bf16.xpose.msra.mxu0 0
      %2356 = vmatprep.subr.bf16.mxu0 0
      %2357 = vmatpush2.bf16.xpose.msra.mxu0 0
      %2358 = vmatprep.subr.bf16.mxu0 0
      %2359 = vmatpush2.bf16.xpose.msra.mxu0 0
      %2360 = vmatprep.subr.bf16.mxu0 0
      %2361 = vmatpush2.bf16.xpose.msra.mxu0 0
      %2362 = vmatprep.subr.bf16.mxu0 0
      %2363 = vmatpush2.bf16.xpose.msra.mxu0 0
      %2364 = vmatprep.mubr.bf16.mxu0 0
      %2365 = vmatmul.mubr.bf16.gmra.mxu0 %v2327
      %v2366 = vpop.f32.mrf.mxu0
      %v2367 = vadd.f32 0.0, %v2366
      %v2368 = vpop.f32.mrf.mxu0
      %v2369 = vpop.f32.mrf.mxu0
      %v2370 = vadd.f32 0.0, %v2369
      %v2371 = vpop.f32.mrf.mxu0
      %2372 = vdwg.mxu0
      %v2373 = vmul.f32 %v2367, 0.25
      %v2374 = vmul.f32 %v2370, 0.25
      %v2375 = vsel %vm779, %v2373, -inf
      %2376 = vmax.xlane.f32.xlu0 %v2375
      %v2377 = vpop.xlane.xlu0 %2376
      %v2378 = vsel %vm779, %v2374, -inf
      %2379 = vmax.xlane.f32.xlu0 %v2378
      %v2380 = vpop.xlane.xlu0 %2379
      %v2381 = vsub.f32 %v2373, %v2377
      %v2382 = vsub.f32 %v2374, %v2380
      %v2383 = vmul.f32 %v2381, 1.442695
      %v2384 = vpow.pop %v2383
      %v2385 = vmul.f32 %v2382, 1.442695
      %v2386 = vpow.pop %v2385
      %v2387 = vsel %vm779, %v2384, 0.0
      %2388 = vadd.xlane.f32.xlu0 %v2387
      %v2389 = vpop.xlane.xlu0 %2388
      %v2390 = vsel %vm779, %v2386, 0.0
      %2391 = vadd.xlane.f32.xlu0 %v2390
      %v2392 = vpop.xlane.xlu0 %2391
      %v2393 = vrcp.pop %v2389
      %v2394 = vmul.f32 %v2384, %v2393
      %v2395 = vrcp.pop %v2392
      %v2396 = vmul.f32 %v2386, %v2395
      %v2397 = vpack.c.bf16 %v2396, %v2394
      %v2398 = vpack.c.bf16 %v2321, %v2318
      %v2400 = vsel %vm779, %v2397, 0
      %2402 = vmatprep.subr.bf16.mxu0 0
      %2403 = vmatpush1.bf16.msra.mxu0 0
      %2404 = vmatprep.subr.bf16.mxu0 0
      %2405 = vmatpush1.bf16.msra.mxu0 0
      %2406 = vmatprep.subr.bf16.mxu0 0
      %2407 = vmatpush1.bf16.msra.mxu0 0
      %2408 = vmatprep.subr.bf16.mxu0 0
      %2409 = vmatpush1.bf16.msra.mxu0 0
      %2410 = vmatprep.subr.bf16.mxu0 0
      %2411 = vmatpush1.bf16.msra.mxu0 0
      %2412 = vmatprep.subr.bf16.mxu0 0
      %2413 = vmatpush1.bf16.msra.mxu0 0
      %2414 = vmatprep.subr.bf16.mxu0 0
      %2415 = vmatpush1.bf16.msra.mxu0 0
      %2416 = vmatprep.subr.bf16.mxu0 0
      %2417 = vmatpush1.bf16.msra.mxu0 %v2398
      %2418 = vmatprep.subr.bf16.mxu0 0
      %2419 = vmatpush2.bf16.msra.mxu0 0
      %2420 = vmatprep.subr.bf16.mxu0 0
      %2421 = vmatpush2.bf16.msra.mxu0 0
      %2422 = vmatprep.subr.bf16.mxu0 0
      %2423 = vmatpush2.bf16.msra.mxu0 0
      %2424 = vmatprep.subr.bf16.mxu0 0
      %2425 = vmatpush2.bf16.msra.mxu0 0
      %2426 = vmatprep.subr.bf16.mxu0 0
      %2427 = vmatpush2.bf16.msra.mxu0 0
      %2428 = vmatprep.subr.bf16.mxu0 0
      %2429 = vmatpush2.bf16.msra.mxu0 0
      %2430 = vmatprep.subr.bf16.mxu0 0
      %2431 = vmatpush2.bf16.msra.mxu0 0
      %2432 = vmatprep.subr.bf16.mxu0 0
      %2433 = vmatpush2.bf16.msra.mxu0 0
      %2434 = vmatprep.mubr.bf16.mxu0 0
      %2435 = vmatmul.mubr.bf16.gmra.mxu0 %v2400
      %v2436 = vpop.f32.mrf.mxu0
      %v2437 = vadd.f32 0.0, %v2436
      %v2438 = vpop.f32.mrf.mxu0
      %v2439 = vpop.f32.mrf.mxu0
      %v2440 = vadd.f32 0.0, %v2439
      %v2441 = vpop.f32.mrf.mxu0
      %2442 = vdwg.mxu0
      %v2443 = vpack.c.bf16 %v2440, %v2437
      %s2444 = scalar_lea.vmem %s8, 24
      %v2445 = vld [vmem:[%s2444] sm:$0xf]
      %v2446 = vld [vmem:[%s2444 + $0x4] sm:$0xf]
      %v2449 = vunpack.c.l.b16 %v2445
      %v2450 = vunpack.c.l.b16 %v2446
      %v2451 = vpack.c.b16 %v2450, %v2449
      %v2454 = vsel %vm779, %v2443, 0
      %2456 = vmatprep.subr.bf16.mxu0 0
      %2457 = vmatpush1.bf16.msra.mxu0 0
      %2458 = vmatprep.subr.bf16.mxu0 0
      %2459 = vmatpush1.bf16.msra.mxu0 0
      %2460 = vmatprep.subr.bf16.mxu0 0
      %2461 = vmatpush1.bf16.msra.mxu0 0
      %2462 = vmatprep.subr.bf16.mxu0 0
      %2463 = vmatpush1.bf16.msra.mxu0 0
      %2464 = vmatprep.subr.bf16.mxu0 0
      %2465 = vmatpush1.bf16.msra.mxu0 0
      %2466 = vmatprep.subr.bf16.mxu0 0
      %2467 = vmatpush1.bf16.msra.mxu0 0
      %2468 = vmatprep.subr.bf16.mxu0 0
      %2469 = vmatpush1.bf16.msra.mxu0 0
      %2470 = vmatprep.subr.bf16.mxu0 0
      %2471 = vmatpush1.bf16.msra.mxu0 %v2451
      %2472 = vmatprep.subr.bf16.mxu0 0
      %2473 = vmatpush2.bf16.msra.mxu0 0
      %2474 = vmatprep.subr.bf16.mxu0 0
      %2475 = vmatpush2.bf16.msra.mxu0 0
      %2476 = vmatprep.subr.bf16.mxu0 0
      %2477 = vmatpush2.bf16.msra.mxu0 0
      %2478 = vmatprep.subr.bf16.mxu0 0
      %2479 = vmatpush2.bf16.msra.mxu0 0
      %2480 = vmatprep.subr.bf16.mxu0 0
      %2481 = vmatpush2.bf16.msra.mxu0 0
      %2482 = vmatprep.subr.bf16.mxu0 0
      %2483 = vmatpush2.bf16.msra.mxu0 0
      %2484 = vmatprep.subr.bf16.mxu0 0
      %2485 = vmatpush2.bf16.msra.mxu0 0
      %2486 = vmatprep.subr.bf16.mxu0 0
      %2487 = vmatpush2.bf16.msra.mxu0 0
      %2488 = vmatprep.mubr.bf16.mxu0 0
      %2489 = vmatmul.mubr.bf16.gmra.mxu0 %v2454
      %v2490 = vpop.f32.mrf.mxu0
      %v2491 = vadd.f32 0.0, %v2490
      %v2492 = vpop.f32.mrf.mxu0
      %v2493 = vpop.f32.mrf.mxu0
      %v2494 = vadd.f32 0.0, %v2493
      %v2495 = vpop.f32.mrf.mxu0
      %2496 = vdwg.mxu0
      %v2497 = vadd.f32 %v1980, %v2491
      %v2498 = vadd.f32 %v1981, %v2494
      %s2499 = scalar_lea.vmem %s2, 256
      %v2500 = vld [vmem:[%s2499] sm:$0xf]
      %v2501 = vld [vmem:[%s2499 + $0x4] sm:$0xf]
      %v2502 = vld [vmem:[%s2499 + $0x8] sm:$0xf]
      %v2503 = vld [vmem:[%s2499 + $0xc] sm:$0xf]
      %v2504 = vld [vmem:[%s2499 + $0x10] sm:$0xf]
      %v2505 = vld [vmem:[%s2499 + $0x14] sm:$0xf]
      %v2506 = vld [vmem:[%s2499 + $0x18] sm:$0xf]
      %v2507 = vld [vmem:[%s2499 + $0x1c] sm:$0xf]
      %v2508 = vld [vmem:[%s2499 + $0x20] sm:$0xf]
      %v2509 = vld [vmem:[%s2499 + $0x24] sm:$0xf]
      %v2510 = vld [vmem:[%s2499 + $0x28] sm:$0xf]
      %v2511 = vld [vmem:[%s2499 + $0x2c] sm:$0xf]
      %v2512 = vld [vmem:[%s2499 + $0x30] sm:$0xf]
      %v2513 = vld [vmem:[%s2499 + $0x34] sm:$0xf]
      %v2514 = vld [vmem:[%s2499 + $0x38] sm:$0xf]
      %v2515 = vld [vmem:[%s2499 + $0x3c] sm:$0xf]
      %s2516 = scalar_lea.vmem %s3, 4
      %v2517 = vld [vmem:[%s2516] sm:$0x1]
      %v2519 = vlaneseq
      %v2520 = vshrl.u32 %v2519, 7
      %v2521 = vsub.s32 0, %v2520
      %v2522 = vrot.slane %v2517, %v2521
      %v2540 = vunpack.c.l.b16 %v2500
      %v2541 = vunpack.c.l.b16 %v2501
      %v2542 = vunpack.c.l.b16 %v2502
      %v2543 = vunpack.c.l.b16 %v2503
      %v2544 = vunpack.c.l.b16 %v2504
      %v2545 = vunpack.c.l.b16 %v2505
      %v2546 = vunpack.c.l.b16 %v2506
      %v2547 = vunpack.c.l.b16 %v2507
      %v2548 = vunpack.c.l.b16 %v2508
      %v2549 = vunpack.c.l.b16 %v2509
      %v2550 = vunpack.c.l.b16 %v2510
      %v2551 = vunpack.c.l.b16 %v2511
      %v2552 = vunpack.c.l.b16 %v2512
      %v2553 = vunpack.c.l.b16 %v2513
      %v2554 = vunpack.c.l.b16 %v2514
      %v2555 = vunpack.c.l.b16 %v2515
      %v2556 = vpack.c.b16 %v2541, %v2540
      %v2557 = vpack.c.b16 %v2543, %v2542
      %v2558 = vpack.c.b16 %v2545, %v2544
      %v2559 = vpack.c.b16 %v2547, %v2546
      %v2560 = vpack.c.b16 %v2549, %v2548
      %v2561 = vpack.c.b16 %v2551, %v2550
      %v2562 = vpack.c.b16 %v2553, %v2552
      %v2563 = vpack.c.b16 %v2555, %v2554
      %2572 = vmatprep.subr.bf16.mxu0 0
      %2573 = vmatpush1.bf16.msra.mxu0 %v2563
      %2574 = vmatprep.subr.bf16.mxu0 0
      %2575 = vmatpush1.bf16.msra.mxu0 %v2562
      %2576 = vmatprep.subr.bf16.mxu0 0
      %2577 = vmatpush1.bf16.msra.mxu0 %v2561
      %2578 = vmatprep.subr.bf16.mxu0 0
      %2579 = vmatpush1.bf16.msra.mxu0 %v2560
      %2580 = vmatprep.subr.bf16.mxu0 0
      %2581 = vmatpush1.bf16.msra.mxu0 %v2559
      %2582 = vmatprep.subr.bf16.mxu0 0
      %2583 = vmatpush1.bf16.msra.mxu0 %v2558
      %2584 = vmatprep.subr.bf16.mxu0 0
      %2585 = vmatpush1.bf16.msra.mxu0 %v2557
      %2586 = vmatprep.subr.bf16.mxu0 0
      %2587 = vmatpush1.bf16.msra.mxu0 %v2556
      %2588 = vmatprep.subr.bf16.mxu0 0
      %2589 = vmatpush2.bf16.msra.mxu0 0
      %2590 = vmatprep.subr.bf16.mxu0 0
      %2591 = vmatpush2.bf16.msra.mxu0 0
      %2592 = vmatprep.subr.bf16.mxu0 0
      %2593 = vmatpush2.bf16.msra.mxu0 0
      %2594 = vmatprep.subr.bf16.mxu0 0
      %2595 = vmatpush2.bf16.msra.mxu0 0
      %2596 = vmatprep.subr.bf16.mxu0 0
      %2597 = vmatpush2.bf16.msra.mxu0 0
      %2598 = vmatprep.subr.bf16.mxu0 0
      %2599 = vmatpush2.bf16.msra.mxu0 0
      %2600 = vmatprep.subr.bf16.mxu0 0
      %2601 = vmatpush2.bf16.msra.mxu0 0
      %2602 = vmatprep.subr.bf16.mxu0 0
      %2603 = vmatpush2.bf16.msra.mxu0 0
      %2604 = vmatprep.mubr.bf16.mxu0 0
      %2605 = vmatmul.mubr.bf16.gmra.mxu0 %v439
      %v2606 = vpop.f32.mrf.mxu0
      %v2607 = vadd.f32 %v2522, %v2606
      %v2608 = vpop.f32.mrf.mxu0
      %v2609 = vpop.f32.mrf.mxu0
      %v2610 = vadd.f32 %v2522, %v2609
      %v2611 = vpop.f32.mrf.mxu0
      %2612 = vdwg.mxu0
      %s2613 = scalar_lea.vmem %s4, 256
      %v2614 = vld [vmem:[%s2613] sm:$0xf]
      %v2615 = vld [vmem:[%s2613 + $0x4] sm:$0xf]
      %v2616 = vld [vmem:[%s2613 + $0x8] sm:$0xf]
      %v2617 = vld [vmem:[%s2613 + $0xc] sm:$0xf]
      %v2618 = vld [vmem:[%s2613 + $0x10] sm:$0xf]
      %v2619 = vld [vmem:[%s2613 + $0x14] sm:$0xf]
      %v2620 = vld [vmem:[%s2613 + $0x18] sm:$0xf]
      %v2621 = vld [vmem:[%s2613 + $0x1c] sm:$0xf]
      %v2622 = vld [vmem:[%s2613 + $0x20] sm:$0xf]
      %v2623 = vld [vmem:[%s2613 + $0x24] sm:$0xf]
      %v2624 = vld [vmem:[%s2613 + $0x28] sm:$0xf]
      %v2625 = vld [vmem:[%s2613 + $0x2c] sm:$0xf]
      %v2626 = vld [vmem:[%s2613 + $0x30] sm:$0xf]
      %v2627 = vld [vmem:[%s2613 + $0x34] sm:$0xf]
      %v2628 = vld [vmem:[%s2613 + $0x38] sm:$0xf]
      %v2629 = vld [vmem:[%s2613 + $0x3c] sm:$0xf]
      %s2630 = scalar_lea.vmem %s5, 4
      %v2631 = vld [vmem:[%s2630] sm:$0x1]
      %v2633 = vlaneseq
      %v2634 = vshrl.u32 %v2633, 7
      %v2635 = vsub.s32 0, %v2634
      %v2636 = vrot.slane %v2631, %v2635
      %v2654 = vunpack.c.l.b16 %v2614
      %v2655 = vunpack.c.l.b16 %v2615
      %v2656 = vunpack.c.l.b16 %v2616
      %v2657 = vunpack.c.l.b16 %v2617
      %v2658 = vunpack.c.l.b16 %v2618
      %v2659 = vunpack.c.l.b16 %v2619
      %v2660 = vunpack.c.l.b16 %v2620
      %v2661 = vunpack.c.l.b16 %v2621
      %v2662 = vunpack.c.l.b16 %v2622
      %v2663 = vunpack.c.l.b16 %v2623
      %v2664 = vunpack.c.l.b16 %v2624
      %v2665 = vunpack.c.l.b16 %v2625
      %v2666 = vunpack.c.l.b16 %v2626
      %v2667 = vunpack.c.l.b16 %v2627
      %v2668 = vunpack.c.l.b16 %v2628
      %v2669 = vunpack.c.l.b16 %v2629
      %v2670 = vpack.c.b16 %v2655, %v2654
      %v2671 = vpack.c.b16 %v2657, %v2656
      %v2672 = vpack.c.b16 %v2659, %v2658
      %v2673 = vpack.c.b16 %v2661, %v2660
      %v2674 = vpack.c.b16 %v2663, %v2662
      %v2675 = vpack.c.b16 %v2665, %v2664
      %v2676 = vpack.c.b16 %v2667, %v2666
      %v2677 = vpack.c.b16 %v2669, %v2668
      %2686 = vmatprep.subr.bf16.mxu0 0
      %2687 = vmatpush1.bf16.msra.mxu0 %v2677
      %2688 = vmatprep.subr.bf16.mxu0 0
      %2689 = vmatpush1.bf16.msra.mxu0 %v2676
      %2690 = vmatprep.subr.bf16.mxu0 0
      %2691 = vmatpush1.bf16.msra.mxu0 %v2675
      %2692 = vmatprep.subr.bf16.mxu0 0
      %2693 = vmatpush1.bf16.msra.mxu0 %v2674
      %2694 = vmatprep.subr.bf16.mxu0 0
      %2695 = vmatpush1.bf16.msra.mxu0 %v2673
      %2696 = vmatprep.subr.bf16.mxu0 0
      %2697 = vmatpush1.bf16.msra.mxu0 %v2672
      %2698 = vmatprep.subr.bf16.mxu0 0
      %2699 = vmatpush1.bf16.msra.mxu0 %v2671
      %2700 = vmatprep.subr.bf16.mxu0 0
      %2701 = vmatpush1.bf16.msra.mxu0 %v2670
      %2702 = vmatprep.subr.bf16.mxu0 0
      %2703 = vmatpush2.bf16.msra.mxu0 0
      %2704 = vmatprep.subr.bf16.mxu0 0
      %2705 = vmatpush2.bf16.msra.mxu0 0
      %2706 = vmatprep.subr.bf16.mxu0 0
      %2707 = vmatpush2.bf16.msra.mxu0 0
      %2708 = vmatprep.subr.bf16.mxu0 0
      %2709 = vmatpush2.bf16.msra.mxu0 0
      %2710 = vmatprep.subr.bf16.mxu0 0
      %2711 = vmatpush2.bf16.msra.mxu0 0
      %2712 = vmatprep.subr.bf16.mxu0 0
      %2713 = vmatpush2.bf16.msra.mxu0 0
      %2714 = vmatprep.subr.bf16.mxu0 0
      %2715 = vmatpush2.bf16.msra.mxu0 0
      %2716 = vmatprep.subr.bf16.mxu0 0
      %2717 = vmatpush2.bf16.msra.mxu0 0
      %2718 = vmatprep.mubr.bf16.mxu0 0
      %2719 = vmatmul.mubr.bf16.gmra.mxu0 %v440
      %v2720 = vpop.f32.mrf.mxu0
      %v2721 = vadd.f32 %v2636, %v2720
      %v2722 = vpop.f32.mrf.mxu0
      %v2723 = vpop.f32.mrf.mxu0
      %v2724 = vadd.f32 %v2636, %v2723
      %v2725 = vpop.f32.mrf.mxu0
      %2726 = vdwg.mxu0
      %s2727 = scalar_lea.vmem %s6, 256
      %v2728 = vld [vmem:[%s2727] sm:$0xf]
      %v2729 = vld [vmem:[%s2727 + $0x4] sm:$0xf]
      %v2730 = vld [vmem:[%s2727 + $0x8] sm:$0xf]
      %v2731 = vld [vmem:[%s2727 + $0xc] sm:$0xf]
      %v2732 = vld [vmem:[%s2727 + $0x10] sm:$0xf]
      %v2733 = vld [vmem:[%s2727 + $0x14] sm:$0xf]
      %v2734 = vld [vmem:[%s2727 + $0x18] sm:$0xf]
      %v2735 = vld [vmem:[%s2727 + $0x1c] sm:$0xf]
      %v2736 = vld [vmem:[%s2727 + $0x20] sm:$0xf]
      %v2737 = vld [vmem:[%s2727 + $0x24] sm:$0xf]
      %v2738 = vld [vmem:[%s2727 + $0x28] sm:$0xf]
      %v2739 = vld [vmem:[%s2727 + $0x2c] sm:$0xf]
      %v2740 = vld [vmem:[%s2727 + $0x30] sm:$0xf]
      %v2741 = vld [vmem:[%s2727 + $0x34] sm:$0xf]
      %v2742 = vld [vmem:[%s2727 + $0x38] sm:$0xf]
      %v2743 = vld [vmem:[%s2727 + $0x3c] sm:$0xf]
      %s2744 = scalar_lea.vmem %s7, 4
      %v2745 = vld [vmem:[%s2744] sm:$0x1]
      %v2747 = vlaneseq
      %v2748 = vshrl.u32 %v2747, 7
      %v2749 = vsub.s32 0, %v2748
      %v2750 = vrot.slane %v2745, %v2749
      %v2768 = vunpack.c.l.b16 %v2728
      %v2769 = vunpack.c.l.b16 %v2729
      %v2770 = vunpack.c.l.b16 %v2730
      %v2771 = vunpack.c.l.b16 %v2731
      %v2772 = vunpack.c.l.b16 %v2732
      %v2773 = vunpack.c.l.b16 %v2733
      %v2774 = vunpack.c.l.b16 %v2734
      %v2775 = vunpack.c.l.b16 %v2735
      %v2776 = vunpack.c.l.b16 %v2736
      %v2777 = vunpack.c.l.b16 %v2737
      %v2778 = vunpack.c.l.b16 %v2738
      %v2779 = vunpack.c.l.b16 %v2739
      %v2780 = vunpack.c.l.b16 %v2740
      %v2781 = vunpack.c.l.b16 %v2741
      %v2782 = vunpack.c.l.b16 %v2742
      %v2783 = vunpack.c.l.b16 %v2743
      %v2784 = vpack.c.b16 %v2769, %v2768
      %v2785 = vpack.c.b16 %v2771, %v2770
      %v2786 = vpack.c.b16 %v2773, %v2772
      %v2787 = vpack.c.b16 %v2775, %v2774
      %v2788 = vpack.c.b16 %v2777, %v2776
      %v2789 = vpack.c.b16 %v2779, %v2778
      %v2790 = vpack.c.b16 %v2781, %v2780
      %v2791 = vpack.c.b16 %v2783, %v2782
      %2800 = vmatprep.subr.bf16.mxu0 0
      %2801 = vmatpush1.bf16.msra.mxu0 %v2791
      %2802 = vmatprep.subr.bf16.mxu0 0
      %2803 = vmatpush1.bf16.msra.mxu0 %v2790
      %2804 = vmatprep.subr.bf16.mxu0 0
      %2805 = vmatpush1.bf16.msra.mxu0 %v2789
      %2806 = vmatprep.subr.bf16.mxu0 0
      %2807 = vmatpush1.bf16.msra.mxu0 %v2788
      %2808 = vmatprep.subr.bf16.mxu0 0
      %2809 = vmatpush1.bf16.msra.mxu0 %v2787
      %2810 = vmatprep.subr.bf16.mxu0 0
      %2811 = vmatpush1.bf16.msra.mxu0 %v2786
      %2812 = vmatprep.subr.bf16.mxu0 0
      %2813 = vmatpush1.bf16.msra.mxu0 %v2785
      %2814 = vmatprep.subr.bf16.mxu0 0
      %2815 = vmatpush1.bf16.msra.mxu0 %v2784
      %2816 = vmatprep.subr.bf16.mxu0 0
      %2817 = vmatpush2.bf16.msra.mxu0 0
      %2818 = vmatprep.subr.bf16.mxu0 0
      %2819 = vmatpush2.bf16.msra.mxu0 0
      %2820 = vmatprep.subr.bf16.mxu0 0
      %2821 = vmatpush2.bf16.msra.mxu0 0
      %2822 = vmatprep.subr.bf16.mxu0 0
      %2823 = vmatpush2.bf16.msra.mxu0 0
      %2824 = vmatprep.subr.bf16.mxu0 0
      %2825 = vmatpush2.bf16.msra.mxu0 0
      %2826 = vmatprep.subr.bf16.mxu0 0
      %2827 = vmatpush2.bf16.msra.mxu0 0
      %2828 = vmatprep.subr.bf16.mxu0 0
      %2829 = vmatpush2.bf16.msra.mxu0 0
      %2830 = vmatprep.subr.bf16.mxu0 0
      %2831 = vmatpush2.bf16.msra.mxu0 0
      %2832 = vmatprep.mubr.bf16.mxu0 0
      %2833 = vmatmul.mubr.bf16.gmra.mxu0 %v440
      %v2834 = vpop.f32.mrf.mxu0
      %v2835 = vadd.f32 %v2750, %v2834
      %v2836 = vpop.f32.mrf.mxu0
      %v2837 = vpop.f32.mrf.mxu0
      %v2838 = vadd.f32 %v2750, %v2837
      %v2839 = vpop.f32.mrf.mxu0
      %2840 = vdwg.mxu0
      %v2841 = vpack.c.bf16 %v2610, %v2607
      %v2842 = vpack.c.bf16 %v2724, %v2721
      %v2844 = vsel %vm779, %v2841, 0
      %v2847 = vsel %vm779, %v2842, 0
      %2849 = vmatprep.subr.bf16.mxu0 0
      %2850 = vmatpush1.bf16.xpose.msra.mxu0 0
      %2851 = vmatprep.subr.bf16.mxu0 0
      %2852 = vmatpush1.bf16.xpose.msra.mxu0 0
      %2853 = vmatprep.subr.bf16.mxu0 0
      %2854 = vmatpush1.bf16.xpose.msra.mxu0 0
      %2855 = vmatprep.subr.bf16.mxu0 0
      %2856 = vmatpush1.bf16.xpose.msra.mxu0 0
      %2857 = vmatprep.subr.bf16.mxu0 0
      %2858 = vmatpush1.bf16.xpose.msra.mxu0 0
      %2859 = vmatprep.subr.bf16.mxu0 0
      %2860 = vmatpush1.bf16.xpose.msra.mxu0 0
      %2861 = vmatprep.subr.bf16.mxu0 0
      %2862 = vmatpush1.bf16.xpose.msra.mxu0 0
      %2863 = vmatprep.subr.bf16.mxu0 0
      %2864 = vmatpush1.bf16.xpose.msra.mxu0 %v2847
      %2865 = vmatprep.subr.bf16.mxu0 0
      %2866 = vmatpush2.bf16.xpose.msra.mxu0 0
      %2867 = vmatprep.subr.bf16.mxu0 0
      %2868 = vmatpush2.bf16.xpose.msra.mxu0 0
      %2869 = vmatprep.subr.bf16.mxu0 0
      %2870 = vmatpush2.bf16.xpose.msra.mxu0 0
      %2871 = vmatprep.subr.bf16.mxu0 0
      %2872 = vmatpush2.bf16.xpose.msra.mxu0 0
      %2873 = vmatprep.subr.bf16.mxu0 0
      %2874 = vmatpush2.bf16.xpose.msra.mxu0 0
      %2875 = vmatprep.subr.bf16.mxu0 0
      %2876 = vmatpush2.bf16.xpose.msra.mxu0 0
      %2877 = vmatprep.subr.bf16.mxu0 0
      %2878 = vmatpush2.bf16.xpose.msra.mxu0 0
      %2879 = vmatprep.subr.bf16.mxu0 0
      %2880 = vmatpush2.bf16.xpose.msra.mxu0 0
      %2881 = vmatprep.mubr.bf16.mxu0 0
      %2882 = vmatmul.mubr.bf16.gmra.mxu0 %v2844
      %v2883 = vpop.f32.mrf.mxu0
      %v2884 = vadd.f32 0.0, %v2883
      %v2885 = vpop.f32.mrf.mxu0
      %v2886 = vpop.f32.mrf.mxu0
      %v2887 = vadd.f32 0.0, %v2886
      %v2888 = vpop.f32.mrf.mxu0
      %2889 = vdwg.mxu0
      %v2890 = vmul.f32 %v2884, 0.25
      %v2891 = vmul.f32 %v2887, 0.25
      %v2892 = vsel %vm779, %v2890, -inf
      %2893 = vmax.xlane.f32.xlu0 %v2892
      %v2894 = vpop.xlane.xlu0 %2893
      %v2895 = vsel %vm779, %v2891, -inf
      %2896 = vmax.xlane.f32.xlu0 %v2895
      %v2897 = vpop.xlane.xlu0 %2896
      %v2898 = vsub.f32 %v2890, %v2894
      %v2899 = vsub.f32 %v2891, %v2897
      %v2900 = vmul.f32 %v2898, 1.442695
      %v2901 = vpow.pop %v2900
      %v2902 = vmul.f32 %v2899, 1.442695
      %v2903 = vpow.pop %v2902
      %v2904 = vsel %vm779, %v2901, 0.0
      %2905 = vadd.xlane.f32.xlu0 %v2904
      %v2906 = vpop.xlane.xlu0 %2905
      %v2907 = vsel %vm779, %v2903, 0.0
      %2908 = vadd.xlane.f32.xlu0 %v2907
      %v2909 = vpop.xlane.xlu0 %2908
      %v2910 = vrcp.pop %v2906
      %v2911 = vmul.f32 %v2901, %v2910
      %v2912 = vrcp.pop %v2909
      %v2913 = vmul.f32 %v2903, %v2912
      %v2914 = vpack.c.bf16 %v2913, %v2911
      %v2915 = vpack.c.bf16 %v2838, %v2835
      %v2917 = vsel %vm779, %v2914, 0
      %2919 = vmatprep.subr.bf16.mxu0 0
      %2920 = vmatpush1.bf16.msra.mxu0 0
      %2921 = vmatprep.subr.bf16.mxu0 0
      %2922 = vmatpush1.bf16.msra.mxu0 0
      %2923 = vmatprep.subr.bf16.mxu0 0
      %2924 = vmatpush1.bf16.msra.mxu0 0
      %2925 = vmatprep.subr.bf16.mxu0 0
      %2926 = vmatpush1.bf16.msra.mxu0 0
      %2927 = vmatprep.subr.bf16.mxu0 0
      %2928 = vmatpush1.bf16.msra.mxu0 0
      %2929 = vmatprep.subr.bf16.mxu0 0
      %2930 = vmatpush1.bf16.msra.mxu0 0
      %2931 = vmatprep.subr.bf16.mxu0 0
      %2932 = vmatpush1.bf16.msra.mxu0 0
      %2933 = vmatprep.subr.bf16.mxu0 0
      %2934 = vmatpush1.bf16.msra.mxu0 %v2915
      %2935 = vmatprep.subr.bf16.mxu0 0
      %2936 = vmatpush2.bf16.msra.mxu0 0
      %2937 = vmatprep.subr.bf16.mxu0 0
      %2938 = vmatpush2.bf16.msra.mxu0 0
      %2939 = vmatprep.subr.bf16.mxu0 0
      %2940 = vmatpush2.bf16.msra.mxu0 0
      %2941 = vmatprep.subr.bf16.mxu0 0
      %2942 = vmatpush2.bf16.msra.mxu0 0
      %2943 = vmatprep.subr.bf16.mxu0 0
      %2944 = vmatpush2.bf16.msra.mxu0 0
      %2945 = vmatprep.subr.bf16.mxu0 0
      %2946 = vmatpush2.bf16.msra.mxu0 0
      %2947 = vmatprep.subr.bf16.mxu0 0
      %2948 = vmatpush2.bf16.msra.mxu0 0
      %2949 = vmatprep.subr.bf16.mxu0 0
      %2950 = vmatpush2.bf16.msra.mxu0 0
      %2951 = vmatprep.mubr.bf16.mxu0 0
      %2952 = vmatmul.mubr.bf16.gmra.mxu0 %v2917
      %v2953 = vpop.f32.mrf.mxu0
      %v2954 = vadd.f32 0.0, %v2953
      %v2955 = vpop.f32.mrf.mxu0
      %v2956 = vpop.f32.mrf.mxu0
      %v2957 = vadd.f32 0.0, %v2956
      %v2958 = vpop.f32.mrf.mxu0
      %2959 = vdwg.mxu0
      %v2960 = vpack.c.bf16 %v2957, %v2954
      %s2961 = scalar_lea.vmem %s8, 32
      %v2962 = vld [vmem:[%s2961] sm:$0xf]
      %v2963 = vld [vmem:[%s2961 + $0x4] sm:$0xf]
      %v2966 = vunpack.c.l.b16 %v2962
      %v2967 = vunpack.c.l.b16 %v2963
      %v2968 = vpack.c.b16 %v2967, %v2966
      %v2971 = vsel %vm779, %v2960, 0
      %2973 = vmatprep.subr.bf16.mxu0 0
      %2974 = vmatpush1.bf16.msra.mxu0 0
      %2975 = vmatprep.subr.bf16.mxu0 0
      %2976 = vmatpush1.bf16.msra.mxu0 0
      %2977 = vmatprep.subr.bf16.mxu0 0
      %2978 = vmatpush1.bf16.msra.mxu0 0
      %2979 = vmatprep.subr.bf16.mxu0 0
      %2980 = vmatpush1.bf16.msra.mxu0 0
      %2981 = vmatprep.subr.bf16.mxu0 0
      %2982 = vmatpush1.bf16.msra.mxu0 0
      %2983 = vmatprep.subr.bf16.mxu0 0
      %2984 = vmatpush1.bf16.msra.mxu0 0
      %2985 = vmatprep.subr.bf16.mxu0 0
      %2986 = vmatpush1.bf16.msra.mxu0 0
      %2987 = vmatprep.subr.bf16.mxu0 0
      %2988 = vmatpush1.bf16.msra.mxu0 %v2968
      %2989 = vmatprep.subr.bf16.mxu0 0
      %2990 = vmatpush2.bf16.msra.mxu0 0
      %2991 = vmatprep.subr.bf16.mxu0 0
      %2992 = vmatpush2.bf16.msra.mxu0 0
      %2993 = vmatprep.subr.bf16.mxu0 0
      %2994 = vmatpush2.bf16.msra.mxu0 0
      %2995 = vmatprep.subr.bf16.mxu0 0
      %2996 = vmatpush2.bf16.msra.mxu0 0
      %2997 = vmatprep.subr.bf16.mxu0 0
      %2998 = vmatpush2.bf16.msra.mxu0 0
      %2999 = vmatprep.subr.bf16.mxu0 0
      %3000 = vmatpush2.bf16.msra.mxu0 0
      %3001 = vmatprep.subr.bf16.mxu0 0
      %3002 = vmatpush2.bf16.msra.mxu0 0
      %3003 = vmatprep.subr.bf16.mxu0 0
      %3004 = vmatpush2.bf16.msra.mxu0 0
      %3005 = vmatprep.mubr.bf16.mxu0 0
      %3006 = vmatmul.mubr.bf16.gmra.mxu0 %v2971
      %v3007 = vpop.f32.mrf.mxu0
      %v3008 = vadd.f32 0.0, %v3007
      %v3009 = vpop.f32.mrf.mxu0
      %v3010 = vpop.f32.mrf.mxu0
      %v3011 = vadd.f32 0.0, %v3010
      %v3012 = vpop.f32.mrf.mxu0
      %3013 = vdwg.mxu0
      %v3014 = vadd.f32 %v2497, %v3008
      %v3015 = vadd.f32 %v2498, %v3011
      %s3016 = scalar_lea.vmem %s2, 320
      %v3017 = vld [vmem:[%s3016] sm:$0xf]
      %v3018 = vld [vmem:[%s3016 + $0x4] sm:$0xf]
      %v3019 = vld [vmem:[%s3016 + $0x8] sm:$0xf]
      %v3020 = vld [vmem:[%s3016 + $0xc] sm:$0xf]
      %v3021 = vld [vmem:[%s3016 + $0x10] sm:$0xf]
      %v3022 = vld [vmem:[%s3016 + $0x14] sm:$0xf]
      %v3023 = vld [vmem:[%s3016 + $0x18] sm:$0xf]
      %v3024 = vld [vmem:[%s3016 + $0x1c] sm:$0xf]
      %v3025 = vld [vmem:[%s3016 + $0x20] sm:$0xf]
      %v3026 = vld [vmem:[%s3016 + $0x24] sm:$0xf]
      %v3027 = vld [vmem:[%s3016 + $0x28] sm:$0xf]
      %v3028 = vld [vmem:[%s3016 + $0x2c] sm:$0xf]
      %v3029 = vld [vmem:[%s3016 + $0x30] sm:$0xf]
      %v3030 = vld [vmem:[%s3016 + $0x34] sm:$0xf]
      %v3031 = vld [vmem:[%s3016 + $0x38] sm:$0xf]
      %v3032 = vld [vmem:[%s3016 + $0x3c] sm:$0xf]
      %s3033 = scalar_lea.vmem %s3, 5
      %v3034 = vld [vmem:[%s3033] sm:$0x1]
      %v3036 = vlaneseq
      %v3037 = vshrl.u32 %v3036, 7
      %v3038 = vsub.s32 0, %v3037
      %v3039 = vrot.slane %v3034, %v3038
      %v3057 = vunpack.c.l.b16 %v3017
      %v3058 = vunpack.c.l.b16 %v3018
      %v3059 = vunpack.c.l.b16 %v3019
      %v3060 = vunpack.c.l.b16 %v3020
      %v3061 = vunpack.c.l.b16 %v3021
      %v3062 = vunpack.c.l.b16 %v3022
      %v3063 = vunpack.c.l.b16 %v3023
      %v3064 = vunpack.c.l.b16 %v3024
      %v3065 = vunpack.c.l.b16 %v3025
      %v3066 = vunpack.c.l.b16 %v3026
      %v3067 = vunpack.c.l.b16 %v3027
      %v3068 = vunpack.c.l.b16 %v3028
      %v3069 = vunpack.c.l.b16 %v3029
      %v3070 = vunpack.c.l.b16 %v3030
      %v3071 = vunpack.c.l.b16 %v3031
      %v3072 = vunpack.c.l.b16 %v3032
      %v3073 = vpack.c.b16 %v3058, %v3057
      %v3074 = vpack.c.b16 %v3060, %v3059
      %v3075 = vpack.c.b16 %v3062, %v3061
      %v3076 = vpack.c.b16 %v3064, %v3063
      %v3077 = vpack.c.b16 %v3066, %v3065
      %v3078 = vpack.c.b16 %v3068, %v3067
      %v3079 = vpack.c.b16 %v3070, %v3069
      %v3080 = vpack.c.b16 %v3072, %v3071
      %3089 = vmatprep.subr.bf16.mxu0 0
      %3090 = vmatpush1.bf16.msra.mxu0 %v3080
      %3091 = vmatprep.subr.bf16.mxu0 0
      %3092 = vmatpush1.bf16.msra.mxu0 %v3079
      %3093 = vmatprep.subr.bf16.mxu0 0
      %3094 = vmatpush1.bf16.msra.mxu0 %v3078
      %3095 = vmatprep.subr.bf16.mxu0 0
      %3096 = vmatpush1.bf16.msra.mxu0 %v3077
      %3097 = vmatprep.subr.bf16.mxu0 0
      %3098 = vmatpush1.bf16.msra.mxu0 %v3076
      %3099 = vmatprep.subr.bf16.mxu0 0
      %3100 = vmatpush1.bf16.msra.mxu0 %v3075
      %3101 = vmatprep.subr.bf16.mxu0 0
      %3102 = vmatpush1.bf16.msra.mxu0 %v3074
      %3103 = vmatprep.subr.bf16.mxu0 0
      %3104 = vmatpush1.bf16.msra.mxu0 %v3073
      %3105 = vmatprep.subr.bf16.mxu0 0
      %3106 = vmatpush2.bf16.msra.mxu0 0
      %3107 = vmatprep.subr.bf16.mxu0 0
      %3108 = vmatpush2.bf16.msra.mxu0 0
      %3109 = vmatprep.subr.bf16.mxu0 0
      %3110 = vmatpush2.bf16.msra.mxu0 0
      %3111 = vmatprep.subr.bf16.mxu0 0
      %3112 = vmatpush2.bf16.msra.mxu0 0
      %3113 = vmatprep.subr.bf16.mxu0 0
      %3114 = vmatpush2.bf16.msra.mxu0 0
      %3115 = vmatprep.subr.bf16.mxu0 0
      %3116 = vmatpush2.bf16.msra.mxu0 0
      %3117 = vmatprep.subr.bf16.mxu0 0
      %3118 = vmatpush2.bf16.msra.mxu0 0
      %3119 = vmatprep.subr.bf16.mxu0 0
      %3120 = vmatpush2.bf16.msra.mxu0 0
      %3121 = vmatprep.mubr.bf16.mxu0 0
      %3122 = vmatmul.mubr.bf16.gmra.mxu0 %v439
      %v3123 = vpop.f32.mrf.mxu0
      %v3124 = vadd.f32 %v3039, %v3123
      %v3125 = vpop.f32.mrf.mxu0
      %v3126 = vpop.f32.mrf.mxu0
      %v3127 = vadd.f32 %v3039, %v3126
      %v3128 = vpop.f32.mrf.mxu0
      %3129 = vdwg.mxu0
      %s3130 = scalar_lea.vmem %s4, 320
      %v3131 = vld [vmem:[%s3130] sm:$0xf]
      %v3132 = vld [vmem:[%s3130 + $0x4] sm:$0xf]
      %v3133 = vld [vmem:[%s3130 + $0x8] sm:$0xf]
      %v3134 = vld [vmem:[%s3130 + $0xc] sm:$0xf]
      %v3135 = vld [vmem:[%s3130 + $0x10] sm:$0xf]
      %v3136 = vld [vmem:[%s3130 + $0x14] sm:$0xf]
      %v3137 = vld [vmem:[%s3130 + $0x18] sm:$0xf]
      %v3138 = vld [vmem:[%s3130 + $0x1c] sm:$0xf]
      %v3139 = vld [vmem:[%s3130 + $0x20] sm:$0xf]
      %v3140 = vld [vmem:[%s3130 + $0x24] sm:$0xf]
      %v3141 = vld [vmem:[%s3130 + $0x28] sm:$0xf]
      %v3142 = vld [vmem:[%s3130 + $0x2c] sm:$0xf]
      %v3143 = vld [vmem:[%s3130 + $0x30] sm:$0xf]
      %v3144 = vld [vmem:[%s3130 + $0x34] sm:$0xf]
      %v3145 = vld [vmem:[%s3130 + $0x38] sm:$0xf]
      %v3146 = vld [vmem:[%s3130 + $0x3c] sm:$0xf]
      %s3147 = scalar_lea.vmem %s5, 5
      %v3148 = vld [vmem:[%s3147] sm:$0x1]
      %v3150 = vlaneseq
      %v3151 = vshrl.u32 %v3150, 7
      %v3152 = vsub.s32 0, %v3151
      %v3153 = vrot.slane %v3148, %v3152
      %v3171 = vunpack.c.l.b16 %v3131
      %v3172 = vunpack.c.l.b16 %v3132
      %v3173 = vunpack.c.l.b16 %v3133
      %v3174 = vunpack.c.l.b16 %v3134
      %v3175 = vunpack.c.l.b16 %v3135
      %v3176 = vunpack.c.l.b16 %v3136
      %v3177 = vunpack.c.l.b16 %v3137
      %v3178 = vunpack.c.l.b16 %v3138
      %v3179 = vunpack.c.l.b16 %v3139
      %v3180 = vunpack.c.l.b16 %v3140
      %v3181 = vunpack.c.l.b16 %v3141
      %v3182 = vunpack.c.l.b16 %v3142
      %v3183 = vunpack.c.l.b16 %v3143
      %v3184 = vunpack.c.l.b16 %v3144
      %v3185 = vunpack.c.l.b16 %v3145
      %v3186 = vunpack.c.l.b16 %v3146
      %v3187 = vpack.c.b16 %v3172, %v3171
      %v3188 = vpack.c.b16 %v3174, %v3173
      %v3189 = vpack.c.b16 %v3176, %v3175
      %v3190 = vpack.c.b16 %v3178, %v3177
      %v3191 = vpack.c.b16 %v3180, %v3179
      %v3192 = vpack.c.b16 %v3182, %v3181
      %v3193 = vpack.c.b16 %v3184, %v3183
      %v3194 = vpack.c.b16 %v3186, %v3185
      %3203 = vmatprep.subr.bf16.mxu0 0
      %3204 = vmatpush1.bf16.msra.mxu0 %v3194
      %3205 = vmatprep.subr.bf16.mxu0 0
      %3206 = vmatpush1.bf16.msra.mxu0 %v3193
      %3207 = vmatprep.subr.bf16.mxu0 0
      %3208 = vmatpush1.bf16.msra.mxu0 %v3192
      %3209 = vmatprep.subr.bf16.mxu0 0
      %3210 = vmatpush1.bf16.msra.mxu0 %v3191
      %3211 = vmatprep.subr.bf16.mxu0 0
      %3212 = vmatpush1.bf16.msra.mxu0 %v3190
      %3213 = vmatprep.subr.bf16.mxu0 0
      %3214 = vmatpush1.bf16.msra.mxu0 %v3189
      %3215 = vmatprep.subr.bf16.mxu0 0
      %3216 = vmatpush1.bf16.msra.mxu0 %v3188
      %3217 = vmatprep.subr.bf16.mxu0 0
      %3218 = vmatpush1.bf16.msra.mxu0 %v3187
      %3219 = vmatprep.subr.bf16.mxu0 0
      %3220 = vmatpush2.bf16.msra.mxu0 0
      %3221 = vmatprep.subr.bf16.mxu0 0
      %3222 = vmatpush2.bf16.msra.mxu0 0
      %3223 = vmatprep.subr.bf16.mxu0 0
      %3224 = vmatpush2.bf16.msra.mxu0 0
      %3225 = vmatprep.subr.bf16.mxu0 0
      %3226 = vmatpush2.bf16.msra.mxu0 0
      %3227 = vmatprep.subr.bf16.mxu0 0
      %3228 = vmatpush2.bf16.msra.mxu0 0
      %3229 = vmatprep.subr.bf16.mxu0 0
      %3230 = vmatpush2.bf16.msra.mxu0 0
      %3231 = vmatprep.subr.bf16.mxu0 0
      %3232 = vmatpush2.bf16.msra.mxu0 0
      %3233 = vmatprep.subr.bf16.mxu0 0
      %3234 = vmatpush2.bf16.msra.mxu0 0
      %3235 = vmatprep.mubr.bf16.mxu0 0
      %3236 = vmatmul.mubr.bf16.gmra.mxu0 %v440
      %v3237 = vpop.f32.mrf.mxu0
      %v3238 = vadd.f32 %v3153, %v3237
      %v3239 = vpop.f32.mrf.mxu0
      %v3240 = vpop.f32.mrf.mxu0
      %v3241 = vadd.f32 %v3153, %v3240
      %v3242 = vpop.f32.mrf.mxu0
      %3243 = vdwg.mxu0
      %s3244 = scalar_lea.vmem %s6, 320
      %v3245 = vld [vmem:[%s3244] sm:$0xf]
      %v3246 = vld [vmem:[%s3244 + $0x4] sm:$0xf]
      %v3247 = vld [vmem:[%s3244 + $0x8] sm:$0xf]
      %v3248 = vld [vmem:[%s3244 + $0xc] sm:$0xf]
      %v3249 = vld [vmem:[%s3244 + $0x10] sm:$0xf]
      %v3250 = vld [vmem:[%s3244 + $0x14] sm:$0xf]
      %v3251 = vld [vmem:[%s3244 + $0x18] sm:$0xf]
      %v3252 = vld [vmem:[%s3244 + $0x1c] sm:$0xf]
      %v3253 = vld [vmem:[%s3244 + $0x20] sm:$0xf]
      %v3254 = vld [vmem:[%s3244 + $0x24] sm:$0xf]
      %v3255 = vld [vmem:[%s3244 + $0x28] sm:$0xf]
      %v3256 = vld [vmem:[%s3244 + $0x2c] sm:$0xf]
      %v3257 = vld [vmem:[%s3244 + $0x30] sm:$0xf]
      %v3258 = vld [vmem:[%s3244 + $0x34] sm:$0xf]
      %v3259 = vld [vmem:[%s3244 + $0x38] sm:$0xf]
      %v3260 = vld [vmem:[%s3244 + $0x3c] sm:$0xf]
      %s3261 = scalar_lea.vmem %s7, 5
      %v3262 = vld [vmem:[%s3261] sm:$0x1]
      %v3264 = vlaneseq
      %v3265 = vshrl.u32 %v3264, 7
      %v3266 = vsub.s32 0, %v3265
      %v3267 = vrot.slane %v3262, %v3266
      %v3285 = vunpack.c.l.b16 %v3245
      %v3286 = vunpack.c.l.b16 %v3246
      %v3287 = vunpack.c.l.b16 %v3247
      %v3288 = vunpack.c.l.b16 %v3248
      %v3289 = vunpack.c.l.b16 %v3249
      %v3290 = vunpack.c.l.b16 %v3250
      %v3291 = vunpack.c.l.b16 %v3251
      %v3292 = vunpack.c.l.b16 %v3252
      %v3293 = vunpack.c.l.b16 %v3253
      %v3294 = vunpack.c.l.b16 %v3254
      %v3295 = vunpack.c.l.b16 %v3255
      %v3296 = vunpack.c.l.b16 %v3256
      %v3297 = vunpack.c.l.b16 %v3257
      %v3298 = vunpack.c.l.b16 %v3258
      %v3299 = vunpack.c.l.b16 %v3259
      %v3300 = vunpack.c.l.b16 %v3260
      %v3301 = vpack.c.b16 %v3286, %v3285
      %v3302 = vpack.c.b16 %v3288, %v3287
      %v3303 = vpack.c.b16 %v3290, %v3289
      %v3304 = vpack.c.b16 %v3292, %v3291
      %v3305 = vpack.c.b16 %v3294, %v3293
      %v3306 = vpack.c.b16 %v3296, %v3295
      %v3307 = vpack.c.b16 %v3298, %v3297
      %v3308 = vpack.c.b16 %v3300, %v3299
      %3317 = vmatprep.subr.bf16.mxu0 0
      %3318 = vmatpush1.bf16.msra.mxu0 %v3308
      %3319 = vmatprep.subr.bf16.mxu0 0
      %3320 = vmatpush1.bf16.msra.mxu0 %v3307
      %3321 = vmatprep.subr.bf16.mxu0 0
      %3322 = vmatpush1.bf16.msra.mxu0 %v3306
      %3323 = vmatprep.subr.bf16.mxu0 0
      %3324 = vmatpush1.bf16.msra.mxu0 %v3305
      %3325 = vmatprep.subr.bf16.mxu0 0
      %3326 = vmatpush1.bf16.msra.mxu0 %v3304
      %3327 = vmatprep.subr.bf16.mxu0 0
      %3328 = vmatpush1.bf16.msra.mxu0 %v3303
      %3329 = vmatprep.subr.bf16.mxu0 0
      %3330 = vmatpush1.bf16.msra.mxu0 %v3302
      %3331 = vmatprep.subr.bf16.mxu0 0
      %3332 = vmatpush1.bf16.msra.mxu0 %v3301
      %3333 = vmatprep.subr.bf16.mxu0 0
      %3334 = vmatpush2.bf16.msra.mxu0 0
      %3335 = vmatprep.subr.bf16.mxu0 0
      %3336 = vmatpush2.bf16.msra.mxu0 0
      %3337 = vmatprep.subr.bf16.mxu0 0
      %3338 = vmatpush2.bf16.msra.mxu0 0
      %3339 = vmatprep.subr.bf16.mxu0 0
      %3340 = vmatpush2.bf16.msra.mxu0 0
      %3341 = vmatprep.subr.bf16.mxu0 0
      %3342 = vmatpush2.bf16.msra.mxu0 0
      %3343 = vmatprep.subr.bf16.mxu0 0
      %3344 = vmatpush2.bf16.msra.mxu0 0
      %3345 = vmatprep.subr.bf16.mxu0 0
      %3346 = vmatpush2.bf16.msra.mxu0 0
      %3347 = vmatprep.subr.bf16.mxu0 0
      %3348 = vmatpush2.bf16.msra.mxu0 0
      %3349 = vmatprep.mubr.bf16.mxu0 0
      %3350 = vmatmul.mubr.bf16.gmra.mxu0 %v440
      %v3351 = vpop.f32.mrf.mxu0
      %v3352 = vadd.f32 %v3267, %v3351
      %v3353 = vpop.f32.mrf.mxu0
      %v3354 = vpop.f32.mrf.mxu0
      %v3355 = vadd.f32 %v3267, %v3354
      %v3356 = vpop.f32.mrf.mxu0
      %3357 = vdwg.mxu0
      %v3358 = vpack.c.bf16 %v3127, %v3124
      %v3359 = vpack.c.bf16 %v3241, %v3238
      %v3361 = vsel %vm779, %v3358, 0
      %v3364 = vsel %vm779, %v3359, 0
      %3366 = vmatprep.subr.bf16.mxu0 0
      %3367 = vmatpush1.bf16.xpose.msra.mxu0 0
      %3368 = vmatprep.subr.bf16.mxu0 0
      %3369 = vmatpush1.bf16.xpose.msra.mxu0 0
      %3370 = vmatprep.subr.bf16.mxu0 0
      %3371 = vmatpush1.bf16.xpose.msra.mxu0 0
      %3372 = vmatprep.subr.bf16.mxu0 0
      %3373 = vmatpush1.bf16.xpose.msra.mxu0 0
      %3374 = vmatprep.subr.bf16.mxu0 0
      %3375 = vmatpush1.bf16.xpose.msra.mxu0 0
      %3376 = vmatprep.subr.bf16.mxu0 0
      %3377 = vmatpush1.bf16.xpose.msra.mxu0 0
      %3378 = vmatprep.subr.bf16.mxu0 0
      %3379 = vmatpush1.bf16.xpose.msra.mxu0 0
      %3380 = vmatprep.subr.bf16.mxu0 0
      %3381 = vmatpush1.bf16.xpose.msra.mxu0 %v3364
      %3382 = vmatprep.subr.bf16.mxu0 0
      %3383 = vmatpush2.bf16.xpose.msra.mxu0 0
      %3384 = vmatprep.subr.bf16.mxu0 0
      %3385 = vmatpush2.bf16.xpose.msra.mxu0 0
      %3386 = vmatprep.subr.bf16.mxu0 0
      %3387 = vmatpush2.bf16.xpose.msra.mxu0 0
      %3388 = vmatprep.subr.bf16.mxu0 0
      %3389 = vmatpush2.bf16.xpose.msra.mxu0 0
      %3390 = vmatprep.subr.bf16.mxu0 0
      %3391 = vmatpush2.bf16.xpose.msra.mxu0 0
      %3392 = vmatprep.subr.bf16.mxu0 0
      %3393 = vmatpush2.bf16.xpose.msra.mxu0 0
      %3394 = vmatprep.subr.bf16.mxu0 0
      %3395 = vmatpush2.bf16.xpose.msra.mxu0 0
      %3396 = vmatprep.subr.bf16.mxu0 0
      %3397 = vmatpush2.bf16.xpose.msra.mxu0 0
      %3398 = vmatprep.mubr.bf16.mxu0 0
      %3399 = vmatmul.mubr.bf16.gmra.mxu0 %v3361
      %v3400 = vpop.f32.mrf.mxu0
      %v3401 = vadd.f32 0.0, %v3400
      %v3402 = vpop.f32.mrf.mxu0
      %v3403 = vpop.f32.mrf.mxu0
      %v3404 = vadd.f32 0.0, %v3403
      %v3405 = vpop.f32.mrf.mxu0
      %3406 = vdwg.mxu0
      %v3407 = vmul.f32 %v3401, 0.25
      %v3408 = vmul.f32 %v3404, 0.25
      %v3409 = vsel %vm779, %v3407, -inf
      %3410 = vmax.xlane.f32.xlu0 %v3409
      %v3411 = vpop.xlane.xlu0 %3410
      %v3412 = vsel %vm779, %v3408, -inf
      %3413 = vmax.xlane.f32.xlu0 %v3412
      %v3414 = vpop.xlane.xlu0 %3413
      %v3415 = vsub.f32 %v3407, %v3411
      %v3416 = vsub.f32 %v3408, %v3414
      %v3417 = vmul.f32 %v3415, 1.442695
      %v3418 = vpow.pop %v3417
      %v3419 = vmul.f32 %v3416, 1.442695
      %v3420 = vpow.pop %v3419
      %v3421 = vsel %vm779, %v3418, 0.0
      %3422 = vadd.xlane.f32.xlu0 %v3421
      %v3423 = vpop.xlane.xlu0 %3422
      %v3424 = vsel %vm779, %v3420, 0.0
      %3425 = vadd.xlane.f32.xlu0 %v3424
      %v3426 = vpop.xlane.xlu0 %3425
      %v3427 = vrcp.pop %v3423
      %v3428 = vmul.f32 %v3418, %v3427
      %v3429 = vrcp.pop %v3426
      %v3430 = vmul.f32 %v3420, %v3429
      %v3431 = vpack.c.bf16 %v3430, %v3428
      %v3432 = vpack.c.bf16 %v3355, %v3352
      %v3434 = vsel %vm779, %v3431, 0
      %3436 = vmatprep.subr.bf16.mxu0 0
      %3437 = vmatpush1.bf16.msra.mxu0 0
      %3438 = vmatprep.subr.bf16.mxu0 0
      %3439 = vmatpush1.bf16.msra.mxu0 0
      %3440 = vmatprep.subr.bf16.mxu0 0
      %3441 = vmatpush1.bf16.msra.mxu0 0
      %3442 = vmatprep.subr.bf16.mxu0 0
      %3443 = vmatpush1.bf16.msra.mxu0 0
      %3444 = vmatprep.subr.bf16.mxu0 0
      %3445 = vmatpush1.bf16.msra.mxu0 0
      %3446 = vmatprep.subr.bf16.mxu0 0
      %3447 = vmatpush1.bf16.msra.mxu0 0
      %3448 = vmatprep.subr.bf16.mxu0 0
      %3449 = vmatpush1.bf16.msra.mxu0 0
      %3450 = vmatprep.subr.bf16.mxu0 0
      %3451 = vmatpush1.bf16.msra.mxu0 %v3432
      %3452 = vmatprep.subr.bf16.mxu0 0
      %3453 = vmatpush2.bf16.msra.mxu0 0
      %3454 = vmatprep.subr.bf16.mxu0 0
      %3455 = vmatpush2.bf16.msra.mxu0 0
      %3456 = vmatprep.subr.bf16.mxu0 0
      %3457 = vmatpush2.bf16.msra.mxu0 0
      %3458 = vmatprep.subr.bf16.mxu0 0
      %3459 = vmatpush2.bf16.msra.mxu0 0
      %3460 = vmatprep.subr.bf16.mxu0 0
      %3461 = vmatpush2.bf16.msra.mxu0 0
      %3462 = vmatprep.subr.bf16.mxu0 0
      %3463 = vmatpush2.bf16.msra.mxu0 0
      %3464 = vmatprep.subr.bf16.mxu0 0
      %3465 = vmatpush2.bf16.msra.mxu0 0
      %3466 = vmatprep.subr.bf16.mxu0 0
      %3467 = vmatpush2.bf16.msra.mxu0 0
      %3468 = vmatprep.mubr.bf16.mxu0 0
      %3469 = vmatmul.mubr.bf16.gmra.mxu0 %v3434
      %v3470 = vpop.f32.mrf.mxu0
      %v3471 = vadd.f32 0.0, %v3470
      %v3472 = vpop.f32.mrf.mxu0
      %v3473 = vpop.f32.mrf.mxu0
      %v3474 = vadd.f32 0.0, %v3473
      %v3475 = vpop.f32.mrf.mxu0
      %3476 = vdwg.mxu0
      %v3477 = vpack.c.bf16 %v3474, %v3471
      %s3478 = scalar_lea.vmem %s8, 40
      %v3479 = vld [vmem:[%s3478] sm:$0xf]
      %v3480 = vld [vmem:[%s3478 + $0x4] sm:$0xf]
      %v3483 = vunpack.c.l.b16 %v3479
      %v3484 = vunpack.c.l.b16 %v3480
      %v3485 = vpack.c.b16 %v3484, %v3483
      %v3488 = vsel %vm779, %v3477, 0
      %3490 = vmatprep.subr.bf16.mxu0 0
      %3491 = vmatpush1.bf16.msra.mxu0 0
      %3492 = vmatprep.subr.bf16.mxu0 0
      %3493 = vmatpush1.bf16.msra.mxu0 0
      %3494 = vmatprep.subr.bf16.mxu0 0
      %3495 = vmatpush1.bf16.msra.mxu0 0
      %3496 = vmatprep.subr.bf16.mxu0 0
      %3497 = vmatpush1.bf16.msra.mxu0 0
      %3498 = vmatprep.subr.bf16.mxu0 0
      %3499 = vmatpush1.bf16.msra.mxu0 0
      %3500 = vmatprep.subr.bf16.mxu0 0
      %3501 = vmatpush1.bf16.msra.mxu0 0
      %3502 = vmatprep.subr.bf16.mxu0 0
      %3503 = vmatpush1.bf16.msra.mxu0 0
      %3504 = vmatprep.subr.bf16.mxu0 0
      %3505 = vmatpush1.bf16.msra.mxu0 %v3485
      %3506 = vmatprep.subr.bf16.mxu0 0
      %3507 = vmatpush2.bf16.msra.mxu0 0
      %3508 = vmatprep.subr.bf16.mxu0 0
      %3509 = vmatpush2.bf16.msra.mxu0 0
      %3510 = vmatprep.subr.bf16.mxu0 0
      %3511 = vmatpush2.bf16.msra.mxu0 0
      %3512 = vmatprep.subr.bf16.mxu0 0
      %3513 = vmatpush2.bf16.msra.mxu0 0
      %3514 = vmatprep.subr.bf16.mxu0 0
      %3515 = vmatpush2.bf16.msra.mxu0 0
      %3516 = vmatprep.subr.bf16.mxu0 0
      %3517 = vmatpush2.bf16.msra.mxu0 0
      %3518 = vmatprep.subr.bf16.mxu0 0
      %3519 = vmatpush2.bf16.msra.mxu0 0
      %3520 = vmatprep.subr.bf16.mxu0 0
      %3521 = vmatpush2.bf16.msra.mxu0 0
      %3522 = vmatprep.mubr.bf16.mxu0 0
      %3523 = vmatmul.mubr.bf16.gmra.mxu0 %v3488
      %v3524 = vpop.f32.mrf.mxu0
      %v3525 = vadd.f32 0.0, %v3524
      %v3526 = vpop.f32.mrf.mxu0
      %v3527 = vpop.f32.mrf.mxu0
      %v3528 = vadd.f32 0.0, %v3527
      %v3529 = vpop.f32.mrf.mxu0
      %3530 = vdwg.mxu0
      %v3531 = vadd.f32 %v3014, %v3525
      %v3532 = vadd.f32 %v3015, %v3528
      %s3533 = scalar_lea.vmem %s2, 384
      %v3534 = vld [vmem:[%s3533] sm:$0xf]
      %v3535 = vld [vmem:[%s3533 + $0x4] sm:$0xf]
      %v3536 = vld [vmem:[%s3533 + $0x8] sm:$0xf]
      %v3537 = vld [vmem:[%s3533 + $0xc] sm:$0xf]
      %v3538 = vld [vmem:[%s3533 + $0x10] sm:$0xf]
      %v3539 = vld [vmem:[%s3533 + $0x14] sm:$0xf]
      %v3540 = vld [vmem:[%s3533 + $0x18] sm:$0xf]
      %v3541 = vld [vmem:[%s3533 + $0x1c] sm:$0xf]
      %v3542 = vld [vmem:[%s3533 + $0x20] sm:$0xf]
      %v3543 = vld [vmem:[%s3533 + $0x24] sm:$0xf]
      %v3544 = vld [vmem:[%s3533 + $0x28] sm:$0xf]
      %v3545 = vld [vmem:[%s3533 + $0x2c] sm:$0xf]
      %v3546 = vld [vmem:[%s3533 + $0x30] sm:$0xf]
      %v3547 = vld [vmem:[%s3533 + $0x34] sm:$0xf]
      %v3548 = vld [vmem:[%s3533 + $0x38] sm:$0xf]
      %v3549 = vld [vmem:[%s3533 + $0x3c] sm:$0xf]
      %s3550 = scalar_lea.vmem %s3, 6
      %v3551 = vld [vmem:[%s3550] sm:$0x1]
      %v3553 = vlaneseq
      %v3554 = vshrl.u32 %v3553, 7
      %v3555 = vsub.s32 0, %v3554
      %v3556 = vrot.slane %v3551, %v3555
      %v3574 = vunpack.c.l.b16 %v3534
      %v3575 = vunpack.c.l.b16 %v3535
      %v3576 = vunpack.c.l.b16 %v3536
      %v3577 = vunpack.c.l.b16 %v3537
      %v3578 = vunpack.c.l.b16 %v3538
      %v3579 = vunpack.c.l.b16 %v3539
      %v3580 = vunpack.c.l.b16 %v3540
      %v3581 = vunpack.c.l.b16 %v3541
      %v3582 = vunpack.c.l.b16 %v3542
      %v3583 = vunpack.c.l.b16 %v3543
      %v3584 = vunpack.c.l.b16 %v3544
      %v3585 = vunpack.c.l.b16 %v3545
      %v3586 = vunpack.c.l.b16 %v3546
      %v3587 = vunpack.c.l.b16 %v3547
      %v3588 = vunpack.c.l.b16 %v3548
      %v3589 = vunpack.c.l.b16 %v3549
      %v3590 = vpack.c.b16 %v3575, %v3574
      %v3591 = vpack.c.b16 %v3577, %v3576
      %v3592 = vpack.c.b16 %v3579, %v3578
      %v3593 = vpack.c.b16 %v3581, %v3580
      %v3594 = vpack.c.b16 %v3583, %v3582
      %v3595 = vpack.c.b16 %v3585, %v3584
      %v3596 = vpack.c.b16 %v3587, %v3586
      %v3597 = vpack.c.b16 %v3589, %v3588
      %3606 = vmatprep.subr.bf16.mxu0 0
      %3607 = vmatpush1.bf16.msra.mxu0 %v3597
      %3608 = vmatprep.subr.bf16.mxu0 0
      %3609 = vmatpush1.bf16.msra.mxu0 %v3596
      %3610 = vmatprep.subr.bf16.mxu0 0
      %3611 = vmatpush1.bf16.msra.mxu0 %v3595
      %3612 = vmatprep.subr.bf16.mxu0 0
      %3613 = vmatpush1.bf16.msra.mxu0 %v3594
      %3614 = vmatprep.subr.bf16.mxu0 0
      %3615 = vmatpush1.bf16.msra.mxu0 %v3593
      %3616 = vmatprep.subr.bf16.mxu0 0
      %3617 = vmatpush1.bf16.msra.mxu0 %v3592
      %3618 = vmatprep.subr.bf16.mxu0 0
      %3619 = vmatpush1.bf16.msra.mxu0 %v3591
      %3620 = vmatprep.subr.bf16.mxu0 0
      %3621 = vmatpush1.bf16.msra.mxu0 %v3590
      %3622 = vmatprep.subr.bf16.mxu0 0
      %3623 = vmatpush2.bf16.msra.mxu0 0
      %3624 = vmatprep.subr.bf16.mxu0 0
      %3625 = vmatpush2.bf16.msra.mxu0 0
      %3626 = vmatprep.subr.bf16.mxu0 0
      %3627 = vmatpush2.bf16.msra.mxu0 0
      %3628 = vmatprep.subr.bf16.mxu0 0
      %3629 = vmatpush2.bf16.msra.mxu0 0
      %3630 = vmatprep.subr.bf16.mxu0 0
      %3631 = vmatpush2.bf16.msra.mxu0 0
      %3632 = vmatprep.subr.bf16.mxu0 0
      %3633 = vmatpush2.bf16.msra.mxu0 0
      %3634 = vmatprep.subr.bf16.mxu0 0
      %3635 = vmatpush2.bf16.msra.mxu0 0
      %3636 = vmatprep.subr.bf16.mxu0 0
      %3637 = vmatpush2.bf16.msra.mxu0 0
      %3638 = vmatprep.mubr.bf16.mxu0 0
      %3639 = vmatmul.mubr.bf16.gmra.mxu0 %v439
      %v3640 = vpop.f32.mrf.mxu0
      %v3641 = vadd.f32 %v3556, %v3640
      %v3642 = vpop.f32.mrf.mxu0
      %v3643 = vpop.f32.mrf.mxu0
      %v3644 = vadd.f32 %v3556, %v3643
      %v3645 = vpop.f32.mrf.mxu0
      %3646 = vdwg.mxu0
      %s3647 = scalar_lea.vmem %s4, 384
      %v3648 = vld [vmem:[%s3647] sm:$0xf]
      %v3649 = vld [vmem:[%s3647 + $0x4] sm:$0xf]
      %v3650 = vld [vmem:[%s3647 + $0x8] sm:$0xf]
      %v3651 = vld [vmem:[%s3647 + $0xc] sm:$0xf]
      %v3652 = vld [vmem:[%s3647 + $0x10] sm:$0xf]
      %v3653 = vld [vmem:[%s3647 + $0x14] sm:$0xf]
      %v3654 = vld [vmem:[%s3647 + $0x18] sm:$0xf]
      %v3655 = vld [vmem:[%s3647 + $0x1c] sm:$0xf]
      %v3656 = vld [vmem:[%s3647 + $0x20] sm:$0xf]
      %v3657 = vld [vmem:[%s3647 + $0x24] sm:$0xf]
      %v3658 = vld [vmem:[%s3647 + $0x28] sm:$0xf]
      %v3659 = vld [vmem:[%s3647 + $0x2c] sm:$0xf]
      %v3660 = vld [vmem:[%s3647 + $0x30] sm:$0xf]
      %v3661 = vld [vmem:[%s3647 + $0x34] sm:$0xf]
      %v3662 = vld [vmem:[%s3647 + $0x38] sm:$0xf]
      %v3663 = vld [vmem:[%s3647 + $0x3c] sm:$0xf]
      %s3664 = scalar_lea.vmem %s5, 6
      %v3665 = vld [vmem:[%s3664] sm:$0x1]
      %v3667 = vlaneseq
      %v3668 = vshrl.u32 %v3667, 7
      %v3669 = vsub.s32 0, %v3668
      %v3670 = vrot.slane %v3665, %v3669
      %v3688 = vunpack.c.l.b16 %v3648
      %v3689 = vunpack.c.l.b16 %v3649
      %v3690 = vunpack.c.l.b16 %v3650
      %v3691 = vunpack.c.l.b16 %v3651
      %v3692 = vunpack.c.l.b16 %v3652
      %v3693 = vunpack.c.l.b16 %v3653
      %v3694 = vunpack.c.l.b16 %v3654
      %v3695 = vunpack.c.l.b16 %v3655
      %v3696 = vunpack.c.l.b16 %v3656
      %v3697 = vunpack.c.l.b16 %v3657
      %v3698 = vunpack.c.l.b16 %v3658
      %v3699 = vunpack.c.l.b16 %v3659
      %v3700 = vunpack.c.l.b16 %v3660
      %v3701 = vunpack.c.l.b16 %v3661
      %v3702 = vunpack.c.l.b16 %v3662
      %v3703 = vunpack.c.l.b16 %v3663
      %v3704 = vpack.c.b16 %v3689, %v3688
      %v3705 = vpack.c.b16 %v3691, %v3690
      %v3706 = vpack.c.b16 %v3693, %v3692
      %v3707 = vpack.c.b16 %v3695, %v3694
      %v3708 = vpack.c.b16 %v3697, %v3696
      %v3709 = vpack.c.b16 %v3699, %v3698
      %v3710 = vpack.c.b16 %v3701, %v3700
      %v3711 = vpack.c.b16 %v3703, %v3702
      %3720 = vmatprep.subr.bf16.mxu0 0
      %3721 = vmatpush1.bf16.msra.mxu0 %v3711
      %3722 = vmatprep.subr.bf16.mxu0 0
      %3723 = vmatpush1.bf16.msra.mxu0 %v3710
      %3724 = vmatprep.subr.bf16.mxu0 0
      %3725 = vmatpush1.bf16.msra.mxu0 %v3709
      %3726 = vmatprep.subr.bf16.mxu0 0
      %3727 = vmatpush1.bf16.msra.mxu0 %v3708
      %3728 = vmatprep.subr.bf16.mxu0 0
      %3729 = vmatpush1.bf16.msra.mxu0 %v3707
      %3730 = vmatprep.subr.bf16.mxu0 0
      %3731 = vmatpush1.bf16.msra.mxu0 %v3706
      %3732 = vmatprep.subr.bf16.mxu0 0
      %3733 = vmatpush1.bf16.msra.mxu0 %v3705
      %3734 = vmatprep.subr.bf16.mxu0 0
      %3735 = vmatpush1.bf16.msra.mxu0 %v3704
      %3736 = vmatprep.subr.bf16.mxu0 0
      %3737 = vmatpush2.bf16.msra.mxu0 0
      %3738 = vmatprep.subr.bf16.mxu0 0
      %3739 = vmatpush2.bf16.msra.mxu0 0
      %3740 = vmatprep.subr.bf16.mxu0 0
      %3741 = vmatpush2.bf16.msra.mxu0 0
      %3742 = vmatprep.subr.bf16.mxu0 0
      %3743 = vmatpush2.bf16.msra.mxu0 0
      %3744 = vmatprep.subr.bf16.mxu0 0
      %3745 = vmatpush2.bf16.msra.mxu0 0
      %3746 = vmatprep.subr.bf16.mxu0 0
      %3747 = vmatpush2.bf16.msra.mxu0 0
      %3748 = vmatprep.subr.bf16.mxu0 0
      %3749 = vmatpush2.bf16.msra.mxu0 0
      %3750 = vmatprep.subr.bf16.mxu0 0
      %3751 = vmatpush2.bf16.msra.mxu0 0
      %3752 = vmatprep.mubr.bf16.mxu0 0
      %3753 = vmatmul.mubr.bf16.gmra.mxu0 %v440
      %v3754 = vpop.f32.mrf.mxu0
      %v3755 = vadd.f32 %v3670, %v3754
      %v3756 = vpop.f32.mrf.mxu0
      %v3757 = vpop.f32.mrf.mxu0
      %v3758 = vadd.f32 %v3670, %v3757
      %v3759 = vpop.f32.mrf.mxu0
      %3760 = vdwg.mxu0
      %s3761 = scalar_lea.vmem %s6, 384
      %v3762 = vld [vmem:[%s3761] sm:$0xf]
      %v3763 = vld [vmem:[%s3761 + $0x4] sm:$0xf]
      %v3764 = vld [vmem:[%s3761 + $0x8] sm:$0xf]
      %v3765 = vld [vmem:[%s3761 + $0xc] sm:$0xf]
      %v3766 = vld [vmem:[%s3761 + $0x10] sm:$0xf]
      %v3767 = vld [vmem:[%s3761 + $0x14] sm:$0xf]
      %v3768 = vld [vmem:[%s3761 + $0x18] sm:$0xf]
      %v3769 = vld [vmem:[%s3761 + $0x1c] sm:$0xf]
      %v3770 = vld [vmem:[%s3761 + $0x20] sm:$0xf]
      %v3771 = vld [vmem:[%s3761 + $0x24] sm:$0xf]
      %v3772 = vld [vmem:[%s3761 + $0x28] sm:$0xf]
      %v3773 = vld [vmem:[%s3761 + $0x2c] sm:$0xf]
      %v3774 = vld [vmem:[%s3761 + $0x30] sm:$0xf]
      %v3775 = vld [vmem:[%s3761 + $0x34] sm:$0xf]
      %v3776 = vld [vmem:[%s3761 + $0x38] sm:$0xf]
      %v3777 = vld [vmem:[%s3761 + $0x3c] sm:$0xf]
      %s3778 = scalar_lea.vmem %s7, 6
      %v3779 = vld [vmem:[%s3778] sm:$0x1]
      %v3781 = vlaneseq
      %v3782 = vshrl.u32 %v3781, 7
      %v3783 = vsub.s32 0, %v3782
      %v3784 = vrot.slane %v3779, %v3783
      %v3802 = vunpack.c.l.b16 %v3762
      %v3803 = vunpack.c.l.b16 %v3763
      %v3804 = vunpack.c.l.b16 %v3764
      %v3805 = vunpack.c.l.b16 %v3765
      %v3806 = vunpack.c.l.b16 %v3766
      %v3807 = vunpack.c.l.b16 %v3767
      %v3808 = vunpack.c.l.b16 %v3768
      %v3809 = vunpack.c.l.b16 %v3769
      %v3810 = vunpack.c.l.b16 %v3770
      %v3811 = vunpack.c.l.b16 %v3771
      %v3812 = vunpack.c.l.b16 %v3772
      %v3813 = vunpack.c.l.b16 %v3773
      %v3814 = vunpack.c.l.b16 %v3774
      %v3815 = vunpack.c.l.b16 %v3775
      %v3816 = vunpack.c.l.b16 %v3776
      %v3817 = vunpack.c.l.b16 %v3777
      %v3818 = vpack.c.b16 %v3803, %v3802
      %v3819 = vpack.c.b16 %v3805, %v3804
      %v3820 = vpack.c.b16 %v3807, %v3806
      %v3821 = vpack.c.b16 %v3809, %v3808
      %v3822 = vpack.c.b16 %v3811, %v3810
      %v3823 = vpack.c.b16 %v3813, %v3812
      %v3824 = vpack.c.b16 %v3815, %v3814
      %v3825 = vpack.c.b16 %v3817, %v3816
      %3834 = vmatprep.subr.bf16.mxu0 0
      %3835 = vmatpush1.bf16.msra.mxu0 %v3825
      %3836 = vmatprep.subr.bf16.mxu0 0
      %3837 = vmatpush1.bf16.msra.mxu0 %v3824
      %3838 = vmatprep.subr.bf16.mxu0 0
      %3839 = vmatpush1.bf16.msra.mxu0 %v3823
      %3840 = vmatprep.subr.bf16.mxu0 0
      %3841 = vmatpush1.bf16.msra.mxu0 %v3822
      %3842 = vmatprep.subr.bf16.mxu0 0
      %3843 = vmatpush1.bf16.msra.mxu0 %v3821
      %3844 = vmatprep.subr.bf16.mxu0 0
      %3845 = vmatpush1.bf16.msra.mxu0 %v3820
      %3846 = vmatprep.subr.bf16.mxu0 0
      %3847 = vmatpush1.bf16.msra.mxu0 %v3819
      %3848 = vmatprep.subr.bf16.mxu0 0
      %3849 = vmatpush1.bf16.msra.mxu0 %v3818
      %3850 = vmatprep.subr.bf16.mxu0 0
      %3851 = vmatpush2.bf16.msra.mxu0 0
      %3852 = vmatprep.subr.bf16.mxu0 0
      %3853 = vmatpush2.bf16.msra.mxu0 0
      %3854 = vmatprep.subr.bf16.mxu0 0
      %3855 = vmatpush2.bf16.msra.mxu0 0
      %3856 = vmatprep.subr.bf16.mxu0 0
      %3857 = vmatpush2.bf16.msra.mxu0 0
      %3858 = vmatprep.subr.bf16.mxu0 0
      %3859 = vmatpush2.bf16.msra.mxu0 0
      %3860 = vmatprep.subr.bf16.mxu0 0
      %3861 = vmatpush2.bf16.msra.mxu0 0
      %3862 = vmatprep.subr.bf16.mxu0 0
      %3863 = vmatpush2.bf16.msra.mxu0 0
      %3864 = vmatprep.subr.bf16.mxu0 0
      %3865 = vmatpush2.bf16.msra.mxu0 0
      %3866 = vmatprep.mubr.bf16.mxu0 0
      %3867 = vmatmul.mubr.bf16.gmra.mxu0 %v440
      %v3868 = vpop.f32.mrf.mxu0
      %v3869 = vadd.f32 %v3784, %v3868
      %v3870 = vpop.f32.mrf.mxu0
      %v3871 = vpop.f32.mrf.mxu0
      %v3872 = vadd.f32 %v3784, %v3871
      %v3873 = vpop.f32.mrf.mxu0
      %3874 = vdwg.mxu0
      %v3875 = vpack.c.bf16 %v3644, %v3641
      %v3876 = vpack.c.bf16 %v3758, %v3755
      %v3878 = vsel %vm779, %v3875, 0
      %v3881 = vsel %vm779, %v3876, 0
      %3883 = vmatprep.subr.bf16.mxu0 0
      %3884 = vmatpush1.bf16.xpose.msra.mxu0 0
      %3885 = vmatprep.subr.bf16.mxu0 0
      %3886 = vmatpush1.bf16.xpose.msra.mxu0 0
      %3887 = vmatprep.subr.bf16.mxu0 0
      %3888 = vmatpush1.bf16.xpose.msra.mxu0 0
      %3889 = vmatprep.subr.bf16.mxu0 0
      %3890 = vmatpush1.bf16.xpose.msra.mxu0 0
      %3891 = vmatprep.subr.bf16.mxu0 0
      %3892 = vmatpush1.bf16.xpose.msra.mxu0 0
      %3893 = vmatprep.subr.bf16.mxu0 0
      %3894 = vmatpush1.bf16.xpose.msra.mxu0 0
      %3895 = vmatprep.subr.bf16.mxu0 0
      %3896 = vmatpush1.bf16.xpose.msra.mxu0 0
      %3897 = vmatprep.subr.bf16.mxu0 0
      %3898 = vmatpush1.bf16.xpose.msra.mxu0 %v3881
      %3899 = vmatprep.subr.bf16.mxu0 0
      %3900 = vmatpush2.bf16.xpose.msra.mxu0 0
      %3901 = vmatprep.subr.bf16.mxu0 0
      %3902 = vmatpush2.bf16.xpose.msra.mxu0 0
      %3903 = vmatprep.subr.bf16.mxu0 0
      %3904 = vmatpush2.bf16.xpose.msra.mxu0 0
      %3905 = vmatprep.subr.bf16.mxu0 0
      %3906 = vmatpush2.bf16.xpose.msra.mxu0 0
      %3907 = vmatprep.subr.bf16.mxu0 0
      %3908 = vmatpush2.bf16.xpose.msra.mxu0 0
      %3909 = vmatprep.subr.bf16.mxu0 0
      %3910 = vmatpush2.bf16.xpose.msra.mxu0 0
      %3911 = vmatprep.subr.bf16.mxu0 0
      %3912 = vmatpush2.bf16.xpose.msra.mxu0 0
      %3913 = vmatprep.subr.bf16.mxu0 0
      %3914 = vmatpush2.bf16.xpose.msra.mxu0 0
      %3915 = vmatprep.mubr.bf16.mxu0 0
      %3916 = vmatmul.mubr.bf16.gmra.mxu0 %v3878
      %v3917 = vpop.f32.mrf.mxu0
      %v3918 = vadd.f32 0.0, %v3917
      %v3919 = vpop.f32.mrf.mxu0
      %v3920 = vpop.f32.mrf.mxu0
      %v3921 = vadd.f32 0.0, %v3920
      %v3922 = vpop.f32.mrf.mxu0
      %3923 = vdwg.mxu0
      %v3924 = vmul.f32 %v3918, 0.25
      %v3925 = vmul.f32 %v3921, 0.25
      %v3926 = vsel %vm779, %v3924, -inf
      %3927 = vmax.xlane.f32.xlu0 %v3926
      %v3928 = vpop.xlane.xlu0 %3927
      %v3929 = vsel %vm779, %v3925, -inf
      %3930 = vmax.xlane.f32.xlu0 %v3929
      %v3931 = vpop.xlane.xlu0 %3930
      %v3932 = vsub.f32 %v3924, %v3928
      %v3933 = vsub.f32 %v3925, %v3931
      %v3934 = vmul.f32 %v3932, 1.442695
      %v3935 = vpow.pop %v3934
      %v3936 = vmul.f32 %v3933, 1.442695
      %v3937 = vpow.pop %v3936
      %v3938 = vsel %vm779, %v3935, 0.0
      %3939 = vadd.xlane.f32.xlu0 %v3938
      %v3940 = vpop.xlane.xlu0 %3939
      %v3941 = vsel %vm779, %v3937, 0.0
      %3942 = vadd.xlane.f32.xlu0 %v3941
      %v3943 = vpop.xlane.xlu0 %3942
      %v3944 = vrcp.pop %v3940
      %v3945 = vmul.f32 %v3935, %v3944
      %v3946 = vrcp.pop %v3943
      %v3947 = vmul.f32 %v3937, %v3946
      %v3948 = vpack.c.bf16 %v3947, %v3945
      %v3949 = vpack.c.bf16 %v3872, %v3869
      %v3951 = vsel %vm779, %v3948, 0
      %3953 = vmatprep.subr.bf16.mxu0 0
      %3954 = vmatpush1.bf16.msra.mxu0 0
      %3955 = vmatprep.subr.bf16.mxu0 0
      %3956 = vmatpush1.bf16.msra.mxu0 0
      %3957 = vmatprep.subr.bf16.mxu0 0
      %3958 = vmatpush1.bf16.msra.mxu0 0
      %3959 = vmatprep.subr.bf16.mxu0 0
      %3960 = vmatpush1.bf16.msra.mxu0 0
      %3961 = vmatprep.subr.bf16.mxu0 0
      %3962 = vmatpush1.bf16.msra.mxu0 0
      %3963 = vmatprep.subr.bf16.mxu0 0
      %3964 = vmatpush1.bf16.msra.mxu0 0
      %3965 = vmatprep.subr.bf16.mxu0 0
      %3966 = vmatpush1.bf16.msra.mxu0 0
      %3967 = vmatprep.subr.bf16.mxu0 0
      %3968 = vmatpush1.bf16.msra.mxu0 %v3949
      %3969 = vmatprep.subr.bf16.mxu0 0
      %3970 = vmatpush2.bf16.msra.mxu0 0
      %3971 = vmatprep.subr.bf16.mxu0 0
      %3972 = vmatpush2.bf16.msra.mxu0 0
      %3973 = vmatprep.subr.bf16.mxu0 0
      %3974 = vmatpush2.bf16.msra.mxu0 0
      %3975 = vmatprep.subr.bf16.mxu0 0
      %3976 = vmatpush2.bf16.msra.mxu0 0
      %3977 = vmatprep.subr.bf16.mxu0 0
      %3978 = vmatpush2.bf16.msra.mxu0 0
      %3979 = vmatprep.subr.bf16.mxu0 0
      %3980 = vmatpush2.bf16.msra.mxu0 0
      %3981 = vmatprep.subr.bf16.mxu0 0
      %3982 = vmatpush2.bf16.msra.mxu0 0
      %3983 = vmatprep.subr.bf16.mxu0 0
      %3984 = vmatpush2.bf16.msra.mxu0 0
      %3985 = vmatprep.mubr.bf16.mxu0 0
      %3986 = vmatmul.mubr.bf16.gmra.mxu0 %v3951
      %v3987 = vpop.f32.mrf.mxu0
      %v3988 = vadd.f32 0.0, %v3987
      %v3989 = vpop.f32.mrf.mxu0
      %v3990 = vpop.f32.mrf.mxu0
      %v3991 = vadd.f32 0.0, %v3990
      %v3992 = vpop.f32.mrf.mxu0
      %3993 = vdwg.mxu0
      %v3994 = vpack.c.bf16 %v3991, %v3988
      %s3995 = scalar_lea.vmem %s8, 48
      %v3996 = vld [vmem:[%s3995] sm:$0xf]
      %v3997 = vld [vmem:[%s3995 + $0x4] sm:$0xf]
      %v4000 = vunpack.c.l.b16 %v3996
      %v4001 = vunpack.c.l.b16 %v3997
      %v4002 = vpack.c.b16 %v4001, %v4000
      %v4005 = vsel %vm779, %v3994, 0
      %4007 = vmatprep.subr.bf16.mxu0 0
      %4008 = vmatpush1.bf16.msra.mxu0 0
      %4009 = vmatprep.subr.bf16.mxu0 0
      %4010 = vmatpush1.bf16.msra.mxu0 0
      %4011 = vmatprep.subr.bf16.mxu0 0
      %4012 = vmatpush1.bf16.msra.mxu0 0
      %4013 = vmatprep.subr.bf16.mxu0 0
      %4014 = vmatpush1.bf16.msra.mxu0 0
      %4015 = vmatprep.subr.bf16.mxu0 0
      %4016 = vmatpush1.bf16.msra.mxu0 0
      %4017 = vmatprep.subr.bf16.mxu0 0
      %4018 = vmatpush1.bf16.msra.mxu0 0
      %4019 = vmatprep.subr.bf16.mxu0 0
      %4020 = vmatpush1.bf16.msra.mxu0 0
      %4021 = vmatprep.subr.bf16.mxu0 0
      %4022 = vmatpush1.bf16.msra.mxu0 %v4002
      %4023 = vmatprep.subr.bf16.mxu0 0
      %4024 = vmatpush2.bf16.msra.mxu0 0
      %4025 = vmatprep.subr.bf16.mxu0 0
      %4026 = vmatpush2.bf16.msra.mxu0 0
      %4027 = vmatprep.subr.bf16.mxu0 0
      %4028 = vmatpush2.bf16.msra.mxu0 0
      %4029 = vmatprep.subr.bf16.mxu0 0
      %4030 = vmatpush2.bf16.msra.mxu0 0
      %4031 = vmatprep.subr.bf16.mxu0 0
      %4032 = vmatpush2.bf16.msra.mxu0 0
      %4033 = vmatprep.subr.bf16.mxu0 0
      %4034 = vmatpush2.bf16.msra.mxu0 0
      %4035 = vmatprep.subr.bf16.mxu0 0
      %4036 = vmatpush2.bf16.msra.mxu0 0
      %4037 = vmatprep.subr.bf16.mxu0 0
      %4038 = vmatpush2.bf16.msra.mxu0 0
      %4039 = vmatprep.mubr.bf16.mxu0 0
      %4040 = vmatmul.mubr.bf16.gmra.mxu0 %v4005
      %v4041 = vpop.f32.mrf.mxu0
      %v4042 = vadd.f32 0.0, %v4041
      %v4043 = vpop.f32.mrf.mxu0
      %v4044 = vpop.f32.mrf.mxu0
      %v4045 = vadd.f32 0.0, %v4044
      %v4046 = vpop.f32.mrf.mxu0
      %4047 = vdwg.mxu0
      %v4048 = vadd.f32 %v3531, %v4042
      %v4049 = vadd.f32 %v3532, %v4045
      %s4050 = scalar_lea.vmem %s2, 448
      %v4051 = vld [vmem:[%s4050] sm:$0xf]
      %v4052 = vld [vmem:[%s4050 + $0x4] sm:$0xf]
      %v4053 = vld [vmem:[%s4050 + $0x8] sm:$0xf]
      %v4054 = vld [vmem:[%s4050 + $0xc] sm:$0xf]
      %v4055 = vld [vmem:[%s4050 + $0x10] sm:$0xf]
      %v4056 = vld [vmem:[%s4050 + $0x14] sm:$0xf]
      %v4057 = vld [vmem:[%s4050 + $0x18] sm:$0xf]
      %v4058 = vld [vmem:[%s4050 + $0x1c] sm:$0xf]
      %v4059 = vld [vmem:[%s4050 + $0x20] sm:$0xf]
      %v4060 = vld [vmem:[%s4050 + $0x24] sm:$0xf]
      %v4061 = vld [vmem:[%s4050 + $0x28] sm:$0xf]
      %v4062 = vld [vmem:[%s4050 + $0x2c] sm:$0xf]
      %v4063 = vld [vmem:[%s4050 + $0x30] sm:$0xf]
      %v4064 = vld [vmem:[%s4050 + $0x34] sm:$0xf]
      %v4065 = vld [vmem:[%s4050 + $0x38] sm:$0xf]
      %v4066 = vld [vmem:[%s4050 + $0x3c] sm:$0xf]
      %s4067 = scalar_lea.vmem %s3, 7
      %v4068 = vld [vmem:[%s4067] sm:$0x1]
      %v4070 = vlaneseq
      %v4071 = vshrl.u32 %v4070, 7
      %v4072 = vsub.s32 0, %v4071
      %v4073 = vrot.slane %v4068, %v4072
      %v4091 = vunpack.c.l.b16 %v4051
      %v4092 = vunpack.c.l.b16 %v4052
      %v4093 = vunpack.c.l.b16 %v4053
      %v4094 = vunpack.c.l.b16 %v4054
      %v4095 = vunpack.c.l.b16 %v4055
      %v4096 = vunpack.c.l.b16 %v4056
      %v4097 = vunpack.c.l.b16 %v4057
      %v4098 = vunpack.c.l.b16 %v4058
      %v4099 = vunpack.c.l.b16 %v4059
      %v4100 = vunpack.c.l.b16 %v4060
      %v4101 = vunpack.c.l.b16 %v4061
      %v4102 = vunpack.c.l.b16 %v4062
      %v4103 = vunpack.c.l.b16 %v4063
      %v4104 = vunpack.c.l.b16 %v4064
      %v4105 = vunpack.c.l.b16 %v4065
      %v4106 = vunpack.c.l.b16 %v4066
      %v4107 = vpack.c.b16 %v4092, %v4091
      %v4108 = vpack.c.b16 %v4094, %v4093
      %v4109 = vpack.c.b16 %v4096, %v4095
      %v4110 = vpack.c.b16 %v4098, %v4097
      %v4111 = vpack.c.b16 %v4100, %v4099
      %v4112 = vpack.c.b16 %v4102, %v4101
      %v4113 = vpack.c.b16 %v4104, %v4103
      %v4114 = vpack.c.b16 %v4106, %v4105
      %4123 = vmatprep.subr.bf16.mxu0 0
      %4124 = vmatpush1.bf16.msra.mxu0 %v4114
      %4125 = vmatprep.subr.bf16.mxu0 0
      %4126 = vmatpush1.bf16.msra.mxu0 %v4113
      %4127 = vmatprep.subr.bf16.mxu0 0
      %4128 = vmatpush1.bf16.msra.mxu0 %v4112
      %4129 = vmatprep.subr.bf16.mxu0 0
      %4130 = vmatpush1.bf16.msra.mxu0 %v4111
      %4131 = vmatprep.subr.bf16.mxu0 0
      %4132 = vmatpush1.bf16.msra.mxu0 %v4110
      %4133 = vmatprep.subr.bf16.mxu0 0
      %4134 = vmatpush1.bf16.msra.mxu0 %v4109
      %4135 = vmatprep.subr.bf16.mxu0 0
      %4136 = vmatpush1.bf16.msra.mxu0 %v4108
      %4137 = vmatprep.subr.bf16.mxu0 0
      %4138 = vmatpush1.bf16.msra.mxu0 %v4107
      %4139 = vmatprep.subr.bf16.mxu0 0
      %4140 = vmatpush2.bf16.msra.mxu0 0
      %4141 = vmatprep.subr.bf16.mxu0 0
      %4142 = vmatpush2.bf16.msra.mxu0 0
      %4143 = vmatprep.subr.bf16.mxu0 0
      %4144 = vmatpush2.bf16.msra.mxu0 0
      %4145 = vmatprep.subr.bf16.mxu0 0
      %4146 = vmatpush2.bf16.msra.mxu0 0
      %4147 = vmatprep.subr.bf16.mxu0 0
      %4148 = vmatpush2.bf16.msra.mxu0 0
      %4149 = vmatprep.subr.bf16.mxu0 0
      %4150 = vmatpush2.bf16.msra.mxu0 0
      %4151 = vmatprep.subr.bf16.mxu0 0
      %4152 = vmatpush2.bf16.msra.mxu0 0
      %4153 = vmatprep.subr.bf16.mxu0 0
      %4154 = vmatpush2.bf16.msra.mxu0 0
      %4155 = vmatprep.mubr.bf16.mxu0 0
      %4156 = vmatmul.mubr.bf16.gmra.mxu0 %v439
      %v4157 = vpop.f32.mrf.mxu0
      %v4158 = vadd.f32 %v4073, %v4157
      %v4159 = vpop.f32.mrf.mxu0
      %v4160 = vpop.f32.mrf.mxu0
      %v4161 = vadd.f32 %v4073, %v4160
      %v4162 = vpop.f32.mrf.mxu0
      %4163 = vdwg.mxu0
      %s4164 = scalar_lea.vmem %s4, 448
      %v4165 = vld [vmem:[%s4164] sm:$0xf]
      %v4166 = vld [vmem:[%s4164 + $0x4] sm:$0xf]
      %v4167 = vld [vmem:[%s4164 + $0x8] sm:$0xf]
      %v4168 = vld [vmem:[%s4164 + $0xc] sm:$0xf]
      %v4169 = vld [vmem:[%s4164 + $0x10] sm:$0xf]
      %v4170 = vld [vmem:[%s4164 + $0x14] sm:$0xf]
      %v4171 = vld [vmem:[%s4164 + $0x18] sm:$0xf]
      %v4172 = vld [vmem:[%s4164 + $0x1c] sm:$0xf]
      %v4173 = vld [vmem:[%s4164 + $0x20] sm:$0xf]
      %v4174 = vld [vmem:[%s4164 + $0x24] sm:$0xf]
      %v4175 = vld [vmem:[%s4164 + $0x28] sm:$0xf]
      %v4176 = vld [vmem:[%s4164 + $0x2c] sm:$0xf]
      %v4177 = vld [vmem:[%s4164 + $0x30] sm:$0xf]
      %v4178 = vld [vmem:[%s4164 + $0x34] sm:$0xf]
      %v4179 = vld [vmem:[%s4164 + $0x38] sm:$0xf]
      %v4180 = vld [vmem:[%s4164 + $0x3c] sm:$0xf]
      %s4181 = scalar_lea.vmem %s5, 7
      %v4182 = vld [vmem:[%s4181] sm:$0x1]
      %v4184 = vlaneseq
      %v4185 = vshrl.u32 %v4184, 7
      %v4186 = vsub.s32 0, %v4185
      %v4187 = vrot.slane %v4182, %v4186
      %v4205 = vunpack.c.l.b16 %v4165
      %v4206 = vunpack.c.l.b16 %v4166
      %v4207 = vunpack.c.l.b16 %v4167
      %v4208 = vunpack.c.l.b16 %v4168
      %v4209 = vunpack.c.l.b16 %v4169
      %v4210 = vunpack.c.l.b16 %v4170
      %v4211 = vunpack.c.l.b16 %v4171
      %v4212 = vunpack.c.l.b16 %v4172
      %v4213 = vunpack.c.l.b16 %v4173
      %v4214 = vunpack.c.l.b16 %v4174
      %v4215 = vunpack.c.l.b16 %v4175
      %v4216 = vunpack.c.l.b16 %v4176
      %v4217 = vunpack.c.l.b16 %v4177
      %v4218 = vunpack.c.l.b16 %v4178
      %v4219 = vunpack.c.l.b16 %v4179
      %v4220 = vunpack.c.l.b16 %v4180
      %v4221 = vpack.c.b16 %v4206, %v4205
      %v4222 = vpack.c.b16 %v4208, %v4207
      %v4223 = vpack.c.b16 %v4210, %v4209
      %v4224 = vpack.c.b16 %v4212, %v4211
      %v4225 = vpack.c.b16 %v4214, %v4213
      %v4226 = vpack.c.b16 %v4216, %v4215
      %v4227 = vpack.c.b16 %v4218, %v4217
      %v4228 = vpack.c.b16 %v4220, %v4219
      %4237 = vmatprep.subr.bf16.mxu0 0
      %4238 = vmatpush1.bf16.msra.mxu0 %v4228
      %4239 = vmatprep.subr.bf16.mxu0 0
      %4240 = vmatpush1.bf16.msra.mxu0 %v4227
      %4241 = vmatprep.subr.bf16.mxu0 0
      %4242 = vmatpush1.bf16.msra.mxu0 %v4226
      %4243 = vmatprep.subr.bf16.mxu0 0
      %4244 = vmatpush1.bf16.msra.mxu0 %v4225
      %4245 = vmatprep.subr.bf16.mxu0 0
      %4246 = vmatpush1.bf16.msra.mxu0 %v4224
      %4247 = vmatprep.subr.bf16.mxu0 0
      %4248 = vmatpush1.bf16.msra.mxu0 %v4223
      %4249 = vmatprep.subr.bf16.mxu0 0
      %4250 = vmatpush1.bf16.msra.mxu0 %v4222
      %4251 = vmatprep.subr.bf16.mxu0 0
      %4252 = vmatpush1.bf16.msra.mxu0 %v4221
      %4253 = vmatprep.subr.bf16.mxu0 0
      %4254 = vmatpush2.bf16.msra.mxu0 0
      %4255 = vmatprep.subr.bf16.mxu0 0
      %4256 = vmatpush2.bf16.msra.mxu0 0
      %4257 = vmatprep.subr.bf16.mxu0 0
      %4258 = vmatpush2.bf16.msra.mxu0 0
      %4259 = vmatprep.subr.bf16.mxu0 0
      %4260 = vmatpush2.bf16.msra.mxu0 0
      %4261 = vmatprep.subr.bf16.mxu0 0
      %4262 = vmatpush2.bf16.msra.mxu0 0
      %4263 = vmatprep.subr.bf16.mxu0 0
      %4264 = vmatpush2.bf16.msra.mxu0 0
      %4265 = vmatprep.subr.bf16.mxu0 0
      %4266 = vmatpush2.bf16.msra.mxu0 0
      %4267 = vmatprep.subr.bf16.mxu0 0
      %4268 = vmatpush2.bf16.msra.mxu0 0
      %4269 = vmatprep.mubr.bf16.mxu0 0
      %4270 = vmatmul.mubr.bf16.gmra.mxu0 %v440
      %v4271 = vpop.f32.mrf.mxu0
      %v4272 = vadd.f32 %v4187, %v4271
      %v4273 = vpop.f32.mrf.mxu0
      %v4274 = vpop.f32.mrf.mxu0
      %v4275 = vadd.f32 %v4187, %v4274
      %v4276 = vpop.f32.mrf.mxu0
      %4277 = vdwg.mxu0
      %s4278 = scalar_lea.vmem %s6, 448
      %v4279 = vld [vmem:[%s4278] sm:$0xf]
      %v4280 = vld [vmem:[%s4278 + $0x4] sm:$0xf]
      %v4281 = vld [vmem:[%s4278 + $0x8] sm:$0xf]
      %v4282 = vld [vmem:[%s4278 + $0xc] sm:$0xf]
      %v4283 = vld [vmem:[%s4278 + $0x10] sm:$0xf]
      %v4284 = vld [vmem:[%s4278 + $0x14] sm:$0xf]
      %v4285 = vld [vmem:[%s4278 + $0x18] sm:$0xf]
      %v4286 = vld [vmem:[%s4278 + $0x1c] sm:$0xf]
      %v4287 = vld [vmem:[%s4278 + $0x20] sm:$0xf]
      %v4288 = vld [vmem:[%s4278 + $0x24] sm:$0xf]
      %v4289 = vld [vmem:[%s4278 + $0x28] sm:$0xf]
      %v4290 = vld [vmem:[%s4278 + $0x2c] sm:$0xf]
      %v4291 = vld [vmem:[%s4278 + $0x30] sm:$0xf]
      %v4292 = vld [vmem:[%s4278 + $0x34] sm:$0xf]
      %v4293 = vld [vmem:[%s4278 + $0x38] sm:$0xf]
      %v4294 = vld [vmem:[%s4278 + $0x3c] sm:$0xf]
      %s4295 = scalar_lea.vmem %s7, 7
      %v4296 = vld [vmem:[%s4295] sm:$0x1]
      %v4298 = vlaneseq
      %v4299 = vshrl.u32 %v4298, 7
      %v4300 = vsub.s32 0, %v4299
      %v4301 = vrot.slane %v4296, %v4300
      %v4319 = vunpack.c.l.b16 %v4279
      %v4320 = vunpack.c.l.b16 %v4280
      %v4321 = vunpack.c.l.b16 %v4281
      %v4322 = vunpack.c.l.b16 %v4282
      %v4323 = vunpack.c.l.b16 %v4283
      %v4324 = vunpack.c.l.b16 %v4284
      %v4325 = vunpack.c.l.b16 %v4285
      %v4326 = vunpack.c.l.b16 %v4286
      %v4327 = vunpack.c.l.b16 %v4287
      %v4328 = vunpack.c.l.b16 %v4288
      %v4329 = vunpack.c.l.b16 %v4289
      %v4330 = vunpack.c.l.b16 %v4290
      %v4331 = vunpack.c.l.b16 %v4291
      %v4332 = vunpack.c.l.b16 %v4292
      %v4333 = vunpack.c.l.b16 %v4293
      %v4334 = vunpack.c.l.b16 %v4294
      %v4335 = vpack.c.b16 %v4320, %v4319
      %v4336 = vpack.c.b16 %v4322, %v4321
      %v4337 = vpack.c.b16 %v4324, %v4323
      %v4338 = vpack.c.b16 %v4326, %v4325
      %v4339 = vpack.c.b16 %v4328, %v4327
      %v4340 = vpack.c.b16 %v4330, %v4329
      %v4341 = vpack.c.b16 %v4332, %v4331
      %v4342 = vpack.c.b16 %v4334, %v4333
      %4351 = vmatprep.subr.bf16.mxu0 0
      %4352 = vmatpush1.bf16.msra.mxu0 %v4342
      %4353 = vmatprep.subr.bf16.mxu0 0
      %4354 = vmatpush1.bf16.msra.mxu0 %v4341
      %4355 = vmatprep.subr.bf16.mxu0 0
      %4356 = vmatpush1.bf16.msra.mxu0 %v4340
      %4357 = vmatprep.subr.bf16.mxu0 0
      %4358 = vmatpush1.bf16.msra.mxu0 %v4339
      %4359 = vmatprep.subr.bf16.mxu0 0
      %4360 = vmatpush1.bf16.msra.mxu0 %v4338
      %4361 = vmatprep.subr.bf16.mxu0 0
      %4362 = vmatpush1.bf16.msra.mxu0 %v4337
      %4363 = vmatprep.subr.bf16.mxu0 0
      %4364 = vmatpush1.bf16.msra.mxu0 %v4336
      %4365 = vmatprep.subr.bf16.mxu0 0
      %4366 = vmatpush1.bf16.msra.mxu0 %v4335
      %4367 = vmatprep.subr.bf16.mxu0 0
      %4368 = vmatpush2.bf16.msra.mxu0 0
      %4369 = vmatprep.subr.bf16.mxu0 0
      %4370 = vmatpush2.bf16.msra.mxu0 0
      %4371 = vmatprep.subr.bf16.mxu0 0
      %4372 = vmatpush2.bf16.msra.mxu0 0
      %4373 = vmatprep.subr.bf16.mxu0 0
      %4374 = vmatpush2.bf16.msra.mxu0 0
      %4375 = vmatprep.subr.bf16.mxu0 0
      %4376 = vmatpush2.bf16.msra.mxu0 0
      %4377 = vmatprep.subr.bf16.mxu0 0
      %4378 = vmatpush2.bf16.msra.mxu0 0
      %4379 = vmatprep.subr.bf16.mxu0 0
      %4380 = vmatpush2.bf16.msra.mxu0 0
      %4381 = vmatprep.subr.bf16.mxu0 0
      %4382 = vmatpush2.bf16.msra.mxu0 0
      %4383 = vmatprep.mubr.bf16.mxu0 0
      %4384 = vmatmul.mubr.bf16.gmra.mxu0 %v440
      %v4385 = vpop.f32.mrf.mxu0
      %v4386 = vadd.f32 %v4301, %v4385
      %v4387 = vpop.f32.mrf.mxu0
      %v4388 = vpop.f32.mrf.mxu0
      %v4389 = vadd.f32 %v4301, %v4388
      %v4390 = vpop.f32.mrf.mxu0
      %4391 = vdwg.mxu0
      %v4392 = vpack.c.bf16 %v4161, %v4158
      %v4393 = vpack.c.bf16 %v4275, %v4272
      %v4395 = vsel %vm779, %v4392, 0
      %v4398 = vsel %vm779, %v4393, 0
      %4400 = vmatprep.subr.bf16.mxu0 0
      %4401 = vmatpush1.bf16.xpose.msra.mxu0 0
      %4402 = vmatprep.subr.bf16.mxu0 0
      %4403 = vmatpush1.bf16.xpose.msra.mxu0 0
      %4404 = vmatprep.subr.bf16.mxu0 0
      %4405 = vmatpush1.bf16.xpose.msra.mxu0 0
      %4406 = vmatprep.subr.bf16.mxu0 0
      %4407 = vmatpush1.bf16.xpose.msra.mxu0 0
      %4408 = vmatprep.subr.bf16.mxu0 0
      %4409 = vmatpush1.bf16.xpose.msra.mxu0 0
      %4410 = vmatprep.subr.bf16.mxu0 0
      %4411 = vmatpush1.bf16.xpose.msra.mxu0 0
      %4412 = vmatprep.subr.bf16.mxu0 0
      %4413 = vmatpush1.bf16.xpose.msra.mxu0 0
      %4414 = vmatprep.subr.bf16.mxu0 0
      %4415 = vmatpush1.bf16.xpose.msra.mxu0 %v4398
      %4416 = vmatprep.subr.bf16.mxu0 0
      %4417 = vmatpush2.bf16.xpose.msra.mxu0 0
      %4418 = vmatprep.subr.bf16.mxu0 0
      %4419 = vmatpush2.bf16.xpose.msra.mxu0 0
      %4420 = vmatprep.subr.bf16.mxu0 0
      %4421 = vmatpush2.bf16.xpose.msra.mxu0 0
      %4422 = vmatprep.subr.bf16.mxu0 0
      %4423 = vmatpush2.bf16.xpose.msra.mxu0 0
      %4424 = vmatprep.subr.bf16.mxu0 0
      %4425 = vmatpush2.bf16.xpose.msra.mxu0 0
      %4426 = vmatprep.subr.bf16.mxu0 0
      %4427 = vmatpush2.bf16.xpose.msra.mxu0 0
      %4428 = vmatprep.subr.bf16.mxu0 0
      %4429 = vmatpush2.bf16.xpose.msra.mxu0 0
      %4430 = vmatprep.subr.bf16.mxu0 0
      %4431 = vmatpush2.bf16.xpose.msra.mxu0 0
      %4432 = vmatprep.mubr.bf16.mxu0 0
      %4433 = vmatmul.mubr.bf16.gmra.mxu0 %v4395
      %v4434 = vpop.f32.mrf.mxu0
      %v4435 = vadd.f32 0.0, %v4434
      %v4436 = vpop.f32.mrf.mxu0
      %v4437 = vpop.f32.mrf.mxu0
      %v4438 = vadd.f32 0.0, %v4437
      %v4439 = vpop.f32.mrf.mxu0
      %4440 = vdwg.mxu0
      %v4441 = vmul.f32 %v4435, 0.25
      %v4442 = vmul.f32 %v4438, 0.25
      %v4443 = vsel %vm779, %v4441, -inf
      %4444 = vmax.xlane.f32.xlu0 %v4443
      %v4445 = vpop.xlane.xlu0 %4444
      %v4446 = vsel %vm779, %v4442, -inf
      %4447 = vmax.xlane.f32.xlu0 %v4446
      %v4448 = vpop.xlane.xlu0 %4447
      %v4449 = vsub.f32 %v4441, %v4445
      %v4450 = vsub.f32 %v4442, %v4448
      %v4451 = vmul.f32 %v4449, 1.442695
      %v4452 = vpow.pop %v4451
      %v4453 = vmul.f32 %v4450, 1.442695
      %v4454 = vpow.pop %v4453
      %v4455 = vsel %vm779, %v4452, 0.0
      %4456 = vadd.xlane.f32.xlu0 %v4455
      %v4457 = vpop.xlane.xlu0 %4456
      %v4458 = vsel %vm779, %v4454, 0.0
      %4459 = vadd.xlane.f32.xlu0 %v4458
      %v4460 = vpop.xlane.xlu0 %4459
      %v4461 = vrcp.pop %v4457
      %v4462 = vmul.f32 %v4452, %v4461
      %v4463 = vrcp.pop %v4460
      %v4464 = vmul.f32 %v4454, %v4463
      %v4465 = vpack.c.bf16 %v4464, %v4462
      %v4466 = vpack.c.bf16 %v4389, %v4386
      %v4468 = vsel %vm779, %v4465, 0
      %4470 = vmatprep.subr.bf16.mxu0 0
      %4471 = vmatpush1.bf16.msra.mxu0 0
      %4472 = vmatprep.subr.bf16.mxu0 0
      %4473 = vmatpush1.bf16.msra.mxu0 0
      %4474 = vmatprep.subr.bf16.mxu0 0
      %4475 = vmatpush1.bf16.msra.mxu0 0
      %4476 = vmatprep.subr.bf16.mxu0 0
      %4477 = vmatpush1.bf16.msra.mxu0 0
      %4478 = vmatprep.subr.bf16.mxu0 0
      %4479 = vmatpush1.bf16.msra.mxu0 0
      %4480 = vmatprep.subr.bf16.mxu0 0
      %4481 = vmatpush1.bf16.msra.mxu0 0
      %4482 = vmatprep.subr.bf16.mxu0 0
      %4483 = vmatpush1.bf16.msra.mxu0 0
      %4484 = vmatprep.subr.bf16.mxu0 0
      %4485 = vmatpush1.bf16.msra.mxu0 %v4466
      %4486 = vmatprep.subr.bf16.mxu0 0
      %4487 = vmatpush2.bf16.msra.mxu0 0
      %4488 = vmatprep.subr.bf16.mxu0 0
      %4489 = vmatpush2.bf16.msra.mxu0 0
      %4490 = vmatprep.subr.bf16.mxu0 0
      %4491 = vmatpush2.bf16.msra.mxu0 0
      %4492 = vmatprep.subr.bf16.mxu0 0
      %4493 = vmatpush2.bf16.msra.mxu0 0
      %4494 = vmatprep.subr.bf16.mxu0 0
      %4495 = vmatpush2.bf16.msra.mxu0 0
      %4496 = vmatprep.subr.bf16.mxu0 0
      %4497 = vmatpush2.bf16.msra.mxu0 0
      %4498 = vmatprep.subr.bf16.mxu0 0
      %4499 = vmatpush2.bf16.msra.mxu0 0
      %4500 = vmatprep.subr.bf16.mxu0 0
      %4501 = vmatpush2.bf16.msra.mxu0 0
      %4502 = vmatprep.mubr.bf16.mxu0 0
      %4503 = vmatmul.mubr.bf16.gmra.mxu0 %v4468
      %v4504 = vpop.f32.mrf.mxu0
      %v4505 = vadd.f32 0.0, %v4504
      %v4506 = vpop.f32.mrf.mxu0
      %v4507 = vpop.f32.mrf.mxu0
      %v4508 = vadd.f32 0.0, %v4507
      %v4509 = vpop.f32.mrf.mxu0
      %4510 = vdwg.mxu0
      %v4511 = vpack.c.bf16 %v4508, %v4505
      %s4512 = scalar_lea.vmem %s8, 56
      %v4513 = vld [vmem:[%s4512] sm:$0xf]
      %v4514 = vld [vmem:[%s4512 + $0x4] sm:$0xf]
      %v4517 = vunpack.c.l.b16 %v4513
      %v4518 = vunpack.c.l.b16 %v4514
      %v4519 = vpack.c.b16 %v4518, %v4517
      %v4522 = vsel %vm779, %v4511, 0
      %4524 = vmatprep.subr.bf16.mxu0 0
      %4525 = vmatpush1.bf16.msra.mxu0 0
      %4526 = vmatprep.subr.bf16.mxu0 0
      %4527 = vmatpush1.bf16.msra.mxu0 0
      %4528 = vmatprep.subr.bf16.mxu0 0
      %4529 = vmatpush1.bf16.msra.mxu0 0
      %4530 = vmatprep.subr.bf16.mxu0 0
      %4531 = vmatpush1.bf16.msra.mxu0 0
      %4532 = vmatprep.subr.bf16.mxu0 0
      %4533 = vmatpush1.bf16.msra.mxu0 0
      %4534 = vmatprep.subr.bf16.mxu0 0
      %4535 = vmatpush1.bf16.msra.mxu0 0
      %4536 = vmatprep.subr.bf16.mxu0 0
      %4537 = vmatpush1.bf16.msra.mxu0 0
      %4538 = vmatprep.subr.bf16.mxu0 0
      %4539 = vmatpush1.bf16.msra.mxu0 %v4519
      %4540 = vmatprep.subr.bf16.mxu0 0
      %4541 = vmatpush2.bf16.msra.mxu0 0
      %4542 = vmatprep.subr.bf16.mxu0 0
      %4543 = vmatpush2.bf16.msra.mxu0 0
      %4544 = vmatprep.subr.bf16.mxu0 0
      %4545 = vmatpush2.bf16.msra.mxu0 0
      %4546 = vmatprep.subr.bf16.mxu0 0
      %4547 = vmatpush2.bf16.msra.mxu0 0
      %4548 = vmatprep.subr.bf16.mxu0 0
      %4549 = vmatpush2.bf16.msra.mxu0 0
      %4550 = vmatprep.subr.bf16.mxu0 0
      %4551 = vmatpush2.bf16.msra.mxu0 0
      %4552 = vmatprep.subr.bf16.mxu0 0
      %4553 = vmatpush2.bf16.msra.mxu0 0
      %4554 = vmatprep.subr.bf16.mxu0 0
      %4555 = vmatpush2.bf16.msra.mxu0 0
      %4556 = vmatprep.mubr.bf16.mxu0 0
      %4557 = vmatmul.mubr.bf16.gmra.mxu0 %v4522
      %v4558 = vpop.f32.mrf.mxu0
      %v4559 = vadd.f32 0.0, %v4558
      %v4560 = vpop.f32.mrf.mxu0
      %v4561 = vpop.f32.mrf.mxu0
      %v4562 = vadd.f32 0.0, %v4561
      %v4563 = vpop.f32.mrf.mxu0
      %4564 = vdwg.mxu0
      %v4565 = vadd.f32 %v4048, %v4559
      %v4566 = vadd.f32 %v4049, %v4562
      %v4567 = vadd.f32 %v435, %v4565
      %v4568 = vadd.f32 %v436, %v4566
      %v4569 = vld [vmem:[%s9] sm:$0x1]
      %v4571 = vlaneseq
      %v4572 = vshrl.u32 %v4571, 7
      %v4573 = vsub.s32 0, %v4572
      %v4574 = vrot.slane %v4569, %v4573
      %v4576 = vadd.f32 %v4567, %v4574
      %v4577 = vadd.f32 %v4568, %v4574
      %4578 = vadd.xlane.f32.xlu0 %v4576
      %v4579 = vpop.xlane.xlu0 %4578
      %4580 = vadd.xlane.f32.xlu0 %v4577
      %v4581 = vpop.xlane.xlu0 %4580
      %v4582 = vrcp.pop 128.0
      %v4583 = vmul.f32 %v4579, %v4582
      %v4584 = vmul.f32 %v4581, %v4582
      %v4585 = vsub.f32 %v4576, %v4583
      %v4586 = vsub.f32 %v4577, %v4584
      %v4587 = vmul.f32 %v4585, %v4585
      %v4588 = vmul.f32 %v4586, %v4586
      %4589 = vadd.xlane.f32.xlu0 %v4587
      %v4590 = vpop.xlane.xlu0 %4589
      %4591 = vadd.xlane.f32.xlu0 %v4588
      %v4592 = vpop.xlane.xlu0 %4591
      %v4593 = vmul.f32 %v4590, %v4582
      %v4594 = vmul.f32 %v4592, %v4582
      %v4595 = vadd.f32 %v4593, 1e-05
      %v4596 = vadd.f32 %v4594, 1e-05
      %v4597 = vrsqrt.pop %v4595
      %v4598 = vrsqrt.pop %v4596
      %v4599 = vmul.f32 %v4585, %v4597
      %v4600 = vmul.f32 %v4586, %v4598
      %v4601 = vld [vmem:[%s10] sm:$0x1]
      %v4603 = vlaneseq
      %v4604 = vshrl.u32 %v4603, 7
      %v4605 = vsub.s32 0, %v4604
      %v4606 = vrot.slane %v4601, %v4605
      %v4608 = vmul.f32 %v4599, %v4606
      %v4609 = vmul.f32 %v4600, %v4606
      %v4610 = vld [vmem:[%s11] sm:$0x1]
      %v4612 = vlaneseq
      %v4613 = vshrl.u32 %v4612, 7
      %v4614 = vsub.s32 0, %v4613
      %v4615 = vrot.slane %v4610, %v4614
      %v4617 = vadd.f32 %v4608, %v4615
      %v4618 = vadd.f32 %v4609, %v4615
      %4619 = vst [vmem:[%s433] sm:$0xff] %v4617
      %4620 = vst [vmem:[%s433 + $0x8] sm:$0xff] %v4618
      %p4621 = scmp.lt.s32.totalorder %s23, 1
      %s4622 = scalar_select %p4621, %s23, 1
      %s4623 = smul.addr %s4622, 2
      %s4624 = smul.addr %s4623, 8
      %s4625 = scalar_lea.vmem %s12, %s4624
      // Predicated region
      $region69: #{model_forward.27} parent=67 // pred_check
        %p4626 = pneg %p303
      $region70: #{model_forward.27} parent=67 // pred_check_branch
        %4628 = sbr.rel (%p4626) target = $region72
      $region71: #{model_forward.27} parent=67 // pred_region
        _
      $region72: #{model_forward.27} parent=67 // pred_fallthru
        _
    $region68: #{model_forward.27} parent=5 // pred_fallthru
      _
    %p4629 = scmp.le.s32.totalorder 2, %s18
    // Predicated region
    $region73: #{model_forward.27} parent=5 // pred_check
      %p4630 = pneg %p4629
    $region74: #{model_forward.27} parent=5 // pred_check_branch
      %4632 = sbr.rel (%p4630) target = $region76
    $region75: #{model_forward.27} parent=5 // pred_region
      %s4633 = ssub.s32 %s18, 2
      // Predicated region
      $region77: #{model_forward.27} parent=75 // pred_check
        %p4634 = pneg %p309
      $region78: #{model_forward.27} parent=75 // pred_check_branch
        %4636 = sbr.rel (%p4634) target = $region80
      $region79: #{model_forward.27} parent=75 // pred_region
        %p4637 = scmp.lt.s32.totalorder %s24, 1
        %s4638 = scalar_select %p4637, %s24, 1
        %s4639 = smul.addr %s4638, 2
        %s4640 = smul.addr %s4639, 8
        %s4641 = scalar_lea.vmem %s12, %s4640
      $region80: #{model_forward.27} parent=75 // pred_fallthru
        _
    $region76: #{model_forward.27} parent=5 // pred_fallthru
      _
  $region6: #{model_forward.27} parent=0 // loop_footer
    %s22 = sadd.s32 1, %s18
  $region7: #{model_forward.27} parent=0 // loop_footer_branch
    %17 = sbr.rel target = $region3
  $region8: #{model_forward.27} parent=0 // loop_exit
    _

</llo_original>
